<compile_context>
chip_gen: v6e
topology: v6e:2x2x1
jax: 0.10.0
libtpu: 0.0.40
codegen_flags: <defaults>
</compile_context>

<pallas_src>
import functools

import numpy as np
import jax
import jax.numpy as jnp
from jax import lax
from jax.experimental import pallas as pl
from jax.experimental.pallas import tpu as pltpu

PAD = 0          # Constants.PAD
NEG_INF = -1e30  # finite stand-in for -inf in the attention mask
EPS = 1e-5       # BatchNorm1d / LayerNorm default eps

# Flip to jnp.bfloat16 on v6e / v7x for 2x MXU throughput and half the VMEM
# traffic (accumulation stays f32 via preferred_element_type).
MATMUL_DTYPE = jnp.float32


def _mm(a, b):
    """MXU matmul with f32 accumulation; inputs cast to MATMUL_DTYPE."""
    return jnp.dot(a.astype(MATMUL_DTYPE), b.astype(MATMUL_DTYPE),
                   preferred_element_type=jnp.float32)


def _mm_nt(a, b):
    """a @ b.T (contract last dim of both), f32 accumulation."""
    return lax.dot_general(a.astype(MATMUL_DTYPE), b.astype(MATMUL_DTYPE),
                           (((1,), (1,)), ((), ())),
                           preferred_element_type=jnp.float32)


# ----------------------------------------------------------------------------
# The single fused Pallas kernel (whole forward pass)
# ----------------------------------------------------------------------------
def _neutic_fused_kernel(
        # activations / masks
        cmb_ref, pos_ref, npad_ref, bias_ref,
        # combine_fully
        cw_ref, cb_ref,
        # folded conv branch + BN_ReLU
        convw_ref, convb_ref, bng_ref, bnb_ref,
        # stacked per-layer weights (leading axis = layer index)
        wqkv_ref, bqkv_ref, wo_ref, bo_ref, ln1g_ref, ln1b_ref,
        w1_ref, b1_ref, w2_ref, b2_ref, ln2g_ref, ln2b_ref,
        # mlp head
        f1w_ref, f1b_ref, f2w_ref, f2b_ref,
        # output
        out_ref,
        # scratch
        xp_ref,
        *, B, T, d, H, d_k, d_v, L, K):
    BT = B * T
    halo = K // 2
    scale = 1.0 / float(np.sqrt(d_k))

    npad = npad_ref[...]            # [BT, 1]  non-pad mask (float)
    bias = bias_ref[...]            # [BT, BT] additive attention bias

    # ---- combine_fully + positional encoding --------------------------------
    x = _mm(cmb_ref[...], cw_ref[...]) + cb_ref[...] + pos_ref[...]   # [BT, d]

    # ---- conv branch: (conv_1|conv_2|conv_3 -> conv_gate) folded K-tap conv --
    # halo handled with a zero-initialised VMEM scratch, no host-side pad.
    xp_ref[:, :halo, :] = jnp.zeros((B, halo, d), jnp.float32)
    xp_ref[:, halo + T:, :] = jnp.zeros((B, halo, d), jnp.float32)
    xp_ref[:, halo:halo + T, :] = x.reshape(B, T, d)

    acc = jnp.zeros((BT, d), jnp.float32)
    for k in range(K):                             # K=5 static taps
        tap = xp_ref[:, k:k + T, :].reshape(BT, d)
        acc = acc + _mm(tap, convw_ref[k])
    acc = acc + convb_ref[...]

    bng = bng_ref[...]
    bnb = bnb_ref[...]

    def bn_relu(v):   # BatchNorm1d(track_running_stats=False) + ReLU, batch stats
        mu = jnp.mean(v, axis=0, keepdims=True)
        var = jnp.mean((v - mu) * (v - mu), axis=0, keepdims=True)   # biased
        return jnp.maximum((v - mu) * lax.rsqrt(var + EPS) * bng + bnb, 0.0)

    def layer_norm(v, g, b):
        mu = jnp.mean(v, axis=-1, keepdims=True)
        var = jnp.mean((v - mu) * (v - mu), axis=-1, keepdims=True)
        return (v - mu) * lax.rsqrt(var + EPS) * g + b

    x = bn_relu(bn_relu(acc) + x)                  # attention input, [BT, d]

    # ---- L transformer encoder layers (post-norm MHA + FFN), unrolled -------
    for l in range(L):
        qkv = _mm(x, wqkv_ref[l]) + bqkv_ref[l]    # [BT, H*(2*d_k + d_v)]
        wo_l = wo_ref[l]                           # [H*d_v, d]
        proj = jnp.zeros((BT, d), jnp.float32)
        for hh in range(H):                        # heads stay on the lane axis
            q_h = qkv[:, hh * d_k:(hh + 1) * d_k]
            k_h = qkv[:, H * d_k + hh * d_k:H * d_k + (hh + 1) * d_k]
            v_h = qkv[:, 2 * H * d_k + hh * d_v:2 * H * d_k + (hh + 1) * d_v]
            s = _mm_nt(q_h, k_h) * scale + bias    # [BT, BT]
            s = s - jnp.max(s, axis=-1, keepdims=True)
            p = jnp.exp(s)
            p = p / jnp.sum(p, axis=-1, keepdims=True)
            ctx = _mm(p, v_h)                      # [BT, d_v]
            proj = proj + _mm(ctx, wo_l[hh * d_v:(hh + 1) * d_v, :])
        r = proj + bo_ref[l] + x                   # residual
        r = layer_norm(r, ln1g_ref[l], ln1b_ref[l]) * npad
        h1 = jnp.maximum(_mm(r, w1_ref[l]) + b1_ref[l], 0.0)
        y = _mm(h1, w2_ref[l]) + b2_ref[l]
        x = layer_norm(y + r, ln2g_ref[l], ln2b_ref[l]) * npad

    # ---- mlp head: reshape(B, h*d) -> fully_1 -> dropout(eval) -> fully_2 ---
    x3 = x.reshape(B, T, d)
    s1 = jnp.zeros((B, f1b_ref.shape[-1]), jnp.float32)
    for t in range(T):                             # row-block matmuls == reshape
        xt = x3[:, t:t + 1, :].reshape(B, d)
        s1 = s1 + _mm(xt, f1w_ref[t * d:(t + 1) * d, :])
    s1 = s1 + f1b_ref[...]
    out_ref[...] = (_mm(s1, f2w_ref[...]) + f2b_ref[...]).astype(out_ref.dtype)


# ----------------------------------------------------------------------------
# Host-side glue: masks, embedding gathers, the single pallas_call
# ----------------------------------------------------------------------------
def neutic_forward(params, len_seq, wid_seq, flag_seq, src_pos):
    cfg = params["cfg"]
    B, T = len_seq.shape
    d, H = cfg["d"], cfg["n_head"]
    d_k, d_v, L = cfg["d_k"], cfg["d_v"], cfg["L"]
    K = params["conv_eff_w"].shape[0]

    # masks, built once in XLA (tiny): non-pad mask + flat additive attn bias
    nonpad = (len_seq != PAD)
    npad = nonpad.astype(jnp.float32).reshape(B * T, 1)
    batch_ids = jnp.repeat(jnp.arange(B, dtype=jnp.int32), T)
    allowed = ((batch_ids[:, None] == batch_ids[None, :])
               & nonpad.reshape(B * T)[None, :])
    attn_bias = jnp.where(allowed, 0.0, NEG_INF).astype(jnp.float32)

    # embedding lookups (XLA gathers); everything else runs inside the kernel
    e_len = jnp.take(params["emb_len"], len_seq, axis=0)
    e_wid = jnp.take(params["emb_wid"], wid_seq, axis=0)
    e_flag = jnp.take(params["emb_flag"], flag_seq, axis=0)
    cmb = jnp.concatenate([e_len, e_wid, e_flag], axis=-1).reshape(B * T, 3 * d)
    pos = jnp.take(params["pos_table"], src_pos, axis=0).reshape(B * T, d)

    kern = functools.partial(_neutic_fused_kernel, B=B, T=T, d=d, H=H,
                             d_k=d_k, d_v=d_v, L=L, K=K)
    return pl.pallas_call(
        kern,
        out_shape=jax.ShapeDtypeStruct((B, cfg["grained"]), jnp.float32),
        scratch_shapes=[pltpu.VMEM((B, T + 2 * (K // 2), d), jnp.float32)],
    )(cmb, pos, npad, attn_bias,
      params["combine_w"], params["combine_b"],
      params["conv_eff_w"], params["conv_eff_b"],
      params["bn_g"], params["bn_b"],
      params["wqkv"], params["bqkv"], params["wo"], params["bo"],
      params["ln1_g"], params["ln1_b"],
      params["w1"], params["b1"], params["w2"], params["b2"],
      params["ln2_g"], params["ln2_b"],
      params["f1_w"], params["f1_b"], params["f2_w"], params["f2_b"])


# ----------------------------------------------------------------------------
# Init-time weight preparation (never per forward call)
# ----------------------------------------------------------------------------
def get_sinusoid_encoding_table(n_position, d_hid, padding_idx=None):
    def cal_angle(position, hid_idx):
        return position / np.power(10000, 2 * (hid_idx // 2) / d_hid)

    tbl = np.array([[cal_angle(p, j) for j in range(d_hid)]
                    for p in range(n_position)])
    tbl[:, 0::2] = np.sin(tbl[:, 0::2])
    tbl[:, 1::2] = np.cos(tbl[:, 1::2])
    if padding_idx is not None:
        tbl[padding_idx] = 0.0
    return jnp.asarray(tbl, dtype=jnp.float32)


def fuse_conv_branch(c1w, c1b, c2w, c2b, c3w, c3b, cgw, cgb):
    """Fold conv_1(K=1)/conv_2(K=3)/conv_3(K=5) + 1x1 conv_gate into ONE K=5
    conv.  Torch layouts: conv_i [Cout, Cin, K], gate [d, 3d, 1].  Exact:
    the gate is a plain 1x1 linear on the concatenation (no nonlinearity)."""
    d = c1w.shape[0]
    Wg = cgw[:, :, 0].T                               # [3d, d]
    Wg1, Wg2, Wg3 = Wg[:d], Wg[d:2 * d], Wg[2 * d:]
    W1 = jnp.transpose(c1w, (2, 1, 0))                # [1, Cin, Cout]
    W2 = jnp.transpose(c2w, (2, 1, 0))                # [3, Cin, Cout]
    W3 = jnp.transpose(c3w, (2, 1, 0))                # [5, Cin, Cout]
    W_eff = jnp.einsum('kio,od->kid', W3, Wg3)                        # taps 0..4
    W_eff = W_eff.at[1:4].add(jnp.einsum('kio,od->kid', W2, Wg2))     # taps 1..3
    W_eff = W_eff.at[2].add(W1[0] @ Wg1)                              # tap  2
    b_eff = c1b @ Wg1 + c2b @ Wg2 + c3b @ Wg3 + cgb
    return W_eff.astype(MATMUL_DTYPE), b_eff.reshape(1, d).astype(jnp.float32)


def init_params(key, n_src_vocab, h, grained, d, d_inner, L, n_head, d_k, d_v):
    keys = iter(jax.random.split(key, 256))

    def nrm(shape, scale=0.05):
        return jax.random.normal(next(keys), shape, jnp.float32) * scale

    def emb(vocab):
        return nrm((vocab, d)).at[PAD].set(0.0)       # padding_idx = PAD

    # raw torch-layout conv weights kept for the pure-JAX reference check;
    # folded once into the single K=5 conv used by the kernel.
    raw = dict(
        c1w=nrm((d, d, 1)), c1b=nrm((d,), 0.02),
        c2w=nrm((d, d, 3)), c2b=nrm((d,), 0.02),
        c3w=nrm((d, d, 5)), c3b=nrm((d,), 0.02),
        cgw=nrm((d, 3 * d, 1)), cgb=nrm((d,), 0.02),
    )
    conv_eff_w, conv_eff_b = fuse_conv_branch(
        raw["c1w"], raw["c1b"], raw["c2w"], raw["c2b"],
        raw["c3w"], raw["c3b"], raw["cgw"], raw["cgb"])

    md = MATMUL_DTYPE
    wqkv, bqkv, wo, bo = [], [], [], []
    ln1g, ln1b, w1, b1, w2, b2, ln2g, ln2b = [], [], [], [], [], [], [], []
    for _ in range(L):
        wq = nrm((d, n_head * d_k))
        wk = nrm((d, n_head * d_k))
        wv = nrm((d, n_head * d_v))
        wqkv.append(jnp.concatenate([wq, wk, wv], axis=1))   # fused QKV weight
        bqkv.append(nrm((1, n_head * (2 * d_k + d_v)), 0.02))
        wo.append(nrm((n_head * d_v, d)))
        bo.append(nrm((1, d), 0.02))
        ln1g.append(jnp.ones((1, d), jnp.float32))
        ln1b.append(jnp.zeros((1, d), jnp.float32))
        w1.append(nrm((d, d_inner)))
        b1.append(nrm((1, d_inner), 0.02))
        w2.append(nrm((d_inner, d)))
        b2.append(nrm((1, d), 0.02))
        ln2g.append(jnp.ones((1, d), jnp.float32))
        ln2b.append(jnp.zeros((1, d), jnp.float32))

    return dict(
        cfg=dict(d=d, n_head=n_head, d_k=d_k, d_v=d_v, L=L,
                 grained=grained, h=h),
        raw=raw,
        emb_len=emb(n_src_vocab[0]),
        emb_wid=emb(n_src_vocab[1]),
        emb_flag=emb(n_src_vocab[2]),
        pos_table=get_sinusoid_encoding_table(h + 1, d, padding_idx=0),
        combine_w=nrm((3 * d, d)).astype(md),
        combine_b=nrm((1, d), 0.02),
        conv_eff_w=conv_eff_w, conv_eff_b=conv_eff_b,
        bn_g=jnp.ones((1, d), jnp.float32), bn_b=jnp.zeros((1, d), jnp.float32),
        wqkv=jnp.stack(wqkv).astype(md), bqkv=jnp.stack(bqkv),
        wo=jnp.stack(wo).astype(md), bo=jnp.stack(bo),
        ln1_g=jnp.stack(ln1g), ln1_b=jnp.stack(ln1b),
        w1=jnp.stack(w1).astype(md), b1=jnp.stack(b1),
        w2=jnp.stack(w2).astype(md), b2=jnp.stack(b2),
        ln2_g=jnp.stack(ln2g), ln2_b=jnp.stack(ln2b),
        f1_w=nrm((h * d, 512)).astype(md), f1_b=nrm((1, 512), 0.02),
        f2_w=nrm((512, grained)).astype(md), f2_b=nrm((1, grained), 0.02),
    )


# ----------------------------------------------------------------------------
# Plain-JAX (no Pallas) reference in the natural, un-fused form -- used only
# to validate the fused kernel end to end.
# ----------------------------------------------------------------------------
def neutic_reference(params, len_seq, wid_seq, flag_seq, src_pos):
    cfg, raw = params["cfg"], params["raw"]
    B, T = len_seq.shape
    d, H, d_k, d_v, L = cfg["d"], cfg["n_head"], cfg["d_k"], cfg["d_v"], cfg["L"]
    f32 = lambda a: jnp.asarray(a, jnp.float32)

    nonpad = (len_seq != PAD)
    npad = nonpad.astype(jnp.float32)[:, :, None]           # [B,T,1]
    key_pad4 = (~nonpad)[:, None, None, :]                   # [B,1,1,T]

    e = jnp.concatenate([jnp.take(params["emb_len"], len_seq, axis=0),
                         jnp.take(params["emb_wid"], wid_seq, axis=0),
                         jnp.take(params["emb_flag"], flag_seq, axis=0)], -1)
    x = e @ f32(params["combine_w"]) + params["combine_b"]
    x = x + jnp.take(params["pos_table"], src_pos, axis=0)   # [B,T,d]

    def conv1d(xs, w, b, padn):     # xs [B,T,Cin], torch w [Cout,Cin,K]
        Kc = w.shape[-1]
        xp = jnp.pad(xs, ((0, 0), (padn, padn), (0, 0)))
        out = jnp.zeros(xs.shape[:2] + (w.shape[0],), jnp.float32)
        for kk in range(Kc):
            out = out + xp[:, kk:kk + T, :] @ w[:, :, kk].T
        return out + b

    br = jnp.concatenate([conv1d(x, raw["c1w"], raw["c1b"], 0),
                          conv1d(x, raw["c2w"], raw["c2b"], 1),
                          conv1d(x, raw["c3w"], raw["c3b"], 2)], axis=-1)
    br = br @ raw["cgw"][:, :, 0].T + raw["cgb"]

    def bn_relu(v):
        mu = jnp.mean(v, axis=(0, 1), keepdims=True)
        var = jnp.mean((v - mu) ** 2, axis=(0, 1), keepdims=True)
        return jnp.maximum((v - mu) * lax.rsqrt(var + EPS) * params["bn_g"]
                           + params["bn_b"], 0.0)

    def layer_norm(v, g, b):
        mu = jnp.mean(v, axis=-1, keepdims=True)
        var = jnp.mean((v - mu) ** 2, axis=-1, keepdims=True)
        return (v - mu) * lax.rsqrt(var + EPS) * g + b

    x = bn_relu(bn_relu(br) + x)

    for l in range(L):
        qkv = x @ f32(params["wqkv"][l]) + params["bqkv"][l]
        q, k, v = jnp.split(qkv, [H * d_k, 2 * H * d_k], axis=-1)
        q = q.reshape(B, T, H, d_k).transpose(0, 2, 1, 3)
        k = k.reshape(B, T, H, d_k).transpose(0, 2, 1, 3)
        v = v.reshape(B, T, H, d_v).transpose(0, 2, 1, 3)
        s = jnp.einsum('bhqd,bhkd->bhqk', q, k) / np.sqrt(d_k)
        s = jnp.where(key_pad4, NEG_INF, s)
        p = jax.nn.softmax(s, axis=-1)
        ctx = jnp.einsum('bhqk,bhkd->bhqd', p, v)
        ctx = ctx.transpose(0, 2, 1, 3).reshape(B, T, H * d_v)
        r = ctx @ f32(params["wo"][l]) + params["bo"][l] + x
        r = layer_norm(r, params["ln1_g"][l], params["ln1_b"][l]) * npad
        h1 = jnp.maximum(r @ f32(params["w1"][l]) + params["b1"][l], 0.0)
        y = h1 @ f32(params["w2"][l]) + params["b2"][l]
        x = layer_norm(y + r, params["ln2_g"][l], params["ln2_b"][l]) * npad

    flat = x.reshape(B, T * d)
    s1 = flat @ f32(params["f1_w"]) + params["f1_b"]
    return s1 @ f32(params["f2_w"]) + params["f2_b"]


if __name__ == "__main__":
    key = jax.random.PRNGKey(0)
    B, h = 2, 8
    n_src_vocab = (12, 12, 12)
    grained = 5
    d, d_inner, L, n_head, d_k, d_v = 32, 64, 2, 4, 8, 8

    pk, k1, k2, k3 = jax.random.split(key, 4)
    params = init_params(pk, n_src_vocab, h, grained, d, d_inner, L,
                         n_head, d_k, d_v)

    len_seq = jax.random.randint(k1, (B, h), 1, n_src_vocab[0])
    wid_seq = jax.random.randint(k2, (B, h), 1, n_src_vocab[1])
    flag_seq = jax.random.randint(k3, (B, h), 1, n_src_vocab[2])
    # pad the tail of the second sequence to exercise the masks
    len_seq = len_seq.at[1, -2:].set(PAD)
    wid_seq = wid_seq.at[1, -2:].set(PAD)
    flag_seq = flag_seq.at[1, -2:].set(PAD)
    src_pos = (jnp.broadcast_to(jnp.arange(1, h + 1), (B, h))
               * (len_seq != PAD)).astype(jnp.int32)

    # one pallas_call per forward; jit fuses the tiny XLA glue (gathers/masks)
    fwd = jax.jit(lambda a, b, c, e: neutic_forward(params, a, b, c, e))
    out = jax.block_until_ready(fwd(len_seq, wid_seq, flag_seq, src_pos))

    assert out.shape == (B, grained), out.shape
    assert bool(jnp.all(jnp.isfinite(out)))

    # structural self-check against the plain-JAX reference (loose tolerance:
    # only accumulation order / MXU precision mode differ between the paths)
    with jax.default_matmul_precision("float32"):
        ref = neutic_reference(params, len_seq, wid_seq, flag_seq, src_pos)
    tol = 5e-2 if MATMUL_DTYPE == jnp.float32 else 1e-1
    np.testing.assert_allclose(np.asarray(out), np.asarray(ref),
                               rtol=tol, atol=tol)
    print("KERNEL_OK")
</pallas_src>

<mosaic_0001>
module attributes {stable_mosaic.version = 11 : i64} {
  func.func @_neutic_fused_kernel(%arg0: memref<16x96xf32, #tpu.memory_space<vmem>>, %arg1: memref<16x32xf32, #tpu.memory_space<vmem>>, %arg2: memref<16x1xf32, #tpu.memory_space<vmem>>, %arg3: memref<16x16xf32, #tpu.memory_space<vmem>>, %arg4: memref<96x32xf32, #tpu.memory_space<vmem>>, %arg5: memref<1x32xf32, #tpu.memory_space<vmem>>, %arg6: memref<5x32x32xf32, #tpu.memory_space<vmem>>, %arg7: memref<1x32xf32, #tpu.memory_space<vmem>>, %arg8: memref<1x32xf32, #tpu.memory_space<vmem>>, %arg9: memref<1x32xf32, #tpu.memory_space<vmem>>, %arg10: memref<2x32x96xf32, #tpu.memory_space<vmem>>, %arg11: memref<2x1x96xf32, #tpu.memory_space<vmem>>, %arg12: memref<2x32x32xf32, #tpu.memory_space<vmem>>, %arg13: memref<2x1x32xf32, #tpu.memory_space<vmem>>, %arg14: memref<2x1x32xf32, #tpu.memory_space<vmem>>, %arg15: memref<2x1x32xf32, #tpu.memory_space<vmem>>, %arg16: memref<2x32x64xf32, #tpu.memory_space<vmem>>, %arg17: memref<2x1x64xf32, #tpu.memory_space<vmem>>, %arg18: memref<2x64x32xf32, #tpu.memory_space<vmem>>, %arg19: memref<2x1x32xf32, #tpu.memory_space<vmem>>, %arg20: memref<2x1x32xf32, #tpu.memory_space<vmem>>, %arg21: memref<2x1x32xf32, #tpu.memory_space<vmem>>, %arg22: memref<256x512xf32, #tpu.memory_space<vmem>>, %arg23: memref<1x512xf32, #tpu.memory_space<vmem>>, %arg24: memref<512x5xf32, #tpu.memory_space<vmem>>, %arg25: memref<1x5xf32, #tpu.memory_space<vmem>>, %arg26: memref<2x5xf32, #tpu.memory_space<vmem>>, %arg27: memref<2x12x32xf32, #tpu.memory_space<vmem>>) attributes {dimension_semantics = [], scalar_prefetch = 0 : i64, scratch_operands = 1 : i64, tpu.core_type = #tpu.core_type<tc>} {
    %c0 = arith.constant 0 : index
    %c0_0 = arith.constant 0 : index
    %0 = vector.load %arg2[%c0, %c0_0] : memref<16x1xf32, #tpu.memory_space<vmem>>, vector<16x1xf32>
    %c0_1 = arith.constant 0 : index
    %c0_2 = arith.constant 0 : index
    %1 = vector.load %arg3[%c0_1, %c0_2] : memref<16x16xf32, #tpu.memory_space<vmem>>, vector<16x16xf32>
    %c0_3 = arith.constant 0 : index
    %c0_4 = arith.constant 0 : index
    %2 = vector.load %arg0[%c0_3, %c0_4] : memref<16x96xf32, #tpu.memory_space<vmem>>, vector<16x96xf32>
    %c0_5 = arith.constant 0 : index
    %c0_6 = arith.constant 0 : index
    %3 = vector.load %arg4[%c0_5, %c0_6] : memref<96x32xf32, #tpu.memory_space<vmem>>, vector<96x32xf32>
    %cst = arith.constant dense<0.000000e+00> : vector<16x32xf32>
    %4 = tpu.matmul %2, %3, %cst {dimension_numbers = #tpu.dot_dimension_numbers<[1], [0], [0], [1], [0, 0, 1, 1], [], []>} : vector<16x96xf32>, vector<96x32xf32>, vector<16x32xf32> -> vector<16x32xf32>
    %c0_7 = arith.constant 0 : index
    %c0_8 = arith.constant 0 : index
    %5 = vector.load %arg5[%c0_7, %c0_8] : memref<1x32xf32, #tpu.memory_space<vmem>>, vector<1x32xf32>
    %6 = vector.broadcast %5 : vector<1x32xf32> to vector<16x32xf32>
    %7 = arith.addf %4, %6 : vector<16x32xf32>
    %c0_9 = arith.constant 0 : index
    %c0_10 = arith.constant 0 : index
    %8 = vector.load %arg1[%c0_9, %c0_10] : memref<16x32xf32, #tpu.memory_space<vmem>>, vector<16x32xf32>
    %9 = arith.addf %7, %8 : vector<16x32xf32>
    %cst_11 = arith.constant 0.000000e+00 : f32
    %10 = vector.broadcast %cst_11 : f32 to vector<2x2x32xf32>
    %c0_12 = arith.constant 0 : index
    %c0_13 = arith.constant 0 : index
    %c0_14 = arith.constant 0 : index
    %11 = vector.load %arg27[%c0_12, %c0_13, %c0_14] : memref<2x12x32xf32, #tpu.memory_space<vmem>>, vector<2x2x32xf32>
    tpu.vector_store %arg27[%c0_12, %c0_13, %c0_14], %10 {strides = array<i32>} : memref<2x12x32xf32, #tpu.memory_space<vmem>>, vector<2x2x32xf32>,
    %cst_15 = arith.constant 0.000000e+00 : f32
    %12 = vector.broadcast %cst_15 : f32 to vector<2x2x32xf32>
    %c0_16 = arith.constant 0 : index
    %c10 = arith.constant 10 : index
    %c0_17 = arith.constant 0 : index
    %13 = vector.load %arg27[%c0_16, %c10, %c0_17] : memref<2x12x32xf32, #tpu.memory_space<vmem>>, vector<2x2x32xf32>
    tpu.vector_store %arg27[%c0_16, %c10, %c0_17], %12 {strides = array<i32>} : memref<2x12x32xf32, #tpu.memory_space<vmem>>, vector<2x2x32xf32>,
    %14 = vector.shape_cast %9 : vector<16x32xf32> to vector<2x8x32xf32>
    %c0_18 = arith.constant 0 : index
    %c2 = arith.constant 2 : index
    %c0_19 = arith.constant 0 : index
    %15 = vector.load %arg27[%c0_18, %c2, %c0_19] : memref<2x12x32xf32, #tpu.memory_space<vmem>>, vector<2x8x32xf32>
    tpu.vector_store %arg27[%c0_18, %c2, %c0_19], %14 {strides = array<i32>} : memref<2x12x32xf32, #tpu.memory_space<vmem>>, vector<2x8x32xf32>,
    %cst_20 = arith.constant 0.000000e+00 : f32
    %16 = vector.broadcast %cst_20 : f32 to vector<16x32xf32>
    %c0_21 = arith.constant 0 : index
    %c0_22 = arith.constant 0 : index
    %c0_23 = arith.constant 0 : index
    %17 = vector.load %arg27[%c0_21, %c0_22, %c0_23] : memref<2x12x32xf32, #tpu.memory_space<vmem>>, vector<2x8x32xf32>
    %18 = vector.shape_cast %17 : vector<2x8x32xf32> to vector<16x32xf32>
    %c0_24 = arith.constant 0 : index
    %c0_25 = arith.constant 0 : index
    %c0_26 = arith.constant 0 : index
    %19 = vector.load %arg6[%c0_24, %c0_25, %c0_26] : memref<5x32x32xf32, #tpu.memory_space<vmem>>, vector<1x32x32xf32>
    %20 = vector.shape_cast %19 : vector<1x32x32xf32> to vector<32x32xf32>
    %cst_27 = arith.constant dense<0.000000e+00> : vector<16x32xf32>
    %21 = tpu.matmul %18, %20, %cst_27 {dimension_numbers = #tpu.dot_dimension_numbers<[1], [0], [0], [1], [0, 0, 1, 1], [], []>} : vector<16x32xf32>, vector<32x32xf32>, vector<16x32xf32> -> vector<16x32xf32>
    %22 = arith.addf %16, %21 : vector<16x32xf32>
    %c0_28 = arith.constant 0 : index
    %c1 = arith.constant 1 : index
    %c0_29 = arith.constant 0 : index
    %23 = vector.load %arg27[%c0_28, %c1, %c0_29] : memref<2x12x32xf32, #tpu.memory_space<vmem>>, vector<2x8x32xf32>
    %24 = vector.shape_cast %23 : vector<2x8x32xf32> to vector<16x32xf32>
    %c1_30 = arith.constant 1 : index
    %c0_31 = arith.constant 0 : index
    %c0_32 = arith.constant 0 : index
    %25 = vector.load %arg6[%c1_30, %c0_31, %c0_32] : memref<5x32x32xf32, #tpu.memory_space<vmem>>, vector<1x32x32xf32>
    %26 = vector.shape_cast %25 : vector<1x32x32xf32> to vector<32x32xf32>
    %cst_33 = arith.constant dense<0.000000e+00> : vector<16x32xf32>
    %27 = tpu.matmul %24, %26, %cst_33 {dimension_numbers = #tpu.dot_dimension_numbers<[1], [0], [0], [1], [0, 0, 1, 1], [], []>} : vector<16x32xf32>, vector<32x32xf32>, vector<16x32xf32> -> vector<16x32xf32>
    %28 = arith.addf %22, %27 : vector<16x32xf32>
    %c0_34 = arith.constant 0 : index
    %c2_35 = arith.constant 2 : index
    %c0_36 = arith.constant 0 : index
    %29 = vector.load %arg27[%c0_34, %c2_35, %c0_36] : memref<2x12x32xf32, #tpu.memory_space<vmem>>, vector<2x8x32xf32>
    %30 = vector.shape_cast %29 : vector<2x8x32xf32> to vector<16x32xf32>
    %c2_37 = arith.constant 2 : index
    %c0_38 = arith.constant 0 : index
    %c0_39 = arith.constant 0 : index
    %31 = vector.load %arg6[%c2_37, %c0_38, %c0_39] : memref<5x32x32xf32, #tpu.memory_space<vmem>>, vector<1x32x32xf32>
    %32 = vector.shape_cast %31 : vector<1x32x32xf32> to vector<32x32xf32>
    %cst_40 = arith.constant dense<0.000000e+00> : vector<16x32xf32>
    %33 = tpu.matmul %30, %32, %cst_40 {dimension_numbers = #tpu.dot_dimension_numbers<[1], [0], [0], [1], [0, 0, 1, 1], [], []>} : vector<16x32xf32>, vector<32x32xf32>, vector<16x32xf32> -> vector<16x32xf32>
    %34 = arith.addf %28, %33 : vector<16x32xf32>
    %c0_41 = arith.constant 0 : index
    %c3 = arith.constant 3 : index
    %c0_42 = arith.constant 0 : index
    %35 = vector.load %arg27[%c0_41, %c3, %c0_42] : memref<2x12x32xf32, #tpu.memory_space<vmem>>, vector<2x8x32xf32>
    %36 = vector.shape_cast %35 : vector<2x8x32xf32> to vector<16x32xf32>
    %c3_43 = arith.constant 3 : index
    %c0_44 = arith.constant 0 : index
    %c0_45 = arith.constant 0 : index
    %37 = vector.load %arg6[%c3_43, %c0_44, %c0_45] : memref<5x32x32xf32, #tpu.memory_space<vmem>>, vector<1x32x32xf32>
    %38 = vector.shape_cast %37 : vector<1x32x32xf32> to vector<32x32xf32>
    %cst_46 = arith.constant dense<0.000000e+00> : vector<16x32xf32>
    %39 = tpu.matmul %36, %38, %cst_46 {dimension_numbers = #tpu.dot_dimension_numbers<[1], [0], [0], [1], [0, 0, 1, 1], [], []>} : vector<16x32xf32>, vector<32x32xf32>, vector<16x32xf32> -> vector<16x32xf32>
    %40 = arith.addf %34, %39 : vector<16x32xf32>
    %c0_47 = arith.constant 0 : index
    %c4 = arith.constant 4 : index
    %c0_48 = arith.constant 0 : index
    %41 = vector.load %arg27[%c0_47, %c4, %c0_48] : memref<2x12x32xf32, #tpu.memory_space<vmem>>, vector<2x8x32xf32>
    %42 = vector.shape_cast %41 : vector<2x8x32xf32> to vector<16x32xf32>
    %c4_49 = arith.constant 4 : index
    %c0_50 = arith.constant 0 : index
    %c0_51 = arith.constant 0 : index
    %43 = vector.load %arg6[%c4_49, %c0_50, %c0_51] : memref<5x32x32xf32, #tpu.memory_space<vmem>>, vector<1x32x32xf32>
    %44 = vector.shape_cast %43 : vector<1x32x32xf32> to vector<32x32xf32>
    %cst_52 = arith.constant dense<0.000000e+00> : vector<16x32xf32>
    %45 = tpu.matmul %42, %44, %cst_52 {dimension_numbers = #tpu.dot_dimension_numbers<[1], [0], [0], [1], [0, 0, 1, 1], [], []>} : vector<16x32xf32>, vector<32x32xf32>, vector<16x32xf32> -> vector<16x32xf32>
    %46 = arith.addf %40, %45 : vector<16x32xf32>
    %c0_53 = arith.constant 0 : index
    %c0_54 = arith.constant 0 : index
    %47 = vector.load %arg7[%c0_53, %c0_54] : memref<1x32xf32, #tpu.memory_space<vmem>>, vector<1x32xf32>
    %48 = vector.broadcast %47 : vector<1x32xf32> to vector<16x32xf32>
    %49 = arith.addf %46, %48 : vector<16x32xf32>
    %c0_55 = arith.constant 0 : index
    %c0_56 = arith.constant 0 : index
    %50 = vector.load %arg8[%c0_55, %c0_56] : memref<1x32xf32, #tpu.memory_space<vmem>>, vector<1x32xf32>
    %c0_57 = arith.constant 0 : index
    %c0_58 = arith.constant 0 : index
    %51 = vector.load %arg9[%c0_57, %c0_58] : memref<1x32xf32, #tpu.memory_space<vmem>>, vector<1x32xf32>
    %cst_59 = arith.constant dense<0.000000e+00> : vector<32xf32>
    %52 = vector.multi_reduction <add>, %49, %cst_59 [0] : vector<16x32xf32> to vector<32xf32>
    %53 = vector.shape_cast %52 : vector<32xf32> to vector<1x32xf32>
    %cst_60 = arith.constant 1.600000e+01 : f32
    %54 = vector.broadcast %cst_60 : f32 to vector<1x32xf32>
    %55 = arith.divf %53, %54 : vector<1x32xf32>
    %56 = vector.broadcast %55 : vector<1x32xf32> to vector<16x32xf32>
    %57 = arith.subf %49, %56 : vector<16x32xf32>
    %58 = vector.broadcast %55 : vector<1x32xf32> to vector<16x32xf32>
    %59 = arith.subf %49, %58 : vector<16x32xf32>
    %60 = arith.mulf %57, %59 : vector<16x32xf32>
    %cst_61 = arith.constant dense<0.000000e+00> : vector<32xf32>
    %61 = vector.multi_reduction <add>, %60, %cst_61 [0] : vector<16x32xf32> to vector<32xf32>
    %62 = vector.shape_cast %61 : vector<32xf32> to vector<1x32xf32>
    %cst_62 = arith.constant 1.600000e+01 : f32
    %63 = vector.broadcast %cst_62 : f32 to vector<1x32xf32>
    %64 = arith.divf %62, %63 : vector<1x32xf32>
    %65 = vector.broadcast %55 : vector<1x32xf32> to vector<16x32xf32>
    %66 = arith.subf %49, %65 : vector<16x32xf32>
    %cst_63 = arith.constant 9.99999974E-6 : f32
    %67 = vector.broadcast %cst_63 : f32 to vector<1x32xf32>
    %68 = arith.addf %64, %67 : vector<1x32xf32>
    %69 = math.rsqrt %68 : vector<1x32xf32>
    %70 = vector.broadcast %69 : vector<1x32xf32> to vector<16x32xf32>
    %71 = arith.mulf %66, %70 : vector<16x32xf32>
    %72 = vector.broadcast %50 : vector<1x32xf32> to vector<16x32xf32>
    %73 = arith.mulf %71, %72 : vector<16x32xf32>
    %74 = vector.broadcast %51 : vector<1x32xf32> to vector<16x32xf32>
    %75 = arith.addf %73, %74 : vector<16x32xf32>
    %cst_64 = arith.constant 0.000000e+00 : f32
    %76 = vector.broadcast %cst_64 : f32 to vector<16x32xf32>
    %77 = arith.maximumf %75, %76 : vector<16x32xf32>
    %78 = arith.addf %77, %9 : vector<16x32xf32>
    %cst_65 = arith.constant dense<0.000000e+00> : vector<32xf32>
    %79 = vector.multi_reduction <add>, %78, %cst_65 [0] : vector<16x32xf32> to vector<32xf32>
    %80 = vector.shape_cast %79 : vector<32xf32> to vector<1x32xf32>
    %cst_66 = arith.constant 1.600000e+01 : f32
    %81 = vector.broadcast %cst_66 : f32 to vector<1x32xf32>
    %82 = arith.divf %80, %81 : vector<1x32xf32>
    %83 = vector.broadcast %82 : vector<1x32xf32> to vector<16x32xf32>
    %84 = arith.subf %78, %83 : vector<16x32xf32>
    %85 = vector.broadcast %82 : vector<1x32xf32> to vector<16x32xf32>
    %86 = arith.subf %78, %85 : vector<16x32xf32>
    %87 = arith.mulf %84, %86 : vector<16x32xf32>
    %cst_67 = arith.constant dense<0.000000e+00> : vector<32xf32>
    %88 = vector.multi_reduction <add>, %87, %cst_67 [0] : vector<16x32xf32> to vector<32xf32>
    %89 = vector.shape_cast %88 : vector<32xf32> to vector<1x32xf32>
    %cst_68 = arith.constant 1.600000e+01 : f32
    %90 = vector.broadcast %cst_68 : f32 to vector<1x32xf32>
    %91 = arith.divf %89, %90 : vector<1x32xf32>
    %92 = vector.broadcast %82 : vector<1x32xf32> to vector<16x32xf32>
    %93 = arith.subf %78, %92 : vector<16x32xf32>
    %cst_69 = arith.constant 9.99999974E-6 : f32
    %94 = vector.broadcast %cst_69 : f32 to vector<1x32xf32>
    %95 = arith.addf %91, %94 : vector<1x32xf32>
    %96 = math.rsqrt %95 : vector<1x32xf32>
    %97 = vector.broadcast %96 : vector<1x32xf32> to vector<16x32xf32>
    %98 = arith.mulf %93, %97 : vector<16x32xf32>
    %99 = vector.broadcast %50 : vector<1x32xf32> to vector<16x32xf32>
    %100 = arith.mulf %98, %99 : vector<16x32xf32>
    %101 = vector.broadcast %51 : vector<1x32xf32> to vector<16x32xf32>
    %102 = arith.addf %100, %101 : vector<16x32xf32>
    %cst_70 = arith.constant 0.000000e+00 : f32
    %103 = vector.broadcast %cst_70 : f32 to vector<16x32xf32>
    %104 = arith.maximumf %102, %103 : vector<16x32xf32>
    %c0_71 = arith.constant 0 : index
    %c0_72 = arith.constant 0 : index
    %c0_73 = arith.constant 0 : index
    %105 = vector.load %arg10[%c0_71, %c0_72, %c0_73] : memref<2x32x96xf32, #tpu.memory_space<vmem>>, vector<1x32x96xf32>
    %106 = vector.shape_cast %105 : vector<1x32x96xf32> to vector<32x96xf32>
    %cst_74 = arith.constant dense<0.000000e+00> : vector<16x96xf32>
    %107 = tpu.matmul %104, %106, %cst_74 {dimension_numbers = #tpu.dot_dimension_numbers<[1], [0], [0], [1], [0, 0, 1, 1], [], []>} : vector<16x32xf32>, vector<32x96xf32>, vector<16x96xf32> -> vector<16x96xf32>
    %c0_75 = arith.constant 0 : index
    %c0_76 = arith.constant 0 : index
    %c0_77 = arith.constant 0 : index
    %108 = vector.load %arg11[%c0_75, %c0_76, %c0_77] : memref<2x1x96xf32, #tpu.memory_space<vmem>>, vector<1x1x96xf32>
    %109 = vector.shape_cast %108 : vector<1x1x96xf32> to vector<1x96xf32>
    %110 = vector.broadcast %109 : vector<1x96xf32> to vector<16x96xf32>
    %111 = arith.addf %107, %110 : vector<16x96xf32>
    %c0_78 = arith.constant 0 : index
    %c0_79 = arith.constant 0 : index
    %c0_80 = arith.constant 0 : index
    %112 = vector.load %arg12[%c0_78, %c0_79, %c0_80] : memref<2x32x32xf32, #tpu.memory_space<vmem>>, vector<1x32x32xf32>
    %113 = vector.shape_cast %112 : vector<1x32x32xf32> to vector<32x32xf32>
    %cst_81 = arith.constant 0.000000e+00 : f32
    %114 = vector.broadcast %cst_81 : f32 to vector<16x32xf32>
    %115 = vector.extract_strided_slice %111 {offsets = [0, 0], sizes = [16, 8], strides = [1, 1]} : vector<16x96xf32> to vector<16x8xf32>
    %116 = vector.extract_strided_slice %111 {offsets = [0, 32], sizes = [16, 8], strides = [1, 1]} : vector<16x96xf32> to vector<16x8xf32>
    %117 = vector.extract_strided_slice %111 {offsets = [0, 64], sizes = [16, 8], strides = [1, 1]} : vector<16x96xf32> to vector<16x8xf32>
    %cst_82 = arith.constant dense<0.000000e+00> : vector<16x16xf32>
    %118 = tpu.matmul %115, %116, %cst_82 {dimension_numbers = #tpu.dot_dimension_numbers<[1], [1], [0], [0], [0, 0, 1, 0], [], []>} : vector<16x8xf32>, vector<16x8xf32>, vector<16x16xf32> -> vector<16x16xf32>
    %cst_83 = arith.constant 0.353553385 : f32
    %119 = vector.broadcast %cst_83 : f32 to vector<16x16xf32>
    %120 = arith.mulf %118, %119 : vector<16x16xf32>
    %121 = arith.addf %120, %1 : vector<16x16xf32>
    %cst_84 = arith.constant dense<0xFF800000> : vector<16xf32>
    %122 = vector.multi_reduction <maximumf>, %121, %cst_84 [1] : vector<16x16xf32> to vector<16xf32>
    %123 = vector.shape_cast %122 : vector<16xf32> to vector<16x1xf32>
    %124 = vector.broadcast %123 : vector<16x1xf32> to vector<16x16xf32>
    %125 = arith.subf %121, %124 : vector<16x16xf32>
    %126 = math.exp %125 : vector<16x16xf32>
    %cst_85 = arith.constant dense<0.000000e+00> : vector<16xf32>
    %127 = vector.multi_reduction <add>, %126, %cst_85 [1] : vector<16x16xf32> to vector<16xf32>
    %128 = vector.shape_cast %127 : vector<16xf32> to vector<16x1xf32>
    %129 = vector.broadcast %128 : vector<16x1xf32> to vector<16x16xf32>
    %130 = arith.divf %126, %129 : vector<16x16xf32>
    %cst_86 = arith.constant dense<0.000000e+00> : vector<16x8xf32>
    %131 = tpu.matmul %130, %117, %cst_86 {dimension_numbers = #tpu.dot_dimension_numbers<[1], [0], [0], [1], [0, 0, 1, 1], [], []>} : vector<16x16xf32>, vector<16x8xf32>, vector<16x8xf32> -> vector<16x8xf32>
    %132 = vector.extract_strided_slice %113 {offsets = [0, 0], sizes = [8, 32], strides = [1, 1]} : vector<32x32xf32> to vector<8x32xf32>
    %cst_87 = arith.constant dense<0.000000e+00> : vector<16x32xf32>
    %133 = tpu.matmul %131, %132, %cst_87 {dimension_numbers = #tpu.dot_dimension_numbers<[1], [0], [0], [1], [0, 0, 1, 1], [], []>} : vector<16x8xf32>, vector<8x32xf32>, vector<16x32xf32> -> vector<16x32xf32>
    %134 = arith.addf %114, %133 : vector<16x32xf32>
    %135 = vector.extract_strided_slice %111 {offsets = [0, 8], sizes = [16, 8], strides = [1, 1]} : vector<16x96xf32> to vector<16x8xf32>
    %136 = vector.extract_strided_slice %111 {offsets = [0, 40], sizes = [16, 8], strides = [1, 1]} : vector<16x96xf32> to vector<16x8xf32>
    %137 = vector.extract_strided_slice %111 {offsets = [0, 72], sizes = [16, 8], strides = [1, 1]} : vector<16x96xf32> to vector<16x8xf32>
    %cst_88 = arith.constant dense<0.000000e+00> : vector<16x16xf32>
    %138 = tpu.matmul %135, %136, %cst_88 {dimension_numbers = #tpu.dot_dimension_numbers<[1], [1], [0], [0], [0, 0, 1, 0], [], []>} : vector<16x8xf32>, vector<16x8xf32>, vector<16x16xf32> -> vector<16x16xf32>
    %cst_89 = arith.constant 0.353553385 : f32
    %139 = vector.broadcast %cst_89 : f32 to vector<16x16xf32>
    %140 = arith.mulf %138, %139 : vector<16x16xf32>
    %141 = arith.addf %140, %1 : vector<16x16xf32>
    %cst_90 = arith.constant dense<0xFF800000> : vector<16xf32>
    %142 = vector.multi_reduction <maximumf>, %141, %cst_90 [1] : vector<16x16xf32> to vector<16xf32>
    %143 = vector.shape_cast %142 : vector<16xf32> to vector<16x1xf32>
    %144 = vector.broadcast %143 : vector<16x1xf32> to vector<16x16xf32>
    %145 = arith.subf %141, %144 : vector<16x16xf32>
    %146 = math.exp %145 : vector<16x16xf32>
    %cst_91 = arith.constant dense<0.000000e+00> : vector<16xf32>
    %147 = vector.multi_reduction <add>, %146, %cst_91 [1] : vector<16x16xf32> to vector<16xf32>
    %148 = vector.shape_cast %147 : vector<16xf32> to vector<16x1xf32>
    %149 = vector.broadcast %148 : vector<16x1xf32> to vector<16x16xf32>
    %150 = arith.divf %146, %149 : vector<16x16xf32>
    %cst_92 = arith.constant dense<0.000000e+00> : vector<16x8xf32>
    %151 = tpu.matmul %150, %137, %cst_92 {dimension_numbers = #tpu.dot_dimension_numbers<[1], [0], [0], [1], [0, 0, 1, 1], [], []>} : vector<16x16xf32>, vector<16x8xf32>, vector<16x8xf32> -> vector<16x8xf32>
    %152 = vector.extract_strided_slice %113 {offsets = [8, 0], sizes = [8, 32], strides = [1, 1]} : vector<32x32xf32> to vector<8x32xf32>
    %cst_93 = arith.constant dense<0.000000e+00> : vector<16x32xf32>
    %153 = tpu.matmul %151, %152, %cst_93 {dimension_numbers = #tpu.dot_dimension_numbers<[1], [0], [0], [1], [0, 0, 1, 1], [], []>} : vector<16x8xf32>, vector<8x32xf32>, vector<16x32xf32> -> vector<16x32xf32>
    %154 = arith.addf %134, %153 : vector<16x32xf32>
    %155 = vector.extract_strided_slice %111 {offsets = [0, 16], sizes = [16, 8], strides = [1, 1]} : vector<16x96xf32> to vector<16x8xf32>
    %156 = vector.extract_strided_slice %111 {offsets = [0, 48], sizes = [16, 8], strides = [1, 1]} : vector<16x96xf32> to vector<16x8xf32>
    %157 = vector.extract_strided_slice %111 {offsets = [0, 80], sizes = [16, 8], strides = [1, 1]} : vector<16x96xf32> to vector<16x8xf32>
    %cst_94 = arith.constant dense<0.000000e+00> : vector<16x16xf32>
    %158 = tpu.matmul %155, %156, %cst_94 {dimension_numbers = #tpu.dot_dimension_numbers<[1], [1], [0], [0], [0, 0, 1, 0], [], []>} : vector<16x8xf32>, vector<16x8xf32>, vector<16x16xf32> -> vector<16x16xf32>
    %cst_95 = arith.constant 0.353553385 : f32
    %159 = vector.broadcast %cst_95 : f32 to vector<16x16xf32>
    %160 = arith.mulf %158, %159 : vector<16x16xf32>
    %161 = arith.addf %160, %1 : vector<16x16xf32>
    %cst_96 = arith.constant dense<0xFF800000> : vector<16xf32>
    %162 = vector.multi_reduction <maximumf>, %161, %cst_96 [1] : vector<16x16xf32> to vector<16xf32>
    %163 = vector.shape_cast %162 : vector<16xf32> to vector<16x1xf32>
    %164 = vector.broadcast %163 : vector<16x1xf32> to vector<16x16xf32>
    %165 = arith.subf %161, %164 : vector<16x16xf32>
    %166 = math.exp %165 : vector<16x16xf32>
    %cst_97 = arith.constant dense<0.000000e+00> : vector<16xf32>
    %167 = vector.multi_reduction <add>, %166, %cst_97 [1] : vector<16x16xf32> to vector<16xf32>
    %168 = vector.shape_cast %167 : vector<16xf32> to vector<16x1xf32>
    %169 = vector.broadcast %168 : vector<16x1xf32> to vector<16x16xf32>
    %170 = arith.divf %166, %169 : vector<16x16xf32>
    %cst_98 = arith.constant dense<0.000000e+00> : vector<16x8xf32>
    %171 = tpu.matmul %170, %157, %cst_98 {dimension_numbers = #tpu.dot_dimension_numbers<[1], [0], [0], [1], [0, 0, 1, 1], [], []>} : vector<16x16xf32>, vector<16x8xf32>, vector<16x8xf32> -> vector<16x8xf32>
    %172 = vector.extract_strided_slice %113 {offsets = [16, 0], sizes = [8, 32], strides = [1, 1]} : vector<32x32xf32> to vector<8x32xf32>
    %cst_99 = arith.constant dense<0.000000e+00> : vector<16x32xf32>
    %173 = tpu.matmul %171, %172, %cst_99 {dimension_numbers = #tpu.dot_dimension_numbers<[1], [0], [0], [1], [0, 0, 1, 1], [], []>} : vector<16x8xf32>, vector<8x32xf32>, vector<16x32xf32> -> vector<16x32xf32>
    %174 = arith.addf %154, %173 : vector<16x32xf32>
    %175 = vector.extract_strided_slice %111 {offsets = [0, 24], sizes = [16, 8], strides = [1, 1]} : vector<16x96xf32> to vector<16x8xf32>
    %176 = vector.extract_strided_slice %111 {offsets = [0, 56], sizes = [16, 8], strides = [1, 1]} : vector<16x96xf32> to vector<16x8xf32>
    %177 = vector.extract_strided_slice %111 {offsets = [0, 88], sizes = [16, 8], strides = [1, 1]} : vector<16x96xf32> to vector<16x8xf32>
    %cst_100 = arith.constant dense<0.000000e+00> : vector<16x16xf32>
    %178 = tpu.matmul %175, %176, %cst_100 {dimension_numbers = #tpu.dot_dimension_numbers<[1], [1], [0], [0], [0, 0, 1, 0], [], []>} : vector<16x8xf32>, vector<16x8xf32>, vector<16x16xf32> -> vector<16x16xf32>
    %cst_101 = arith.constant 0.353553385 : f32
    %179 = vector.broadcast %cst_101 : f32 to vector<16x16xf32>
    %180 = arith.mulf %178, %179 : vector<16x16xf32>
    %181 = arith.addf %180, %1 : vector<16x16xf32>
    %cst_102 = arith.constant dense<0xFF800000> : vector<16xf32>
    %182 = vector.multi_reduction <maximumf>, %181, %cst_102 [1] : vector<16x16xf32> to vector<16xf32>
    %183 = vector.shape_cast %182 : vector<16xf32> to vector<16x1xf32>
    %184 = vector.broadcast %183 : vector<16x1xf32> to vector<16x16xf32>
    %185 = arith.subf %181, %184 : vector<16x16xf32>
    %186 = math.exp %185 : vector<16x16xf32>
    %cst_103 = arith.constant dense<0.000000e+00> : vector<16xf32>
    %187 = vector.multi_reduction <add>, %186, %cst_103 [1] : vector<16x16xf32> to vector<16xf32>
    %188 = vector.shape_cast %187 : vector<16xf32> to vector<16x1xf32>
    %189 = vector.broadcast %188 : vector<16x1xf32> to vector<16x16xf32>
    %190 = arith.divf %186, %189 : vector<16x16xf32>
    %cst_104 = arith.constant dense<0.000000e+00> : vector<16x8xf32>
    %191 = tpu.matmul %190, %177, %cst_104 {dimension_numbers = #tpu.dot_dimension_numbers<[1], [0], [0], [1], [0, 0, 1, 1], [], []>} : vector<16x16xf32>, vector<16x8xf32>, vector<16x8xf32> -> vector<16x8xf32>
    %192 = vector.extract_strided_slice %113 {offsets = [24, 0], sizes = [8, 32], strides = [1, 1]} : vector<32x32xf32> to vector<8x32xf32>
    %cst_105 = arith.constant dense<0.000000e+00> : vector<16x32xf32>
    %193 = tpu.matmul %191, %192, %cst_105 {dimension_numbers = #tpu.dot_dimension_numbers<[1], [0], [0], [1], [0, 0, 1, 1], [], []>} : vector<16x8xf32>, vector<8x32xf32>, vector<16x32xf32> -> vector<16x32xf32>
    %194 = arith.addf %174, %193 : vector<16x32xf32>
    %c0_106 = arith.constant 0 : index
    %c0_107 = arith.constant 0 : index
    %c0_108 = arith.constant 0 : index
    %195 = vector.load %arg13[%c0_106, %c0_107, %c0_108] : memref<2x1x32xf32, #tpu.memory_space<vmem>>, vector<1x1x32xf32>
    %196 = vector.shape_cast %195 : vector<1x1x32xf32> to vector<1x32xf32>
    %197 = vector.broadcast %196 : vector<1x32xf32> to vector<16x32xf32>
    %198 = arith.addf %194, %197 : vector<16x32xf32>
    %199 = arith.addf %198, %104 : vector<16x32xf32>
    %c0_109 = arith.constant 0 : index
    %c0_110 = arith.constant 0 : index
    %c0_111 = arith.constant 0 : index
    %200 = vector.load %arg14[%c0_109, %c0_110, %c0_111] : memref<2x1x32xf32, #tpu.memory_space<vmem>>, vector<1x1x32xf32>
    %201 = vector.shape_cast %200 : vector<1x1x32xf32> to vector<1x32xf32>
    %c0_112 = arith.constant 0 : index
    %c0_113 = arith.constant 0 : index
    %c0_114 = arith.constant 0 : index
    %202 = vector.load %arg15[%c0_112, %c0_113, %c0_114] : memref<2x1x32xf32, #tpu.memory_space<vmem>>, vector<1x1x32xf32>
    %203 = vector.shape_cast %202 : vector<1x1x32xf32> to vector<1x32xf32>
    %cst_115 = arith.constant dense<0.000000e+00> : vector<16xf32>
    %204 = vector.multi_reduction <add>, %199, %cst_115 [1] : vector<16x32xf32> to vector<16xf32>
    %205 = vector.shape_cast %204 : vector<16xf32> to vector<16x1xf32>
    %cst_116 = arith.constant 3.200000e+01 : f32
    %206 = vector.broadcast %cst_116 : f32 to vector<16x1xf32>
    %207 = arith.divf %205, %206 : vector<16x1xf32>
    %208 = vector.broadcast %207 : vector<16x1xf32> to vector<16x32xf32>
    %209 = arith.subf %199, %208 : vector<16x32xf32>
    %210 = vector.broadcast %207 : vector<16x1xf32> to vector<16x32xf32>
    %211 = arith.subf %199, %210 : vector<16x32xf32>
    %212 = arith.mulf %209, %211 : vector<16x32xf32>
    %cst_117 = arith.constant dense<0.000000e+00> : vector<16xf32>
    %213 = vector.multi_reduction <add>, %212, %cst_117 [1] : vector<16x32xf32> to vector<16xf32>
    %214 = vector.shape_cast %213 : vector<16xf32> to vector<16x1xf32>
    %cst_118 = arith.constant 3.200000e+01 : f32
    %215 = vector.broadcast %cst_118 : f32 to vector<16x1xf32>
    %216 = arith.divf %214, %215 : vector<16x1xf32>
    %217 = vector.broadcast %207 : vector<16x1xf32> to vector<16x32xf32>
    %218 = arith.subf %199, %217 : vector<16x32xf32>
    %cst_119 = arith.constant 9.99999974E-6 : f32
    %219 = vector.broadcast %cst_119 : f32 to vector<16x1xf32>
    %220 = arith.addf %216, %219 : vector<16x1xf32>
    %221 = math.rsqrt %220 : vector<16x1xf32>
    %222 = vector.broadcast %221 : vector<16x1xf32> to vector<16x32xf32>
    %223 = arith.mulf %218, %222 : vector<16x32xf32>
    %224 = vector.broadcast %201 : vector<1x32xf32> to vector<16x32xf32>
    %225 = arith.mulf %223, %224 : vector<16x32xf32>
    %226 = vector.broadcast %203 : vector<1x32xf32> to vector<16x32xf32>
    %227 = arith.addf %225, %226 : vector<16x32xf32>
    %228 = vector.broadcast %0 : vector<16x1xf32> to vector<16x32xf32>
    %229 = arith.mulf %227, %228 : vector<16x32xf32>
    %c0_120 = arith.constant 0 : index
    %c0_121 = arith.constant 0 : index
    %c0_122 = arith.constant 0 : index
    %230 = vector.load %arg16[%c0_120, %c0_121, %c0_122] : memref<2x32x64xf32, #tpu.memory_space<vmem>>, vector<1x32x64xf32>
    %231 = vector.shape_cast %230 : vector<1x32x64xf32> to vector<32x64xf32>
    %cst_123 = arith.constant dense<0.000000e+00> : vector<16x64xf32>
    %232 = tpu.matmul %229, %231, %cst_123 {dimension_numbers = #tpu.dot_dimension_numbers<[1], [0], [0], [1], [0, 0, 1, 1], [], []>} : vector<16x32xf32>, vector<32x64xf32>, vector<16x64xf32> -> vector<16x64xf32>
    %c0_124 = arith.constant 0 : index
    %c0_125 = arith.constant 0 : index
    %c0_126 = arith.constant 0 : index
    %233 = vector.load %arg17[%c0_124, %c0_125, %c0_126] : memref<2x1x64xf32, #tpu.memory_space<vmem>>, vector<1x1x64xf32>
    %234 = vector.shape_cast %233 : vector<1x1x64xf32> to vector<1x64xf32>
    %235 = vector.broadcast %234 : vector<1x64xf32> to vector<16x64xf32>
    %236 = arith.addf %232, %235 : vector<16x64xf32>
    %cst_127 = arith.constant 0.000000e+00 : f32
    %237 = vector.broadcast %cst_127 : f32 to vector<16x64xf32>
    %238 = arith.maximumf %236, %237 : vector<16x64xf32>
    %c0_128 = arith.constant 0 : index
    %c0_129 = arith.constant 0 : index
    %c0_130 = arith.constant 0 : index
    %239 = vector.load %arg18[%c0_128, %c0_129, %c0_130] : memref<2x64x32xf32, #tpu.memory_space<vmem>>, vector<1x64x32xf32>
    %240 = vector.shape_cast %239 : vector<1x64x32xf32> to vector<64x32xf32>
    %cst_131 = arith.constant dense<0.000000e+00> : vector<16x32xf32>
    %241 = tpu.matmul %238, %240, %cst_131 {dimension_numbers = #tpu.dot_dimension_numbers<[1], [0], [0], [1], [0, 0, 1, 1], [], []>} : vector<16x64xf32>, vector<64x32xf32>, vector<16x32xf32> -> vector<16x32xf32>
    %c0_132 = arith.constant 0 : index
    %c0_133 = arith.constant 0 : index
    %c0_134 = arith.constant 0 : index
    %242 = vector.load %arg19[%c0_132, %c0_133, %c0_134] : memref<2x1x32xf32, #tpu.memory_space<vmem>>, vector<1x1x32xf32>
    %243 = vector.shape_cast %242 : vector<1x1x32xf32> to vector<1x32xf32>
    %244 = vector.broadcast %243 : vector<1x32xf32> to vector<16x32xf32>
    %245 = arith.addf %241, %244 : vector<16x32xf32>
    %246 = arith.addf %245, %229 : vector<16x32xf32>
    %c0_135 = arith.constant 0 : index
    %c0_136 = arith.constant 0 : index
    %c0_137 = arith.constant 0 : index
    %247 = vector.load %arg20[%c0_135, %c0_136, %c0_137] : memref<2x1x32xf32, #tpu.memory_space<vmem>>, vector<1x1x32xf32>
    %248 = vector.shape_cast %247 : vector<1x1x32xf32> to vector<1x32xf32>
    %c0_138 = arith.constant 0 : index
    %c0_139 = arith.constant 0 : index
    %c0_140 = arith.constant 0 : index
    %249 = vector.load %arg21[%c0_138, %c0_139, %c0_140] : memref<2x1x32xf32, #tpu.memory_space<vmem>>, vector<1x1x32xf32>
    %250 = vector.shape_cast %249 : vector<1x1x32xf32> to vector<1x32xf32>
    %cst_141 = arith.constant dense<0.000000e+00> : vector<16xf32>
    %251 = vector.multi_reduction <add>, %246, %cst_141 [1] : vector<16x32xf32> to vector<16xf32>
    %252 = vector.shape_cast %251 : vector<16xf32> to vector<16x1xf32>
    %cst_142 = arith.constant 3.200000e+01 : f32
    %253 = vector.broadcast %cst_142 : f32 to vector<16x1xf32>
    %254 = arith.divf %252, %253 : vector<16x1xf32>
    %255 = vector.broadcast %254 : vector<16x1xf32> to vector<16x32xf32>
    %256 = arith.subf %246, %255 : vector<16x32xf32>
    %257 = vector.broadcast %254 : vector<16x1xf32> to vector<16x32xf32>
    %258 = arith.subf %246, %257 : vector<16x32xf32>
    %259 = arith.mulf %256, %258 : vector<16x32xf32>
    %cst_143 = arith.constant dense<0.000000e+00> : vector<16xf32>
    %260 = vector.multi_reduction <add>, %259, %cst_143 [1] : vector<16x32xf32> to vector<16xf32>
    %261 = vector.shape_cast %260 : vector<16xf32> to vector<16x1xf32>
    %cst_144 = arith.constant 3.200000e+01 : f32
    %262 = vector.broadcast %cst_144 : f32 to vector<16x1xf32>
    %263 = arith.divf %261, %262 : vector<16x1xf32>
    %264 = vector.broadcast %254 : vector<16x1xf32> to vector<16x32xf32>
    %265 = arith.subf %246, %264 : vector<16x32xf32>
    %cst_145 = arith.constant 9.99999974E-6 : f32
    %266 = vector.broadcast %cst_145 : f32 to vector<16x1xf32>
    %267 = arith.addf %263, %266 : vector<16x1xf32>
    %268 = math.rsqrt %267 : vector<16x1xf32>
    %269 = vector.broadcast %268 : vector<16x1xf32> to vector<16x32xf32>
    %270 = arith.mulf %265, %269 : vector<16x32xf32>
    %271 = vector.broadcast %248 : vector<1x32xf32> to vector<16x32xf32>
    %272 = arith.mulf %270, %271 : vector<16x32xf32>
    %273 = vector.broadcast %250 : vector<1x32xf32> to vector<16x32xf32>
    %274 = arith.addf %272, %273 : vector<16x32xf32>
    %275 = vector.broadcast %0 : vector<16x1xf32> to vector<16x32xf32>
    %276 = arith.mulf %274, %275 : vector<16x32xf32>
    %c1_146 = arith.constant 1 : index
    %c0_147 = arith.constant 0 : index
    %c0_148 = arith.constant 0 : index
    %277 = vector.load %arg10[%c1_146, %c0_147, %c0_148] : memref<2x32x96xf32, #tpu.memory_space<vmem>>, vector<1x32x96xf32>
    %278 = vector.shape_cast %277 : vector<1x32x96xf32> to vector<32x96xf32>
    %cst_149 = arith.constant dense<0.000000e+00> : vector<16x96xf32>
    %279 = tpu.matmul %276, %278, %cst_149 {dimension_numbers = #tpu.dot_dimension_numbers<[1], [0], [0], [1], [0, 0, 1, 1], [], []>} : vector<16x32xf32>, vector<32x96xf32>, vector<16x96xf32> -> vector<16x96xf32>
    %c1_150 = arith.constant 1 : index
    %c0_151 = arith.constant 0 : index
    %c0_152 = arith.constant 0 : index
    %280 = vector.load %arg11[%c1_150, %c0_151, %c0_152] : memref<2x1x96xf32, #tpu.memory_space<vmem>>, vector<1x1x96xf32>
    %281 = vector.shape_cast %280 : vector<1x1x96xf32> to vector<1x96xf32>
    %282 = vector.broadcast %281 : vector<1x96xf32> to vector<16x96xf32>
    %283 = arith.addf %279, %282 : vector<16x96xf32>
    %c1_153 = arith.constant 1 : index
    %c0_154 = arith.constant 0 : index
    %c0_155 = arith.constant 0 : index
    %284 = vector.load %arg12[%c1_153, %c0_154, %c0_155] : memref<2x32x32xf32, #tpu.memory_space<vmem>>, vector<1x32x32xf32>
    %285 = vector.shape_cast %284 : vector<1x32x32xf32> to vector<32x32xf32>
    %cst_156 = arith.constant 0.000000e+00 : f32
    %286 = vector.broadcast %cst_156 : f32 to vector<16x32xf32>
    %287 = vector.extract_strided_slice %283 {offsets = [0, 0], sizes = [16, 8], strides = [1, 1]} : vector<16x96xf32> to vector<16x8xf32>
    %288 = vector.extract_strided_slice %283 {offsets = [0, 32], sizes = [16, 8], strides = [1, 1]} : vector<16x96xf32> to vector<16x8xf32>
    %289 = vector.extract_strided_slice %283 {offsets = [0, 64], sizes = [16, 8], strides = [1, 1]} : vector<16x96xf32> to vector<16x8xf32>
    %cst_157 = arith.constant dense<0.000000e+00> : vector<16x16xf32>
    %290 = tpu.matmul %287, %288, %cst_157 {dimension_numbers = #tpu.dot_dimension_numbers<[1], [1], [0], [0], [0, 0, 1, 0], [], []>} : vector<16x8xf32>, vector<16x8xf32>, vector<16x16xf32> -> vector<16x16xf32>
    %cst_158 = arith.constant 0.353553385 : f32
    %291 = vector.broadcast %cst_158 : f32 to vector<16x16xf32>
    %292 = arith.mulf %290, %291 : vector<16x16xf32>
    %293 = arith.addf %292, %1 : vector<16x16xf32>
    %cst_159 = arith.constant dense<0xFF800000> : vector<16xf32>
    %294 = vector.multi_reduction <maximumf>, %293, %cst_159 [1] : vector<16x16xf32> to vector<16xf32>
    %295 = vector.shape_cast %294 : vector<16xf32> to vector<16x1xf32>
    %296 = vector.broadcast %295 : vector<16x1xf32> to vector<16x16xf32>
    %297 = arith.subf %293, %296 : vector<16x16xf32>
    %298 = math.exp %297 : vector<16x16xf32>
    %cst_160 = arith.constant dense<0.000000e+00> : vector<16xf32>
    %299 = vector.multi_reduction <add>, %298, %cst_160 [1] : vector<16x16xf32> to vector<16xf32>
    %300 = vector.shape_cast %299 : vector<16xf32> to vector<16x1xf32>
    %301 = vector.broadcast %300 : vector<16x1xf32> to vector<16x16xf32>
    %302 = arith.divf %298, %301 : vector<16x16xf32>
    %cst_161 = arith.constant dense<0.000000e+00> : vector<16x8xf32>
    %303 = tpu.matmul %302, %289, %cst_161 {dimension_numbers = #tpu.dot_dimension_numbers<[1], [0], [0], [1], [0, 0, 1, 1], [], []>} : vector<16x16xf32>, vector<16x8xf32>, vector<16x8xf32> -> vector<16x8xf32>
    %304 = vector.extract_strided_slice %285 {offsets = [0, 0], sizes = [8, 32], strides = [1, 1]} : vector<32x32xf32> to vector<8x32xf32>
    %cst_162 = arith.constant dense<0.000000e+00> : vector<16x32xf32>
    %305 = tpu.matmul %303, %304, %cst_162 {dimension_numbers = #tpu.dot_dimension_numbers<[1], [0], [0], [1], [0, 0, 1, 1], [], []>} : vector<16x8xf32>, vector<8x32xf32>, vector<16x32xf32> -> vector<16x32xf32>
    %306 = arith.addf %286, %305 : vector<16x32xf32>
    %307 = vector.extract_strided_slice %283 {offsets = [0, 8], sizes = [16, 8], strides = [1, 1]} : vector<16x96xf32> to vector<16x8xf32>
    %308 = vector.extract_strided_slice %283 {offsets = [0, 40], sizes = [16, 8], strides = [1, 1]} : vector<16x96xf32> to vector<16x8xf32>
    %309 = vector.extract_strided_slice %283 {offsets = [0, 72], sizes = [16, 8], strides = [1, 1]} : vector<16x96xf32> to vector<16x8xf32>
    %cst_163 = arith.constant dense<0.000000e+00> : vector<16x16xf32>
    %310 = tpu.matmul %307, %308, %cst_163 {dimension_numbers = #tpu.dot_dimension_numbers<[1], [1], [0], [0], [0, 0, 1, 0], [], []>} : vector<16x8xf32>, vector<16x8xf32>, vector<16x16xf32> -> vector<16x16xf32>
    %cst_164 = arith.constant 0.353553385 : f32
    %311 = vector.broadcast %cst_164 : f32 to vector<16x16xf32>
    %312 = arith.mulf %310, %311 : vector<16x16xf32>
    %313 = arith.addf %312, %1 : vector<16x16xf32>
    %cst_165 = arith.constant dense<0xFF800000> : vector<16xf32>
    %314 = vector.multi_reduction <maximumf>, %313, %cst_165 [1] : vector<16x16xf32> to vector<16xf32>
    %315 = vector.shape_cast %314 : vector<16xf32> to vector<16x1xf32>
    %316 = vector.broadcast %315 : vector<16x1xf32> to vector<16x16xf32>
    %317 = arith.subf %313, %316 : vector<16x16xf32>
    %318 = math.exp %317 : vector<16x16xf32>
    %cst_166 = arith.constant dense<0.000000e+00> : vector<16xf32>
    %319 = vector.multi_reduction <add>, %318, %cst_166 [1] : vector<16x16xf32> to vector<16xf32>
    %320 = vector.shape_cast %319 : vector<16xf32> to vector<16x1xf32>
    %321 = vector.broadcast %320 : vector<16x1xf32> to vector<16x16xf32>
    %322 = arith.divf %318, %321 : vector<16x16xf32>
    %cst_167 = arith.constant dense<0.000000e+00> : vector<16x8xf32>
    %323 = tpu.matmul %322, %309, %cst_167 {dimension_numbers = #tpu.dot_dimension_numbers<[1], [0], [0], [1], [0, 0, 1, 1], [], []>} : vector<16x16xf32>, vector<16x8xf32>, vector<16x8xf32> -> vector<16x8xf32>
    %324 = vector.extract_strided_slice %285 {offsets = [8, 0], sizes = [8, 32], strides = [1, 1]} : vector<32x32xf32> to vector<8x32xf32>
    %cst_168 = arith.constant dense<0.000000e+00> : vector<16x32xf32>
    %325 = tpu.matmul %323, %324, %cst_168 {dimension_numbers = #tpu.dot_dimension_numbers<[1], [0], [0], [1], [0, 0, 1, 1], [], []>} : vector<16x8xf32>, vector<8x32xf32>, vector<16x32xf32> -> vector<16x32xf32>
    %326 = arith.addf %306, %325 : vector<16x32xf32>
    %327 = vector.extract_strided_slice %283 {offsets = [0, 16], sizes = [16, 8], strides = [1, 1]} : vector<16x96xf32> to vector<16x8xf32>
    %328 = vector.extract_strided_slice %283 {offsets = [0, 48], sizes = [16, 8], strides = [1, 1]} : vector<16x96xf32> to vector<16x8xf32>
    %329 = vector.extract_strided_slice %283 {offsets = [0, 80], sizes = [16, 8], strides = [1, 1]} : vector<16x96xf32> to vector<16x8xf32>
    %cst_169 = arith.constant dense<0.000000e+00> : vector<16x16xf32>
    %330 = tpu.matmul %327, %328, %cst_169 {dimension_numbers = #tpu.dot_dimension_numbers<[1], [1], [0], [0], [0, 0, 1, 0], [], []>} : vector<16x8xf32>, vector<16x8xf32>, vector<16x16xf32> -> vector<16x16xf32>
    %cst_170 = arith.constant 0.353553385 : f32
    %331 = vector.broadcast %cst_170 : f32 to vector<16x16xf32>
    %332 = arith.mulf %330, %331 : vector<16x16xf32>
    %333 = arith.addf %332, %1 : vector<16x16xf32>
    %cst_171 = arith.constant dense<0xFF800000> : vector<16xf32>
    %334 = vector.multi_reduction <maximumf>, %333, %cst_171 [1] : vector<16x16xf32> to vector<16xf32>
    %335 = vector.shape_cast %334 : vector<16xf32> to vector<16x1xf32>
    %336 = vector.broadcast %335 : vector<16x1xf32> to vector<16x16xf32>
    %337 = arith.subf %333, %336 : vector<16x16xf32>
    %338 = math.exp %337 : vector<16x16xf32>
    %cst_172 = arith.constant dense<0.000000e+00> : vector<16xf32>
    %339 = vector.multi_reduction <add>, %338, %cst_172 [1] : vector<16x16xf32> to vector<16xf32>
    %340 = vector.shape_cast %339 : vector<16xf32> to vector<16x1xf32>
    %341 = vector.broadcast %340 : vector<16x1xf32> to vector<16x16xf32>
    %342 = arith.divf %338, %341 : vector<16x16xf32>
    %cst_173 = arith.constant dense<0.000000e+00> : vector<16x8xf32>
    %343 = tpu.matmul %342, %329, %cst_173 {dimension_numbers = #tpu.dot_dimension_numbers<[1], [0], [0], [1], [0, 0, 1, 1], [], []>} : vector<16x16xf32>, vector<16x8xf32>, vector<16x8xf32> -> vector<16x8xf32>
    %344 = vector.extract_strided_slice %285 {offsets = [16, 0], sizes = [8, 32], strides = [1, 1]} : vector<32x32xf32> to vector<8x32xf32>
    %cst_174 = arith.constant dense<0.000000e+00> : vector<16x32xf32>
    %345 = tpu.matmul %343, %344, %cst_174 {dimension_numbers = #tpu.dot_dimension_numbers<[1], [0], [0], [1], [0, 0, 1, 1], [], []>} : vector<16x8xf32>, vector<8x32xf32>, vector<16x32xf32> -> vector<16x32xf32>
    %346 = arith.addf %326, %345 : vector<16x32xf32>
    %347 = vector.extract_strided_slice %283 {offsets = [0, 24], sizes = [16, 8], strides = [1, 1]} : vector<16x96xf32> to vector<16x8xf32>
    %348 = vector.extract_strided_slice %283 {offsets = [0, 56], sizes = [16, 8], strides = [1, 1]} : vector<16x96xf32> to vector<16x8xf32>
    %349 = vector.extract_strided_slice %283 {offsets = [0, 88], sizes = [16, 8], strides = [1, 1]} : vector<16x96xf32> to vector<16x8xf32>
    %cst_175 = arith.constant dense<0.000000e+00> : vector<16x16xf32>
    %350 = tpu.matmul %347, %348, %cst_175 {dimension_numbers = #tpu.dot_dimension_numbers<[1], [1], [0], [0], [0, 0, 1, 0], [], []>} : vector<16x8xf32>, vector<16x8xf32>, vector<16x16xf32> -> vector<16x16xf32>
    %cst_176 = arith.constant 0.353553385 : f32
    %351 = vector.broadcast %cst_176 : f32 to vector<16x16xf32>
    %352 = arith.mulf %350, %351 : vector<16x16xf32>
    %353 = arith.addf %352, %1 : vector<16x16xf32>
    %cst_177 = arith.constant dense<0xFF800000> : vector<16xf32>
    %354 = vector.multi_reduction <maximumf>, %353, %cst_177 [1] : vector<16x16xf32> to vector<16xf32>
    %355 = vector.shape_cast %354 : vector<16xf32> to vector<16x1xf32>
    %356 = vector.broadcast %355 : vector<16x1xf32> to vector<16x16xf32>
    %357 = arith.subf %353, %356 : vector<16x16xf32>
    %358 = math.exp %357 : vector<16x16xf32>
    %cst_178 = arith.constant dense<0.000000e+00> : vector<16xf32>
    %359 = vector.multi_reduction <add>, %358, %cst_178 [1] : vector<16x16xf32> to vector<16xf32>
    %360 = vector.shape_cast %359 : vector<16xf32> to vector<16x1xf32>
    %361 = vector.broadcast %360 : vector<16x1xf32> to vector<16x16xf32>
    %362 = arith.divf %358, %361 : vector<16x16xf32>
    %cst_179 = arith.constant dense<0.000000e+00> : vector<16x8xf32>
    %363 = tpu.matmul %362, %349, %cst_179 {dimension_numbers = #tpu.dot_dimension_numbers<[1], [0], [0], [1], [0, 0, 1, 1], [], []>} : vector<16x16xf32>, vector<16x8xf32>, vector<16x8xf32> -> vector<16x8xf32>
    %364 = vector.extract_strided_slice %285 {offsets = [24, 0], sizes = [8, 32], strides = [1, 1]} : vector<32x32xf32> to vector<8x32xf32>
    %cst_180 = arith.constant dense<0.000000e+00> : vector<16x32xf32>
    %365 = tpu.matmul %363, %364, %cst_180 {dimension_numbers = #tpu.dot_dimension_numbers<[1], [0], [0], [1], [0, 0, 1, 1], [], []>} : vector<16x8xf32>, vector<8x32xf32>, vector<16x32xf32> -> vector<16x32xf32>
    %366 = arith.addf %346, %365 : vector<16x32xf32>
    %c1_181 = arith.constant 1 : index
    %c0_182 = arith.constant 0 : index
    %c0_183 = arith.constant 0 : index
    %367 = vector.load %arg13[%c1_181, %c0_182, %c0_183] : memref<2x1x32xf32, #tpu.memory_space<vmem>>, vector<1x1x32xf32>
    %368 = vector.shape_cast %367 : vector<1x1x32xf32> to vector<1x32xf32>
    %369 = vector.broadcast %368 : vector<1x32xf32> to vector<16x32xf32>
    %370 = arith.addf %366, %369 : vector<16x32xf32>
    %371 = arith.addf %370, %276 : vector<16x32xf32>
    %c1_184 = arith.constant 1 : index
    %c0_185 = arith.constant 0 : index
    %c0_186 = arith.constant 0 : index
    %372 = vector.load %arg14[%c1_184, %c0_185, %c0_186] : memref<2x1x32xf32, #tpu.memory_space<vmem>>, vector<1x1x32xf32>
    %373 = vector.shape_cast %372 : vector<1x1x32xf32> to vector<1x32xf32>
    %c1_187 = arith.constant 1 : index
    %c0_188 = arith.constant 0 : index
    %c0_189 = arith.constant 0 : index
    %374 = vector.load %arg15[%c1_187, %c0_188, %c0_189] : memref<2x1x32xf32, #tpu.memory_space<vmem>>, vector<1x1x32xf32>
    %375 = vector.shape_cast %374 : vector<1x1x32xf32> to vector<1x32xf32>
    %cst_190 = arith.constant dense<0.000000e+00> : vector<16xf32>
    %376 = vector.multi_reduction <add>, %371, %cst_190 [1] : vector<16x32xf32> to vector<16xf32>
    %377 = vector.shape_cast %376 : vector<16xf32> to vector<16x1xf32>
    %cst_191 = arith.constant 3.200000e+01 : f32
    %378 = vector.broadcast %cst_191 : f32 to vector<16x1xf32>
    %379 = arith.divf %377, %378 : vector<16x1xf32>
    %380 = vector.broadcast %379 : vector<16x1xf32> to vector<16x32xf32>
    %381 = arith.subf %371, %380 : vector<16x32xf32>
    %382 = vector.broadcast %379 : vector<16x1xf32> to vector<16x32xf32>
    %383 = arith.subf %371, %382 : vector<16x32xf32>
    %384 = arith.mulf %381, %383 : vector<16x32xf32>
    %cst_192 = arith.constant dense<0.000000e+00> : vector<16xf32>
    %385 = vector.multi_reduction <add>, %384, %cst_192 [1] : vector<16x32xf32> to vector<16xf32>
    %386 = vector.shape_cast %385 : vector<16xf32> to vector<16x1xf32>
    %cst_193 = arith.constant 3.200000e+01 : f32
    %387 = vector.broadcast %cst_193 : f32 to vector<16x1xf32>
    %388 = arith.divf %386, %387 : vector<16x1xf32>
    %389 = vector.broadcast %379 : vector<16x1xf32> to vector<16x32xf32>
    %390 = arith.subf %371, %389 : vector<16x32xf32>
    %cst_194 = arith.constant 9.99999974E-6 : f32
    %391 = vector.broadcast %cst_194 : f32 to vector<16x1xf32>
    %392 = arith.addf %388, %391 : vector<16x1xf32>
    %393 = math.rsqrt %392 : vector<16x1xf32>
    %394 = vector.broadcast %393 : vector<16x1xf32> to vector<16x32xf32>
    %395 = arith.mulf %390, %394 : vector<16x32xf32>
    %396 = vector.broadcast %373 : vector<1x32xf32> to vector<16x32xf32>
    %397 = arith.mulf %395, %396 : vector<16x32xf32>
    %398 = vector.broadcast %375 : vector<1x32xf32> to vector<16x32xf32>
    %399 = arith.addf %397, %398 : vector<16x32xf32>
    %400 = vector.broadcast %0 : vector<16x1xf32> to vector<16x32xf32>
    %401 = arith.mulf %399, %400 : vector<16x32xf32>
    %c1_195 = arith.constant 1 : index
    %c0_196 = arith.constant 0 : index
    %c0_197 = arith.constant 0 : index
    %402 = vector.load %arg16[%c1_195, %c0_196, %c0_197] : memref<2x32x64xf32, #tpu.memory_space<vmem>>, vector<1x32x64xf32>
    %403 = vector.shape_cast %402 : vector<1x32x64xf32> to vector<32x64xf32>
    %cst_198 = arith.constant dense<0.000000e+00> : vector<16x64xf32>
    %404 = tpu.matmul %401, %403, %cst_198 {dimension_numbers = #tpu.dot_dimension_numbers<[1], [0], [0], [1], [0, 0, 1, 1], [], []>} : vector<16x32xf32>, vector<32x64xf32>, vector<16x64xf32> -> vector<16x64xf32>
    %c1_199 = arith.constant 1 : index
    %c0_200 = arith.constant 0 : index
    %c0_201 = arith.constant 0 : index
    %405 = vector.load %arg17[%c1_199, %c0_200, %c0_201] : memref<2x1x64xf32, #tpu.memory_space<vmem>>, vector<1x1x64xf32>
    %406 = vector.shape_cast %405 : vector<1x1x64xf32> to vector<1x64xf32>
    %407 = vector.broadcast %406 : vector<1x64xf32> to vector<16x64xf32>
    %408 = arith.addf %404, %407 : vector<16x64xf32>
    %cst_202 = arith.constant 0.000000e+00 : f32
    %409 = vector.broadcast %cst_202 : f32 to vector<16x64xf32>
    %410 = arith.maximumf %408, %409 : vector<16x64xf32>
    %c1_203 = arith.constant 1 : index
    %c0_204 = arith.constant 0 : index
    %c0_205 = arith.constant 0 : index
    %411 = vector.load %arg18[%c1_203, %c0_204, %c0_205] : memref<2x64x32xf32, #tpu.memory_space<vmem>>, vector<1x64x32xf32>
    %412 = vector.shape_cast %411 : vector<1x64x32xf32> to vector<64x32xf32>
    %cst_206 = arith.constant dense<0.000000e+00> : vector<16x32xf32>
    %413 = tpu.matmul %410, %412, %cst_206 {dimension_numbers = #tpu.dot_dimension_numbers<[1], [0], [0], [1], [0, 0, 1, 1], [], []>} : vector<16x64xf32>, vector<64x32xf32>, vector<16x32xf32> -> vector<16x32xf32>
    %c1_207 = arith.constant 1 : index
    %c0_208 = arith.constant 0 : index
    %c0_209 = arith.constant 0 : index
    %414 = vector.load %arg19[%c1_207, %c0_208, %c0_209] : memref<2x1x32xf32, #tpu.memory_space<vmem>>, vector<1x1x32xf32>
    %415 = vector.shape_cast %414 : vector<1x1x32xf32> to vector<1x32xf32>
    %416 = vector.broadcast %415 : vector<1x32xf32> to vector<16x32xf32>
    %417 = arith.addf %413, %416 : vector<16x32xf32>
    %418 = arith.addf %417, %401 : vector<16x32xf32>
    %c1_210 = arith.constant 1 : index
    %c0_211 = arith.constant 0 : index
    %c0_212 = arith.constant 0 : index
    %419 = vector.load %arg20[%c1_210, %c0_211, %c0_212] : memref<2x1x32xf32, #tpu.memory_space<vmem>>, vector<1x1x32xf32>
    %420 = vector.shape_cast %419 : vector<1x1x32xf32> to vector<1x32xf32>
    %c1_213 = arith.constant 1 : index
    %c0_214 = arith.constant 0 : index
    %c0_215 = arith.constant 0 : index
    %421 = vector.load %arg21[%c1_213, %c0_214, %c0_215] : memref<2x1x32xf32, #tpu.memory_space<vmem>>, vector<1x1x32xf32>
    %422 = vector.shape_cast %421 : vector<1x1x32xf32> to vector<1x32xf32>
    %cst_216 = arith.constant dense<0.000000e+00> : vector<16xf32>
    %423 = vector.multi_reduction <add>, %418, %cst_216 [1] : vector<16x32xf32> to vector<16xf32>
    %424 = vector.shape_cast %423 : vector<16xf32> to vector<16x1xf32>
    %cst_217 = arith.constant 3.200000e+01 : f32
    %425 = vector.broadcast %cst_217 : f32 to vector<16x1xf32>
    %426 = arith.divf %424, %425 : vector<16x1xf32>
    %427 = vector.broadcast %426 : vector<16x1xf32> to vector<16x32xf32>
    %428 = arith.subf %418, %427 : vector<16x32xf32>
    %429 = vector.broadcast %426 : vector<16x1xf32> to vector<16x32xf32>
    %430 = arith.subf %418, %429 : vector<16x32xf32>
    %431 = arith.mulf %428, %430 : vector<16x32xf32>
    %cst_218 = arith.constant dense<0.000000e+00> : vector<16xf32>
    %432 = vector.multi_reduction <add>, %431, %cst_218 [1] : vector<16x32xf32> to vector<16xf32>
    %433 = vector.shape_cast %432 : vector<16xf32> to vector<16x1xf32>
    %cst_219 = arith.constant 3.200000e+01 : f32
    %434 = vector.broadcast %cst_219 : f32 to vector<16x1xf32>
    %435 = arith.divf %433, %434 : vector<16x1xf32>
    %436 = vector.broadcast %426 : vector<16x1xf32> to vector<16x32xf32>
    %437 = arith.subf %418, %436 : vector<16x32xf32>
    %cst_220 = arith.constant 9.99999974E-6 : f32
    %438 = vector.broadcast %cst_220 : f32 to vector<16x1xf32>
    %439 = arith.addf %435, %438 : vector<16x1xf32>
    %440 = math.rsqrt %439 : vector<16x1xf32>
    %441 = vector.broadcast %440 : vector<16x1xf32> to vector<16x32xf32>
    %442 = arith.mulf %437, %441 : vector<16x32xf32>
    %443 = vector.broadcast %420 : vector<1x32xf32> to vector<16x32xf32>
    %444 = arith.mulf %442, %443 : vector<16x32xf32>
    %445 = vector.broadcast %422 : vector<1x32xf32> to vector<16x32xf32>
    %446 = arith.addf %444, %445 : vector<16x32xf32>
    %447 = vector.broadcast %0 : vector<16x1xf32> to vector<16x32xf32>
    %448 = arith.mulf %446, %447 : vector<16x32xf32>
    %449 = vector.shape_cast %448 : vector<16x32xf32> to vector<2x8x32xf32>
    %cst_221 = arith.constant 0.000000e+00 : f32
    %450 = vector.broadcast %cst_221 : f32 to vector<2x512xf32>
    %451 = vector.extract_strided_slice %449 {offsets = [0, 0, 0], sizes = [2, 1, 32], strides = [1, 1, 1]} : vector<2x8x32xf32> to vector<2x1x32xf32>
    %452 = vector.shape_cast %451 : vector<2x1x32xf32> to vector<2x32xf32>
    %c0_222 = arith.constant 0 : index
    %c0_223 = arith.constant 0 : index
    %453 = vector.load %arg22[%c0_222, %c0_223] : memref<256x512xf32, #tpu.memory_space<vmem>>, vector<32x512xf32>
    %cst_224 = arith.constant dense<0.000000e+00> : vector<2x512xf32>
    %454 = tpu.matmul %452, %453, %cst_224 {dimension_numbers = #tpu.dot_dimension_numbers<[1], [0], [0], [1], [0, 0, 1, 1], [], []>} : vector<2x32xf32>, vector<32x512xf32>, vector<2x512xf32> -> vector<2x512xf32>
    %455 = arith.addf %450, %454 : vector<2x512xf32>
    %456 = vector.extract_strided_slice %449 {offsets = [0, 1, 0], sizes = [2, 1, 32], strides = [1, 1, 1]} : vector<2x8x32xf32> to vector<2x1x32xf32>
    %457 = vector.shape_cast %456 : vector<2x1x32xf32> to vector<2x32xf32>
    %c32 = arith.constant 32 : index
    %c0_225 = arith.constant 0 : index
    %458 = vector.load %arg22[%c32, %c0_225] : memref<256x512xf32, #tpu.memory_space<vmem>>, vector<32x512xf32>
    %cst_226 = arith.constant dense<0.000000e+00> : vector<2x512xf32>
    %459 = tpu.matmul %457, %458, %cst_226 {dimension_numbers = #tpu.dot_dimension_numbers<[1], [0], [0], [1], [0, 0, 1, 1], [], []>} : vector<2x32xf32>, vector<32x512xf32>, vector<2x512xf32> -> vector<2x512xf32>
    %460 = arith.addf %455, %459 : vector<2x512xf32>
    %461 = vector.extract_strided_slice %449 {offsets = [0, 2, 0], sizes = [2, 1, 32], strides = [1, 1, 1]} : vector<2x8x32xf32> to vector<2x1x32xf32>
    %462 = vector.shape_cast %461 : vector<2x1x32xf32> to vector<2x32xf32>
    %c64 = arith.constant 64 : index
    %c0_227 = arith.constant 0 : index
    %463 = vector.load %arg22[%c64, %c0_227] : memref<256x512xf32, #tpu.memory_space<vmem>>, vector<32x512xf32>
    %cst_228 = arith.constant dense<0.000000e+00> : vector<2x512xf32>
    %464 = tpu.matmul %462, %463, %cst_228 {dimension_numbers = #tpu.dot_dimension_numbers<[1], [0], [0], [1], [0, 0, 1, 1], [], []>} : vector<2x32xf32>, vector<32x512xf32>, vector<2x512xf32> -> vector<2x512xf32>
    %465 = arith.addf %460, %464 : vector<2x512xf32>
    %466 = vector.extract_strided_slice %449 {offsets = [0, 3, 0], sizes = [2, 1, 32], strides = [1, 1, 1]} : vector<2x8x32xf32> to vector<2x1x32xf32>
    %467 = vector.shape_cast %466 : vector<2x1x32xf32> to vector<2x32xf32>
    %c96 = arith.constant 96 : index
    %c0_229 = arith.constant 0 : index
    %468 = vector.load %arg22[%c96, %c0_229] : memref<256x512xf32, #tpu.memory_space<vmem>>, vector<32x512xf32>
    %cst_230 = arith.constant dense<0.000000e+00> : vector<2x512xf32>
    %469 = tpu.matmul %467, %468, %cst_230 {dimension_numbers = #tpu.dot_dimension_numbers<[1], [0], [0], [1], [0, 0, 1, 1], [], []>} : vector<2x32xf32>, vector<32x512xf32>, vector<2x512xf32> -> vector<2x512xf32>
    %470 = arith.addf %465, %469 : vector<2x512xf32>
    %471 = vector.extract_strided_slice %449 {offsets = [0, 4, 0], sizes = [2, 1, 32], strides = [1, 1, 1]} : vector<2x8x32xf32> to vector<2x1x32xf32>
    %472 = vector.shape_cast %471 : vector<2x1x32xf32> to vector<2x32xf32>
    %c128 = arith.constant 128 : index
    %c0_231 = arith.constant 0 : index
    %473 = vector.load %arg22[%c128, %c0_231] : memref<256x512xf32, #tpu.memory_space<vmem>>, vector<32x512xf32>
    %cst_232 = arith.constant dense<0.000000e+00> : vector<2x512xf32>
    %474 = tpu.matmul %472, %473, %cst_232 {dimension_numbers = #tpu.dot_dimension_numbers<[1], [0], [0], [1], [0, 0, 1, 1], [], []>} : vector<2x32xf32>, vector<32x512xf32>, vector<2x512xf32> -> vector<2x512xf32>
    %475 = arith.addf %470, %474 : vector<2x512xf32>
    %476 = vector.extract_strided_slice %449 {offsets = [0, 5, 0], sizes = [2, 1, 32], strides = [1, 1, 1]} : vector<2x8x32xf32> to vector<2x1x32xf32>
    %477 = vector.shape_cast %476 : vector<2x1x32xf32> to vector<2x32xf32>
    %c160 = arith.constant 160 : index
    %c0_233 = arith.constant 0 : index
    %478 = vector.load %arg22[%c160, %c0_233] : memref<256x512xf32, #tpu.memory_space<vmem>>, vector<32x512xf32>
    %cst_234 = arith.constant dense<0.000000e+00> : vector<2x512xf32>
    %479 = tpu.matmul %477, %478, %cst_234 {dimension_numbers = #tpu.dot_dimension_numbers<[1], [0], [0], [1], [0, 0, 1, 1], [], []>} : vector<2x32xf32>, vector<32x512xf32>, vector<2x512xf32> -> vector<2x512xf32>
    %480 = arith.addf %475, %479 : vector<2x512xf32>
    %481 = vector.extract_strided_slice %449 {offsets = [0, 6, 0], sizes = [2, 1, 32], strides = [1, 1, 1]} : vector<2x8x32xf32> to vector<2x1x32xf32>
    %482 = vector.shape_cast %481 : vector<2x1x32xf32> to vector<2x32xf32>
    %c192 = arith.constant 192 : index
    %c0_235 = arith.constant 0 : index
    %483 = vector.load %arg22[%c192, %c0_235] : memref<256x512xf32, #tpu.memory_space<vmem>>, vector<32x512xf32>
    %cst_236 = arith.constant dense<0.000000e+00> : vector<2x512xf32>
    %484 = tpu.matmul %482, %483, %cst_236 {dimension_numbers = #tpu.dot_dimension_numbers<[1], [0], [0], [1], [0, 0, 1, 1], [], []>} : vector<2x32xf32>, vector<32x512xf32>, vector<2x512xf32> -> vector<2x512xf32>
    %485 = arith.addf %480, %484 : vector<2x512xf32>
    %486 = vector.extract_strided_slice %449 {offsets = [0, 7, 0], sizes = [2, 1, 32], strides = [1, 1, 1]} : vector<2x8x32xf32> to vector<2x1x32xf32>
    %487 = vector.shape_cast %486 : vector<2x1x32xf32> to vector<2x32xf32>
    %c224 = arith.constant 224 : index
    %c0_237 = arith.constant 0 : index
    %488 = vector.load %arg22[%c224, %c0_237] : memref<256x512xf32, #tpu.memory_space<vmem>>, vector<32x512xf32>
    %cst_238 = arith.constant dense<0.000000e+00> : vector<2x512xf32>
    %489 = tpu.matmul %487, %488, %cst_238 {dimension_numbers = #tpu.dot_dimension_numbers<[1], [0], [0], [1], [0, 0, 1, 1], [], []>} : vector<2x32xf32>, vector<32x512xf32>, vector<2x512xf32> -> vector<2x512xf32>
    %490 = arith.addf %485, %489 : vector<2x512xf32>
    %c0_239 = arith.constant 0 : index
    %c0_240 = arith.constant 0 : index
    %491 = vector.load %arg23[%c0_239, %c0_240] : memref<1x512xf32, #tpu.memory_space<vmem>>, vector<1x512xf32>
    %492 = vector.broadcast %491 : vector<1x512xf32> to vector<2x512xf32>
    %493 = arith.addf %490, %492 : vector<2x512xf32>
    %c0_241 = arith.constant 0 : index
    %c0_242 = arith.constant 0 : index
    %494 = vector.load %arg24[%c0_241, %c0_242] : memref<512x5xf32, #tpu.memory_space<vmem>>, vector<512x5xf32>
    %cst_243 = arith.constant dense<0.000000e+00> : vector<2x5xf32>
    %495 = tpu.matmul %493, %494, %cst_243 {dimension_numbers = #tpu.dot_dimension_numbers<[1], [0], [0], [1], [0, 0, 1, 1], [], []>} : vector<2x512xf32>, vector<512x5xf32>, vector<2x5xf32> -> vector<2x5xf32>
    %c0_244 = arith.constant 0 : index
    %c0_245 = arith.constant 0 : index
    %496 = vector.load %arg25[%c0_244, %c0_245] : memref<1x5xf32, #tpu.memory_space<vmem>>, vector<1x5xf32>
    %497 = vector.broadcast %496 : vector<1x5xf32> to vector<2x5xf32>
    %498 = arith.addf %495, %497 : vector<2x5xf32>
    %c0_246 = arith.constant 0 : index
    %c0_247 = arith.constant 0 : index
    %499 = vector.load %arg26[%c0_246, %c0_247] : memref<2x5xf32, #tpu.memory_space<vmem>>, vector<2x5xf32>
    tpu.vector_store %arg26[%c0_246, %c0_247], %498 {strides = array<i32>} : memref<2x5xf32, #tpu.memory_space<vmem>>, vector<2x5xf32>,
    return
  }
}

</mosaic_0001>

<llo_original>
// kernel: _lambda_.1
$region0: #{_lambda_.1}
  #allocation0 [shape = 'u32[]', space=smem, size = 0x4, offset = 0x4, fixed_abs, tag = 'smem constant byte address 0x4 - core index']
  #allocation1 [shape = 'u32[144,128]{1,0:T(1,128)}', space=vmem, size = 0x12000, scoped, tag = 'internal scratch']
  #allocation2 [shape = 'f32[2,12,32]{2,1,0:T(8,128)}', space=vmem, size = 0x4000, scoped, tag = 'scratch operand']
  %s0 = inlined_call_operand.vmem [shape: f32[16,96], index: 0, kind: input, shape index: {}]
  %s1 = inlined_call_operand.vmem [shape: f32[16,32], index: 1, kind: input, shape index: {}]
  %s2 = inlined_call_operand.vmem [shape: f32[16,1], index: 2, kind: input, shape index: {}]
  %s3 = inlined_call_operand.vmem [shape: f32[16,16], index: 3, kind: input, shape index: {}]
  %s4 = inlined_call_operand.vmem [shape: f32[96,32], index: 4, kind: input, shape index: {}]
  %s5 = inlined_call_operand.vmem [shape: f32[1,32], index: 5, kind: input, shape index: {}]
  %s6 = inlined_call_operand.vmem [shape: f32[5,32,32], index: 6, kind: input, shape index: {}]
  %s7 = inlined_call_operand.vmem [shape: f32[1,32], index: 7, kind: input, shape index: {}]
  %s8 = inlined_call_operand.vmem [shape: f32[1,32], index: 8, kind: input, shape index: {}]
  %s9 = inlined_call_operand.vmem [shape: f32[1,32], index: 9, kind: input, shape index: {}]
  %s10 = inlined_call_operand.vmem [shape: f32[2,32,96], index: 10, kind: input, shape index: {}]
  %s11 = inlined_call_operand.vmem [shape: f32[2,1,96], index: 11, kind: input, shape index: {}]
  %s12 = inlined_call_operand.vmem [shape: f32[2,32,32], index: 12, kind: input, shape index: {}]
  %s13 = inlined_call_operand.vmem [shape: f32[2,1,32], index: 13, kind: input, shape index: {}]
  %s14 = inlined_call_operand.vmem [shape: f32[2,1,32], index: 14, kind: input, shape index: {}, may-alias: {14,20}]
  %s15 = inlined_call_operand.vmem [shape: f32[2,1,32], index: 15, kind: input, shape index: {}, may-alias: {15,21}]
  %s16 = inlined_call_operand.vmem [shape: f32[2,32,64], index: 16, kind: input, shape index: {}]
  %s17 = inlined_call_operand.vmem [shape: f32[2,1,64], index: 17, kind: input, shape index: {}]
  %s18 = inlined_call_operand.vmem [shape: f32[2,64,32], index: 18, kind: input, shape index: {}]
  %s19 = inlined_call_operand.vmem [shape: f32[2,1,32], index: 19, kind: input, shape index: {}]
  %s20 = inlined_call_operand.vmem [shape: f32[2,1,32], index: 20, kind: input, shape index: {}, may-alias: {14,20}]
  %s21 = inlined_call_operand.vmem [shape: f32[2,1,32], index: 21, kind: input, shape index: {}, may-alias: {15,21}]
  %s22 = inlined_call_operand.hbm [shape: f32[256,512], index: 22, kind: input, shape index: {}]
  %s23 = inlined_call_operand.vmem [shape: f32[1,512], index: 23, kind: input, shape index: {}]
  %s24 = inlined_call_operand.hbm [shape: f32[512,5], index: 24, kind: input, shape index: {}]
  %s25 = inlined_call_operand.vmem [shape: f32[1,5], index: 25, kind: input, shape index: {}]
  %s26 = inlined_call_operand.hbm [shape: f32[2,5], index: 26, kind: output, shape index: {}]
  %s27 = sld [smem:[#allocation0]]
  $region122: #{_lambda_.1} parent=0
    _
  %s29 = ssub.s32 1, %s27
  %s30 = scalar_select 0, %s29, %s27
  $region1: #{_lambda_.1} parent=0
    #allocation3 [shape = 'u8[524288]{0}', space=vmem, size = 0x80000, scoped, tag = 'input window, operand 22, single buffered']
    #allocation4 [shape = 's32[1]{0}', space=sflag, size = 0x4, scoped, tag = 'scoped memory for _lambda_.1']
    #allocation5 [shape = 's32[1]{0}', space=sflag, size = 0x4, scoped, tag = 'scoped memory for _lambda_.1']
    #allocation6 [shape = 'u8[262144]{0}', space=vmem, size = 0x40000, scoped, tag = 'input window, operand 24, single buffered']
    #allocation7 [shape = 's32[1]{0}', space=sflag, size = 0x4, scoped, tag = 'scoped memory for _lambda_.1']
    #allocation8 [shape = 'u8[1024]{0}', space=vmem, size = 0x400, scoped, tag = 'output window, operand 0, single buffered']
    %31 = vsyncpa [#allocation4], 0
    %32 = vsyncpa [#allocation7], 0
    %33 = vsyncpa [#allocation5], 0
    // Predicated region
    $region2: #{_lambda_.1} parent=1 // pred_check
      _
    $region3: #{_lambda_.1} parent=1 // pred_check_branch
      %35 = sbr.rel (0) target = $region5
    $region4: #{_lambda_.1} parent=1 // pred_region
      _
    $region5: #{_lambda_.1} parent=1 // pred_fallthru
      _
    // Predicated region
    $region6: #{_lambda_.1} parent=1 // pred_check
      _
    $region7: #{_lambda_.1} parent=1 // pred_check_branch
      %37 = sbr.rel (0) target = $region9
    $region8: #{_lambda_.1} parent=1 // pred_region
      _
    $region9: #{_lambda_.1} parent=1 // pred_fallthru
      _
    // Predicated region
    $region10: #{_lambda_.1} parent=1 // pred_check
      _
    $region11: #{_lambda_.1} parent=1 // pred_check_branch
      %39 = sbr.rel (0) target = $region13
    $region12: #{_lambda_.1} parent=1 // pred_region
      _
    $region13: #{_lambda_.1} parent=1 // pred_fallthru
      _
    // Predicated region
    $region14: #{_lambda_.1} parent=1 // pred_check
      _
    $region15: #{_lambda_.1} parent=1 // pred_check_branch
      %41 = sbr.rel (0) target = $region17
    $region16: #{_lambda_.1} parent=1 // pred_region
      _
    $region17: #{_lambda_.1} parent=1 // pred_fallthru
      _
    // Predicated region
    $region18: #{_lambda_.1} parent=1 // pred_check
      _
    $region19: #{_lambda_.1} parent=1 // pred_check_branch
      %43 = sbr.rel (0) target = $region21
    $region20: #{_lambda_.1} parent=1 // pred_region
      _
    $region21: #{_lambda_.1} parent=1 // pred_fallthru
      _
    // Predicated region
    $region22: #{_lambda_.1} parent=1 // pred_check
      _
    $region23: #{_lambda_.1} parent=1 // pred_check_branch
      %45 = sbr.rel (0) target = $region25
    $region24: #{_lambda_.1} parent=1 // pred_region
      _
    $region25: #{_lambda_.1} parent=1 // pred_fallthru
      _
    // Predicated region
    $region26: #{_lambda_.1} parent=1 // pred_check
      _
    $region27: #{_lambda_.1} parent=1 // pred_check_branch
      %47 = sbr.rel (0) target = $region29
    $region28: #{_lambda_.1} parent=1 // pred_region
      _
    $region29: #{_lambda_.1} parent=1 // pred_fallthru
      _
    // Predicated region
    $region30: #{_lambda_.1} parent=1 // pred_check
      _
    $region31: #{_lambda_.1} parent=1 // pred_check_branch
      %49 = sbr.rel (0) target = $region33
    $region32: #{_lambda_.1} parent=1 // pred_region
      _
    $region33: #{_lambda_.1} parent=1 // pred_fallthru
      _
    // Predicated region
    $region34: #{_lambda_.1} parent=1 // pred_check
      _
    $region35: #{_lambda_.1} parent=1 // pred_check_branch
      %51 = sbr.rel (0) target = $region37
    $region36: #{_lambda_.1} parent=1 // pred_region
      _
    $region37: #{_lambda_.1} parent=1 // pred_fallthru
      _
    // Predicated region
    $region38: #{_lambda_.1} parent=1 // pred_check
      _
    $region39: #{_lambda_.1} parent=1 // pred_check_branch
      %53 = sbr.rel (0) target = $region41
    $region40: #{_lambda_.1} parent=1 // pred_region
      _
    $region41: #{_lambda_.1} parent=1 // pred_fallthru
      _
    // Predicated region
    $region42: #{_lambda_.1} parent=1 // pred_check
      _
    $region43: #{_lambda_.1} parent=1 // pred_check_branch
      %55 = sbr.rel (0) target = $region45
    $region44: #{_lambda_.1} parent=1 // pred_region
      _
    $region45: #{_lambda_.1} parent=1 // pred_fallthru
      _
    // Predicated region
    $region46: #{_lambda_.1} parent=1 // pred_check
      _
    $region47: #{_lambda_.1} parent=1 // pred_check_branch
      %57 = sbr.rel (0) target = $region49
    $region48: #{_lambda_.1} parent=1 // pred_region
      _
    $region49: #{_lambda_.1} parent=1 // pred_fallthru
      _
    // Predicated region
    $region50: #{_lambda_.1} parent=1 // pred_check
      _
    $region51: #{_lambda_.1} parent=1 // pred_check_branch
      %59 = sbr.rel (0) target = $region53
    $region52: #{_lambda_.1} parent=1 // pred_region
      _
    $region53: #{_lambda_.1} parent=1 // pred_fallthru
      _
    // Predicated region
    $region54: #{_lambda_.1} parent=1 // pred_check
      _
    $region55: #{_lambda_.1} parent=1 // pred_check_branch
      %61 = sbr.rel (0) target = $region57
    $region56: #{_lambda_.1} parent=1 // pred_region
      _
    $region57: #{_lambda_.1} parent=1 // pred_fallthru
      _
    // Predicated region
    $region58: #{_lambda_.1} parent=1 // pred_check
      _
    $region59: #{_lambda_.1} parent=1 // pred_check_branch
      %63 = sbr.rel (0) target = $region61
    $region60: #{_lambda_.1} parent=1 // pred_region
      _
    $region61: #{_lambda_.1} parent=1 // pred_fallthru
      _
    // Predicated region
    $region62: #{_lambda_.1} parent=1 // pred_check
      _
    $region63: #{_lambda_.1} parent=1 // pred_check_branch
      %65 = sbr.rel (0) target = $region65
    $region64: #{_lambda_.1} parent=1 // pred_region
      _
    $region65: #{_lambda_.1} parent=1 // pred_fallthru
      _
    // Predicated region
    $region66: #{_lambda_.1} parent=1 // pred_check
      _
    $region67: #{_lambda_.1} parent=1 // pred_check_branch
      %67 = sbr.rel (0) target = $region69
    $region68: #{_lambda_.1} parent=1 // pred_region
      _
    $region69: #{_lambda_.1} parent=1 // pred_fallthru
      _
    // Predicated region
    $region70: #{_lambda_.1} parent=1 // pred_check
      _
    $region71: #{_lambda_.1} parent=1 // pred_check_branch
      %69 = sbr.rel (0) target = $region73
    $region72: #{_lambda_.1} parent=1 // pred_region
      _
    $region73: #{_lambda_.1} parent=1 // pred_fallthru
      _
    // Predicated region
    $region74: #{_lambda_.1} parent=1 // pred_check
      _
    $region75: #{_lambda_.1} parent=1 // pred_check_branch
      %71 = sbr.rel (0) target = $region77
    $region76: #{_lambda_.1} parent=1 // pred_region
      _
    $region77: #{_lambda_.1} parent=1 // pred_fallthru
      _
    // Predicated region
    $region78: #{_lambda_.1} parent=1 // pred_check
      _
    $region79: #{_lambda_.1} parent=1 // pred_check_branch
      %73 = sbr.rel (0) target = $region81
    $region80: #{_lambda_.1} parent=1 // pred_region
      _
    $region81: #{_lambda_.1} parent=1 // pred_fallthru
      _
    // Predicated region
    $region82: #{_lambda_.1} parent=1 // pred_check
      _
    $region83: #{_lambda_.1} parent=1 // pred_check_branch
      %75 = sbr.rel (0) target = $region85
    $region84: #{_lambda_.1} parent=1 // pred_region
      _
    $region85: #{_lambda_.1} parent=1 // pred_fallthru
      _
    // Predicated region
    $region86: #{_lambda_.1} parent=1 // pred_check
      _
    $region87: #{_lambda_.1} parent=1 // pred_check_branch
      %77 = sbr.rel (0) target = $region89
    $region88: #{_lambda_.1} parent=1 // pred_region
      _
    $region89: #{_lambda_.1} parent=1 // pred_fallthru
      _
    // Predicated region
    $region90: #{_lambda_.1} parent=1 // pred_check
      _
    $region91: #{_lambda_.1} parent=1 // pred_check_branch
      %79 = sbr.rel (0) target = $region93
    $region92: #{_lambda_.1} parent=1 // pred_region
      %s81 = ssub.s32 16384, 16384
      %82 = vsyncadd [#allocation4], %s81
      %s83 = sshll.u32 [#allocation3], 4
      %s84 = int_to_ptr.vmem [resolvable:$true] %s83
      %89 = dma.hbm_to_vmem [thread:$0]  %s22, 16384, %s84, [#allocation4], 512, 512, 32
    $region93: #{_lambda_.1} parent=1 // pred_fallthru
      _
    // Predicated region
    $region94: #{_lambda_.1} parent=1 // pred_check
      _
    $region95: #{_lambda_.1} parent=1 // pred_check_branch
      %91 = sbr.rel (0) target = $region97
    $region96: #{_lambda_.1} parent=1 // pred_region
      _
    $region97: #{_lambda_.1} parent=1 // pred_fallthru
      _
    // Predicated region
    $region98: #{_lambda_.1} parent=1 // pred_check
      _
    $region99: #{_lambda_.1} parent=1 // pred_check_branch
      %93 = sbr.rel (0) target = $region101
    $region100: #{_lambda_.1} parent=1 // pred_region
      %s95 = ssub.s32 8192, 8192
      %96 = vsyncadd [#allocation7], %s95
      %s97 = sshll.u32 [#allocation6], 4
      %s98 = int_to_ptr.vmem [resolvable:$true] %s97
      %103 = dma.hbm_to_vmem [thread:$0]  %s24, 8192, %s98, [#allocation7], 128, 128, 8
    $region101: #{_lambda_.1} parent=1 // pred_fallthru
      _
    // Predicated region
    $region102: #{_lambda_.1} parent=1 // pred_check
      _
    $region103: #{_lambda_.1} parent=1 // pred_check_branch
      %105 = sbr.rel (0) target = $region105
    $region104: #{_lambda_.1} parent=1 // pred_region
      _
    $region105: #{_lambda_.1} parent=1 // pred_fallthru
      _
    // Predicated region
    $region106: #{_lambda_.1} parent=1 // pred_check
      _
    $region107: #{_lambda_.1} parent=1 // pred_check_branch
      %107 = sbr.rel (0) target = $region109
    $region108: #{_lambda_.1} parent=1 // pred_region
      %108 = dma.done [#allocation4], 16384
    $region109: #{_lambda_.1} parent=1 // pred_fallthru
      _
    // Predicated region
    $region110: #{_lambda_.1} parent=1 // pred_check
      _
    $region111: #{_lambda_.1} parent=1 // pred_check_branch
      %110 = sbr.rel (0) target = $region113
    $region112: #{_lambda_.1} parent=1 // pred_region
      %111 = dma.done [#allocation7], 8192
    $region113: #{_lambda_.1} parent=1 // pred_fallthru
      _
    %v112 = vld [vmem:[%s2] sm:$0xff]
    %v113 = vld [vmem:[%s2 + $0x8] sm:$0xff]
    %v114 = vld [vmem:[%s3] sm:$0xff]
    %v115 = vld [vmem:[%s3 + $0x8] sm:$0xff]
    %v116 = vld [vmem:[%s0] sm:$0xff]
    %v117 = vld [vmem:[%s0 + $0x8] sm:$0xff]
    %v118 = vld [vmem:[%s4] sm:$0xff]
    %v119 = vld [vmem:[%s4 + $0x8] sm:$0xff]
    %v120 = vld [vmem:[%s4 + $0x10] sm:$0xff]
    %v121 = vld [vmem:[%s4 + $0x18] sm:$0xff]
    %v122 = vld [vmem:[%s4 + $0x20] sm:$0xff]
    %v123 = vld [vmem:[%s4 + $0x28] sm:$0xff]
    %v124 = vld [vmem:[%s4 + $0x30] sm:$0xff]
    %v125 = vld [vmem:[%s4 + $0x38] sm:$0xff]
    %v126 = vld [vmem:[%s4 + $0x40] sm:$0xff]
    %v127 = vld [vmem:[%s4 + $0x48] sm:$0xff]
    %v128 = vld [vmem:[%s4 + $0x50] sm:$0xff]
    %v129 = vld [vmem:[%s4 + $0x58] sm:$0xff]
    %v130 = vld [vmem:[%s5] sm:$0x1]
    %v132 = vlaneseq
    %v133 = vshrl.u32 %v132, 7
    %v134 = vsub.s32 0, %v133
    %v135 = vrot.slane %v130, %v134
    %vm137 = vcmask 785408
    %v139 = vsel %vm137, %v116, 0
    %v142 = vsel %vm137, %v117, 0
    %144 = vmatprep.subr.mxu0 0.0
    %145 = vmatpush1.msra.mxu0 0.0
    %146 = vmatprep.subr.mxu0 0.0
    %147 = vmatpush1.msra.mxu0 0.0
    %148 = vmatprep.subr.mxu0 0.0
    %149 = vmatpush1.msra.mxu0 0.0
    %150 = vmatprep.subr.mxu0 0.0
    %151 = vmatpush1.msra.mxu0 0.0
    %152 = vmatprep.subr.mxu0 0.0
    %153 = vmatpush1.msra.mxu0 %v129
    %154 = vmatprep.subr.mxu0 0.0
    %155 = vmatpush1.msra.mxu0 %v128
    %156 = vmatprep.subr.mxu0 0.0
    %157 = vmatpush1.msra.mxu0 %v127
    %158 = vmatprep.subr.mxu0 0.0
    %159 = vmatpush1.msra.mxu0 %v126
    %160 = vmatprep.subr.mxu0 0.0
    %161 = vmatpush1.msra.mxu0 %v125
    %162 = vmatprep.subr.mxu0 0.0
    %163 = vmatpush1.msra.mxu0 %v124
    %164 = vmatprep.subr.mxu0 0.0
    %165 = vmatpush1.msra.mxu0 %v123
    %166 = vmatprep.subr.mxu0 0.0
    %167 = vmatpush1.msra.mxu0 %v122
    %168 = vmatprep.subr.mxu0 0.0
    %169 = vmatpush1.msra.mxu0 %v121
    %170 = vmatprep.subr.mxu0 0.0
    %171 = vmatpush1.msra.mxu0 %v120
    %172 = vmatprep.subr.mxu0 0.0
    %173 = vmatpush1.msra.mxu0 %v119
    %174 = vmatprep.subr.mxu0 0.0
    %175 = vmatpush1.msra.mxu0 %v118
    %176 = vmatprep.subr.mxu0 0.0
    %177 = vmatpush2.msra.mxu0 0.0
    %178 = vmatprep.subr.mxu0 0.0
    %179 = vmatpush2.msra.mxu0 0.0
    %180 = vmatprep.subr.mxu0 0.0
    %181 = vmatpush2.msra.mxu0 0.0
    %182 = vmatprep.subr.mxu0 0.0
    %183 = vmatpush2.msra.mxu0 0.0
    %184 = vmatprep.subr.mxu0 0.0
    %185 = vmatpush2.msra.mxu0 0.0
    %186 = vmatprep.subr.mxu0 0.0
    %187 = vmatpush2.msra.mxu0 0.0
    %188 = vmatprep.subr.mxu0 0.0
    %189 = vmatpush2.msra.mxu0 0.0
    %190 = vmatprep.subr.mxu0 0.0
    %191 = vmatpush2.msra.mxu0 0.0
    %192 = vmatprep.subr.mxu0 0.0
    %193 = vmatpush2.msra.mxu0 0.0
    %194 = vmatprep.subr.mxu0 0.0
    %195 = vmatpush2.msra.mxu0 0.0
    %196 = vmatprep.subr.mxu0 0.0
    %197 = vmatpush2.msra.mxu0 0.0
    %198 = vmatprep.subr.mxu0 0.0
    %199 = vmatpush2.msra.mxu0 0.0
    %200 = vmatprep.subr.mxu0 0.0
    %201 = vmatpush2.msra.mxu0 0.0
    %202 = vmatprep.subr.mxu0 0.0
    %203 = vmatpush2.msra.mxu0 0.0
    %204 = vmatprep.subr.mxu0 0.0
    %205 = vmatpush2.msra.mxu0 0.0
    %206 = vmatprep.subr.mxu0 0.0
    %207 = vmatpush2.msra.mxu0 0.0
    %208 = vmatprep.mubr.f32.mxu0 0.0
    %209 = vmatmul.mubr.f32.gmra.mxu0 %v139
    %v210 = vpop.f32.mrf.mxu0
    %v211 = vadd.f32 %v135, %v210
    %v212 = vpop.f32.mrf.mxu0
    %213 = vmatprep.mubr.f32.mxu0 0.0
    %214 = vmatmul.mubr.f32.gmra.mxu0 %v142
    %v215 = vpop.f32.mrf.mxu0
    %v216 = vadd.f32 %v135, %v215
    %v217 = vpop.f32.mrf.mxu0
    %218 = vdwg.mxu0
    %v219 = vld [vmem:[%s1] sm:$0xff]
    %v220 = vld [vmem:[%s1 + $0x8] sm:$0xff]
    %v221 = vadd.f32 %v211, %v219
    %v222 = vadd.f32 %v216, %v220
    %vm223 = vcmask 254976
    %224 = vst.msk [vmem:[#allocation2] sm:$0x3] %vm223, 0.0
    %225 = vst.msk [vmem:[#allocation2 + $0x10] sm:$0x3] %vm223, 0.0
    %226 = vst.msk [vmem:[#allocation2 + $0xa] sm:$0x3] %vm223, 0.0
    %227 = vst.msk [vmem:[#allocation2 + $0x1a] sm:$0x3] %vm223, 0.0
    %vm228 = vcmask 261120
    %229 = vst.msk [vmem:[#allocation2 + $0x2] sm:$0xff] %vm228, %v221
    %230 = vst.msk [vmem:[#allocation2 + $0x12] sm:$0xff] %vm228, %v222
    %v231 = vld [vmem:[#allocation2] sm:$0xff]
    %v232 = vld [vmem:[#allocation2 + $0x10] sm:$0xff]
    %v233 = vld [vmem:[%s6] sm:$0xff]
    %v234 = vld [vmem:[%s6 + $0x8] sm:$0xff]
    %v235 = vld [vmem:[%s6 + $0x10] sm:$0xff]
    %v236 = vld [vmem:[%s6 + $0x18] sm:$0xff]
    %v237 = vld [vmem:[#allocation2 + $0x1] sm:$0xff]
    %v238 = vld [vmem:[#allocation2 + $0x11] sm:$0xff]
    %s239 = scalar_lea.vmem %s6, 32
    %v240 = vld [vmem:[%s239] sm:$0xff]
    %v241 = vld [vmem:[%s239 + $0x8] sm:$0xff]
    %v242 = vld [vmem:[%s239 + $0x10] sm:$0xff]
    %v243 = vld [vmem:[%s239 + $0x18] sm:$0xff]
    %v245 = vsel %vm228, %v237, 0
    %v248 = vsel %vm228, %v238, 0
    %250 = vmatprep.subr.mxu0 0.0
    %251 = vmatpush1.msra.mxu0 0.0
    %252 = vmatprep.subr.mxu0 0.0
    %253 = vmatpush1.msra.mxu0 0.0
    %254 = vmatprep.subr.mxu0 0.0
    %255 = vmatpush1.msra.mxu0 0.0
    %256 = vmatprep.subr.mxu0 0.0
    %257 = vmatpush1.msra.mxu0 0.0
    %258 = vmatprep.subr.mxu0 0.0
    %259 = vmatpush1.msra.mxu0 0.0
    %260 = vmatprep.subr.mxu0 0.0
    %261 = vmatpush1.msra.mxu0 0.0
    %262 = vmatprep.subr.mxu0 0.0
    %263 = vmatpush1.msra.mxu0 0.0
    %264 = vmatprep.subr.mxu0 0.0
    %265 = vmatpush1.msra.mxu0 0.0
    %266 = vmatprep.subr.mxu0 0.0
    %267 = vmatpush1.msra.mxu0 0.0
    %268 = vmatprep.subr.mxu0 0.0
    %269 = vmatpush1.msra.mxu0 0.0
    %270 = vmatprep.subr.mxu0 0.0
    %271 = vmatpush1.msra.mxu0 0.0
    %272 = vmatprep.subr.mxu0 0.0
    %273 = vmatpush1.msra.mxu0 0.0
    %274 = vmatprep.subr.mxu0 0.0
    %275 = vmatpush1.msra.mxu0 %v243
    %276 = vmatprep.subr.mxu0 0.0
    %277 = vmatpush1.msra.mxu0 %v242
    %278 = vmatprep.subr.mxu0 0.0
    %279 = vmatpush1.msra.mxu0 %v241
    %280 = vmatprep.subr.mxu0 0.0
    %281 = vmatpush1.msra.mxu0 %v240
    %282 = vmatprep.subr.mxu0 0.0
    %283 = vmatpush2.msra.mxu0 0.0
    %284 = vmatprep.subr.mxu0 0.0
    %285 = vmatpush2.msra.mxu0 0.0
    %286 = vmatprep.subr.mxu0 0.0
    %287 = vmatpush2.msra.mxu0 0.0
    %288 = vmatprep.subr.mxu0 0.0
    %289 = vmatpush2.msra.mxu0 0.0
    %290 = vmatprep.subr.mxu0 0.0
    %291 = vmatpush2.msra.mxu0 0.0
    %292 = vmatprep.subr.mxu0 0.0
    %293 = vmatpush2.msra.mxu0 0.0
    %294 = vmatprep.subr.mxu0 0.0
    %295 = vmatpush2.msra.mxu0 0.0
    %296 = vmatprep.subr.mxu0 0.0
    %297 = vmatpush2.msra.mxu0 0.0
    %298 = vmatprep.subr.mxu0 0.0
    %299 = vmatpush2.msra.mxu0 0.0
    %300 = vmatprep.subr.mxu0 0.0
    %301 = vmatpush2.msra.mxu0 0.0
    %302 = vmatprep.subr.mxu0 0.0
    %303 = vmatpush2.msra.mxu0 0.0
    %304 = vmatprep.subr.mxu0 0.0
    %305 = vmatpush2.msra.mxu0 0.0
    %306 = vmatprep.subr.mxu0 0.0
    %307 = vmatpush2.msra.mxu0 0.0
    %308 = vmatprep.subr.mxu0 0.0
    %309 = vmatpush2.msra.mxu0 0.0
    %310 = vmatprep.subr.mxu0 0.0
    %311 = vmatpush2.msra.mxu0 0.0
    %312 = vmatprep.subr.mxu0 0.0
    %313 = vmatpush2.msra.mxu0 0.0
    %314 = vmatprep.mubr.f32.mxu0 0.0
    %315 = vmatmul.mubr.f32.gmra.mxu0 %v245
    %v316 = vpop.f32.mrf.mxu0
    %v317 = vadd.f32 0.0, %v316
    %v318 = vpop.f32.mrf.mxu0
    %319 = vmatprep.mubr.f32.mxu0 0.0
    %320 = vmatmul.mubr.f32.gmra.mxu0 %v248
    %v321 = vpop.f32.mrf.mxu0
    %v322 = vadd.f32 0.0, %v321
    %v323 = vpop.f32.mrf.mxu0
    %324 = vdwg.mxu0
    %v326 = vsel %vm228, %v231, 0
    %v329 = vsel %vm228, %v232, 0
    %331 = vmatprep.subr.mxu0 0.0
    %332 = vmatpush1.msra.mxu0 0.0
    %333 = vmatprep.subr.mxu0 0.0
    %334 = vmatpush1.msra.mxu0 0.0
    %335 = vmatprep.subr.mxu0 0.0
    %336 = vmatpush1.msra.mxu0 0.0
    %337 = vmatprep.subr.mxu0 0.0
    %338 = vmatpush1.msra.mxu0 0.0
    %339 = vmatprep.subr.mxu0 0.0
    %340 = vmatpush1.msra.mxu0 0.0
    %341 = vmatprep.subr.mxu0 0.0
    %342 = vmatpush1.msra.mxu0 0.0
    %343 = vmatprep.subr.mxu0 0.0
    %344 = vmatpush1.msra.mxu0 0.0
    %345 = vmatprep.subr.mxu0 0.0
    %346 = vmatpush1.msra.mxu0 0.0
    %347 = vmatprep.subr.mxu0 0.0
    %348 = vmatpush1.msra.mxu0 0.0
    %349 = vmatprep.subr.mxu0 0.0
    %350 = vmatpush1.msra.mxu0 0.0
    %351 = vmatprep.subr.mxu0 0.0
    %352 = vmatpush1.msra.mxu0 0.0
    %353 = vmatprep.subr.mxu0 0.0
    %354 = vmatpush1.msra.mxu0 0.0
    %355 = vmatprep.subr.mxu0 0.0
    %356 = vmatpush1.msra.mxu0 %v236
    %357 = vmatprep.subr.mxu0 0.0
    %358 = vmatpush1.msra.mxu0 %v235
    %359 = vmatprep.subr.mxu0 0.0
    %360 = vmatpush1.msra.mxu0 %v234
    %361 = vmatprep.subr.mxu0 0.0
    %362 = vmatpush1.msra.mxu0 %v233
    %363 = vmatprep.subr.mxu0 0.0
    %364 = vmatpush2.msra.mxu0 0.0
    %365 = vmatprep.subr.mxu0 0.0
    %366 = vmatpush2.msra.mxu0 0.0
    %367 = vmatprep.subr.mxu0 0.0
    %368 = vmatpush2.msra.mxu0 0.0
    %369 = vmatprep.subr.mxu0 0.0
    %370 = vmatpush2.msra.mxu0 0.0
    %371 = vmatprep.subr.mxu0 0.0
    %372 = vmatpush2.msra.mxu0 0.0
    %373 = vmatprep.subr.mxu0 0.0
    %374 = vmatpush2.msra.mxu0 0.0
    %375 = vmatprep.subr.mxu0 0.0
    %376 = vmatpush2.msra.mxu0 0.0
    %377 = vmatprep.subr.mxu0 0.0
    %378 = vmatpush2.msra.mxu0 0.0
    %379 = vmatprep.subr.mxu0 0.0
    %380 = vmatpush2.msra.mxu0 0.0
    %381 = vmatprep.subr.mxu0 0.0
    %382 = vmatpush2.msra.mxu0 0.0
    %383 = vmatprep.subr.mxu0 0.0
    %384 = vmatpush2.msra.mxu0 0.0
    %385 = vmatprep.subr.mxu0 0.0
    %386 = vmatpush2.msra.mxu0 0.0
    %387 = vmatprep.subr.mxu0 0.0
    %388 = vmatpush2.msra.mxu0 0.0
    %389 = vmatprep.subr.mxu0 0.0
    %390 = vmatpush2.msra.mxu0 0.0
    %391 = vmatprep.subr.mxu0 0.0
    %392 = vmatpush2.msra.mxu0 0.0
    %393 = vmatprep.subr.mxu0 0.0
    %394 = vmatpush2.msra.mxu0 0.0
    %395 = vmatprep.mubr.f32.mxu0 0.0
    %396 = vmatmul.mubr.f32.gmra.mxu0 %v326
    %v397 = vpop.f32.mrf.mxu0
    %v398 = vadd.f32 %v317, %v397
    %v399 = vpop.f32.mrf.mxu0
    %400 = vmatprep.mubr.f32.mxu0 0.0
    %401 = vmatmul.mubr.f32.gmra.mxu0 %v329
    %v402 = vpop.f32.mrf.mxu0
    %v403 = vadd.f32 %v322, %v402
    %v404 = vpop.f32.mrf.mxu0
    %405 = vdwg.mxu0
    %v406 = vld [vmem:[#allocation2 + $0x2] sm:$0xff]
    %v407 = vld [vmem:[#allocation2 + $0x12] sm:$0xff]
    %s408 = scalar_lea.vmem %s6, 64
    %v409 = vld [vmem:[%s408] sm:$0xff]
    %v410 = vld [vmem:[%s408 + $0x8] sm:$0xff]
    %v411 = vld [vmem:[%s408 + $0x10] sm:$0xff]
    %v412 = vld [vmem:[%s408 + $0x18] sm:$0xff]
    %v414 = vsel %vm228, %v406, 0
    %v417 = vsel %vm228, %v407, 0
    %419 = vmatprep.subr.mxu0 0.0
    %420 = vmatpush1.msra.mxu0 0.0
    %421 = vmatprep.subr.mxu0 0.0
    %422 = vmatpush1.msra.mxu0 0.0
    %423 = vmatprep.subr.mxu0 0.0
    %424 = vmatpush1.msra.mxu0 0.0
    %425 = vmatprep.subr.mxu0 0.0
    %426 = vmatpush1.msra.mxu0 0.0
    %427 = vmatprep.subr.mxu0 0.0
    %428 = vmatpush1.msra.mxu0 0.0
    %429 = vmatprep.subr.mxu0 0.0
    %430 = vmatpush1.msra.mxu0 0.0
    %431 = vmatprep.subr.mxu0 0.0
    %432 = vmatpush1.msra.mxu0 0.0
    %433 = vmatprep.subr.mxu0 0.0
    %434 = vmatpush1.msra.mxu0 0.0
    %435 = vmatprep.subr.mxu0 0.0
    %436 = vmatpush1.msra.mxu0 0.0
    %437 = vmatprep.subr.mxu0 0.0
    %438 = vmatpush1.msra.mxu0 0.0
    %439 = vmatprep.subr.mxu0 0.0
    %440 = vmatpush1.msra.mxu0 0.0
    %441 = vmatprep.subr.mxu0 0.0
    %442 = vmatpush1.msra.mxu0 0.0
    %443 = vmatprep.subr.mxu0 0.0
    %444 = vmatpush1.msra.mxu0 %v412
    %445 = vmatprep.subr.mxu0 0.0
    %446 = vmatpush1.msra.mxu0 %v411
    %447 = vmatprep.subr.mxu0 0.0
    %448 = vmatpush1.msra.mxu0 %v410
    %449 = vmatprep.subr.mxu0 0.0
    %450 = vmatpush1.msra.mxu0 %v409
    %451 = vmatprep.subr.mxu0 0.0
    %452 = vmatpush2.msra.mxu0 0.0
    %453 = vmatprep.subr.mxu0 0.0
    %454 = vmatpush2.msra.mxu0 0.0
    %455 = vmatprep.subr.mxu0 0.0
    %456 = vmatpush2.msra.mxu0 0.0
    %457 = vmatprep.subr.mxu0 0.0
    %458 = vmatpush2.msra.mxu0 0.0
    %459 = vmatprep.subr.mxu0 0.0
    %460 = vmatpush2.msra.mxu0 0.0
    %461 = vmatprep.subr.mxu0 0.0
    %462 = vmatpush2.msra.mxu0 0.0
    %463 = vmatprep.subr.mxu0 0.0
    %464 = vmatpush2.msra.mxu0 0.0
    %465 = vmatprep.subr.mxu0 0.0
    %466 = vmatpush2.msra.mxu0 0.0
    %467 = vmatprep.subr.mxu0 0.0
    %468 = vmatpush2.msra.mxu0 0.0
    %469 = vmatprep.subr.mxu0 0.0
    %470 = vmatpush2.msra.mxu0 0.0
    %471 = vmatprep.subr.mxu0 0.0
    %472 = vmatpush2.msra.mxu0 0.0
    %473 = vmatprep.subr.mxu0 0.0
    %474 = vmatpush2.msra.mxu0 0.0
    %475 = vmatprep.subr.mxu0 0.0
    %476 = vmatpush2.msra.mxu0 0.0
    %477 = vmatprep.subr.mxu0 0.0
    %478 = vmatpush2.msra.mxu0 0.0
    %479 = vmatprep.subr.mxu0 0.0
    %480 = vmatpush2.msra.mxu0 0.0
    %481 = vmatprep.subr.mxu0 0.0
    %482 = vmatpush2.msra.mxu0 0.0
    %483 = vmatprep.mubr.f32.mxu0 0.0
    %484 = vmatmul.mubr.f32.gmra.mxu0 %v414
    %v485 = vpop.f32.mrf.mxu0
    %v486 = vadd.f32 0.0, %v485
    %v487 = vpop.f32.mrf.mxu0
    %488 = vmatprep.mubr.f32.mxu0 0.0
    %489 = vmatmul.mubr.f32.gmra.mxu0 %v417
    %v490 = vpop.f32.mrf.mxu0
    %v491 = vadd.f32 0.0, %v490
    %v492 = vpop.f32.mrf.mxu0
    %493 = vdwg.mxu0
    %v494 = vadd.f32 %v398, %v486
    %v495 = vadd.f32 %v403, %v491
    %v496 = vld [vmem:[#allocation2 + $0x3] sm:$0xff]
    %v497 = vld [vmem:[#allocation2 + $0x13] sm:$0xff]
    %s498 = scalar_lea.vmem %s6, 96
    %v499 = vld [vmem:[%s498] sm:$0xff]
    %v500 = vld [vmem:[%s498 + $0x8] sm:$0xff]
    %v501 = vld [vmem:[%s498 + $0x10] sm:$0xff]
    %v502 = vld [vmem:[%s498 + $0x18] sm:$0xff]
    %v504 = vsel %vm228, %v496, 0
    %v507 = vsel %vm228, %v497, 0
    %509 = vmatprep.subr.mxu0 0.0
    %510 = vmatpush1.msra.mxu0 0.0
    %511 = vmatprep.subr.mxu0 0.0
    %512 = vmatpush1.msra.mxu0 0.0
    %513 = vmatprep.subr.mxu0 0.0
    %514 = vmatpush1.msra.mxu0 0.0
    %515 = vmatprep.subr.mxu0 0.0
    %516 = vmatpush1.msra.mxu0 0.0
    %517 = vmatprep.subr.mxu0 0.0
    %518 = vmatpush1.msra.mxu0 0.0
    %519 = vmatprep.subr.mxu0 0.0
    %520 = vmatpush1.msra.mxu0 0.0
    %521 = vmatprep.subr.mxu0 0.0
    %522 = vmatpush1.msra.mxu0 0.0
    %523 = vmatprep.subr.mxu0 0.0
    %524 = vmatpush1.msra.mxu0 0.0
    %525 = vmatprep.subr.mxu0 0.0
    %526 = vmatpush1.msra.mxu0 0.0
    %527 = vmatprep.subr.mxu0 0.0
    %528 = vmatpush1.msra.mxu0 0.0
    %529 = vmatprep.subr.mxu0 0.0
    %530 = vmatpush1.msra.mxu0 0.0
    %531 = vmatprep.subr.mxu0 0.0
    %532 = vmatpush1.msra.mxu0 0.0
    %533 = vmatprep.subr.mxu0 0.0
    %534 = vmatpush1.msra.mxu0 %v502
    %535 = vmatprep.subr.mxu0 0.0
    %536 = vmatpush1.msra.mxu0 %v501
    %537 = vmatprep.subr.mxu0 0.0
    %538 = vmatpush1.msra.mxu0 %v500
    %539 = vmatprep.subr.mxu0 0.0
    %540 = vmatpush1.msra.mxu0 %v499
    %541 = vmatprep.subr.mxu0 0.0
    %542 = vmatpush2.msra.mxu0 0.0
    %543 = vmatprep.subr.mxu0 0.0
    %544 = vmatpush2.msra.mxu0 0.0
    %545 = vmatprep.subr.mxu0 0.0
    %546 = vmatpush2.msra.mxu0 0.0
    %547 = vmatprep.subr.mxu0 0.0
    %548 = vmatpush2.msra.mxu0 0.0
    %549 = vmatprep.subr.mxu0 0.0
    %550 = vmatpush2.msra.mxu0 0.0
    %551 = vmatprep.subr.mxu0 0.0
    %552 = vmatpush2.msra.mxu0 0.0
    %553 = vmatprep.subr.mxu0 0.0
    %554 = vmatpush2.msra.mxu0 0.0
    %555 = vmatprep.subr.mxu0 0.0
    %556 = vmatpush2.msra.mxu0 0.0
    %557 = vmatprep.subr.mxu0 0.0
    %558 = vmatpush2.msra.mxu0 0.0
    %559 = vmatprep.subr.mxu0 0.0
    %560 = vmatpush2.msra.mxu0 0.0
    %561 = vmatprep.subr.mxu0 0.0
    %562 = vmatpush2.msra.mxu0 0.0
    %563 = vmatprep.subr.mxu0 0.0
    %564 = vmatpush2.msra.mxu0 0.0
    %565 = vmatprep.subr.mxu0 0.0
    %566 = vmatpush2.msra.mxu0 0.0
    %567 = vmatprep.subr.mxu0 0.0
    %568 = vmatpush2.msra.mxu0 0.0
    %569 = vmatprep.subr.mxu0 0.0
    %570 = vmatpush2.msra.mxu0 0.0
    %571 = vmatprep.subr.mxu0 0.0
    %572 = vmatpush2.msra.mxu0 0.0
    %573 = vmatprep.mubr.f32.mxu0 0.0
    %574 = vmatmul.mubr.f32.gmra.mxu0 %v504
    %v575 = vpop.f32.mrf.mxu0
    %v576 = vadd.f32 0.0, %v575
    %v577 = vpop.f32.mrf.mxu0
    %578 = vmatprep.mubr.f32.mxu0 0.0
    %579 = vmatmul.mubr.f32.gmra.mxu0 %v507
    %v580 = vpop.f32.mrf.mxu0
    %v581 = vadd.f32 0.0, %v580
    %v582 = vpop.f32.mrf.mxu0
    %583 = vdwg.mxu0
    %v584 = vadd.f32 %v494, %v576
    %v585 = vadd.f32 %v495, %v581
    %v586 = vld [vmem:[#allocation2 + $0x4] sm:$0xff]
    %v587 = vld [vmem:[#allocation2 + $0x14] sm:$0xff]
    %s588 = scalar_lea.vmem %s6, 128
    %v589 = vld [vmem:[%s588] sm:$0xff]
    %v590 = vld [vmem:[%s588 + $0x8] sm:$0xff]
    %v591 = vld [vmem:[%s588 + $0x10] sm:$0xff]
    %v592 = vld [vmem:[%s588 + $0x18] sm:$0xff]
    %v594 = vsel %vm228, %v586, 0
    %v597 = vsel %vm228, %v587, 0
    %599 = vmatprep.subr.mxu0 0.0
    %600 = vmatpush1.msra.mxu0 0.0
    %601 = vmatprep.subr.mxu0 0.0
    %602 = vmatpush1.msra.mxu0 0.0
    %603 = vmatprep.subr.mxu0 0.0
    %604 = vmatpush1.msra.mxu0 0.0
    %605 = vmatprep.subr.mxu0 0.0
    %606 = vmatpush1.msra.mxu0 0.0
    %607 = vmatprep.subr.mxu0 0.0
    %608 = vmatpush1.msra.mxu0 0.0
    %609 = vmatprep.subr.mxu0 0.0
    %610 = vmatpush1.msra.mxu0 0.0
    %611 = vmatprep.subr.mxu0 0.0
    %612 = vmatpush1.msra.mxu0 0.0
    %613 = vmatprep.subr.mxu0 0.0
    %614 = vmatpush1.msra.mxu0 0.0
    %615 = vmatprep.subr.mxu0 0.0
    %616 = vmatpush1.msra.mxu0 0.0
    %617 = vmatprep.subr.mxu0 0.0
    %618 = vmatpush1.msra.mxu0 0.0
    %619 = vmatprep.subr.mxu0 0.0
    %620 = vmatpush1.msra.mxu0 0.0
    %621 = vmatprep.subr.mxu0 0.0
    %622 = vmatpush1.msra.mxu0 0.0
    %623 = vmatprep.subr.mxu0 0.0
    %624 = vmatpush1.msra.mxu0 %v592
    %625 = vmatprep.subr.mxu0 0.0
    %626 = vmatpush1.msra.mxu0 %v591
    %627 = vmatprep.subr.mxu0 0.0
    %628 = vmatpush1.msra.mxu0 %v590
    %629 = vmatprep.subr.mxu0 0.0
    %630 = vmatpush1.msra.mxu0 %v589
    %631 = vmatprep.subr.mxu0 0.0
    %632 = vmatpush2.msra.mxu0 0.0
    %633 = vmatprep.subr.mxu0 0.0
    %634 = vmatpush2.msra.mxu0 0.0
    %635 = vmatprep.subr.mxu0 0.0
    %636 = vmatpush2.msra.mxu0 0.0
    %637 = vmatprep.subr.mxu0 0.0
    %638 = vmatpush2.msra.mxu0 0.0
    %639 = vmatprep.subr.mxu0 0.0
    %640 = vmatpush2.msra.mxu0 0.0
    %641 = vmatprep.subr.mxu0 0.0
    %642 = vmatpush2.msra.mxu0 0.0
    %643 = vmatprep.subr.mxu0 0.0
    %644 = vmatpush2.msra.mxu0 0.0
    %645 = vmatprep.subr.mxu0 0.0
    %646 = vmatpush2.msra.mxu0 0.0
    %647 = vmatprep.subr.mxu0 0.0
    %648 = vmatpush2.msra.mxu0 0.0
    %649 = vmatprep.subr.mxu0 0.0
    %650 = vmatpush2.msra.mxu0 0.0
    %651 = vmatprep.subr.mxu0 0.0
    %652 = vmatpush2.msra.mxu0 0.0
    %653 = vmatprep.subr.mxu0 0.0
    %654 = vmatpush2.msra.mxu0 0.0
    %655 = vmatprep.subr.mxu0 0.0
    %656 = vmatpush2.msra.mxu0 0.0
    %657 = vmatprep.subr.mxu0 0.0
    %658 = vmatpush2.msra.mxu0 0.0
    %659 = vmatprep.subr.mxu0 0.0
    %660 = vmatpush2.msra.mxu0 0.0
    %661 = vmatprep.subr.mxu0 0.0
    %662 = vmatpush2.msra.mxu0 0.0
    %663 = vmatprep.mubr.f32.mxu0 0.0
    %664 = vmatmul.mubr.f32.gmra.mxu0 %v594
    %v665 = vpop.f32.mrf.mxu0
    %v666 = vadd.f32 0.0, %v665
    %v667 = vpop.f32.mrf.mxu0
    %668 = vmatprep.mubr.f32.mxu0 0.0
    %669 = vmatmul.mubr.f32.gmra.mxu0 %v597
    %v670 = vpop.f32.mrf.mxu0
    %v671 = vadd.f32 0.0, %v670
    %v672 = vpop.f32.mrf.mxu0
    %673 = vdwg.mxu0
    %v674 = vadd.f32 %v584, %v666
    %v675 = vadd.f32 %v585, %v671
    %v676 = vld [vmem:[%s7] sm:$0x1]
    %v678 = vlaneseq
    %v679 = vshrl.u32 %v678, 7
    %v680 = vsub.s32 0, %v679
    %v681 = vrot.slane %v676, %v680
    %v683 = vadd.f32 %v674, %v681
    %v684 = vadd.f32 %v675, %v681
    %v685 = vld [vmem:[%s8] sm:$0x1]
    %v686 = vld [vmem:[%s9] sm:$0x1]
    %v687 = vsel %vm228, %v683, 0.0
    %v688 = vsel %vm228, %v684, 0.0
    %v689 = vadd.f32 %v687, %v688
    %v690 = vrot.slane %v689, 4
    %v691 = vadd.f32 %v689, %v690
    %v692 = vrot.slane %v691, 2
    %v693 = vadd.f32 %v691, %v692
    %v694 = vrot.slane %v693, 1
    %v695 = vadd.f32 %v693, %v694
    %v696 = vrcp.pop 16.0
    %v697 = vmul.f32 %v695, %v696
    %v698 = vsub.f32 %v683, %v697
    %v699 = vsub.f32 %v684, %v697
    %v700 = vmul.f32 %v698, %v698
    %v701 = vmul.f32 %v699, %v699
    %v702 = vsel %vm228, %v700, 0.0
    %v703 = vsel %vm228, %v701, 0.0
    %v704 = vadd.f32 %v702, %v703
    %v705 = vrot.slane %v704, 4
    %v706 = vadd.f32 %v704, %v705
    %v707 = vrot.slane %v706, 2
    %v708 = vadd.f32 %v706, %v707
    %v709 = vrot.slane %v708, 1
    %v710 = vadd.f32 %v708, %v709
    %v711 = vmul.f32 %v710, %v696
    %v712 = vadd.f32 %v711, 1e-05
    %v713 = vrsqrt.pop %v712
    %v714 = vmul.f32 %v698, %v713
    %v715 = vmul.f32 %v699, %v713
    %v717 = vlaneseq
    %v718 = vshrl.u32 %v717, 7
    %v719 = vsub.s32 0, %v718
    %v720 = vrot.slane %v685, %v719
    %v722 = vmul.f32 %v714, %v720
    %v723 = vmul.f32 %v715, %v720
    %v725 = vlaneseq
    %v726 = vshrl.u32 %v725, 7
    %v727 = vsub.s32 0, %v726
    %v728 = vrot.slane %v686, %v727
    %v730 = vadd.f32 %v722, %v728
    %v731 = vadd.f32 %v723, %v728
    %v732 = vmax.f32 %v730, 0.0
    %v733 = vmax.f32 %v731, 0.0
    %v734 = vadd.f32 %v732, %v221
    %v735 = vadd.f32 %v733, %v222
    %v736 = vsel %vm228, %v734, 0.0
    %v737 = vsel %vm228, %v735, 0.0
    %v738 = vadd.f32 %v736, %v737
    %v739 = vrot.slane %v738, 4
    %v740 = vadd.f32 %v738, %v739
    %v741 = vrot.slane %v740, 2
    %v742 = vadd.f32 %v740, %v741
    %v743 = vrot.slane %v742, 1
    %v744 = vadd.f32 %v742, %v743
    %v745 = vmul.f32 %v744, %v696
    %v746 = vsub.f32 %v734, %v745
    %v747 = vsub.f32 %v735, %v745
    %v748 = vmul.f32 %v746, %v746
    %v749 = vmul.f32 %v747, %v747
    %v750 = vsel %vm228, %v748, 0.0
    %v751 = vsel %vm228, %v749, 0.0
    %v752 = vadd.f32 %v750, %v751
    %v753 = vrot.slane %v752, 4
    %v754 = vadd.f32 %v752, %v753
    %v755 = vrot.slane %v754, 2
    %v756 = vadd.f32 %v754, %v755
    %v757 = vrot.slane %v756, 1
    %v758 = vadd.f32 %v756, %v757
    %v759 = vmul.f32 %v758, %v696
    %v760 = vadd.f32 %v759, 1e-05
    %v761 = vrsqrt.pop %v760
    %v762 = vmul.f32 %v746, %v761
    %v763 = vmul.f32 %v747, %v761
    %v764 = vmul.f32 %v762, %v720
    %v765 = vmul.f32 %v763, %v720
    %v766 = vadd.f32 %v764, %v728
    %v767 = vadd.f32 %v765, %v728
    %v768 = vmax.f32 %v766, 0.0
    %v769 = vmax.f32 %v767, 0.0
    %v770 = vld [vmem:[%s10] sm:$0xff]
    %v771 = vld [vmem:[%s10 + $0x8] sm:$0xff]
    %v772 = vld [vmem:[%s10 + $0x10] sm:$0xff]
    %v773 = vld [vmem:[%s10 + $0x18] sm:$0xff]
    %v774 = vld [vmem:[%s11] sm:$0x1]
    %v776 = vlaneseq
    %v777 = vshrl.u32 %v776, 7
    %v778 = vsub.s32 0, %v777
    %v779 = vrot.slane %v774, %v778
    %v782 = vsel %vm228, %v768, 0
    %v785 = vsel %vm228, %v769, 0
    %787 = vmatprep.subr.mxu0 0.0
    %788 = vmatpush1.msra.mxu0 0.0
    %789 = vmatprep.subr.mxu0 0.0
    %790 = vmatpush1.msra.mxu0 0.0
    %791 = vmatprep.subr.mxu0 0.0
    %792 = vmatpush1.msra.mxu0 0.0
    %793 = vmatprep.subr.mxu0 0.0
    %794 = vmatpush1.msra.mxu0 0.0
    %795 = vmatprep.subr.mxu0 0.0
    %796 = vmatpush1.msra.mxu0 0.0
    %797 = vmatprep.subr.mxu0 0.0
    %798 = vmatpush1.msra.mxu0 0.0
    %799 = vmatprep.subr.mxu0 0.0
    %800 = vmatpush1.msra.mxu0 0.0
    %801 = vmatprep.subr.mxu0 0.0
    %802 = vmatpush1.msra.mxu0 0.0
    %803 = vmatprep.subr.mxu0 0.0
    %804 = vmatpush1.msra.mxu0 0.0
    %805 = vmatprep.subr.mxu0 0.0
    %806 = vmatpush1.msra.mxu0 0.0
    %807 = vmatprep.subr.mxu0 0.0
    %808 = vmatpush1.msra.mxu0 0.0
    %809 = vmatprep.subr.mxu0 0.0
    %810 = vmatpush1.msra.mxu0 0.0
    %811 = vmatprep.subr.mxu0 0.0
    %812 = vmatpush1.msra.mxu0 %v773
    %813 = vmatprep.subr.mxu0 0.0
    %814 = vmatpush1.msra.mxu0 %v772
    %815 = vmatprep.subr.mxu0 0.0
    %816 = vmatpush1.msra.mxu0 %v771
    %817 = vmatprep.subr.mxu0 0.0
    %818 = vmatpush1.msra.mxu0 %v770
    %819 = vmatprep.subr.mxu0 0.0
    %820 = vmatpush2.msra.mxu0 0.0
    %821 = vmatprep.subr.mxu0 0.0
    %822 = vmatpush2.msra.mxu0 0.0
    %823 = vmatprep.subr.mxu0 0.0
    %824 = vmatpush2.msra.mxu0 0.0
    %825 = vmatprep.subr.mxu0 0.0
    %826 = vmatpush2.msra.mxu0 0.0
    %827 = vmatprep.subr.mxu0 0.0
    %828 = vmatpush2.msra.mxu0 0.0
    %829 = vmatprep.subr.mxu0 0.0
    %830 = vmatpush2.msra.mxu0 0.0
    %831 = vmatprep.subr.mxu0 0.0
    %832 = vmatpush2.msra.mxu0 0.0
    %833 = vmatprep.subr.mxu0 0.0
    %834 = vmatpush2.msra.mxu0 0.0
    %835 = vmatprep.subr.mxu0 0.0
    %836 = vmatpush2.msra.mxu0 0.0
    %837 = vmatprep.subr.mxu0 0.0
    %838 = vmatpush2.msra.mxu0 0.0
    %839 = vmatprep.subr.mxu0 0.0
    %840 = vmatpush2.msra.mxu0 0.0
    %841 = vmatprep.subr.mxu0 0.0
    %842 = vmatpush2.msra.mxu0 0.0
    %843 = vmatprep.subr.mxu0 0.0
    %844 = vmatpush2.msra.mxu0 0.0
    %845 = vmatprep.subr.mxu0 0.0
    %846 = vmatpush2.msra.mxu0 0.0
    %847 = vmatprep.subr.mxu0 0.0
    %848 = vmatpush2.msra.mxu0 0.0
    %849 = vmatprep.subr.mxu0 0.0
    %850 = vmatpush2.msra.mxu0 0.0
    %851 = vmatprep.mubr.f32.mxu0 0.0
    %852 = vmatmul.mubr.f32.gmra.mxu0 %v782
    %v853 = vpop.f32.mrf.mxu0
    %v854 = vadd.f32 %v779, %v853
    %v855 = vpop.f32.mrf.mxu0
    %856 = vmatprep.mubr.f32.mxu0 0.0
    %857 = vmatmul.mubr.f32.gmra.mxu0 %v785
    %v858 = vpop.f32.mrf.mxu0
    %v859 = vadd.f32 %v779, %v858
    %v860 = vpop.f32.mrf.mxu0
    %861 = vdwg.mxu0
    %v862 = vld [vmem:[%s12] sm:$0xff]
    %v863 = vld [vmem:[%s12 + $0x8] sm:$0xff]
    %v864 = vld [vmem:[%s12 + $0x10] sm:$0xff]
    %v865 = vld [vmem:[%s12 + $0x18] sm:$0xff]
    %868 = vrot.lane.b32.xlu0 %v854, 96
    %v869 = vpop.permute.xlu0 %868
    %870 = vrot.lane.b32.xlu0 %v859, 96
    %v871 = vpop.permute.xlu0 %870
    %vm872 = vcmask 64512
    %v873 = vsel %vm872, %v854, 0
    %v875 = vsel %vm872, %v859, 0
    %v877 = vsel %vm872, %v869, 0
    %v879 = vsel %vm872, %v871, 0
    %881 = vmatprep.subr.mxu0 0.0
    %882 = vmatpush1.xpose.msra.mxu0 0.0
    %883 = vmatprep.subr.mxu0 0.0
    %884 = vmatpush1.xpose.msra.mxu0 0.0
    %885 = vmatprep.subr.mxu0 0.0
    %886 = vmatpush1.xpose.msra.mxu0 0.0
    %887 = vmatprep.subr.mxu0 0.0
    %888 = vmatpush1.xpose.msra.mxu0 0.0
    %889 = vmatprep.subr.mxu0 0.0
    %890 = vmatpush1.xpose.msra.mxu0 0.0
    %891 = vmatprep.subr.mxu0 0.0
    %892 = vmatpush1.xpose.msra.mxu0 0.0
    %893 = vmatprep.subr.mxu0 0.0
    %894 = vmatpush1.xpose.msra.mxu0 0.0
    %895 = vmatprep.subr.mxu0 0.0
    %896 = vmatpush1.xpose.msra.mxu0 0.0
    %897 = vmatprep.subr.mxu0 0.0
    %898 = vmatpush1.xpose.msra.mxu0 0.0
    %899 = vmatprep.subr.mxu0 0.0
    %900 = vmatpush1.xpose.msra.mxu0 0.0
    %901 = vmatprep.subr.mxu0 0.0
    %902 = vmatpush1.xpose.msra.mxu0 0.0
    %903 = vmatprep.subr.mxu0 0.0
    %904 = vmatpush1.xpose.msra.mxu0 0.0
    %905 = vmatprep.subr.mxu0 0.0
    %906 = vmatpush1.xpose.msra.mxu0 0.0
    %907 = vmatprep.subr.mxu0 0.0
    %908 = vmatpush1.xpose.msra.mxu0 0.0
    %909 = vmatprep.subr.mxu0 0.0
    %910 = vmatpush1.xpose.msra.mxu0 %v879
    %911 = vmatprep.subr.mxu0 0.0
    %912 = vmatpush1.xpose.msra.mxu0 %v877
    %913 = vmatprep.subr.mxu0 0.0
    %914 = vmatpush2.xpose.msra.mxu0 0.0
    %915 = vmatprep.subr.mxu0 0.0
    %916 = vmatpush2.xpose.msra.mxu0 0.0
    %917 = vmatprep.subr.mxu0 0.0
    %918 = vmatpush2.xpose.msra.mxu0 0.0
    %919 = vmatprep.subr.mxu0 0.0
    %920 = vmatpush2.xpose.msra.mxu0 0.0
    %921 = vmatprep.subr.mxu0 0.0
    %922 = vmatpush2.xpose.msra.mxu0 0.0
    %923 = vmatprep.subr.mxu0 0.0
    %924 = vmatpush2.xpose.msra.mxu0 0.0
    %925 = vmatprep.subr.mxu0 0.0
    %926 = vmatpush2.xpose.msra.mxu0 0.0
    %927 = vmatprep.subr.mxu0 0.0
    %928 = vmatpush2.xpose.msra.mxu0 0.0
    %929 = vmatprep.subr.mxu0 0.0
    %930 = vmatpush2.xpose.msra.mxu0 0.0
    %931 = vmatprep.subr.mxu0 0.0
    %932 = vmatpush2.xpose.msra.mxu0 0.0
    %933 = vmatprep.subr.mxu0 0.0
    %934 = vmatpush2.xpose.msra.mxu0 0.0
    %935 = vmatprep.subr.mxu0 0.0
    %936 = vmatpush2.xpose.msra.mxu0 0.0
    %937 = vmatprep.subr.mxu0 0.0
    %938 = vmatpush2.xpose.msra.mxu0 0.0
    %939 = vmatprep.subr.mxu0 0.0
    %940 = vmatpush2.xpose.msra.mxu0 0.0
    %941 = vmatprep.subr.mxu0 0.0
    %942 = vmatpush2.xpose.msra.mxu0 0.0
    %943 = vmatprep.subr.mxu0 0.0
    %944 = vmatpush2.xpose.msra.mxu0 0.0
    %945 = vmatprep.mubr.f32.mxu0 0.0
    %946 = vmatmul.mubr.f32.gmra.mxu0 %v873
    %v947 = vpop.f32.mrf.mxu0
    %v948 = vadd.f32 0.0, %v947
    %v949 = vpop.f32.mrf.mxu0
    %950 = vmatprep.mubr.f32.mxu0 0.0
    %951 = vmatmul.mubr.f32.gmra.mxu0 %v875
    %v952 = vpop.f32.mrf.mxu0
    %v953 = vadd.f32 0.0, %v952
    %v954 = vpop.f32.mrf.mxu0
    %955 = vdwg.mxu0
    %v956 = vmul.f32 %v948, 0.35355338
    %v957 = vmul.f32 %v953, 0.35355338
    %v958 = vadd.f32 %v956, %v114
    %v959 = vadd.f32 %v957, %v115
    %vm960 = vcmask 130048
    %v961 = vsel %vm960, %v958, -inf
    %962 = vmax.xlane.f32.xlu0 %v961
    %v963 = vpop.xlane.xlu0 %962
    %v964 = vsel %vm960, %v959, -inf
    %965 = vmax.xlane.f32.xlu0 %v964
    %v966 = vpop.xlane.xlu0 %965
    %v967 = vsub.f32 %v958, %v963
    %v968 = vsub.f32 %v959, %v966
    %v969 = vmul.f32 %v967, 1.442695
    %v970 = vpow.pop %v969
    %v971 = vmul.f32 %v968, 1.442695
    %v972 = vpow.pop %v971
    %v973 = vsel %vm960, %v970, 0.0
    %974 = vadd.xlane.f32.xlu0 %v973
    %v975 = vpop.xlane.xlu0 %974
    %v976 = vsel %vm960, %v972, 0.0
    %977 = vadd.xlane.f32.xlu0 %v976
    %v978 = vpop.xlane.xlu0 %977
    %v979 = vrcp.pop %v975
    %v980 = vmul.f32 %v970, %v979
    %v981 = vrcp.pop %v978
    %v982 = vmul.f32 %v972, %v981
    %983 = vrot.lane.b32.xlu0 %v854, 64
    %v984 = vpop.permute.xlu0 %983
    %985 = vrot.lane.b32.xlu0 %v859, 64
    %v986 = vpop.permute.xlu0 %985
    %v990 = vsel %vm960, %v980, 0
    %v993 = vsel %vm960, %v982, 0
    %995 = vmatprep.subr.mxu0 0.0
    %996 = vmatpush1.msra.mxu0 0.0
    %997 = vmatprep.subr.mxu0 0.0
    %998 = vmatpush1.msra.mxu0 0.0
    %999 = vmatprep.subr.mxu0 0.0
    %1000 = vmatpush1.msra.mxu0 0.0
    %1001 = vmatprep.subr.mxu0 0.0
    %1002 = vmatpush1.msra.mxu0 0.0
    %1003 = vmatprep.subr.mxu0 0.0
    %1004 = vmatpush1.msra.mxu0 0.0
    %1005 = vmatprep.subr.mxu0 0.0
    %1006 = vmatpush1.msra.mxu0 0.0
    %1007 = vmatprep.subr.mxu0 0.0
    %1008 = vmatpush1.msra.mxu0 0.0
    %1009 = vmatprep.subr.mxu0 0.0
    %1010 = vmatpush1.msra.mxu0 0.0
    %1011 = vmatprep.subr.mxu0 0.0
    %1012 = vmatpush1.msra.mxu0 0.0
    %1013 = vmatprep.subr.mxu0 0.0
    %1014 = vmatpush1.msra.mxu0 0.0
    %1015 = vmatprep.subr.mxu0 0.0
    %1016 = vmatpush1.msra.mxu0 0.0
    %1017 = vmatprep.subr.mxu0 0.0
    %1018 = vmatpush1.msra.mxu0 0.0
    %1019 = vmatprep.subr.mxu0 0.0
    %1020 = vmatpush1.msra.mxu0 0.0
    %1021 = vmatprep.subr.mxu0 0.0
    %1022 = vmatpush1.msra.mxu0 0.0
    %1023 = vmatprep.subr.mxu0 0.0
    %1024 = vmatpush1.msra.mxu0 %v986
    %1025 = vmatprep.subr.mxu0 0.0
    %1026 = vmatpush1.msra.mxu0 %v984
    %1027 = vmatprep.subr.mxu0 0.0
    %1028 = vmatpush2.msra.mxu0 0.0
    %1029 = vmatprep.subr.mxu0 0.0
    %1030 = vmatpush2.msra.mxu0 0.0
    %1031 = vmatprep.subr.mxu0 0.0
    %1032 = vmatpush2.msra.mxu0 0.0
    %1033 = vmatprep.subr.mxu0 0.0
    %1034 = vmatpush2.msra.mxu0 0.0
    %1035 = vmatprep.subr.mxu0 0.0
    %1036 = vmatpush2.msra.mxu0 0.0
    %1037 = vmatprep.subr.mxu0 0.0
    %1038 = vmatpush2.msra.mxu0 0.0
    %1039 = vmatprep.subr.mxu0 0.0
    %1040 = vmatpush2.msra.mxu0 0.0
    %1041 = vmatprep.subr.mxu0 0.0
    %1042 = vmatpush2.msra.mxu0 0.0
    %1043 = vmatprep.subr.mxu0 0.0
    %1044 = vmatpush2.msra.mxu0 0.0
    %1045 = vmatprep.subr.mxu0 0.0
    %1046 = vmatpush2.msra.mxu0 0.0
    %1047 = vmatprep.subr.mxu0 0.0
    %1048 = vmatpush2.msra.mxu0 0.0
    %1049 = vmatprep.subr.mxu0 0.0
    %1050 = vmatpush2.msra.mxu0 0.0
    %1051 = vmatprep.subr.mxu0 0.0
    %1052 = vmatpush2.msra.mxu0 0.0
    %1053 = vmatprep.subr.mxu0 0.0
    %1054 = vmatpush2.msra.mxu0 0.0
    %1055 = vmatprep.subr.mxu0 0.0
    %1056 = vmatpush2.msra.mxu0 0.0
    %1057 = vmatprep.subr.mxu0 0.0
    %1058 = vmatpush2.msra.mxu0 0.0
    %1059 = vmatprep.mubr.f32.mxu0 0.0
    %1060 = vmatmul.mubr.f32.gmra.mxu0 %v990
    %v1061 = vpop.f32.mrf.mxu0
    %v1062 = vadd.f32 0.0, %v1061
    %v1063 = vpop.f32.mrf.mxu0
    %1064 = vmatprep.mubr.f32.mxu0 0.0
    %1065 = vmatmul.mubr.f32.gmra.mxu0 %v993
    %v1066 = vpop.f32.mrf.mxu0
    %v1067 = vadd.f32 0.0, %v1066
    %v1068 = vpop.f32.mrf.mxu0
    %1069 = vdwg.mxu0
    %1070 = vrot.lane.b32.xlu0 %v854, 120
    %v1071 = vpop.permute.xlu0 %1070
    %1072 = vrot.lane.b32.xlu0 %v859, 120
    %v1073 = vpop.permute.xlu0 %1072
    %1074 = vrot.lane.b32.xlu0 %v854, 88
    %v1075 = vpop.permute.xlu0 %1074
    %1076 = vrot.lane.b32.xlu0 %v859, 88
    %v1077 = vpop.permute.xlu0 %1076
    %v1078 = vsel %vm872, %v1071, 0
    %v1080 = vsel %vm872, %v1073, 0
    %v1082 = vsel %vm872, %v1075, 0
    %v1084 = vsel %vm872, %v1077, 0
    %1086 = vmatprep.subr.mxu0 0.0
    %1087 = vmatpush1.xpose.msra.mxu0 0.0
    %1088 = vmatprep.subr.mxu0 0.0
    %1089 = vmatpush1.xpose.msra.mxu0 0.0
    %1090 = vmatprep.subr.mxu0 0.0
    %1091 = vmatpush1.xpose.msra.mxu0 0.0
    %1092 = vmatprep.subr.mxu0 0.0
    %1093 = vmatpush1.xpose.msra.mxu0 0.0
    %1094 = vmatprep.subr.mxu0 0.0
    %1095 = vmatpush1.xpose.msra.mxu0 0.0
    %1096 = vmatprep.subr.mxu0 0.0
    %1097 = vmatpush1.xpose.msra.mxu0 0.0
    %1098 = vmatprep.subr.mxu0 0.0
    %1099 = vmatpush1.xpose.msra.mxu0 0.0
    %1100 = vmatprep.subr.mxu0 0.0
    %1101 = vmatpush1.xpose.msra.mxu0 0.0
    %1102 = vmatprep.subr.mxu0 0.0
    %1103 = vmatpush1.xpose.msra.mxu0 0.0
    %1104 = vmatprep.subr.mxu0 0.0
    %1105 = vmatpush1.xpose.msra.mxu0 0.0
    %1106 = vmatprep.subr.mxu0 0.0
    %1107 = vmatpush1.xpose.msra.mxu0 0.0
    %1108 = vmatprep.subr.mxu0 0.0
    %1109 = vmatpush1.xpose.msra.mxu0 0.0
    %1110 = vmatprep.subr.mxu0 0.0
    %1111 = vmatpush1.xpose.msra.mxu0 0.0
    %1112 = vmatprep.subr.mxu0 0.0
    %1113 = vmatpush1.xpose.msra.mxu0 0.0
    %1114 = vmatprep.subr.mxu0 0.0
    %1115 = vmatpush1.xpose.msra.mxu0 %v1084
    %1116 = vmatprep.subr.mxu0 0.0
    %1117 = vmatpush1.xpose.msra.mxu0 %v1082
    %1118 = vmatprep.subr.mxu0 0.0
    %1119 = vmatpush2.xpose.msra.mxu0 0.0
    %1120 = vmatprep.subr.mxu0 0.0
    %1121 = vmatpush2.xpose.msra.mxu0 0.0
    %1122 = vmatprep.subr.mxu0 0.0
    %1123 = vmatpush2.xpose.msra.mxu0 0.0
    %1124 = vmatprep.subr.mxu0 0.0
    %1125 = vmatpush2.xpose.msra.mxu0 0.0
    %1126 = vmatprep.subr.mxu0 0.0
    %1127 = vmatpush2.xpose.msra.mxu0 0.0
    %1128 = vmatprep.subr.mxu0 0.0
    %1129 = vmatpush2.xpose.msra.mxu0 0.0
    %1130 = vmatprep.subr.mxu0 0.0
    %1131 = vmatpush2.xpose.msra.mxu0 0.0
    %1132 = vmatprep.subr.mxu0 0.0
    %1133 = vmatpush2.xpose.msra.mxu0 0.0
    %1134 = vmatprep.subr.mxu0 0.0
    %1135 = vmatpush2.xpose.msra.mxu0 0.0
    %1136 = vmatprep.subr.mxu0 0.0
    %1137 = vmatpush2.xpose.msra.mxu0 0.0
    %1138 = vmatprep.subr.mxu0 0.0
    %1139 = vmatpush2.xpose.msra.mxu0 0.0
    %1140 = vmatprep.subr.mxu0 0.0
    %1141 = vmatpush2.xpose.msra.mxu0 0.0
    %1142 = vmatprep.subr.mxu0 0.0
    %1143 = vmatpush2.xpose.msra.mxu0 0.0
    %1144 = vmatprep.subr.mxu0 0.0
    %1145 = vmatpush2.xpose.msra.mxu0 0.0
    %1146 = vmatprep.subr.mxu0 0.0
    %1147 = vmatpush2.xpose.msra.mxu0 0.0
    %1148 = vmatprep.subr.mxu0 0.0
    %1149 = vmatpush2.xpose.msra.mxu0 0.0
    %1150 = vmatprep.mubr.f32.mxu0 0.0
    %1151 = vmatmul.mubr.f32.gmra.mxu0 %v1078
    %v1152 = vpop.f32.mrf.mxu0
    %v1153 = vadd.f32 0.0, %v1152
    %v1154 = vpop.f32.mrf.mxu0
    %1155 = vmatprep.mubr.f32.mxu0 0.0
    %1156 = vmatmul.mubr.f32.gmra.mxu0 %v1080
    %v1157 = vpop.f32.mrf.mxu0
    %v1158 = vadd.f32 0.0, %v1157
    %v1159 = vpop.f32.mrf.mxu0
    %1160 = vdwg.mxu0
    %v1161 = vmul.f32 %v1153, 0.35355338
    %v1162 = vmul.f32 %v1158, 0.35355338
    %v1163 = vadd.f32 %v1161, %v114
    %v1164 = vadd.f32 %v1162, %v115
    %v1165 = vsel %vm960, %v1163, -inf
    %1166 = vmax.xlane.f32.xlu0 %v1165
    %v1167 = vpop.xlane.xlu0 %1166
    %v1168 = vsel %vm960, %v1164, -inf
    %1169 = vmax.xlane.f32.xlu0 %v1168
    %v1170 = vpop.xlane.xlu0 %1169
    %v1171 = vsub.f32 %v1163, %v1167
    %v1172 = vsub.f32 %v1164, %v1170
    %v1173 = vmul.f32 %v1171, 1.442695
    %v1174 = vpow.pop %v1173
    %v1175 = vmul.f32 %v1172, 1.442695
    %v1176 = vpow.pop %v1175
    %v1177 = vsel %vm960, %v1174, 0.0
    %1178 = vadd.xlane.f32.xlu0 %v1177
    %v1179 = vpop.xlane.xlu0 %1178
    %v1180 = vsel %vm960, %v1176, 0.0
    %1181 = vadd.xlane.f32.xlu0 %v1180
    %v1182 = vpop.xlane.xlu0 %1181
    %v1183 = vrcp.pop %v1179
    %v1184 = vmul.f32 %v1174, %v1183
    %v1185 = vrcp.pop %v1182
    %v1186 = vmul.f32 %v1176, %v1185
    %1187 = vrot.lane.b32.xlu0 %v854, 56
    %v1188 = vpop.permute.xlu0 %1187
    %1189 = vrot.lane.b32.xlu0 %v859, 56
    %v1190 = vpop.permute.xlu0 %1189
    %v1194 = vsel %vm960, %v1184, 0
    %v1197 = vsel %vm960, %v1186, 0
    %1199 = vmatprep.subr.mxu0 0.0
    %1200 = vmatpush1.msra.mxu0 0.0
    %1201 = vmatprep.subr.mxu0 0.0
    %1202 = vmatpush1.msra.mxu0 0.0
    %1203 = vmatprep.subr.mxu0 0.0
    %1204 = vmatpush1.msra.mxu0 0.0
    %1205 = vmatprep.subr.mxu0 0.0
    %1206 = vmatpush1.msra.mxu0 0.0
    %1207 = vmatprep.subr.mxu0 0.0
    %1208 = vmatpush1.msra.mxu0 0.0
    %1209 = vmatprep.subr.mxu0 0.0
    %1210 = vmatpush1.msra.mxu0 0.0
    %1211 = vmatprep.subr.mxu0 0.0
    %1212 = vmatpush1.msra.mxu0 0.0
    %1213 = vmatprep.subr.mxu0 0.0
    %1214 = vmatpush1.msra.mxu0 0.0
    %1215 = vmatprep.subr.mxu0 0.0
    %1216 = vmatpush1.msra.mxu0 0.0
    %1217 = vmatprep.subr.mxu0 0.0
    %1218 = vmatpush1.msra.mxu0 0.0
    %1219 = vmatprep.subr.mxu0 0.0
    %1220 = vmatpush1.msra.mxu0 0.0
    %1221 = vmatprep.subr.mxu0 0.0
    %1222 = vmatpush1.msra.mxu0 0.0
    %1223 = vmatprep.subr.mxu0 0.0
    %1224 = vmatpush1.msra.mxu0 0.0
    %1225 = vmatprep.subr.mxu0 0.0
    %1226 = vmatpush1.msra.mxu0 0.0
    %1227 = vmatprep.subr.mxu0 0.0
    %1228 = vmatpush1.msra.mxu0 %v1190
    %1229 = vmatprep.subr.mxu0 0.0
    %1230 = vmatpush1.msra.mxu0 %v1188
    %1231 = vmatprep.subr.mxu0 0.0
    %1232 = vmatpush2.msra.mxu0 0.0
    %1233 = vmatprep.subr.mxu0 0.0
    %1234 = vmatpush2.msra.mxu0 0.0
    %1235 = vmatprep.subr.mxu0 0.0
    %1236 = vmatpush2.msra.mxu0 0.0
    %1237 = vmatprep.subr.mxu0 0.0
    %1238 = vmatpush2.msra.mxu0 0.0
    %1239 = vmatprep.subr.mxu0 0.0
    %1240 = vmatpush2.msra.mxu0 0.0
    %1241 = vmatprep.subr.mxu0 0.0
    %1242 = vmatpush2.msra.mxu0 0.0
    %1243 = vmatprep.subr.mxu0 0.0
    %1244 = vmatpush2.msra.mxu0 0.0
    %1245 = vmatprep.subr.mxu0 0.0
    %1246 = vmatpush2.msra.mxu0 0.0
    %1247 = vmatprep.subr.mxu0 0.0
    %1248 = vmatpush2.msra.mxu0 0.0
    %1249 = vmatprep.subr.mxu0 0.0
    %1250 = vmatpush2.msra.mxu0 0.0
    %1251 = vmatprep.subr.mxu0 0.0
    %1252 = vmatpush2.msra.mxu0 0.0
    %1253 = vmatprep.subr.mxu0 0.0
    %1254 = vmatpush2.msra.mxu0 0.0
    %1255 = vmatprep.subr.mxu0 0.0
    %1256 = vmatpush2.msra.mxu0 0.0
    %1257 = vmatprep.subr.mxu0 0.0
    %1258 = vmatpush2.msra.mxu0 0.0
    %1259 = vmatprep.subr.mxu0 0.0
    %1260 = vmatpush2.msra.mxu0 0.0
    %1261 = vmatprep.subr.mxu0 0.0
    %1262 = vmatpush2.msra.mxu0 0.0
    %1263 = vmatprep.mubr.f32.mxu0 0.0
    %1264 = vmatmul.mubr.f32.gmra.mxu0 %v1194
    %v1265 = vpop.f32.mrf.mxu0
    %v1266 = vadd.f32 0.0, %v1265
    %v1267 = vpop.f32.mrf.mxu0
    %1268 = vmatprep.mubr.f32.mxu0 0.0
    %1269 = vmatmul.mubr.f32.gmra.mxu0 %v1197
    %v1270 = vpop.f32.mrf.mxu0
    %v1271 = vadd.f32 0.0, %v1270
    %v1272 = vpop.f32.mrf.mxu0
    %1273 = vdwg.mxu0
    %v1275 = vsel %vm872, %v1266, 0
    %v1278 = vsel %vm872, %v1271, 0
    %1280 = vmatprep.subr.mxu0 0.0
    %1281 = vmatpush1.msra.mxu0 0.0
    %1282 = vmatprep.subr.mxu0 0.0
    %1283 = vmatpush1.msra.mxu0 0.0
    %1284 = vmatprep.subr.mxu0 0.0
    %1285 = vmatpush1.msra.mxu0 0.0
    %1286 = vmatprep.subr.mxu0 0.0
    %1287 = vmatpush1.msra.mxu0 0.0
    %1288 = vmatprep.subr.mxu0 0.0
    %1289 = vmatpush1.msra.mxu0 0.0
    %1290 = vmatprep.subr.mxu0 0.0
    %1291 = vmatpush1.msra.mxu0 0.0
    %1292 = vmatprep.subr.mxu0 0.0
    %1293 = vmatpush1.msra.mxu0 0.0
    %1294 = vmatprep.subr.mxu0 0.0
    %1295 = vmatpush1.msra.mxu0 0.0
    %1296 = vmatprep.subr.mxu0 0.0
    %1297 = vmatpush1.msra.mxu0 0.0
    %1298 = vmatprep.subr.mxu0 0.0
    %1299 = vmatpush1.msra.mxu0 0.0
    %1300 = vmatprep.subr.mxu0 0.0
    %1301 = vmatpush1.msra.mxu0 0.0
    %1302 = vmatprep.subr.mxu0 0.0
    %1303 = vmatpush1.msra.mxu0 0.0
    %1304 = vmatprep.subr.mxu0 0.0
    %1305 = vmatpush1.msra.mxu0 0.0
    %1306 = vmatprep.subr.mxu0 0.0
    %1307 = vmatpush1.msra.mxu0 0.0
    %1308 = vmatprep.subr.mxu0 0.0
    %1309 = vmatpush1.msra.mxu0 0.0
    %1310 = vmatprep.subr.mxu0 0.0
    %1311 = vmatpush1.msra.mxu0 %v863
    %1312 = vmatprep.subr.mxu0 0.0
    %1313 = vmatpush2.msra.mxu0 0.0
    %1314 = vmatprep.subr.mxu0 0.0
    %1315 = vmatpush2.msra.mxu0 0.0
    %1316 = vmatprep.subr.mxu0 0.0
    %1317 = vmatpush2.msra.mxu0 0.0
    %1318 = vmatprep.subr.mxu0 0.0
    %1319 = vmatpush2.msra.mxu0 0.0
    %1320 = vmatprep.subr.mxu0 0.0
    %1321 = vmatpush2.msra.mxu0 0.0
    %1322 = vmatprep.subr.mxu0 0.0
    %1323 = vmatpush2.msra.mxu0 0.0
    %1324 = vmatprep.subr.mxu0 0.0
    %1325 = vmatpush2.msra.mxu0 0.0
    %1326 = vmatprep.subr.mxu0 0.0
    %1327 = vmatpush2.msra.mxu0 0.0
    %1328 = vmatprep.subr.mxu0 0.0
    %1329 = vmatpush2.msra.mxu0 0.0
    %1330 = vmatprep.subr.mxu0 0.0
    %1331 = vmatpush2.msra.mxu0 0.0
    %1332 = vmatprep.subr.mxu0 0.0
    %1333 = vmatpush2.msra.mxu0 0.0
    %1334 = vmatprep.subr.mxu0 0.0
    %1335 = vmatpush2.msra.mxu0 0.0
    %1336 = vmatprep.subr.mxu0 0.0
    %1337 = vmatpush2.msra.mxu0 0.0
    %1338 = vmatprep.subr.mxu0 0.0
    %1339 = vmatpush2.msra.mxu0 0.0
    %1340 = vmatprep.subr.mxu0 0.0
    %1341 = vmatpush2.msra.mxu0 0.0
    %1342 = vmatprep.subr.mxu0 0.0
    %1343 = vmatpush2.msra.mxu0 0.0
    %1344 = vmatprep.mubr.f32.mxu0 0.0
    %1345 = vmatmul.mubr.f32.gmra.mxu0 %v1275
    %v1346 = vpop.f32.mrf.mxu0
    %v1347 = vadd.f32 0.0, %v1346
    %v1348 = vpop.f32.mrf.mxu0
    %1349 = vmatprep.mubr.f32.mxu0 0.0
    %1350 = vmatmul.mubr.f32.gmra.mxu0 %v1278
    %v1351 = vpop.f32.mrf.mxu0
    %v1352 = vadd.f32 0.0, %v1351
    %v1353 = vpop.f32.mrf.mxu0
    %1354 = vdwg.mxu0
    %v1356 = vsel %vm872, %v1062, 0
    %v1359 = vsel %vm872, %v1067, 0
    %1361 = vmatprep.subr.mxu0 0.0
    %1362 = vmatpush1.msra.mxu0 0.0
    %1363 = vmatprep.subr.mxu0 0.0
    %1364 = vmatpush1.msra.mxu0 0.0
    %1365 = vmatprep.subr.mxu0 0.0
    %1366 = vmatpush1.msra.mxu0 0.0
    %1367 = vmatprep.subr.mxu0 0.0
    %1368 = vmatpush1.msra.mxu0 0.0
    %1369 = vmatprep.subr.mxu0 0.0
    %1370 = vmatpush1.msra.mxu0 0.0
    %1371 = vmatprep.subr.mxu0 0.0
    %1372 = vmatpush1.msra.mxu0 0.0
    %1373 = vmatprep.subr.mxu0 0.0
    %1374 = vmatpush1.msra.mxu0 0.0
    %1375 = vmatprep.subr.mxu0 0.0
    %1376 = vmatpush1.msra.mxu0 0.0
    %1377 = vmatprep.subr.mxu0 0.0
    %1378 = vmatpush1.msra.mxu0 0.0
    %1379 = vmatprep.subr.mxu0 0.0
    %1380 = vmatpush1.msra.mxu0 0.0
    %1381 = vmatprep.subr.mxu0 0.0
    %1382 = vmatpush1.msra.mxu0 0.0
    %1383 = vmatprep.subr.mxu0 0.0
    %1384 = vmatpush1.msra.mxu0 0.0
    %1385 = vmatprep.subr.mxu0 0.0
    %1386 = vmatpush1.msra.mxu0 0.0
    %1387 = vmatprep.subr.mxu0 0.0
    %1388 = vmatpush1.msra.mxu0 0.0
    %1389 = vmatprep.subr.mxu0 0.0
    %1390 = vmatpush1.msra.mxu0 0.0
    %1391 = vmatprep.subr.mxu0 0.0
    %1392 = vmatpush1.msra.mxu0 %v862
    %1393 = vmatprep.subr.mxu0 0.0
    %1394 = vmatpush2.msra.mxu0 0.0
    %1395 = vmatprep.subr.mxu0 0.0
    %1396 = vmatpush2.msra.mxu0 0.0
    %1397 = vmatprep.subr.mxu0 0.0
    %1398 = vmatpush2.msra.mxu0 0.0
    %1399 = vmatprep.subr.mxu0 0.0
    %1400 = vmatpush2.msra.mxu0 0.0
    %1401 = vmatprep.subr.mxu0 0.0
    %1402 = vmatpush2.msra.mxu0 0.0
    %1403 = vmatprep.subr.mxu0 0.0
    %1404 = vmatpush2.msra.mxu0 0.0
    %1405 = vmatprep.subr.mxu0 0.0
    %1406 = vmatpush2.msra.mxu0 0.0
    %1407 = vmatprep.subr.mxu0 0.0
    %1408 = vmatpush2.msra.mxu0 0.0
    %1409 = vmatprep.subr.mxu0 0.0
    %1410 = vmatpush2.msra.mxu0 0.0
    %1411 = vmatprep.subr.mxu0 0.0
    %1412 = vmatpush2.msra.mxu0 0.0
    %1413 = vmatprep.subr.mxu0 0.0
    %1414 = vmatpush2.msra.mxu0 0.0
    %1415 = vmatprep.subr.mxu0 0.0
    %1416 = vmatpush2.msra.mxu0 0.0
    %1417 = vmatprep.subr.mxu0 0.0
    %1418 = vmatpush2.msra.mxu0 0.0
    %1419 = vmatprep.subr.mxu0 0.0
    %1420 = vmatpush2.msra.mxu0 0.0
    %1421 = vmatprep.subr.mxu0 0.0
    %1422 = vmatpush2.msra.mxu0 0.0
    %1423 = vmatprep.subr.mxu0 0.0
    %1424 = vmatpush2.msra.mxu0 0.0
    %1425 = vmatprep.mubr.f32.mxu0 0.0
    %1426 = vmatmul.mubr.f32.gmra.mxu0 %v1356
    %v1427 = vpop.f32.mrf.mxu0
    %v1428 = vadd.f32 %v1347, %v1427
    %v1429 = vpop.f32.mrf.mxu0
    %1430 = vmatprep.mubr.f32.mxu0 0.0
    %1431 = vmatmul.mubr.f32.gmra.mxu0 %v1359
    %v1432 = vpop.f32.mrf.mxu0
    %v1433 = vadd.f32 %v1352, %v1432
    %v1434 = vpop.f32.mrf.mxu0
    %1435 = vdwg.mxu0
    %1436 = vrot.lane.b32.xlu0 %v854, 112
    %v1437 = vpop.permute.xlu0 %1436
    %1438 = vrot.lane.b32.xlu0 %v859, 112
    %v1439 = vpop.permute.xlu0 %1438
    %1440 = vrot.lane.b32.xlu0 %v854, 80
    %v1441 = vpop.permute.xlu0 %1440
    %1442 = vrot.lane.b32.xlu0 %v859, 80
    %v1443 = vpop.permute.xlu0 %1442
    %v1444 = vsel %vm872, %v1437, 0
    %v1446 = vsel %vm872, %v1439, 0
    %v1448 = vsel %vm872, %v1441, 0
    %v1450 = vsel %vm872, %v1443, 0
    %1452 = vmatprep.subr.mxu0 0.0
    %1453 = vmatpush1.xpose.msra.mxu0 0.0
    %1454 = vmatprep.subr.mxu0 0.0
    %1455 = vmatpush1.xpose.msra.mxu0 0.0
    %1456 = vmatprep.subr.mxu0 0.0
    %1457 = vmatpush1.xpose.msra.mxu0 0.0
    %1458 = vmatprep.subr.mxu0 0.0
    %1459 = vmatpush1.xpose.msra.mxu0 0.0
    %1460 = vmatprep.subr.mxu0 0.0
    %1461 = vmatpush1.xpose.msra.mxu0 0.0
    %1462 = vmatprep.subr.mxu0 0.0
    %1463 = vmatpush1.xpose.msra.mxu0 0.0
    %1464 = vmatprep.subr.mxu0 0.0
    %1465 = vmatpush1.xpose.msra.mxu0 0.0
    %1466 = vmatprep.subr.mxu0 0.0
    %1467 = vmatpush1.xpose.msra.mxu0 0.0
    %1468 = vmatprep.subr.mxu0 0.0
    %1469 = vmatpush1.xpose.msra.mxu0 0.0
    %1470 = vmatprep.subr.mxu0 0.0
    %1471 = vmatpush1.xpose.msra.mxu0 0.0
    %1472 = vmatprep.subr.mxu0 0.0
    %1473 = vmatpush1.xpose.msra.mxu0 0.0
    %1474 = vmatprep.subr.mxu0 0.0
    %1475 = vmatpush1.xpose.msra.mxu0 0.0
    %1476 = vmatprep.subr.mxu0 0.0
    %1477 = vmatpush1.xpose.msra.mxu0 0.0
    %1478 = vmatprep.subr.mxu0 0.0
    %1479 = vmatpush1.xpose.msra.mxu0 0.0
    %1480 = vmatprep.subr.mxu0 0.0
    %1481 = vmatpush1.xpose.msra.mxu0 %v1450
    %1482 = vmatprep.subr.mxu0 0.0
    %1483 = vmatpush1.xpose.msra.mxu0 %v1448
    %1484 = vmatprep.subr.mxu0 0.0
    %1485 = vmatpush2.xpose.msra.mxu0 0.0
    %1486 = vmatprep.subr.mxu0 0.0
    %1487 = vmatpush2.xpose.msra.mxu0 0.0
    %1488 = vmatprep.subr.mxu0 0.0
    %1489 = vmatpush2.xpose.msra.mxu0 0.0
    %1490 = vmatprep.subr.mxu0 0.0
    %1491 = vmatpush2.xpose.msra.mxu0 0.0
    %1492 = vmatprep.subr.mxu0 0.0
    %1493 = vmatpush2.xpose.msra.mxu0 0.0
    %1494 = vmatprep.subr.mxu0 0.0
    %1495 = vmatpush2.xpose.msra.mxu0 0.0
    %1496 = vmatprep.subr.mxu0 0.0
    %1497 = vmatpush2.xpose.msra.mxu0 0.0
    %1498 = vmatprep.subr.mxu0 0.0
    %1499 = vmatpush2.xpose.msra.mxu0 0.0
    %1500 = vmatprep.subr.mxu0 0.0
    %1501 = vmatpush2.xpose.msra.mxu0 0.0
    %1502 = vmatprep.subr.mxu0 0.0
    %1503 = vmatpush2.xpose.msra.mxu0 0.0
    %1504 = vmatprep.subr.mxu0 0.0
    %1505 = vmatpush2.xpose.msra.mxu0 0.0
    %1506 = vmatprep.subr.mxu0 0.0
    %1507 = vmatpush2.xpose.msra.mxu0 0.0
    %1508 = vmatprep.subr.mxu0 0.0
    %1509 = vmatpush2.xpose.msra.mxu0 0.0
    %1510 = vmatprep.subr.mxu0 0.0
    %1511 = vmatpush2.xpose.msra.mxu0 0.0
    %1512 = vmatprep.subr.mxu0 0.0
    %1513 = vmatpush2.xpose.msra.mxu0 0.0
    %1514 = vmatprep.subr.mxu0 0.0
    %1515 = vmatpush2.xpose.msra.mxu0 0.0
    %1516 = vmatprep.mubr.f32.mxu0 0.0
    %1517 = vmatmul.mubr.f32.gmra.mxu0 %v1444
    %v1518 = vpop.f32.mrf.mxu0
    %v1519 = vadd.f32 0.0, %v1518
    %v1520 = vpop.f32.mrf.mxu0
    %1521 = vmatprep.mubr.f32.mxu0 0.0
    %1522 = vmatmul.mubr.f32.gmra.mxu0 %v1446
    %v1523 = vpop.f32.mrf.mxu0
    %v1524 = vadd.f32 0.0, %v1523
    %v1525 = vpop.f32.mrf.mxu0
    %1526 = vdwg.mxu0
    %v1527 = vmul.f32 %v1519, 0.35355338
    %v1528 = vmul.f32 %v1524, 0.35355338
    %v1529 = vadd.f32 %v1527, %v114
    %v1530 = vadd.f32 %v1528, %v115
    %v1531 = vsel %vm960, %v1529, -inf
    %1532 = vmax.xlane.f32.xlu0 %v1531
    %v1533 = vpop.xlane.xlu0 %1532
    %v1534 = vsel %vm960, %v1530, -inf
    %1535 = vmax.xlane.f32.xlu0 %v1534
    %v1536 = vpop.xlane.xlu0 %1535
    %v1537 = vsub.f32 %v1529, %v1533
    %v1538 = vsub.f32 %v1530, %v1536
    %v1539 = vmul.f32 %v1537, 1.442695
    %v1540 = vpow.pop %v1539
    %v1541 = vmul.f32 %v1538, 1.442695
    %v1542 = vpow.pop %v1541
    %v1543 = vsel %vm960, %v1540, 0.0
    %1544 = vadd.xlane.f32.xlu0 %v1543
    %v1545 = vpop.xlane.xlu0 %1544
    %v1546 = vsel %vm960, %v1542, 0.0
    %1547 = vadd.xlane.f32.xlu0 %v1546
    %v1548 = vpop.xlane.xlu0 %1547
    %v1549 = vrcp.pop %v1545
    %v1550 = vmul.f32 %v1540, %v1549
    %v1551 = vrcp.pop %v1548
    %v1552 = vmul.f32 %v1542, %v1551
    %1553 = vrot.lane.b32.xlu0 %v854, 48
    %v1554 = vpop.permute.xlu0 %1553
    %1555 = vrot.lane.b32.xlu0 %v859, 48
    %v1556 = vpop.permute.xlu0 %1555
    %v1560 = vsel %vm960, %v1550, 0
    %v1563 = vsel %vm960, %v1552, 0
    %1565 = vmatprep.subr.mxu0 0.0
    %1566 = vmatpush1.msra.mxu0 0.0
    %1567 = vmatprep.subr.mxu0 0.0
    %1568 = vmatpush1.msra.mxu0 0.0
    %1569 = vmatprep.subr.mxu0 0.0
    %1570 = vmatpush1.msra.mxu0 0.0
    %1571 = vmatprep.subr.mxu0 0.0
    %1572 = vmatpush1.msra.mxu0 0.0
    %1573 = vmatprep.subr.mxu0 0.0
    %1574 = vmatpush1.msra.mxu0 0.0
    %1575 = vmatprep.subr.mxu0 0.0
    %1576 = vmatpush1.msra.mxu0 0.0
    %1577 = vmatprep.subr.mxu0 0.0
    %1578 = vmatpush1.msra.mxu0 0.0
    %1579 = vmatprep.subr.mxu0 0.0
    %1580 = vmatpush1.msra.mxu0 0.0
    %1581 = vmatprep.subr.mxu0 0.0
    %1582 = vmatpush1.msra.mxu0 0.0
    %1583 = vmatprep.subr.mxu0 0.0
    %1584 = vmatpush1.msra.mxu0 0.0
    %1585 = vmatprep.subr.mxu0 0.0
    %1586 = vmatpush1.msra.mxu0 0.0
    %1587 = vmatprep.subr.mxu0 0.0
    %1588 = vmatpush1.msra.mxu0 0.0
    %1589 = vmatprep.subr.mxu0 0.0
    %1590 = vmatpush1.msra.mxu0 0.0
    %1591 = vmatprep.subr.mxu0 0.0
    %1592 = vmatpush1.msra.mxu0 0.0
    %1593 = vmatprep.subr.mxu0 0.0
    %1594 = vmatpush1.msra.mxu0 %v1556
    %1595 = vmatprep.subr.mxu0 0.0
    %1596 = vmatpush1.msra.mxu0 %v1554
    %1597 = vmatprep.subr.mxu0 0.0
    %1598 = vmatpush2.msra.mxu0 0.0
    %1599 = vmatprep.subr.mxu0 0.0
    %1600 = vmatpush2.msra.mxu0 0.0
    %1601 = vmatprep.subr.mxu0 0.0
    %1602 = vmatpush2.msra.mxu0 0.0
    %1603 = vmatprep.subr.mxu0 0.0
    %1604 = vmatpush2.msra.mxu0 0.0
    %1605 = vmatprep.subr.mxu0 0.0
    %1606 = vmatpush2.msra.mxu0 0.0
    %1607 = vmatprep.subr.mxu0 0.0
    %1608 = vmatpush2.msra.mxu0 0.0
    %1609 = vmatprep.subr.mxu0 0.0
    %1610 = vmatpush2.msra.mxu0 0.0
    %1611 = vmatprep.subr.mxu0 0.0
    %1612 = vmatpush2.msra.mxu0 0.0
    %1613 = vmatprep.subr.mxu0 0.0
    %1614 = vmatpush2.msra.mxu0 0.0
    %1615 = vmatprep.subr.mxu0 0.0
    %1616 = vmatpush2.msra.mxu0 0.0
    %1617 = vmatprep.subr.mxu0 0.0
    %1618 = vmatpush2.msra.mxu0 0.0
    %1619 = vmatprep.subr.mxu0 0.0
    %1620 = vmatpush2.msra.mxu0 0.0
    %1621 = vmatprep.subr.mxu0 0.0
    %1622 = vmatpush2.msra.mxu0 0.0
    %1623 = vmatprep.subr.mxu0 0.0
    %1624 = vmatpush2.msra.mxu0 0.0
    %1625 = vmatprep.subr.mxu0 0.0
    %1626 = vmatpush2.msra.mxu0 0.0
    %1627 = vmatprep.subr.mxu0 0.0
    %1628 = vmatpush2.msra.mxu0 0.0
    %1629 = vmatprep.mubr.f32.mxu0 0.0
    %1630 = vmatmul.mubr.f32.gmra.mxu0 %v1560
    %v1631 = vpop.f32.mrf.mxu0
    %v1632 = vadd.f32 0.0, %v1631
    %v1633 = vpop.f32.mrf.mxu0
    %1634 = vmatprep.mubr.f32.mxu0 0.0
    %1635 = vmatmul.mubr.f32.gmra.mxu0 %v1563
    %v1636 = vpop.f32.mrf.mxu0
    %v1637 = vadd.f32 0.0, %v1636
    %v1638 = vpop.f32.mrf.mxu0
    %1639 = vdwg.mxu0
    %v1641 = vsel %vm872, %v1632, 0
    %v1644 = vsel %vm872, %v1637, 0
    %1646 = vmatprep.subr.mxu0 0.0
    %1647 = vmatpush1.msra.mxu0 0.0
    %1648 = vmatprep.subr.mxu0 0.0
    %1649 = vmatpush1.msra.mxu0 0.0
    %1650 = vmatprep.subr.mxu0 0.0
    %1651 = vmatpush1.msra.mxu0 0.0
    %1652 = vmatprep.subr.mxu0 0.0
    %1653 = vmatpush1.msra.mxu0 0.0
    %1654 = vmatprep.subr.mxu0 0.0
    %1655 = vmatpush1.msra.mxu0 0.0
    %1656 = vmatprep.subr.mxu0 0.0
    %1657 = vmatpush1.msra.mxu0 0.0
    %1658 = vmatprep.subr.mxu0 0.0
    %1659 = vmatpush1.msra.mxu0 0.0
    %1660 = vmatprep.subr.mxu0 0.0
    %1661 = vmatpush1.msra.mxu0 0.0
    %1662 = vmatprep.subr.mxu0 0.0
    %1663 = vmatpush1.msra.mxu0 0.0
    %1664 = vmatprep.subr.mxu0 0.0
    %1665 = vmatpush1.msra.mxu0 0.0
    %1666 = vmatprep.subr.mxu0 0.0
    %1667 = vmatpush1.msra.mxu0 0.0
    %1668 = vmatprep.subr.mxu0 0.0
    %1669 = vmatpush1.msra.mxu0 0.0
    %1670 = vmatprep.subr.mxu0 0.0
    %1671 = vmatpush1.msra.mxu0 0.0
    %1672 = vmatprep.subr.mxu0 0.0
    %1673 = vmatpush1.msra.mxu0 0.0
    %1674 = vmatprep.subr.mxu0 0.0
    %1675 = vmatpush1.msra.mxu0 0.0
    %1676 = vmatprep.subr.mxu0 0.0
    %1677 = vmatpush1.msra.mxu0 %v864
    %1678 = vmatprep.subr.mxu0 0.0
    %1679 = vmatpush2.msra.mxu0 0.0
    %1680 = vmatprep.subr.mxu0 0.0
    %1681 = vmatpush2.msra.mxu0 0.0
    %1682 = vmatprep.subr.mxu0 0.0
    %1683 = vmatpush2.msra.mxu0 0.0
    %1684 = vmatprep.subr.mxu0 0.0
    %1685 = vmatpush2.msra.mxu0 0.0
    %1686 = vmatprep.subr.mxu0 0.0
    %1687 = vmatpush2.msra.mxu0 0.0
    %1688 = vmatprep.subr.mxu0 0.0
    %1689 = vmatpush2.msra.mxu0 0.0
    %1690 = vmatprep.subr.mxu0 0.0
    %1691 = vmatpush2.msra.mxu0 0.0
    %1692 = vmatprep.subr.mxu0 0.0
    %1693 = vmatpush2.msra.mxu0 0.0
    %1694 = vmatprep.subr.mxu0 0.0
    %1695 = vmatpush2.msra.mxu0 0.0
    %1696 = vmatprep.subr.mxu0 0.0
    %1697 = vmatpush2.msra.mxu0 0.0
    %1698 = vmatprep.subr.mxu0 0.0
    %1699 = vmatpush2.msra.mxu0 0.0
    %1700 = vmatprep.subr.mxu0 0.0
    %1701 = vmatpush2.msra.mxu0 0.0
    %1702 = vmatprep.subr.mxu0 0.0
    %1703 = vmatpush2.msra.mxu0 0.0
    %1704 = vmatprep.subr.mxu0 0.0
    %1705 = vmatpush2.msra.mxu0 0.0
    %1706 = vmatprep.subr.mxu0 0.0
    %1707 = vmatpush2.msra.mxu0 0.0
    %1708 = vmatprep.subr.mxu0 0.0
    %1709 = vmatpush2.msra.mxu0 0.0
    %1710 = vmatprep.mubr.f32.mxu0 0.0
    %1711 = vmatmul.mubr.f32.gmra.mxu0 %v1641
    %v1712 = vpop.f32.mrf.mxu0
    %v1713 = vadd.f32 0.0, %v1712
    %v1714 = vpop.f32.mrf.mxu0
    %1715 = vmatprep.mubr.f32.mxu0 0.0
    %1716 = vmatmul.mubr.f32.gmra.mxu0 %v1644
    %v1717 = vpop.f32.mrf.mxu0
    %v1718 = vadd.f32 0.0, %v1717
    %v1719 = vpop.f32.mrf.mxu0
    %1720 = vdwg.mxu0
    %v1721 = vadd.f32 %v1428, %v1713
    %v1722 = vadd.f32 %v1433, %v1718
    %1723 = vrot.lane.b32.xlu0 %v854, 104
    %v1724 = vpop.permute.xlu0 %1723
    %1725 = vrot.lane.b32.xlu0 %v859, 104
    %v1726 = vpop.permute.xlu0 %1725
    %1727 = vrot.lane.b32.xlu0 %v854, 72
    %v1728 = vpop.permute.xlu0 %1727
    %1729 = vrot.lane.b32.xlu0 %v859, 72
    %v1730 = vpop.permute.xlu0 %1729
    %v1731 = vsel %vm872, %v1724, 0
    %v1733 = vsel %vm872, %v1726, 0
    %v1735 = vsel %vm872, %v1728, 0
    %v1737 = vsel %vm872, %v1730, 0
    %1739 = vmatprep.subr.mxu0 0.0
    %1740 = vmatpush1.xpose.msra.mxu0 0.0
    %1741 = vmatprep.subr.mxu0 0.0
    %1742 = vmatpush1.xpose.msra.mxu0 0.0
    %1743 = vmatprep.subr.mxu0 0.0
    %1744 = vmatpush1.xpose.msra.mxu0 0.0
    %1745 = vmatprep.subr.mxu0 0.0
    %1746 = vmatpush1.xpose.msra.mxu0 0.0
    %1747 = vmatprep.subr.mxu0 0.0
    %1748 = vmatpush1.xpose.msra.mxu0 0.0
    %1749 = vmatprep.subr.mxu0 0.0
    %1750 = vmatpush1.xpose.msra.mxu0 0.0
    %1751 = vmatprep.subr.mxu0 0.0
    %1752 = vmatpush1.xpose.msra.mxu0 0.0
    %1753 = vmatprep.subr.mxu0 0.0
    %1754 = vmatpush1.xpose.msra.mxu0 0.0
    %1755 = vmatprep.subr.mxu0 0.0
    %1756 = vmatpush1.xpose.msra.mxu0 0.0
    %1757 = vmatprep.subr.mxu0 0.0
    %1758 = vmatpush1.xpose.msra.mxu0 0.0
    %1759 = vmatprep.subr.mxu0 0.0
    %1760 = vmatpush1.xpose.msra.mxu0 0.0
    %1761 = vmatprep.subr.mxu0 0.0
    %1762 = vmatpush1.xpose.msra.mxu0 0.0
    %1763 = vmatprep.subr.mxu0 0.0
    %1764 = vmatpush1.xpose.msra.mxu0 0.0
    %1765 = vmatprep.subr.mxu0 0.0
    %1766 = vmatpush1.xpose.msra.mxu0 0.0
    %1767 = vmatprep.subr.mxu0 0.0
    %1768 = vmatpush1.xpose.msra.mxu0 %v1737
    %1769 = vmatprep.subr.mxu0 0.0
    %1770 = vmatpush1.xpose.msra.mxu0 %v1735
    %1771 = vmatprep.subr.mxu0 0.0
    %1772 = vmatpush2.xpose.msra.mxu0 0.0
    %1773 = vmatprep.subr.mxu0 0.0
    %1774 = vmatpush2.xpose.msra.mxu0 0.0
    %1775 = vmatprep.subr.mxu0 0.0
    %1776 = vmatpush2.xpose.msra.mxu0 0.0
    %1777 = vmatprep.subr.mxu0 0.0
    %1778 = vmatpush2.xpose.msra.mxu0 0.0
    %1779 = vmatprep.subr.mxu0 0.0
    %1780 = vmatpush2.xpose.msra.mxu0 0.0
    %1781 = vmatprep.subr.mxu0 0.0
    %1782 = vmatpush2.xpose.msra.mxu0 0.0
    %1783 = vmatprep.subr.mxu0 0.0
    %1784 = vmatpush2.xpose.msra.mxu0 0.0
    %1785 = vmatprep.subr.mxu0 0.0
    %1786 = vmatpush2.xpose.msra.mxu0 0.0
    %1787 = vmatprep.subr.mxu0 0.0
    %1788 = vmatpush2.xpose.msra.mxu0 0.0
    %1789 = vmatprep.subr.mxu0 0.0
    %1790 = vmatpush2.xpose.msra.mxu0 0.0
    %1791 = vmatprep.subr.mxu0 0.0
    %1792 = vmatpush2.xpose.msra.mxu0 0.0
    %1793 = vmatprep.subr.mxu0 0.0
    %1794 = vmatpush2.xpose.msra.mxu0 0.0
    %1795 = vmatprep.subr.mxu0 0.0
    %1796 = vmatpush2.xpose.msra.mxu0 0.0
    %1797 = vmatprep.subr.mxu0 0.0
    %1798 = vmatpush2.xpose.msra.mxu0 0.0
    %1799 = vmatprep.subr.mxu0 0.0
    %1800 = vmatpush2.xpose.msra.mxu0 0.0
    %1801 = vmatprep.subr.mxu0 0.0
    %1802 = vmatpush2.xpose.msra.mxu0 0.0
    %1803 = vmatprep.mubr.f32.mxu0 0.0
    %1804 = vmatmul.mubr.f32.gmra.mxu0 %v1731
    %v1805 = vpop.f32.mrf.mxu0
    %v1806 = vadd.f32 0.0, %v1805
    %v1807 = vpop.f32.mrf.mxu0
    %1808 = vmatprep.mubr.f32.mxu0 0.0
    %1809 = vmatmul.mubr.f32.gmra.mxu0 %v1733
    %v1810 = vpop.f32.mrf.mxu0
    %v1811 = vadd.f32 0.0, %v1810
    %v1812 = vpop.f32.mrf.mxu0
    %1813 = vdwg.mxu0
    %v1814 = vmul.f32 %v1806, 0.35355338
    %v1815 = vmul.f32 %v1811, 0.35355338
    %v1816 = vadd.f32 %v1814, %v114
    %v1817 = vadd.f32 %v1815, %v115
    %v1818 = vsel %vm960, %v1816, -inf
    %1819 = vmax.xlane.f32.xlu0 %v1818
    %v1820 = vpop.xlane.xlu0 %1819
    %v1821 = vsel %vm960, %v1817, -inf
    %1822 = vmax.xlane.f32.xlu0 %v1821
    %v1823 = vpop.xlane.xlu0 %1822
    %v1824 = vsub.f32 %v1816, %v1820
    %v1825 = vsub.f32 %v1817, %v1823
    %v1826 = vmul.f32 %v1824, 1.442695
    %v1827 = vpow.pop %v1826
    %v1828 = vmul.f32 %v1825, 1.442695
    %v1829 = vpow.pop %v1828
    %v1830 = vsel %vm960, %v1827, 0.0
    %1831 = vadd.xlane.f32.xlu0 %v1830
    %v1832 = vpop.xlane.xlu0 %1831
    %v1833 = vsel %vm960, %v1829, 0.0
    %1834 = vadd.xlane.f32.xlu0 %v1833
    %v1835 = vpop.xlane.xlu0 %1834
    %v1836 = vrcp.pop %v1832
    %v1837 = vmul.f32 %v1827, %v1836
    %v1838 = vrcp.pop %v1835
    %v1839 = vmul.f32 %v1829, %v1838
    %1840 = vrot.lane.b32.xlu0 %v854, 40
    %v1841 = vpop.permute.xlu0 %1840
    %1842 = vrot.lane.b32.xlu0 %v859, 40
    %v1843 = vpop.permute.xlu0 %1842
    %v1847 = vsel %vm960, %v1837, 0
    %v1850 = vsel %vm960, %v1839, 0
    %1852 = vmatprep.subr.mxu0 0.0
    %1853 = vmatpush1.msra.mxu0 0.0
    %1854 = vmatprep.subr.mxu0 0.0
    %1855 = vmatpush1.msra.mxu0 0.0
    %1856 = vmatprep.subr.mxu0 0.0
    %1857 = vmatpush1.msra.mxu0 0.0
    %1858 = vmatprep.subr.mxu0 0.0
    %1859 = vmatpush1.msra.mxu0 0.0
    %1860 = vmatprep.subr.mxu0 0.0
    %1861 = vmatpush1.msra.mxu0 0.0
    %1862 = vmatprep.subr.mxu0 0.0
    %1863 = vmatpush1.msra.mxu0 0.0
    %1864 = vmatprep.subr.mxu0 0.0
    %1865 = vmatpush1.msra.mxu0 0.0
    %1866 = vmatprep.subr.mxu0 0.0
    %1867 = vmatpush1.msra.mxu0 0.0
    %1868 = vmatprep.subr.mxu0 0.0
    %1869 = vmatpush1.msra.mxu0 0.0
    %1870 = vmatprep.subr.mxu0 0.0
    %1871 = vmatpush1.msra.mxu0 0.0
    %1872 = vmatprep.subr.mxu0 0.0
    %1873 = vmatpush1.msra.mxu0 0.0
    %1874 = vmatprep.subr.mxu0 0.0
    %1875 = vmatpush1.msra.mxu0 0.0
    %1876 = vmatprep.subr.mxu0 0.0
    %1877 = vmatpush1.msra.mxu0 0.0
    %1878 = vmatprep.subr.mxu0 0.0
    %1879 = vmatpush1.msra.mxu0 0.0
    %1880 = vmatprep.subr.mxu0 0.0
    %1881 = vmatpush1.msra.mxu0 %v1843
    %1882 = vmatprep.subr.mxu0 0.0
    %1883 = vmatpush1.msra.mxu0 %v1841
    %1884 = vmatprep.subr.mxu0 0.0
    %1885 = vmatpush2.msra.mxu0 0.0
    %1886 = vmatprep.subr.mxu0 0.0
    %1887 = vmatpush2.msra.mxu0 0.0
    %1888 = vmatprep.subr.mxu0 0.0
    %1889 = vmatpush2.msra.mxu0 0.0
    %1890 = vmatprep.subr.mxu0 0.0
    %1891 = vmatpush2.msra.mxu0 0.0
    %1892 = vmatprep.subr.mxu0 0.0
    %1893 = vmatpush2.msra.mxu0 0.0
    %1894 = vmatprep.subr.mxu0 0.0
    %1895 = vmatpush2.msra.mxu0 0.0
    %1896 = vmatprep.subr.mxu0 0.0
    %1897 = vmatpush2.msra.mxu0 0.0
    %1898 = vmatprep.subr.mxu0 0.0
    %1899 = vmatpush2.msra.mxu0 0.0
    %1900 = vmatprep.subr.mxu0 0.0
    %1901 = vmatpush2.msra.mxu0 0.0
    %1902 = vmatprep.subr.mxu0 0.0
    %1903 = vmatpush2.msra.mxu0 0.0
    %1904 = vmatprep.subr.mxu0 0.0
    %1905 = vmatpush2.msra.mxu0 0.0
    %1906 = vmatprep.subr.mxu0 0.0
    %1907 = vmatpush2.msra.mxu0 0.0
    %1908 = vmatprep.subr.mxu0 0.0
    %1909 = vmatpush2.msra.mxu0 0.0
    %1910 = vmatprep.subr.mxu0 0.0
    %1911 = vmatpush2.msra.mxu0 0.0
    %1912 = vmatprep.subr.mxu0 0.0
    %1913 = vmatpush2.msra.mxu0 0.0
    %1914 = vmatprep.subr.mxu0 0.0
    %1915 = vmatpush2.msra.mxu0 0.0
    %1916 = vmatprep.mubr.f32.mxu0 0.0
    %1917 = vmatmul.mubr.f32.gmra.mxu0 %v1847
    %v1918 = vpop.f32.mrf.mxu0
    %v1919 = vadd.f32 0.0, %v1918
    %v1920 = vpop.f32.mrf.mxu0
    %1921 = vmatprep.mubr.f32.mxu0 0.0
    %1922 = vmatmul.mubr.f32.gmra.mxu0 %v1850
    %v1923 = vpop.f32.mrf.mxu0
    %v1924 = vadd.f32 0.0, %v1923
    %v1925 = vpop.f32.mrf.mxu0
    %1926 = vdwg.mxu0
    %v1928 = vsel %vm872, %v1919, 0
    %v1931 = vsel %vm872, %v1924, 0
    %1933 = vmatprep.subr.mxu0 0.0
    %1934 = vmatpush1.msra.mxu0 0.0
    %1935 = vmatprep.subr.mxu0 0.0
    %1936 = vmatpush1.msra.mxu0 0.0
    %1937 = vmatprep.subr.mxu0 0.0
    %1938 = vmatpush1.msra.mxu0 0.0
    %1939 = vmatprep.subr.mxu0 0.0
    %1940 = vmatpush1.msra.mxu0 0.0
    %1941 = vmatprep.subr.mxu0 0.0
    %1942 = vmatpush1.msra.mxu0 0.0
    %1943 = vmatprep.subr.mxu0 0.0
    %1944 = vmatpush1.msra.mxu0 0.0
    %1945 = vmatprep.subr.mxu0 0.0
    %1946 = vmatpush1.msra.mxu0 0.0
    %1947 = vmatprep.subr.mxu0 0.0
    %1948 = vmatpush1.msra.mxu0 0.0
    %1949 = vmatprep.subr.mxu0 0.0
    %1950 = vmatpush1.msra.mxu0 0.0
    %1951 = vmatprep.subr.mxu0 0.0
    %1952 = vmatpush1.msra.mxu0 0.0
    %1953 = vmatprep.subr.mxu0 0.0
    %1954 = vmatpush1.msra.mxu0 0.0
    %1955 = vmatprep.subr.mxu0 0.0
    %1956 = vmatpush1.msra.mxu0 0.0
    %1957 = vmatprep.subr.mxu0 0.0
    %1958 = vmatpush1.msra.mxu0 0.0
    %1959 = vmatprep.subr.mxu0 0.0
    %1960 = vmatpush1.msra.mxu0 0.0
    %1961 = vmatprep.subr.mxu0 0.0
    %1962 = vmatpush1.msra.mxu0 0.0
    %1963 = vmatprep.subr.mxu0 0.0
    %1964 = vmatpush1.msra.mxu0 %v865
    %1965 = vmatprep.subr.mxu0 0.0
    %1966 = vmatpush2.msra.mxu0 0.0
    %1967 = vmatprep.subr.mxu0 0.0
    %1968 = vmatpush2.msra.mxu0 0.0
    %1969 = vmatprep.subr.mxu0 0.0
    %1970 = vmatpush2.msra.mxu0 0.0
    %1971 = vmatprep.subr.mxu0 0.0
    %1972 = vmatpush2.msra.mxu0 0.0
    %1973 = vmatprep.subr.mxu0 0.0
    %1974 = vmatpush2.msra.mxu0 0.0
    %1975 = vmatprep.subr.mxu0 0.0
    %1976 = vmatpush2.msra.mxu0 0.0
    %1977 = vmatprep.subr.mxu0 0.0
    %1978 = vmatpush2.msra.mxu0 0.0
    %1979 = vmatprep.subr.mxu0 0.0
    %1980 = vmatpush2.msra.mxu0 0.0
    %1981 = vmatprep.subr.mxu0 0.0
    %1982 = vmatpush2.msra.mxu0 0.0
    %1983 = vmatprep.subr.mxu0 0.0
    %1984 = vmatpush2.msra.mxu0 0.0
    %1985 = vmatprep.subr.mxu0 0.0
    %1986 = vmatpush2.msra.mxu0 0.0
    %1987 = vmatprep.subr.mxu0 0.0
    %1988 = vmatpush2.msra.mxu0 0.0
    %1989 = vmatprep.subr.mxu0 0.0
    %1990 = vmatpush2.msra.mxu0 0.0
    %1991 = vmatprep.subr.mxu0 0.0
    %1992 = vmatpush2.msra.mxu0 0.0
    %1993 = vmatprep.subr.mxu0 0.0
    %1994 = vmatpush2.msra.mxu0 0.0
    %1995 = vmatprep.subr.mxu0 0.0
    %1996 = vmatpush2.msra.mxu0 0.0
    %1997 = vmatprep.mubr.f32.mxu0 0.0
    %1998 = vmatmul.mubr.f32.gmra.mxu0 %v1928
    %v1999 = vpop.f32.mrf.mxu0
    %v2000 = vadd.f32 0.0, %v1999
    %v2001 = vpop.f32.mrf.mxu0
    %2002 = vmatprep.mubr.f32.mxu0 0.0
    %2003 = vmatmul.mubr.f32.gmra.mxu0 %v1931
    %v2004 = vpop.f32.mrf.mxu0
    %v2005 = vadd.f32 0.0, %v2004
    %v2006 = vpop.f32.mrf.mxu0
    %2007 = vdwg.mxu0
    %v2008 = vadd.f32 %v1721, %v2000
    %v2009 = vadd.f32 %v1722, %v2005
    %v2010 = vld [vmem:[%s13] sm:$0x1]
    %v2012 = vlaneseq
    %v2013 = vshrl.u32 %v2012, 7
    %v2014 = vsub.s32 0, %v2013
    %v2015 = vrot.slane %v2010, %v2014
    %v2017 = vadd.f32 %v2008, %v2015
    %v2018 = vadd.f32 %v2009, %v2015
    %v2019 = vadd.f32 %v2017, %v768
    %v2020 = vadd.f32 %v2018, %v769
    %v2021 = vld [vmem:[%s14] sm:$0x1]
    %v2022 = vld [vmem:[%s15] sm:$0x1]
    %v2023 = vsel %vm228, %v2019, 0.0
    %2024 = vadd.xlane.f32.xlu0 %v2023
    %v2025 = vpop.xlane.xlu0 %2024
    %v2026 = vsel %vm228, %v2020, 0.0
    %2027 = vadd.xlane.f32.xlu0 %v2026
    %v2028 = vpop.xlane.xlu0 %2027
    %v2029 = vrcp.pop 32.0
    %v2030 = vmul.f32 %v2025, %v2029
    %v2031 = vmul.f32 %v2028, %v2029
    %v2032 = vsub.f32 %v2019, %v2030
    %v2033 = vsub.f32 %v2020, %v2031
    %v2034 = vmul.f32 %v2032, %v2032
    %v2035 = vmul.f32 %v2033, %v2033
    %v2036 = vsel %vm228, %v2034, 0.0
    %2037 = vadd.xlane.f32.xlu0 %v2036
    %v2038 = vpop.xlane.xlu0 %2037
    %v2039 = vsel %vm228, %v2035, 0.0
    %2040 = vadd.xlane.f32.xlu0 %v2039
    %v2041 = vpop.xlane.xlu0 %2040
    %v2042 = vmul.f32 %v2038, %v2029
    %v2043 = vmul.f32 %v2041, %v2029
    %v2044 = vadd.f32 %v2042, 1e-05
    %v2045 = vadd.f32 %v2043, 1e-05
    %v2046 = vrsqrt.pop %v2044
    %v2047 = vrsqrt.pop %v2045
    %v2048 = vmul.f32 %v2032, %v2046
    %v2049 = vmul.f32 %v2033, %v2047
    %v2051 = vlaneseq
    %v2052 = vshrl.u32 %v2051, 7
    %v2053 = vsub.s32 0, %v2052
    %v2054 = vrot.slane %v2021, %v2053
    %v2056 = vmul.f32 %v2048, %v2054
    %v2057 = vmul.f32 %v2049, %v2054
    %v2059 = vlaneseq
    %v2060 = vshrl.u32 %v2059, 7
    %v2061 = vsub.s32 0, %v2060
    %v2062 = vrot.slane %v2022, %v2061
    %v2064 = vadd.f32 %v2056, %v2062
    %v2065 = vadd.f32 %v2057, %v2062
    %2067 = vset.pattern.permute.xlu0 0
    %2068 = vperm.xlu0 %2067, %v112
    %v2069 = vpop.permute.xlu0 %2068
    %2072 = vset.pattern.permute.xlu0 0
    %2073 = vperm.xlu0 %2072, %v113
    %v2074 = vpop.permute.xlu0 %2073
    %v2076 = vmul.f32 %v2064, %v2069
    %v2077 = vmul.f32 %v2065, %v2074
    %v2078 = vld [vmem:[%s16] sm:$0xff]
    %v2079 = vld [vmem:[%s16 + $0x8] sm:$0xff]
    %v2080 = vld [vmem:[%s16 + $0x10] sm:$0xff]
    %v2081 = vld [vmem:[%s16 + $0x18] sm:$0xff]
    %v2082 = vld [vmem:[%s17] sm:$0x1]
    %v2084 = vlaneseq
    %v2085 = vshrl.u32 %v2084, 7
    %v2086 = vsub.s32 0, %v2085
    %v2087 = vrot.slane %v2082, %v2086
    %v2090 = vsel %vm228, %v2076, 0
    %v2093 = vsel %vm228, %v2077, 0
    %2095 = vmatprep.subr.mxu0 0.0
    %2096 = vmatpush1.msra.mxu0 0.0
    %2097 = vmatprep.subr.mxu0 0.0
    %2098 = vmatpush1.msra.mxu0 0.0
    %2099 = vmatprep.subr.mxu0 0.0
    %2100 = vmatpush1.msra.mxu0 0.0
    %2101 = vmatprep.subr.mxu0 0.0
    %2102 = vmatpush1.msra.mxu0 0.0
    %2103 = vmatprep.subr.mxu0 0.0
    %2104 = vmatpush1.msra.mxu0 0.0
    %2105 = vmatprep.subr.mxu0 0.0
    %2106 = vmatpush1.msra.mxu0 0.0
    %2107 = vmatprep.subr.mxu0 0.0
    %2108 = vmatpush1.msra.mxu0 0.0
    %2109 = vmatprep.subr.mxu0 0.0
    %2110 = vmatpush1.msra.mxu0 0.0
    %2111 = vmatprep.subr.mxu0 0.0
    %2112 = vmatpush1.msra.mxu0 0.0
    %2113 = vmatprep.subr.mxu0 0.0
    %2114 = vmatpush1.msra.mxu0 0.0
    %2115 = vmatprep.subr.mxu0 0.0
    %2116 = vmatpush1.msra.mxu0 0.0
    %2117 = vmatprep.subr.mxu0 0.0
    %2118 = vmatpush1.msra.mxu0 0.0
    %2119 = vmatprep.subr.mxu0 0.0
    %2120 = vmatpush1.msra.mxu0 %v2081
    %2121 = vmatprep.subr.mxu0 0.0
    %2122 = vmatpush1.msra.mxu0 %v2080
    %2123 = vmatprep.subr.mxu0 0.0
    %2124 = vmatpush1.msra.mxu0 %v2079
    %2125 = vmatprep.subr.mxu0 0.0
    %2126 = vmatpush1.msra.mxu0 %v2078
    %2127 = vmatprep.subr.mxu0 0.0
    %2128 = vmatpush2.msra.mxu0 0.0
    %2129 = vmatprep.subr.mxu0 0.0
    %2130 = vmatpush2.msra.mxu0 0.0
    %2131 = vmatprep.subr.mxu0 0.0
    %2132 = vmatpush2.msra.mxu0 0.0
    %2133 = vmatprep.subr.mxu0 0.0
    %2134 = vmatpush2.msra.mxu0 0.0
    %2135 = vmatprep.subr.mxu0 0.0
    %2136 = vmatpush2.msra.mxu0 0.0
    %2137 = vmatprep.subr.mxu0 0.0
    %2138 = vmatpush2.msra.mxu0 0.0
    %2139 = vmatprep.subr.mxu0 0.0
    %2140 = vmatpush2.msra.mxu0 0.0
    %2141 = vmatprep.subr.mxu0 0.0
    %2142 = vmatpush2.msra.mxu0 0.0
    %2143 = vmatprep.subr.mxu0 0.0
    %2144 = vmatpush2.msra.mxu0 0.0
    %2145 = vmatprep.subr.mxu0 0.0
    %2146 = vmatpush2.msra.mxu0 0.0
    %2147 = vmatprep.subr.mxu0 0.0
    %2148 = vmatpush2.msra.mxu0 0.0
    %2149 = vmatprep.subr.mxu0 0.0
    %2150 = vmatpush2.msra.mxu0 0.0
    %2151 = vmatprep.subr.mxu0 0.0
    %2152 = vmatpush2.msra.mxu0 0.0
    %2153 = vmatprep.subr.mxu0 0.0
    %2154 = vmatpush2.msra.mxu0 0.0
    %2155 = vmatprep.subr.mxu0 0.0
    %2156 = vmatpush2.msra.mxu0 0.0
    %2157 = vmatprep.subr.mxu0 0.0
    %2158 = vmatpush2.msra.mxu0 0.0
    %2159 = vmatprep.mubr.f32.mxu0 0.0
    %2160 = vmatmul.mubr.f32.gmra.mxu0 %v2090
    %v2161 = vpop.f32.mrf.mxu0
    %v2162 = vadd.f32 %v2087, %v2161
    %v2163 = vpop.f32.mrf.mxu0
    %2164 = vmatprep.mubr.f32.mxu0 0.0
    %2165 = vmatmul.mubr.f32.gmra.mxu0 %v2093
    %v2166 = vpop.f32.mrf.mxu0
    %v2167 = vadd.f32 %v2087, %v2166
    %v2168 = vpop.f32.mrf.mxu0
    %2169 = vdwg.mxu0
    %v2170 = vmax.f32 %v2162, 0.0
    %v2171 = vmax.f32 %v2167, 0.0
    %v2172 = vld [vmem:[%s18] sm:$0xff]
    %v2173 = vld [vmem:[%s18 + $0x8] sm:$0xff]
    %v2174 = vld [vmem:[%s18 + $0x10] sm:$0xff]
    %v2175 = vld [vmem:[%s18 + $0x18] sm:$0xff]
    %v2176 = vld [vmem:[%s18 + $0x20] sm:$0xff]
    %v2177 = vld [vmem:[%s18 + $0x28] sm:$0xff]
    %v2178 = vld [vmem:[%s18 + $0x30] sm:$0xff]
    %v2179 = vld [vmem:[%s18 + $0x38] sm:$0xff]
    %v2180 = vld [vmem:[%s19] sm:$0x1]
    %v2182 = vlaneseq
    %v2183 = vshrl.u32 %v2182, 7
    %v2184 = vsub.s32 0, %v2183
    %v2185 = vrot.slane %v2180, %v2184
    %vm2187 = vcmask 523264
    %v2189 = vsel %vm2187, %v2170, 0
    %v2192 = vsel %vm2187, %v2171, 0
    %2194 = vmatprep.subr.mxu0 0.0
    %2195 = vmatpush1.msra.mxu0 0.0
    %2196 = vmatprep.subr.mxu0 0.0
    %2197 = vmatpush1.msra.mxu0 0.0
    %2198 = vmatprep.subr.mxu0 0.0
    %2199 = vmatpush1.msra.mxu0 0.0
    %2200 = vmatprep.subr.mxu0 0.0
    %2201 = vmatpush1.msra.mxu0 0.0
    %2202 = vmatprep.subr.mxu0 0.0
    %2203 = vmatpush1.msra.mxu0 0.0
    %2204 = vmatprep.subr.mxu0 0.0
    %2205 = vmatpush1.msra.mxu0 0.0
    %2206 = vmatprep.subr.mxu0 0.0
    %2207 = vmatpush1.msra.mxu0 0.0
    %2208 = vmatprep.subr.mxu0 0.0
    %2209 = vmatpush1.msra.mxu0 0.0
    %2210 = vmatprep.subr.mxu0 0.0
    %2211 = vmatpush1.msra.mxu0 %v2179
    %2212 = vmatprep.subr.mxu0 0.0
    %2213 = vmatpush1.msra.mxu0 %v2178
    %2214 = vmatprep.subr.mxu0 0.0
    %2215 = vmatpush1.msra.mxu0 %v2177
    %2216 = vmatprep.subr.mxu0 0.0
    %2217 = vmatpush1.msra.mxu0 %v2176
    %2218 = vmatprep.subr.mxu0 0.0
    %2219 = vmatpush1.msra.mxu0 %v2175
    %2220 = vmatprep.subr.mxu0 0.0
    %2221 = vmatpush1.msra.mxu0 %v2174
    %2222 = vmatprep.subr.mxu0 0.0
    %2223 = vmatpush1.msra.mxu0 %v2173
    %2224 = vmatprep.subr.mxu0 0.0
    %2225 = vmatpush1.msra.mxu0 %v2172
    %2226 = vmatprep.subr.mxu0 0.0
    %2227 = vmatpush2.msra.mxu0 0.0
    %2228 = vmatprep.subr.mxu0 0.0
    %2229 = vmatpush2.msra.mxu0 0.0
    %2230 = vmatprep.subr.mxu0 0.0
    %2231 = vmatpush2.msra.mxu0 0.0
    %2232 = vmatprep.subr.mxu0 0.0
    %2233 = vmatpush2.msra.mxu0 0.0
    %2234 = vmatprep.subr.mxu0 0.0
    %2235 = vmatpush2.msra.mxu0 0.0
    %2236 = vmatprep.subr.mxu0 0.0
    %2237 = vmatpush2.msra.mxu0 0.0
    %2238 = vmatprep.subr.mxu0 0.0
    %2239 = vmatpush2.msra.mxu0 0.0
    %2240 = vmatprep.subr.mxu0 0.0
    %2241 = vmatpush2.msra.mxu0 0.0
    %2242 = vmatprep.subr.mxu0 0.0
    %2243 = vmatpush2.msra.mxu0 0.0
    %2244 = vmatprep.subr.mxu0 0.0
    %2245 = vmatpush2.msra.mxu0 0.0
    %2246 = vmatprep.subr.mxu0 0.0
    %2247 = vmatpush2.msra.mxu0 0.0
    %2248 = vmatprep.subr.mxu0 0.0
    %2249 = vmatpush2.msra.mxu0 0.0
    %2250 = vmatprep.subr.mxu0 0.0
    %2251 = vmatpush2.msra.mxu0 0.0
    %2252 = vmatprep.subr.mxu0 0.0
    %2253 = vmatpush2.msra.mxu0 0.0
    %2254 = vmatprep.subr.mxu0 0.0
    %2255 = vmatpush2.msra.mxu0 0.0
    %2256 = vmatprep.subr.mxu0 0.0
    %2257 = vmatpush2.msra.mxu0 0.0
    %2258 = vmatprep.mubr.f32.mxu0 0.0
    %2259 = vmatmul.mubr.f32.gmra.mxu0 %v2189
    %v2260 = vpop.f32.mrf.mxu0
    %v2261 = vadd.f32 %v2185, %v2260
    %v2262 = vpop.f32.mrf.mxu0
    %2263 = vmatprep.mubr.f32.mxu0 0.0
    %2264 = vmatmul.mubr.f32.gmra.mxu0 %v2192
    %v2265 = vpop.f32.mrf.mxu0
    %v2266 = vadd.f32 %v2185, %v2265
    %v2267 = vpop.f32.mrf.mxu0
    %2268 = vdwg.mxu0
    %v2269 = vadd.f32 %v2261, %v2076
    %v2270 = vadd.f32 %v2266, %v2077
    %v2271 = vld [vmem:[%s20] sm:$0x1]
    %v2272 = vld [vmem:[%s21] sm:$0x1]
    %v2273 = vsel %vm228, %v2269, 0.0
    %2274 = vadd.xlane.f32.xlu0 %v2273
    %v2275 = vpop.xlane.xlu0 %2274
    %v2276 = vsel %vm228, %v2270, 0.0
    %2277 = vadd.xlane.f32.xlu0 %v2276
    %v2278 = vpop.xlane.xlu0 %2277
    %v2279 = vmul.f32 %v2275, %v2029
    %v2280 = vmul.f32 %v2278, %v2029
    %v2281 = vsub.f32 %v2269, %v2279
    %v2282 = vsub.f32 %v2270, %v2280
    %v2283 = vmul.f32 %v2281, %v2281
    %v2284 = vmul.f32 %v2282, %v2282
    %v2285 = vsel %vm228, %v2283, 0.0
    %2286 = vadd.xlane.f32.xlu0 %v2285
    %v2287 = vpop.xlane.xlu0 %2286
    %v2288 = vsel %vm228, %v2284, 0.0
    %2289 = vadd.xlane.f32.xlu0 %v2288
    %v2290 = vpop.xlane.xlu0 %2289
    %v2291 = vmul.f32 %v2287, %v2029
    %v2292 = vmul.f32 %v2290, %v2029
    %v2293 = vadd.f32 %v2291, 1e-05
    %v2294 = vadd.f32 %v2292, 1e-05
    %v2295 = vrsqrt.pop %v2293
    %v2296 = vrsqrt.pop %v2294
    %v2297 = vmul.f32 %v2281, %v2295
    %v2298 = vmul.f32 %v2282, %v2296
    %v2300 = vlaneseq
    %v2301 = vshrl.u32 %v2300, 7
    %v2302 = vsub.s32 0, %v2301
    %v2303 = vrot.slane %v2271, %v2302
    %v2305 = vmul.f32 %v2297, %v2303
    %v2306 = vmul.f32 %v2298, %v2303
    %v2308 = vlaneseq
    %v2309 = vshrl.u32 %v2308, 7
    %v2310 = vsub.s32 0, %v2309
    %v2311 = vrot.slane %v2272, %v2310
    %v2313 = vadd.f32 %v2305, %v2311
    %v2314 = vadd.f32 %v2306, %v2311
    %v2315 = vmul.f32 %v2313, %v2069
    %v2316 = vmul.f32 %v2314, %v2074
    %s2317 = scalar_lea.vmem %s10, 32
    %v2318 = vld [vmem:[%s2317] sm:$0xff]
    %v2319 = vld [vmem:[%s2317 + $0x8] sm:$0xff]
    %v2320 = vld [vmem:[%s2317 + $0x10] sm:$0xff]
    %v2321 = vld [vmem:[%s2317 + $0x18] sm:$0xff]
    %s2322 = scalar_lea.vmem %s11, 1
    %v2323 = vld [vmem:[%s2322] sm:$0x1]
    %v2325 = vlaneseq
    %v2326 = vshrl.u32 %v2325, 7
    %v2327 = vsub.s32 0, %v2326
    %v2328 = vrot.slane %v2323, %v2327
    %v2331 = vsel %vm228, %v2315, 0
    %v2334 = vsel %vm228, %v2316, 0
    %2336 = vmatprep.subr.mxu0 0.0
    %2337 = vmatpush1.msra.mxu0 0.0
    %2338 = vmatprep.subr.mxu0 0.0
    %2339 = vmatpush1.msra.mxu0 0.0
    %2340 = vmatprep.subr.mxu0 0.0
    %2341 = vmatpush1.msra.mxu0 0.0
    %2342 = vmatprep.subr.mxu0 0.0
    %2343 = vmatpush1.msra.mxu0 0.0
    %2344 = vmatprep.subr.mxu0 0.0
    %2345 = vmatpush1.msra.mxu0 0.0
    %2346 = vmatprep.subr.mxu0 0.0
    %2347 = vmatpush1.msra.mxu0 0.0
    %2348 = vmatprep.subr.mxu0 0.0
    %2349 = vmatpush1.msra.mxu0 0.0
    %2350 = vmatprep.subr.mxu0 0.0
    %2351 = vmatpush1.msra.mxu0 0.0
    %2352 = vmatprep.subr.mxu0 0.0
    %2353 = vmatpush1.msra.mxu0 0.0
    %2354 = vmatprep.subr.mxu0 0.0
    %2355 = vmatpush1.msra.mxu0 0.0
    %2356 = vmatprep.subr.mxu0 0.0
    %2357 = vmatpush1.msra.mxu0 0.0
    %2358 = vmatprep.subr.mxu0 0.0
    %2359 = vmatpush1.msra.mxu0 0.0
    %2360 = vmatprep.subr.mxu0 0.0
    %2361 = vmatpush1.msra.mxu0 %v2321
    %2362 = vmatprep.subr.mxu0 0.0
    %2363 = vmatpush1.msra.mxu0 %v2320
    %2364 = vmatprep.subr.mxu0 0.0
    %2365 = vmatpush1.msra.mxu0 %v2319
    %2366 = vmatprep.subr.mxu0 0.0
    %2367 = vmatpush1.msra.mxu0 %v2318
    %2368 = vmatprep.subr.mxu0 0.0
    %2369 = vmatpush2.msra.mxu0 0.0
    %2370 = vmatprep.subr.mxu0 0.0
    %2371 = vmatpush2.msra.mxu0 0.0
    %2372 = vmatprep.subr.mxu0 0.0
    %2373 = vmatpush2.msra.mxu0 0.0
    %2374 = vmatprep.subr.mxu0 0.0
    %2375 = vmatpush2.msra.mxu0 0.0
    %2376 = vmatprep.subr.mxu0 0.0
    %2377 = vmatpush2.msra.mxu0 0.0
    %2378 = vmatprep.subr.mxu0 0.0
    %2379 = vmatpush2.msra.mxu0 0.0
    %2380 = vmatprep.subr.mxu0 0.0
    %2381 = vmatpush2.msra.mxu0 0.0
    %2382 = vmatprep.subr.mxu0 0.0
    %2383 = vmatpush2.msra.mxu0 0.0
    %2384 = vmatprep.subr.mxu0 0.0
    %2385 = vmatpush2.msra.mxu0 0.0
    %2386 = vmatprep.subr.mxu0 0.0
    %2387 = vmatpush2.msra.mxu0 0.0
    %2388 = vmatprep.subr.mxu0 0.0
    %2389 = vmatpush2.msra.mxu0 0.0
    %2390 = vmatprep.subr.mxu0 0.0
    %2391 = vmatpush2.msra.mxu0 0.0
    %2392 = vmatprep.subr.mxu0 0.0
    %2393 = vmatpush2.msra.mxu0 0.0
    %2394 = vmatprep.subr.mxu0 0.0
    %2395 = vmatpush2.msra.mxu0 0.0
    %2396 = vmatprep.subr.mxu0 0.0
    %2397 = vmatpush2.msra.mxu0 0.0
    %2398 = vmatprep.subr.mxu0 0.0
    %2399 = vmatpush2.msra.mxu0 0.0
    %2400 = vmatprep.mubr.f32.mxu0 0.0
    %2401 = vmatmul.mubr.f32.gmra.mxu0 %v2331
    %v2402 = vpop.f32.mrf.mxu0
    %v2403 = vadd.f32 %v2328, %v2402
    %v2404 = vpop.f32.mrf.mxu0
    %2405 = vmatprep.mubr.f32.mxu0 0.0
    %2406 = vmatmul.mubr.f32.gmra.mxu0 %v2334
    %v2407 = vpop.f32.mrf.mxu0
    %v2408 = vadd.f32 %v2328, %v2407
    %v2409 = vpop.f32.mrf.mxu0
    %2410 = vdwg.mxu0
    %s2411 = scalar_lea.vmem %s12, 32
    %v2412 = vld [vmem:[%s2411] sm:$0xff]
    %v2413 = vld [vmem:[%s2411 + $0x8] sm:$0xff]
    %v2414 = vld [vmem:[%s2411 + $0x10] sm:$0xff]
    %v2415 = vld [vmem:[%s2411 + $0x18] sm:$0xff]
    %2418 = vrot.lane.b32.xlu0 %v2403, 96
    %v2419 = vpop.permute.xlu0 %2418
    %2420 = vrot.lane.b32.xlu0 %v2408, 96
    %v2421 = vpop.permute.xlu0 %2420
    %v2422 = vsel %vm872, %v2403, 0
    %v2424 = vsel %vm872, %v2408, 0
    %v2426 = vsel %vm872, %v2419, 0
    %v2428 = vsel %vm872, %v2421, 0
    %2430 = vmatprep.subr.mxu0 0.0
    %2431 = vmatpush1.xpose.msra.mxu0 0.0
    %2432 = vmatprep.subr.mxu0 0.0
    %2433 = vmatpush1.xpose.msra.mxu0 0.0
    %2434 = vmatprep.subr.mxu0 0.0
    %2435 = vmatpush1.xpose.msra.mxu0 0.0
    %2436 = vmatprep.subr.mxu0 0.0
    %2437 = vmatpush1.xpose.msra.mxu0 0.0
    %2438 = vmatprep.subr.mxu0 0.0
    %2439 = vmatpush1.xpose.msra.mxu0 0.0
    %2440 = vmatprep.subr.mxu0 0.0
    %2441 = vmatpush1.xpose.msra.mxu0 0.0
    %2442 = vmatprep.subr.mxu0 0.0
    %2443 = vmatpush1.xpose.msra.mxu0 0.0
    %2444 = vmatprep.subr.mxu0 0.0
    %2445 = vmatpush1.xpose.msra.mxu0 0.0
    %2446 = vmatprep.subr.mxu0 0.0
    %2447 = vmatpush1.xpose.msra.mxu0 0.0
    %2448 = vmatprep.subr.mxu0 0.0
    %2449 = vmatpush1.xpose.msra.mxu0 0.0
    %2450 = vmatprep.subr.mxu0 0.0
    %2451 = vmatpush1.xpose.msra.mxu0 0.0
    %2452 = vmatprep.subr.mxu0 0.0
    %2453 = vmatpush1.xpose.msra.mxu0 0.0
    %2454 = vmatprep.subr.mxu0 0.0
    %2455 = vmatpush1.xpose.msra.mxu0 0.0
    %2456 = vmatprep.subr.mxu0 0.0
    %2457 = vmatpush1.xpose.msra.mxu0 0.0
    %2458 = vmatprep.subr.mxu0 0.0
    %2459 = vmatpush1.xpose.msra.mxu0 %v2428
    %2460 = vmatprep.subr.mxu0 0.0
    %2461 = vmatpush1.xpose.msra.mxu0 %v2426
    %2462 = vmatprep.subr.mxu0 0.0
    %2463 = vmatpush2.xpose.msra.mxu0 0.0
    %2464 = vmatprep.subr.mxu0 0.0
    %2465 = vmatpush2.xpose.msra.mxu0 0.0
    %2466 = vmatprep.subr.mxu0 0.0
    %2467 = vmatpush2.xpose.msra.mxu0 0.0
    %2468 = vmatprep.subr.mxu0 0.0
    %2469 = vmatpush2.xpose.msra.mxu0 0.0
    %2470 = vmatprep.subr.mxu0 0.0
    %2471 = vmatpush2.xpose.msra.mxu0 0.0
    %2472 = vmatprep.subr.mxu0 0.0
    %2473 = vmatpush2.xpose.msra.mxu0 0.0
    %2474 = vmatprep.subr.mxu0 0.0
    %2475 = vmatpush2.xpose.msra.mxu0 0.0
    %2476 = vmatprep.subr.mxu0 0.0
    %2477 = vmatpush2.xpose.msra.mxu0 0.0
    %2478 = vmatprep.subr.mxu0 0.0
    %2479 = vmatpush2.xpose.msra.mxu0 0.0
    %2480 = vmatprep.subr.mxu0 0.0
    %2481 = vmatpush2.xpose.msra.mxu0 0.0
    %2482 = vmatprep.subr.mxu0 0.0
    %2483 = vmatpush2.xpose.msra.mxu0 0.0
    %2484 = vmatprep.subr.mxu0 0.0
    %2485 = vmatpush2.xpose.msra.mxu0 0.0
    %2486 = vmatprep.subr.mxu0 0.0
    %2487 = vmatpush2.xpose.msra.mxu0 0.0
    %2488 = vmatprep.subr.mxu0 0.0
    %2489 = vmatpush2.xpose.msra.mxu0 0.0
    %2490 = vmatprep.subr.mxu0 0.0
    %2491 = vmatpush2.xpose.msra.mxu0 0.0
    %2492 = vmatprep.subr.mxu0 0.0
    %2493 = vmatpush2.xpose.msra.mxu0 0.0
    %2494 = vmatprep.mubr.f32.mxu0 0.0
    %2495 = vmatmul.mubr.f32.gmra.mxu0 %v2422
    %v2496 = vpop.f32.mrf.mxu0
    %v2497 = vadd.f32 0.0, %v2496
    %v2498 = vpop.f32.mrf.mxu0
    %2499 = vmatprep.mubr.f32.mxu0 0.0
    %2500 = vmatmul.mubr.f32.gmra.mxu0 %v2424
    %v2501 = vpop.f32.mrf.mxu0
    %v2502 = vadd.f32 0.0, %v2501
    %v2503 = vpop.f32.mrf.mxu0
    %2504 = vdwg.mxu0
    %v2505 = vmul.f32 %v2497, 0.35355338
    %v2506 = vmul.f32 %v2502, 0.35355338
    %v2507 = vadd.f32 %v2505, %v114
    %v2508 = vadd.f32 %v2506, %v115
    %v2509 = vsel %vm960, %v2507, -inf
    %2510 = vmax.xlane.f32.xlu0 %v2509
    %v2511 = vpop.xlane.xlu0 %2510
    %v2512 = vsel %vm960, %v2508, -inf
    %2513 = vmax.xlane.f32.xlu0 %v2512
    %v2514 = vpop.xlane.xlu0 %2513
    %v2515 = vsub.f32 %v2507, %v2511
    %v2516 = vsub.f32 %v2508, %v2514
    %v2517 = vmul.f32 %v2515, 1.442695
    %v2518 = vpow.pop %v2517
    %v2519 = vmul.f32 %v2516, 1.442695
    %v2520 = vpow.pop %v2519
    %v2521 = vsel %vm960, %v2518, 0.0
    %2522 = vadd.xlane.f32.xlu0 %v2521
    %v2523 = vpop.xlane.xlu0 %2522
    %v2524 = vsel %vm960, %v2520, 0.0
    %2525 = vadd.xlane.f32.xlu0 %v2524
    %v2526 = vpop.xlane.xlu0 %2525
    %v2527 = vrcp.pop %v2523
    %v2528 = vmul.f32 %v2518, %v2527
    %v2529 = vrcp.pop %v2526
    %v2530 = vmul.f32 %v2520, %v2529
    %2531 = vrot.lane.b32.xlu0 %v2403, 64
    %v2532 = vpop.permute.xlu0 %2531
    %2533 = vrot.lane.b32.xlu0 %v2408, 64
    %v2534 = vpop.permute.xlu0 %2533
    %v2538 = vsel %vm960, %v2528, 0
    %v2541 = vsel %vm960, %v2530, 0
    %2543 = vmatprep.subr.mxu0 0.0
    %2544 = vmatpush1.msra.mxu0 0.0
    %2545 = vmatprep.subr.mxu0 0.0
    %2546 = vmatpush1.msra.mxu0 0.0
    %2547 = vmatprep.subr.mxu0 0.0
    %2548 = vmatpush1.msra.mxu0 0.0
    %2549 = vmatprep.subr.mxu0 0.0
    %2550 = vmatpush1.msra.mxu0 0.0
    %2551 = vmatprep.subr.mxu0 0.0
    %2552 = vmatpush1.msra.mxu0 0.0
    %2553 = vmatprep.subr.mxu0 0.0
    %2554 = vmatpush1.msra.mxu0 0.0
    %2555 = vmatprep.subr.mxu0 0.0
    %2556 = vmatpush1.msra.mxu0 0.0
    %2557 = vmatprep.subr.mxu0 0.0
    %2558 = vmatpush1.msra.mxu0 0.0
    %2559 = vmatprep.subr.mxu0 0.0
    %2560 = vmatpush1.msra.mxu0 0.0
    %2561 = vmatprep.subr.mxu0 0.0
    %2562 = vmatpush1.msra.mxu0 0.0
    %2563 = vmatprep.subr.mxu0 0.0
    %2564 = vmatpush1.msra.mxu0 0.0
    %2565 = vmatprep.subr.mxu0 0.0
    %2566 = vmatpush1.msra.mxu0 0.0
    %2567 = vmatprep.subr.mxu0 0.0
    %2568 = vmatpush1.msra.mxu0 0.0
    %2569 = vmatprep.subr.mxu0 0.0
    %2570 = vmatpush1.msra.mxu0 0.0
    %2571 = vmatprep.subr.mxu0 0.0
    %2572 = vmatpush1.msra.mxu0 %v2534
    %2573 = vmatprep.subr.mxu0 0.0
    %2574 = vmatpush1.msra.mxu0 %v2532
    %2575 = vmatprep.subr.mxu0 0.0
    %2576 = vmatpush2.msra.mxu0 0.0
    %2577 = vmatprep.subr.mxu0 0.0
    %2578 = vmatpush2.msra.mxu0 0.0
    %2579 = vmatprep.subr.mxu0 0.0
    %2580 = vmatpush2.msra.mxu0 0.0
    %2581 = vmatprep.subr.mxu0 0.0
    %2582 = vmatpush2.msra.mxu0 0.0
    %2583 = vmatprep.subr.mxu0 0.0
    %2584 = vmatpush2.msra.mxu0 0.0
    %2585 = vmatprep.subr.mxu0 0.0
    %2586 = vmatpush2.msra.mxu0 0.0
    %2587 = vmatprep.subr.mxu0 0.0
    %2588 = vmatpush2.msra.mxu0 0.0
    %2589 = vmatprep.subr.mxu0 0.0
    %2590 = vmatpush2.msra.mxu0 0.0
    %2591 = vmatprep.subr.mxu0 0.0
    %2592 = vmatpush2.msra.mxu0 0.0
    %2593 = vmatprep.subr.mxu0 0.0
    %2594 = vmatpush2.msra.mxu0 0.0
    %2595 = vmatprep.subr.mxu0 0.0
    %2596 = vmatpush2.msra.mxu0 0.0
    %2597 = vmatprep.subr.mxu0 0.0
    %2598 = vmatpush2.msra.mxu0 0.0
    %2599 = vmatprep.subr.mxu0 0.0
    %2600 = vmatpush2.msra.mxu0 0.0
    %2601 = vmatprep.subr.mxu0 0.0
    %2602 = vmatpush2.msra.mxu0 0.0
    %2603 = vmatprep.subr.mxu0 0.0
    %2604 = vmatpush2.msra.mxu0 0.0
    %2605 = vmatprep.subr.mxu0 0.0
    %2606 = vmatpush2.msra.mxu0 0.0
    %2607 = vmatprep.mubr.f32.mxu0 0.0
    %2608 = vmatmul.mubr.f32.gmra.mxu0 %v2538
    %v2609 = vpop.f32.mrf.mxu0
    %v2610 = vadd.f32 0.0, %v2609
    %v2611 = vpop.f32.mrf.mxu0
    %2612 = vmatprep.mubr.f32.mxu0 0.0
    %2613 = vmatmul.mubr.f32.gmra.mxu0 %v2541
    %v2614 = vpop.f32.mrf.mxu0
    %v2615 = vadd.f32 0.0, %v2614
    %v2616 = vpop.f32.mrf.mxu0
    %2617 = vdwg.mxu0
    %2618 = vrot.lane.b32.xlu0 %v2403, 120
    %v2619 = vpop.permute.xlu0 %2618
    %2620 = vrot.lane.b32.xlu0 %v2408, 120
    %v2621 = vpop.permute.xlu0 %2620
    %2622 = vrot.lane.b32.xlu0 %v2403, 88
    %v2623 = vpop.permute.xlu0 %2622
    %2624 = vrot.lane.b32.xlu0 %v2408, 88
    %v2625 = vpop.permute.xlu0 %2624
    %v2626 = vsel %vm872, %v2619, 0
    %v2628 = vsel %vm872, %v2621, 0
    %v2630 = vsel %vm872, %v2623, 0
    %v2632 = vsel %vm872, %v2625, 0
    %2634 = vmatprep.subr.mxu0 0.0
    %2635 = vmatpush1.xpose.msra.mxu0 0.0
    %2636 = vmatprep.subr.mxu0 0.0
    %2637 = vmatpush1.xpose.msra.mxu0 0.0
    %2638 = vmatprep.subr.mxu0 0.0
    %2639 = vmatpush1.xpose.msra.mxu0 0.0
    %2640 = vmatprep.subr.mxu0 0.0
    %2641 = vmatpush1.xpose.msra.mxu0 0.0
    %2642 = vmatprep.subr.mxu0 0.0
    %2643 = vmatpush1.xpose.msra.mxu0 0.0
    %2644 = vmatprep.subr.mxu0 0.0
    %2645 = vmatpush1.xpose.msra.mxu0 0.0
    %2646 = vmatprep.subr.mxu0 0.0
    %2647 = vmatpush1.xpose.msra.mxu0 0.0
    %2648 = vmatprep.subr.mxu0 0.0
    %2649 = vmatpush1.xpose.msra.mxu0 0.0
    %2650 = vmatprep.subr.mxu0 0.0
    %2651 = vmatpush1.xpose.msra.mxu0 0.0
    %2652 = vmatprep.subr.mxu0 0.0
    %2653 = vmatpush1.xpose.msra.mxu0 0.0
    %2654 = vmatprep.subr.mxu0 0.0
    %2655 = vmatpush1.xpose.msra.mxu0 0.0
    %2656 = vmatprep.subr.mxu0 0.0
    %2657 = vmatpush1.xpose.msra.mxu0 0.0
    %2658 = vmatprep.subr.mxu0 0.0
    %2659 = vmatpush1.xpose.msra.mxu0 0.0
    %2660 = vmatprep.subr.mxu0 0.0
    %2661 = vmatpush1.xpose.msra.mxu0 0.0
    %2662 = vmatprep.subr.mxu0 0.0
    %2663 = vmatpush1.xpose.msra.mxu0 %v2632
    %2664 = vmatprep.subr.mxu0 0.0
    %2665 = vmatpush1.xpose.msra.mxu0 %v2630
    %2666 = vmatprep.subr.mxu0 0.0
    %2667 = vmatpush2.xpose.msra.mxu0 0.0
    %2668 = vmatprep.subr.mxu0 0.0
    %2669 = vmatpush2.xpose.msra.mxu0 0.0
    %2670 = vmatprep.subr.mxu0 0.0
    %2671 = vmatpush2.xpose.msra.mxu0 0.0
    %2672 = vmatprep.subr.mxu0 0.0
    %2673 = vmatpush2.xpose.msra.mxu0 0.0
    %2674 = vmatprep.subr.mxu0 0.0
    %2675 = vmatpush2.xpose.msra.mxu0 0.0
    %2676 = vmatprep.subr.mxu0 0.0
    %2677 = vmatpush2.xpose.msra.mxu0 0.0
    %2678 = vmatprep.subr.mxu0 0.0
    %2679 = vmatpush2.xpose.msra.mxu0 0.0
    %2680 = vmatprep.subr.mxu0 0.0
    %2681 = vmatpush2.xpose.msra.mxu0 0.0
    %2682 = vmatprep.subr.mxu0 0.0
    %2683 = vmatpush2.xpose.msra.mxu0 0.0
    %2684 = vmatprep.subr.mxu0 0.0
    %2685 = vmatpush2.xpose.msra.mxu0 0.0
    %2686 = vmatprep.subr.mxu0 0.0
    %2687 = vmatpush2.xpose.msra.mxu0 0.0
    %2688 = vmatprep.subr.mxu0 0.0
    %2689 = vmatpush2.xpose.msra.mxu0 0.0
    %2690 = vmatprep.subr.mxu0 0.0
    %2691 = vmatpush2.xpose.msra.mxu0 0.0
    %2692 = vmatprep.subr.mxu0 0.0
    %2693 = vmatpush2.xpose.msra.mxu0 0.0
    %2694 = vmatprep.subr.mxu0 0.0
    %2695 = vmatpush2.xpose.msra.mxu0 0.0
    %2696 = vmatprep.subr.mxu0 0.0
    %2697 = vmatpush2.xpose.msra.mxu0 0.0
    %2698 = vmatprep.mubr.f32.mxu0 0.0
    %2699 = vmatmul.mubr.f32.gmra.mxu0 %v2626
    %v2700 = vpop.f32.mrf.mxu0
    %v2701 = vadd.f32 0.0, %v2700
    %v2702 = vpop.f32.mrf.mxu0
    %2703 = vmatprep.mubr.f32.mxu0 0.0
    %2704 = vmatmul.mubr.f32.gmra.mxu0 %v2628
    %v2705 = vpop.f32.mrf.mxu0
    %v2706 = vadd.f32 0.0, %v2705
    %v2707 = vpop.f32.mrf.mxu0
    %2708 = vdwg.mxu0
    %v2709 = vmul.f32 %v2701, 0.35355338
    %v2710 = vmul.f32 %v2706, 0.35355338
    %v2711 = vadd.f32 %v2709, %v114
    %v2712 = vadd.f32 %v2710, %v115
    %v2713 = vsel %vm960, %v2711, -inf
    %2714 = vmax.xlane.f32.xlu0 %v2713
    %v2715 = vpop.xlane.xlu0 %2714
    %v2716 = vsel %vm960, %v2712, -inf
    %2717 = vmax.xlane.f32.xlu0 %v2716
    %v2718 = vpop.xlane.xlu0 %2717
    %v2719 = vsub.f32 %v2711, %v2715
    %v2720 = vsub.f32 %v2712, %v2718
    %v2721 = vmul.f32 %v2719, 1.442695
    %v2722 = vpow.pop %v2721
    %v2723 = vmul.f32 %v2720, 1.442695
    %v2724 = vpow.pop %v2723
    %v2725 = vsel %vm960, %v2722, 0.0
    %2726 = vadd.xlane.f32.xlu0 %v2725
    %v2727 = vpop.xlane.xlu0 %2726
    %v2728 = vsel %vm960, %v2724, 0.0
    %2729 = vadd.xlane.f32.xlu0 %v2728
    %v2730 = vpop.xlane.xlu0 %2729
    %v2731 = vrcp.pop %v2727
    %v2732 = vmul.f32 %v2722, %v2731
    %v2733 = vrcp.pop %v2730
    %v2734 = vmul.f32 %v2724, %v2733
    %2735 = vrot.lane.b32.xlu0 %v2403, 56
    %v2736 = vpop.permute.xlu0 %2735
    %2737 = vrot.lane.b32.xlu0 %v2408, 56
    %v2738 = vpop.permute.xlu0 %2737
    %v2742 = vsel %vm960, %v2732, 0
    %v2745 = vsel %vm960, %v2734, 0
    %2747 = vmatprep.subr.mxu0 0.0
    %2748 = vmatpush1.msra.mxu0 0.0
    %2749 = vmatprep.subr.mxu0 0.0
    %2750 = vmatpush1.msra.mxu0 0.0
    %2751 = vmatprep.subr.mxu0 0.0
    %2752 = vmatpush1.msra.mxu0 0.0
    %2753 = vmatprep.subr.mxu0 0.0
    %2754 = vmatpush1.msra.mxu0 0.0
    %2755 = vmatprep.subr.mxu0 0.0
    %2756 = vmatpush1.msra.mxu0 0.0
    %2757 = vmatprep.subr.mxu0 0.0
    %2758 = vmatpush1.msra.mxu0 0.0
    %2759 = vmatprep.subr.mxu0 0.0
    %2760 = vmatpush1.msra.mxu0 0.0
    %2761 = vmatprep.subr.mxu0 0.0
    %2762 = vmatpush1.msra.mxu0 0.0
    %2763 = vmatprep.subr.mxu0 0.0
    %2764 = vmatpush1.msra.mxu0 0.0
    %2765 = vmatprep.subr.mxu0 0.0
    %2766 = vmatpush1.msra.mxu0 0.0
    %2767 = vmatprep.subr.mxu0 0.0
    %2768 = vmatpush1.msra.mxu0 0.0
    %2769 = vmatprep.subr.mxu0 0.0
    %2770 = vmatpush1.msra.mxu0 0.0
    %2771 = vmatprep.subr.mxu0 0.0
    %2772 = vmatpush1.msra.mxu0 0.0
    %2773 = vmatprep.subr.mxu0 0.0
    %2774 = vmatpush1.msra.mxu0 0.0
    %2775 = vmatprep.subr.mxu0 0.0
    %2776 = vmatpush1.msra.mxu0 %v2738
    %2777 = vmatprep.subr.mxu0 0.0
    %2778 = vmatpush1.msra.mxu0 %v2736
    %2779 = vmatprep.subr.mxu0 0.0
    %2780 = vmatpush2.msra.mxu0 0.0
    %2781 = vmatprep.subr.mxu0 0.0
    %2782 = vmatpush2.msra.mxu0 0.0
    %2783 = vmatprep.subr.mxu0 0.0
    %2784 = vmatpush2.msra.mxu0 0.0
    %2785 = vmatprep.subr.mxu0 0.0
    %2786 = vmatpush2.msra.mxu0 0.0
    %2787 = vmatprep.subr.mxu0 0.0
    %2788 = vmatpush2.msra.mxu0 0.0
    %2789 = vmatprep.subr.mxu0 0.0
    %2790 = vmatpush2.msra.mxu0 0.0
    %2791 = vmatprep.subr.mxu0 0.0
    %2792 = vmatpush2.msra.mxu0 0.0
    %2793 = vmatprep.subr.mxu0 0.0
    %2794 = vmatpush2.msra.mxu0 0.0
    %2795 = vmatprep.subr.mxu0 0.0
    %2796 = vmatpush2.msra.mxu0 0.0
    %2797 = vmatprep.subr.mxu0 0.0
    %2798 = vmatpush2.msra.mxu0 0.0
    %2799 = vmatprep.subr.mxu0 0.0
    %2800 = vmatpush2.msra.mxu0 0.0
    %2801 = vmatprep.subr.mxu0 0.0
    %2802 = vmatpush2.msra.mxu0 0.0
    %2803 = vmatprep.subr.mxu0 0.0
    %2804 = vmatpush2.msra.mxu0 0.0
    %2805 = vmatprep.subr.mxu0 0.0
    %2806 = vmatpush2.msra.mxu0 0.0
    %2807 = vmatprep.subr.mxu0 0.0
    %2808 = vmatpush2.msra.mxu0 0.0
    %2809 = vmatprep.subr.mxu0 0.0
    %2810 = vmatpush2.msra.mxu0 0.0
    %2811 = vmatprep.mubr.f32.mxu0 0.0
    %2812 = vmatmul.mubr.f32.gmra.mxu0 %v2742
    %v2813 = vpop.f32.mrf.mxu0
    %v2814 = vadd.f32 0.0, %v2813
    %v2815 = vpop.f32.mrf.mxu0
    %2816 = vmatprep.mubr.f32.mxu0 0.0
    %2817 = vmatmul.mubr.f32.gmra.mxu0 %v2745
    %v2818 = vpop.f32.mrf.mxu0
    %v2819 = vadd.f32 0.0, %v2818
    %v2820 = vpop.f32.mrf.mxu0
    %2821 = vdwg.mxu0
    %v2823 = vsel %vm872, %v2814, 0
    %v2826 = vsel %vm872, %v2819, 0
    %2828 = vmatprep.subr.mxu0 0.0
    %2829 = vmatpush1.msra.mxu0 0.0
    %2830 = vmatprep.subr.mxu0 0.0
    %2831 = vmatpush1.msra.mxu0 0.0
    %2832 = vmatprep.subr.mxu0 0.0
    %2833 = vmatpush1.msra.mxu0 0.0
    %2834 = vmatprep.subr.mxu0 0.0
    %2835 = vmatpush1.msra.mxu0 0.0
    %2836 = vmatprep.subr.mxu0 0.0
    %2837 = vmatpush1.msra.mxu0 0.0
    %2838 = vmatprep.subr.mxu0 0.0
    %2839 = vmatpush1.msra.mxu0 0.0
    %2840 = vmatprep.subr.mxu0 0.0
    %2841 = vmatpush1.msra.mxu0 0.0
    %2842 = vmatprep.subr.mxu0 0.0
    %2843 = vmatpush1.msra.mxu0 0.0
    %2844 = vmatprep.subr.mxu0 0.0
    %2845 = vmatpush1.msra.mxu0 0.0
    %2846 = vmatprep.subr.mxu0 0.0
    %2847 = vmatpush1.msra.mxu0 0.0
    %2848 = vmatprep.subr.mxu0 0.0
    %2849 = vmatpush1.msra.mxu0 0.0
    %2850 = vmatprep.subr.mxu0 0.0
    %2851 = vmatpush1.msra.mxu0 0.0
    %2852 = vmatprep.subr.mxu0 0.0
    %2853 = vmatpush1.msra.mxu0 0.0
    %2854 = vmatprep.subr.mxu0 0.0
    %2855 = vmatpush1.msra.mxu0 0.0
    %2856 = vmatprep.subr.mxu0 0.0
    %2857 = vmatpush1.msra.mxu0 0.0
    %2858 = vmatprep.subr.mxu0 0.0
    %2859 = vmatpush1.msra.mxu0 %v2413
    %2860 = vmatprep.subr.mxu0 0.0
    %2861 = vmatpush2.msra.mxu0 0.0
    %2862 = vmatprep.subr.mxu0 0.0
    %2863 = vmatpush2.msra.mxu0 0.0
    %2864 = vmatprep.subr.mxu0 0.0
    %2865 = vmatpush2.msra.mxu0 0.0
    %2866 = vmatprep.subr.mxu0 0.0
    %2867 = vmatpush2.msra.mxu0 0.0
    %2868 = vmatprep.subr.mxu0 0.0
    %2869 = vmatpush2.msra.mxu0 0.0
    %2870 = vmatprep.subr.mxu0 0.0
    %2871 = vmatpush2.msra.mxu0 0.0
    %2872 = vmatprep.subr.mxu0 0.0
    %2873 = vmatpush2.msra.mxu0 0.0
    %2874 = vmatprep.subr.mxu0 0.0
    %2875 = vmatpush2.msra.mxu0 0.0
    %2876 = vmatprep.subr.mxu0 0.0
    %2877 = vmatpush2.msra.mxu0 0.0
    %2878 = vmatprep.subr.mxu0 0.0
    %2879 = vmatpush2.msra.mxu0 0.0
    %2880 = vmatprep.subr.mxu0 0.0
    %2881 = vmatpush2.msra.mxu0 0.0
    %2882 = vmatprep.subr.mxu0 0.0
    %2883 = vmatpush2.msra.mxu0 0.0
    %2884 = vmatprep.subr.mxu0 0.0
    %2885 = vmatpush2.msra.mxu0 0.0
    %2886 = vmatprep.subr.mxu0 0.0
    %2887 = vmatpush2.msra.mxu0 0.0
    %2888 = vmatprep.subr.mxu0 0.0
    %2889 = vmatpush2.msra.mxu0 0.0
    %2890 = vmatprep.subr.mxu0 0.0
    %2891 = vmatpush2.msra.mxu0 0.0
    %2892 = vmatprep.mubr.f32.mxu0 0.0
    %2893 = vmatmul.mubr.f32.gmra.mxu0 %v2823
    %v2894 = vpop.f32.mrf.mxu0
    %v2895 = vadd.f32 0.0, %v2894
    %v2896 = vpop.f32.mrf.mxu0
    %2897 = vmatprep.mubr.f32.mxu0 0.0
    %2898 = vmatmul.mubr.f32.gmra.mxu0 %v2826
    %v2899 = vpop.f32.mrf.mxu0
    %v2900 = vadd.f32 0.0, %v2899
    %v2901 = vpop.f32.mrf.mxu0
    %2902 = vdwg.mxu0
    %v2904 = vsel %vm872, %v2610, 0
    %v2907 = vsel %vm872, %v2615, 0
    %2909 = vmatprep.subr.mxu0 0.0
    %2910 = vmatpush1.msra.mxu0 0.0
    %2911 = vmatprep.subr.mxu0 0.0
    %2912 = vmatpush1.msra.mxu0 0.0
    %2913 = vmatprep.subr.mxu0 0.0
    %2914 = vmatpush1.msra.mxu0 0.0
    %2915 = vmatprep.subr.mxu0 0.0
    %2916 = vmatpush1.msra.mxu0 0.0
    %2917 = vmatprep.subr.mxu0 0.0
    %2918 = vmatpush1.msra.mxu0 0.0
    %2919 = vmatprep.subr.mxu0 0.0
    %2920 = vmatpush1.msra.mxu0 0.0
    %2921 = vmatprep.subr.mxu0 0.0
    %2922 = vmatpush1.msra.mxu0 0.0
    %2923 = vmatprep.subr.mxu0 0.0
    %2924 = vmatpush1.msra.mxu0 0.0
    %2925 = vmatprep.subr.mxu0 0.0
    %2926 = vmatpush1.msra.mxu0 0.0
    %2927 = vmatprep.subr.mxu0 0.0
    %2928 = vmatpush1.msra.mxu0 0.0
    %2929 = vmatprep.subr.mxu0 0.0
    %2930 = vmatpush1.msra.mxu0 0.0
    %2931 = vmatprep.subr.mxu0 0.0
    %2932 = vmatpush1.msra.mxu0 0.0
    %2933 = vmatprep.subr.mxu0 0.0
    %2934 = vmatpush1.msra.mxu0 0.0
    %2935 = vmatprep.subr.mxu0 0.0
    %2936 = vmatpush1.msra.mxu0 0.0
    %2937 = vmatprep.subr.mxu0 0.0
    %2938 = vmatpush1.msra.mxu0 0.0
    %2939 = vmatprep.subr.mxu0 0.0
    %2940 = vmatpush1.msra.mxu0 %v2412
    %2941 = vmatprep.subr.mxu0 0.0
    %2942 = vmatpush2.msra.mxu0 0.0
    %2943 = vmatprep.subr.mxu0 0.0
    %2944 = vmatpush2.msra.mxu0 0.0
    %2945 = vmatprep.subr.mxu0 0.0
    %2946 = vmatpush2.msra.mxu0 0.0
    %2947 = vmatprep.subr.mxu0 0.0
    %2948 = vmatpush2.msra.mxu0 0.0
    %2949 = vmatprep.subr.mxu0 0.0
    %2950 = vmatpush2.msra.mxu0 0.0
    %2951 = vmatprep.subr.mxu0 0.0
    %2952 = vmatpush2.msra.mxu0 0.0
    %2953 = vmatprep.subr.mxu0 0.0
    %2954 = vmatpush2.msra.mxu0 0.0
    %2955 = vmatprep.subr.mxu0 0.0
    %2956 = vmatpush2.msra.mxu0 0.0
    %2957 = vmatprep.subr.mxu0 0.0
    %2958 = vmatpush2.msra.mxu0 0.0
    %2959 = vmatprep.subr.mxu0 0.0
    %2960 = vmatpush2.msra.mxu0 0.0
    %2961 = vmatprep.subr.mxu0 0.0
    %2962 = vmatpush2.msra.mxu0 0.0
    %2963 = vmatprep.subr.mxu0 0.0
    %2964 = vmatpush2.msra.mxu0 0.0
    %2965 = vmatprep.subr.mxu0 0.0
    %2966 = vmatpush2.msra.mxu0 0.0
    %2967 = vmatprep.subr.mxu0 0.0
    %2968 = vmatpush2.msra.mxu0 0.0
    %2969 = vmatprep.subr.mxu0 0.0
    %2970 = vmatpush2.msra.mxu0 0.0
    %2971 = vmatprep.subr.mxu0 0.0
    %2972 = vmatpush2.msra.mxu0 0.0
    %2973 = vmatprep.mubr.f32.mxu0 0.0
    %2974 = vmatmul.mubr.f32.gmra.mxu0 %v2904
    %v2975 = vpop.f32.mrf.mxu0
    %v2976 = vadd.f32 %v2895, %v2975
    %v2977 = vpop.f32.mrf.mxu0
    %2978 = vmatprep.mubr.f32.mxu0 0.0
    %2979 = vmatmul.mubr.f32.gmra.mxu0 %v2907
    %v2980 = vpop.f32.mrf.mxu0
    %v2981 = vadd.f32 %v2900, %v2980
    %v2982 = vpop.f32.mrf.mxu0
    %2983 = vdwg.mxu0
    %2984 = vrot.lane.b32.xlu0 %v2403, 112
    %v2985 = vpop.permute.xlu0 %2984
    %2986 = vrot.lane.b32.xlu0 %v2408, 112
    %v2987 = vpop.permute.xlu0 %2986
    %2988 = vrot.lane.b32.xlu0 %v2403, 80
    %v2989 = vpop.permute.xlu0 %2988
    %2990 = vrot.lane.b32.xlu0 %v2408, 80
    %v2991 = vpop.permute.xlu0 %2990
    %v2992 = vsel %vm872, %v2985, 0
    %v2994 = vsel %vm872, %v2987, 0
    %v2996 = vsel %vm872, %v2989, 0
    %v2998 = vsel %vm872, %v2991, 0
    %3000 = vmatprep.subr.mxu0 0.0
    %3001 = vmatpush1.xpose.msra.mxu0 0.0
    %3002 = vmatprep.subr.mxu0 0.0
    %3003 = vmatpush1.xpose.msra.mxu0 0.0
    %3004 = vmatprep.subr.mxu0 0.0
    %3005 = vmatpush1.xpose.msra.mxu0 0.0
    %3006 = vmatprep.subr.mxu0 0.0
    %3007 = vmatpush1.xpose.msra.mxu0 0.0
    %3008 = vmatprep.subr.mxu0 0.0
    %3009 = vmatpush1.xpose.msra.mxu0 0.0
    %3010 = vmatprep.subr.mxu0 0.0
    %3011 = vmatpush1.xpose.msra.mxu0 0.0
    %3012 = vmatprep.subr.mxu0 0.0
    %3013 = vmatpush1.xpose.msra.mxu0 0.0
    %3014 = vmatprep.subr.mxu0 0.0
    %3015 = vmatpush1.xpose.msra.mxu0 0.0
    %3016 = vmatprep.subr.mxu0 0.0
    %3017 = vmatpush1.xpose.msra.mxu0 0.0
    %3018 = vmatprep.subr.mxu0 0.0
    %3019 = vmatpush1.xpose.msra.mxu0 0.0
    %3020 = vmatprep.subr.mxu0 0.0
    %3021 = vmatpush1.xpose.msra.mxu0 0.0
    %3022 = vmatprep.subr.mxu0 0.0
    %3023 = vmatpush1.xpose.msra.mxu0 0.0
    %3024 = vmatprep.subr.mxu0 0.0
    %3025 = vmatpush1.xpose.msra.mxu0 0.0
    %3026 = vmatprep.subr.mxu0 0.0
    %3027 = vmatpush1.xpose.msra.mxu0 0.0
    %3028 = vmatprep.subr.mxu0 0.0
    %3029 = vmatpush1.xpose.msra.mxu0 %v2998
    %3030 = vmatprep.subr.mxu0 0.0
    %3031 = vmatpush1.xpose.msra.mxu0 %v2996
    %3032 = vmatprep.subr.mxu0 0.0
    %3033 = vmatpush2.xpose.msra.mxu0 0.0
    %3034 = vmatprep.subr.mxu0 0.0
    %3035 = vmatpush2.xpose.msra.mxu0 0.0
    %3036 = vmatprep.subr.mxu0 0.0
    %3037 = vmatpush2.xpose.msra.mxu0 0.0
    %3038 = vmatprep.subr.mxu0 0.0
    %3039 = vmatpush2.xpose.msra.mxu0 0.0
    %3040 = vmatprep.subr.mxu0 0.0
    %3041 = vmatpush2.xpose.msra.mxu0 0.0
    %3042 = vmatprep.subr.mxu0 0.0
    %3043 = vmatpush2.xpose.msra.mxu0 0.0
    %3044 = vmatprep.subr.mxu0 0.0
    %3045 = vmatpush2.xpose.msra.mxu0 0.0
    %3046 = vmatprep.subr.mxu0 0.0
    %3047 = vmatpush2.xpose.msra.mxu0 0.0
    %3048 = vmatprep.subr.mxu0 0.0
    %3049 = vmatpush2.xpose.msra.mxu0 0.0
    %3050 = vmatprep.subr.mxu0 0.0
    %3051 = vmatpush2.xpose.msra.mxu0 0.0
    %3052 = vmatprep.subr.mxu0 0.0
    %3053 = vmatpush2.xpose.msra.mxu0 0.0
    %3054 = vmatprep.subr.mxu0 0.0
    %3055 = vmatpush2.xpose.msra.mxu0 0.0
    %3056 = vmatprep.subr.mxu0 0.0
    %3057 = vmatpush2.xpose.msra.mxu0 0.0
    %3058 = vmatprep.subr.mxu0 0.0
    %3059 = vmatpush2.xpose.msra.mxu0 0.0
    %3060 = vmatprep.subr.mxu0 0.0
    %3061 = vmatpush2.xpose.msra.mxu0 0.0
    %3062 = vmatprep.subr.mxu0 0.0
    %3063 = vmatpush2.xpose.msra.mxu0 0.0
    %3064 = vmatprep.mubr.f32.mxu0 0.0
    %3065 = vmatmul.mubr.f32.gmra.mxu0 %v2992
    %v3066 = vpop.f32.mrf.mxu0
    %v3067 = vadd.f32 0.0, %v3066
    %v3068 = vpop.f32.mrf.mxu0
    %3069 = vmatprep.mubr.f32.mxu0 0.0
    %3070 = vmatmul.mubr.f32.gmra.mxu0 %v2994
    %v3071 = vpop.f32.mrf.mxu0
    %v3072 = vadd.f32 0.0, %v3071
    %v3073 = vpop.f32.mrf.mxu0
    %3074 = vdwg.mxu0
    %v3075 = vmul.f32 %v3067, 0.35355338
    %v3076 = vmul.f32 %v3072, 0.35355338
    %v3077 = vadd.f32 %v3075, %v114
    %v3078 = vadd.f32 %v3076, %v115
    %v3079 = vsel %vm960, %v3077, -inf
    %3080 = vmax.xlane.f32.xlu0 %v3079
    %v3081 = vpop.xlane.xlu0 %3080
    %v3082 = vsel %vm960, %v3078, -inf
    %3083 = vmax.xlane.f32.xlu0 %v3082
    %v3084 = vpop.xlane.xlu0 %3083
    %v3085 = vsub.f32 %v3077, %v3081
    %v3086 = vsub.f32 %v3078, %v3084
    %v3087 = vmul.f32 %v3085, 1.442695
    %v3088 = vpow.pop %v3087
    %v3089 = vmul.f32 %v3086, 1.442695
    %v3090 = vpow.pop %v3089
    %v3091 = vsel %vm960, %v3088, 0.0
    %3092 = vadd.xlane.f32.xlu0 %v3091
    %v3093 = vpop.xlane.xlu0 %3092
    %v3094 = vsel %vm960, %v3090, 0.0
    %3095 = vadd.xlane.f32.xlu0 %v3094
    %v3096 = vpop.xlane.xlu0 %3095
    %v3097 = vrcp.pop %v3093
    %v3098 = vmul.f32 %v3088, %v3097
    %v3099 = vrcp.pop %v3096
    %v3100 = vmul.f32 %v3090, %v3099
    %3101 = vrot.lane.b32.xlu0 %v2403, 48
    %v3102 = vpop.permute.xlu0 %3101
    %3103 = vrot.lane.b32.xlu0 %v2408, 48
    %v3104 = vpop.permute.xlu0 %3103
    %v3108 = vsel %vm960, %v3098, 0
    %v3111 = vsel %vm960, %v3100, 0
    %3113 = vmatprep.subr.mxu0 0.0
    %3114 = vmatpush1.msra.mxu0 0.0
    %3115 = vmatprep.subr.mxu0 0.0
    %3116 = vmatpush1.msra.mxu0 0.0
    %3117 = vmatprep.subr.mxu0 0.0
    %3118 = vmatpush1.msra.mxu0 0.0
    %3119 = vmatprep.subr.mxu0 0.0
    %3120 = vmatpush1.msra.mxu0 0.0
    %3121 = vmatprep.subr.mxu0 0.0
    %3122 = vmatpush1.msra.mxu0 0.0
    %3123 = vmatprep.subr.mxu0 0.0
    %3124 = vmatpush1.msra.mxu0 0.0
    %3125 = vmatprep.subr.mxu0 0.0
    %3126 = vmatpush1.msra.mxu0 0.0
    %3127 = vmatprep.subr.mxu0 0.0
    %3128 = vmatpush1.msra.mxu0 0.0
    %3129 = vmatprep.subr.mxu0 0.0
    %3130 = vmatpush1.msra.mxu0 0.0
    %3131 = vmatprep.subr.mxu0 0.0
    %3132 = vmatpush1.msra.mxu0 0.0
    %3133 = vmatprep.subr.mxu0 0.0
    %3134 = vmatpush1.msra.mxu0 0.0
    %3135 = vmatprep.subr.mxu0 0.0
    %3136 = vmatpush1.msra.mxu0 0.0
    %3137 = vmatprep.subr.mxu0 0.0
    %3138 = vmatpush1.msra.mxu0 0.0
    %3139 = vmatprep.subr.mxu0 0.0
    %3140 = vmatpush1.msra.mxu0 0.0
    %3141 = vmatprep.subr.mxu0 0.0
    %3142 = vmatpush1.msra.mxu0 %v3104
    %3143 = vmatprep.subr.mxu0 0.0
    %3144 = vmatpush1.msra.mxu0 %v3102
    %3145 = vmatprep.subr.mxu0 0.0
    %3146 = vmatpush2.msra.mxu0 0.0
    %3147 = vmatprep.subr.mxu0 0.0
    %3148 = vmatpush2.msra.mxu0 0.0
    %3149 = vmatprep.subr.mxu0 0.0
    %3150 = vmatpush2.msra.mxu0 0.0
    %3151 = vmatprep.subr.mxu0 0.0
    %3152 = vmatpush2.msra.mxu0 0.0
    %3153 = vmatprep.subr.mxu0 0.0
    %3154 = vmatpush2.msra.mxu0 0.0
    %3155 = vmatprep.subr.mxu0 0.0
    %3156 = vmatpush2.msra.mxu0 0.0
    %3157 = vmatprep.subr.mxu0 0.0
    %3158 = vmatpush2.msra.mxu0 0.0
    %3159 = vmatprep.subr.mxu0 0.0
    %3160 = vmatpush2.msra.mxu0 0.0
    %3161 = vmatprep.subr.mxu0 0.0
    %3162 = vmatpush2.msra.mxu0 0.0
    %3163 = vmatprep.subr.mxu0 0.0
    %3164 = vmatpush2.msra.mxu0 0.0
    %3165 = vmatprep.subr.mxu0 0.0
    %3166 = vmatpush2.msra.mxu0 0.0
    %3167 = vmatprep.subr.mxu0 0.0
    %3168 = vmatpush2.msra.mxu0 0.0
    %3169 = vmatprep.subr.mxu0 0.0
    %3170 = vmatpush2.msra.mxu0 0.0
    %3171 = vmatprep.subr.mxu0 0.0
    %3172 = vmatpush2.msra.mxu0 0.0
    %3173 = vmatprep.subr.mxu0 0.0
    %3174 = vmatpush2.msra.mxu0 0.0
    %3175 = vmatprep.subr.mxu0 0.0
    %3176 = vmatpush2.msra.mxu0 0.0
    %3177 = vmatprep.mubr.f32.mxu0 0.0
    %3178 = vmatmul.mubr.f32.gmra.mxu0 %v3108
    %v3179 = vpop.f32.mrf.mxu0
    %v3180 = vadd.f32 0.0, %v3179
    %v3181 = vpop.f32.mrf.mxu0
    %3182 = vmatprep.mubr.f32.mxu0 0.0
    %3183 = vmatmul.mubr.f32.gmra.mxu0 %v3111
    %v3184 = vpop.f32.mrf.mxu0
    %v3185 = vadd.f32 0.0, %v3184
    %v3186 = vpop.f32.mrf.mxu0
    %3187 = vdwg.mxu0
    %v3189 = vsel %vm872, %v3180, 0
    %v3192 = vsel %vm872, %v3185, 0
    %3194 = vmatprep.subr.mxu0 0.0
    %3195 = vmatpush1.msra.mxu0 0.0
    %3196 = vmatprep.subr.mxu0 0.0
    %3197 = vmatpush1.msra.mxu0 0.0
    %3198 = vmatprep.subr.mxu0 0.0
    %3199 = vmatpush1.msra.mxu0 0.0
    %3200 = vmatprep.subr.mxu0 0.0
    %3201 = vmatpush1.msra.mxu0 0.0
    %3202 = vmatprep.subr.mxu0 0.0
    %3203 = vmatpush1.msra.mxu0 0.0
    %3204 = vmatprep.subr.mxu0 0.0
    %3205 = vmatpush1.msra.mxu0 0.0
    %3206 = vmatprep.subr.mxu0 0.0
    %3207 = vmatpush1.msra.mxu0 0.0
    %3208 = vmatprep.subr.mxu0 0.0
    %3209 = vmatpush1.msra.mxu0 0.0
    %3210 = vmatprep.subr.mxu0 0.0
    %3211 = vmatpush1.msra.mxu0 0.0
    %3212 = vmatprep.subr.mxu0 0.0
    %3213 = vmatpush1.msra.mxu0 0.0
    %3214 = vmatprep.subr.mxu0 0.0
    %3215 = vmatpush1.msra.mxu0 0.0
    %3216 = vmatprep.subr.mxu0 0.0
    %3217 = vmatpush1.msra.mxu0 0.0
    %3218 = vmatprep.subr.mxu0 0.0
    %3219 = vmatpush1.msra.mxu0 0.0
    %3220 = vmatprep.subr.mxu0 0.0
    %3221 = vmatpush1.msra.mxu0 0.0
    %3222 = vmatprep.subr.mxu0 0.0
    %3223 = vmatpush1.msra.mxu0 0.0
    %3224 = vmatprep.subr.mxu0 0.0
    %3225 = vmatpush1.msra.mxu0 %v2414
    %3226 = vmatprep.subr.mxu0 0.0
    %3227 = vmatpush2.msra.mxu0 0.0
    %3228 = vmatprep.subr.mxu0 0.0
    %3229 = vmatpush2.msra.mxu0 0.0
    %3230 = vmatprep.subr.mxu0 0.0
    %3231 = vmatpush2.msra.mxu0 0.0
    %3232 = vmatprep.subr.mxu0 0.0
    %3233 = vmatpush2.msra.mxu0 0.0
    %3234 = vmatprep.subr.mxu0 0.0
    %3235 = vmatpush2.msra.mxu0 0.0
    %3236 = vmatprep.subr.mxu0 0.0
    %3237 = vmatpush2.msra.mxu0 0.0
    %3238 = vmatprep.subr.mxu0 0.0
    %3239 = vmatpush2.msra.mxu0 0.0
    %3240 = vmatprep.subr.mxu0 0.0
    %3241 = vmatpush2.msra.mxu0 0.0
    %3242 = vmatprep.subr.mxu0 0.0
    %3243 = vmatpush2.msra.mxu0 0.0
    %3244 = vmatprep.subr.mxu0 0.0
    %3245 = vmatpush2.msra.mxu0 0.0
    %3246 = vmatprep.subr.mxu0 0.0
    %3247 = vmatpush2.msra.mxu0 0.0
    %3248 = vmatprep.subr.mxu0 0.0
    %3249 = vmatpush2.msra.mxu0 0.0
    %3250 = vmatprep.subr.mxu0 0.0
    %3251 = vmatpush2.msra.mxu0 0.0
    %3252 = vmatprep.subr.mxu0 0.0
    %3253 = vmatpush2.msra.mxu0 0.0
    %3254 = vmatprep.subr.mxu0 0.0
    %3255 = vmatpush2.msra.mxu0 0.0
    %3256 = vmatprep.subr.mxu0 0.0
    %3257 = vmatpush2.msra.mxu0 0.0
    %3258 = vmatprep.mubr.f32.mxu0 0.0
    %3259 = vmatmul.mubr.f32.gmra.mxu0 %v3189
    %v3260 = vpop.f32.mrf.mxu0
    %v3261 = vadd.f32 0.0, %v3260
    %v3262 = vpop.f32.mrf.mxu0
    %3263 = vmatprep.mubr.f32.mxu0 0.0
    %3264 = vmatmul.mubr.f32.gmra.mxu0 %v3192
    %v3265 = vpop.f32.mrf.mxu0
    %v3266 = vadd.f32 0.0, %v3265
    %v3267 = vpop.f32.mrf.mxu0
    %3268 = vdwg.mxu0
    %v3269 = vadd.f32 %v2976, %v3261
    %v3270 = vadd.f32 %v2981, %v3266
    %3271 = vrot.lane.b32.xlu0 %v2403, 104
    %v3272 = vpop.permute.xlu0 %3271
    %3273 = vrot.lane.b32.xlu0 %v2408, 104
    %v3274 = vpop.permute.xlu0 %3273
    %3275 = vrot.lane.b32.xlu0 %v2403, 72
    %v3276 = vpop.permute.xlu0 %3275
    %3277 = vrot.lane.b32.xlu0 %v2408, 72
    %v3278 = vpop.permute.xlu0 %3277
    %v3279 = vsel %vm872, %v3272, 0
    %v3281 = vsel %vm872, %v3274, 0
    %v3283 = vsel %vm872, %v3276, 0
    %v3285 = vsel %vm872, %v3278, 0
    %3287 = vmatprep.subr.mxu0 0.0
    %3288 = vmatpush1.xpose.msra.mxu0 0.0
    %3289 = vmatprep.subr.mxu0 0.0
    %3290 = vmatpush1.xpose.msra.mxu0 0.0
    %3291 = vmatprep.subr.mxu0 0.0
    %3292 = vmatpush1.xpose.msra.mxu0 0.0
    %3293 = vmatprep.subr.mxu0 0.0
    %3294 = vmatpush1.xpose.msra.mxu0 0.0
    %3295 = vmatprep.subr.mxu0 0.0
    %3296 = vmatpush1.xpose.msra.mxu0 0.0
    %3297 = vmatprep.subr.mxu0 0.0
    %3298 = vmatpush1.xpose.msra.mxu0 0.0
    %3299 = vmatprep.subr.mxu0 0.0
    %3300 = vmatpush1.xpose.msra.mxu0 0.0
    %3301 = vmatprep.subr.mxu0 0.0
    %3302 = vmatpush1.xpose.msra.mxu0 0.0
    %3303 = vmatprep.subr.mxu0 0.0
    %3304 = vmatpush1.xpose.msra.mxu0 0.0
    %3305 = vmatprep.subr.mxu0 0.0
    %3306 = vmatpush1.xpose.msra.mxu0 0.0
    %3307 = vmatprep.subr.mxu0 0.0
    %3308 = vmatpush1.xpose.msra.mxu0 0.0
    %3309 = vmatprep.subr.mxu0 0.0
    %3310 = vmatpush1.xpose.msra.mxu0 0.0
    %3311 = vmatprep.subr.mxu0 0.0
    %3312 = vmatpush1.xpose.msra.mxu0 0.0
    %3313 = vmatprep.subr.mxu0 0.0
    %3314 = vmatpush1.xpose.msra.mxu0 0.0
    %3315 = vmatprep.subr.mxu0 0.0
    %3316 = vmatpush1.xpose.msra.mxu0 %v3285
    %3317 = vmatprep.subr.mxu0 0.0
    %3318 = vmatpush1.xpose.msra.mxu0 %v3283
    %3319 = vmatprep.subr.mxu0 0.0
    %3320 = vmatpush2.xpose.msra.mxu0 0.0
    %3321 = vmatprep.subr.mxu0 0.0
    %3322 = vmatpush2.xpose.msra.mxu0 0.0
    %3323 = vmatprep.subr.mxu0 0.0
    %3324 = vmatpush2.xpose.msra.mxu0 0.0
    %3325 = vmatprep.subr.mxu0 0.0
    %3326 = vmatpush2.xpose.msra.mxu0 0.0
    %3327 = vmatprep.subr.mxu0 0.0
    %3328 = vmatpush2.xpose.msra.mxu0 0.0
    %3329 = vmatprep.subr.mxu0 0.0
    %3330 = vmatpush2.xpose.msra.mxu0 0.0
    %3331 = vmatprep.subr.mxu0 0.0
    %3332 = vmatpush2.xpose.msra.mxu0 0.0
    %3333 = vmatprep.subr.mxu0 0.0
    %3334 = vmatpush2.xpose.msra.mxu0 0.0
    %3335 = vmatprep.subr.mxu0 0.0
    %3336 = vmatpush2.xpose.msra.mxu0 0.0
    %3337 = vmatprep.subr.mxu0 0.0
    %3338 = vmatpush2.xpose.msra.mxu0 0.0
    %3339 = vmatprep.subr.mxu0 0.0
    %3340 = vmatpush2.xpose.msra.mxu0 0.0
    %3341 = vmatprep.subr.mxu0 0.0
    %3342 = vmatpush2.xpose.msra.mxu0 0.0
    %3343 = vmatprep.subr.mxu0 0.0
    %3344 = vmatpush2.xpose.msra.mxu0 0.0
    %3345 = vmatprep.subr.mxu0 0.0
    %3346 = vmatpush2.xpose.msra.mxu0 0.0
    %3347 = vmatprep.subr.mxu0 0.0
    %3348 = vmatpush2.xpose.msra.mxu0 0.0
    %3349 = vmatprep.subr.mxu0 0.0
    %3350 = vmatpush2.xpose.msra.mxu0 0.0
    %3351 = vmatprep.mubr.f32.mxu0 0.0
    %3352 = vmatmul.mubr.f32.gmra.mxu0 %v3279
    %v3353 = vpop.f32.mrf.mxu0
    %v3354 = vadd.f32 0.0, %v3353
    %v3355 = vpop.f32.mrf.mxu0
    %3356 = vmatprep.mubr.f32.mxu0 0.0
    %3357 = vmatmul.mubr.f32.gmra.mxu0 %v3281
    %v3358 = vpop.f32.mrf.mxu0
    %v3359 = vadd.f32 0.0, %v3358
    %v3360 = vpop.f32.mrf.mxu0
    %3361 = vdwg.mxu0
    %v3362 = vmul.f32 %v3354, 0.35355338
    %v3363 = vmul.f32 %v3359, 0.35355338
    %v3364 = vadd.f32 %v3362, %v114
    %v3365 = vadd.f32 %v3363, %v115
    %v3366 = vsel %vm960, %v3364, -inf
    %3367 = vmax.xlane.f32.xlu0 %v3366
    %v3368 = vpop.xlane.xlu0 %3367
    %v3369 = vsel %vm960, %v3365, -inf
    %3370 = vmax.xlane.f32.xlu0 %v3369
    %v3371 = vpop.xlane.xlu0 %3370
    %v3372 = vsub.f32 %v3364, %v3368
    %v3373 = vsub.f32 %v3365, %v3371
    %v3374 = vmul.f32 %v3372, 1.442695
    %v3375 = vpow.pop %v3374
    %v3376 = vmul.f32 %v3373, 1.442695
    %v3377 = vpow.pop %v3376
    %v3378 = vsel %vm960, %v3375, 0.0
    %3379 = vadd.xlane.f32.xlu0 %v3378
    %v3380 = vpop.xlane.xlu0 %3379
    %v3381 = vsel %vm960, %v3377, 0.0
    %3382 = vadd.xlane.f32.xlu0 %v3381
    %v3383 = vpop.xlane.xlu0 %3382
    %v3384 = vrcp.pop %v3380
    %v3385 = vmul.f32 %v3375, %v3384
    %v3386 = vrcp.pop %v3383
    %v3387 = vmul.f32 %v3377, %v3386
    %3388 = vrot.lane.b32.xlu0 %v2403, 40
    %v3389 = vpop.permute.xlu0 %3388
    %3390 = vrot.lane.b32.xlu0 %v2408, 40
    %v3391 = vpop.permute.xlu0 %3390
    %v3395 = vsel %vm960, %v3385, 0
    %v3398 = vsel %vm960, %v3387, 0
    %3400 = vmatprep.subr.mxu0 0.0
    %3401 = vmatpush1.msra.mxu0 0.0
    %3402 = vmatprep.subr.mxu0 0.0
    %3403 = vmatpush1.msra.mxu0 0.0
    %3404 = vmatprep.subr.mxu0 0.0
    %3405 = vmatpush1.msra.mxu0 0.0
    %3406 = vmatprep.subr.mxu0 0.0
    %3407 = vmatpush1.msra.mxu0 0.0
    %3408 = vmatprep.subr.mxu0 0.0
    %3409 = vmatpush1.msra.mxu0 0.0
    %3410 = vmatprep.subr.mxu0 0.0
    %3411 = vmatpush1.msra.mxu0 0.0
    %3412 = vmatprep.subr.mxu0 0.0
    %3413 = vmatpush1.msra.mxu0 0.0
    %3414 = vmatprep.subr.mxu0 0.0
    %3415 = vmatpush1.msra.mxu0 0.0
    %3416 = vmatprep.subr.mxu0 0.0
    %3417 = vmatpush1.msra.mxu0 0.0
    %3418 = vmatprep.subr.mxu0 0.0
    %3419 = vmatpush1.msra.mxu0 0.0
    %3420 = vmatprep.subr.mxu0 0.0
    %3421 = vmatpush1.msra.mxu0 0.0
    %3422 = vmatprep.subr.mxu0 0.0
    %3423 = vmatpush1.msra.mxu0 0.0
    %3424 = vmatprep.subr.mxu0 0.0
    %3425 = vmatpush1.msra.mxu0 0.0
    %3426 = vmatprep.subr.mxu0 0.0
    %3427 = vmatpush1.msra.mxu0 0.0
    %3428 = vmatprep.subr.mxu0 0.0
    %3429 = vmatpush1.msra.mxu0 %v3391
    %3430 = vmatprep.subr.mxu0 0.0
    %3431 = vmatpush1.msra.mxu0 %v3389
    %3432 = vmatprep.subr.mxu0 0.0
    %3433 = vmatpush2.msra.mxu0 0.0
    %3434 = vmatprep.subr.mxu0 0.0
    %3435 = vmatpush2.msra.mxu0 0.0
    %3436 = vmatprep.subr.mxu0 0.0
    %3437 = vmatpush2.msra.mxu0 0.0
    %3438 = vmatprep.subr.mxu0 0.0
    %3439 = vmatpush2.msra.mxu0 0.0
    %3440 = vmatprep.subr.mxu0 0.0
    %3441 = vmatpush2.msra.mxu0 0.0
    %3442 = vmatprep.subr.mxu0 0.0
    %3443 = vmatpush2.msra.mxu0 0.0
    %3444 = vmatprep.subr.mxu0 0.0
    %3445 = vmatpush2.msra.mxu0 0.0
    %3446 = vmatprep.subr.mxu0 0.0
    %3447 = vmatpush2.msra.mxu0 0.0
    %3448 = vmatprep.subr.mxu0 0.0
    %3449 = vmatpush2.msra.mxu0 0.0
    %3450 = vmatprep.subr.mxu0 0.0
    %3451 = vmatpush2.msra.mxu0 0.0
    %3452 = vmatprep.subr.mxu0 0.0
    %3453 = vmatpush2.msra.mxu0 0.0
    %3454 = vmatprep.subr.mxu0 0.0
    %3455 = vmatpush2.msra.mxu0 0.0
    %3456 = vmatprep.subr.mxu0 0.0
    %3457 = vmatpush2.msra.mxu0 0.0
    %3458 = vmatprep.subr.mxu0 0.0
    %3459 = vmatpush2.msra.mxu0 0.0
    %3460 = vmatprep.subr.mxu0 0.0
    %3461 = vmatpush2.msra.mxu0 0.0
    %3462 = vmatprep.subr.mxu0 0.0
    %3463 = vmatpush2.msra.mxu0 0.0
    %3464 = vmatprep.mubr.f32.mxu0 0.0
    %3465 = vmatmul.mubr.f32.gmra.mxu0 %v3395
    %v3466 = vpop.f32.mrf.mxu0
    %v3467 = vadd.f32 0.0, %v3466
    %v3468 = vpop.f32.mrf.mxu0
    %3469 = vmatprep.mubr.f32.mxu0 0.0
    %3470 = vmatmul.mubr.f32.gmra.mxu0 %v3398
    %v3471 = vpop.f32.mrf.mxu0
    %v3472 = vadd.f32 0.0, %v3471
    %v3473 = vpop.f32.mrf.mxu0
    %3474 = vdwg.mxu0
    %v3476 = vsel %vm872, %v3467, 0
    %v3479 = vsel %vm872, %v3472, 0
    %3481 = vmatprep.subr.mxu0 0.0
    %3482 = vmatpush1.msra.mxu0 0.0
    %3483 = vmatprep.subr.mxu0 0.0
    %3484 = vmatpush1.msra.mxu0 0.0
    %3485 = vmatprep.subr.mxu0 0.0
    %3486 = vmatpush1.msra.mxu0 0.0
    %3487 = vmatprep.subr.mxu0 0.0
    %3488 = vmatpush1.msra.mxu0 0.0
    %3489 = vmatprep.subr.mxu0 0.0
    %3490 = vmatpush1.msra.mxu0 0.0
    %3491 = vmatprep.subr.mxu0 0.0
    %3492 = vmatpush1.msra.mxu0 0.0
    %3493 = vmatprep.subr.mxu0 0.0
    %3494 = vmatpush1.msra.mxu0 0.0
    %3495 = vmatprep.subr.mxu0 0.0
    %3496 = vmatpush1.msra.mxu0 0.0
    %3497 = vmatprep.subr.mxu0 0.0
    %3498 = vmatpush1.msra.mxu0 0.0
    %3499 = vmatprep.subr.mxu0 0.0
    %3500 = vmatpush1.msra.mxu0 0.0
    %3501 = vmatprep.subr.mxu0 0.0
    %3502 = vmatpush1.msra.mxu0 0.0
    %3503 = vmatprep.subr.mxu0 0.0
    %3504 = vmatpush1.msra.mxu0 0.0
    %3505 = vmatprep.subr.mxu0 0.0
    %3506 = vmatpush1.msra.mxu0 0.0
    %3507 = vmatprep.subr.mxu0 0.0
    %3508 = vmatpush1.msra.mxu0 0.0
    %3509 = vmatprep.subr.mxu0 0.0
    %3510 = vmatpush1.msra.mxu0 0.0
    %3511 = vmatprep.subr.mxu0 0.0
    %3512 = vmatpush1.msra.mxu0 %v2415
    %3513 = vmatprep.subr.mxu0 0.0
    %3514 = vmatpush2.msra.mxu0 0.0
    %3515 = vmatprep.subr.mxu0 0.0
    %3516 = vmatpush2.msra.mxu0 0.0
    %3517 = vmatprep.subr.mxu0 0.0
    %3518 = vmatpush2.msra.mxu0 0.0
    %3519 = vmatprep.subr.mxu0 0.0
    %3520 = vmatpush2.msra.mxu0 0.0
    %3521 = vmatprep.subr.mxu0 0.0
    %3522 = vmatpush2.msra.mxu0 0.0
    %3523 = vmatprep.subr.mxu0 0.0
    %3524 = vmatpush2.msra.mxu0 0.0
    %3525 = vmatprep.subr.mxu0 0.0
    %3526 = vmatpush2.msra.mxu0 0.0
    %3527 = vmatprep.subr.mxu0 0.0
    %3528 = vmatpush2.msra.mxu0 0.0
    %3529 = vmatprep.subr.mxu0 0.0
    %3530 = vmatpush2.msra.mxu0 0.0
    %3531 = vmatprep.subr.mxu0 0.0
    %3532 = vmatpush2.msra.mxu0 0.0
    %3533 = vmatprep.subr.mxu0 0.0
    %3534 = vmatpush2.msra.mxu0 0.0
    %3535 = vmatprep.subr.mxu0 0.0
    %3536 = vmatpush2.msra.mxu0 0.0
    %3537 = vmatprep.subr.mxu0 0.0
    %3538 = vmatpush2.msra.mxu0 0.0
    %3539 = vmatprep.subr.mxu0 0.0
    %3540 = vmatpush2.msra.mxu0 0.0
    %3541 = vmatprep.subr.mxu0 0.0
    %3542 = vmatpush2.msra.mxu0 0.0
    %3543 = vmatprep.subr.mxu0 0.0
    %3544 = vmatpush2.msra.mxu0 0.0
    %3545 = vmatprep.mubr.f32.mxu0 0.0
    %3546 = vmatmul.mubr.f32.gmra.mxu0 %v3476
    %v3547 = vpop.f32.mrf.mxu0
    %v3548 = vadd.f32 0.0, %v3547
    %v3549 = vpop.f32.mrf.mxu0
    %3550 = vmatprep.mubr.f32.mxu0 0.0
    %3551 = vmatmul.mubr.f32.gmra.mxu0 %v3479
    %v3552 = vpop.f32.mrf.mxu0
    %v3553 = vadd.f32 0.0, %v3552
    %v3554 = vpop.f32.mrf.mxu0
    %3555 = vdwg.mxu0
    %v3556 = vadd.f32 %v3269, %v3548
    %v3557 = vadd.f32 %v3270, %v3553
    %s3558 = scalar_lea.vmem %s13, 1
    %v3559 = vld [vmem:[%s3558] sm:$0x1]
    %v3561 = vlaneseq
    %v3562 = vshrl.u32 %v3561, 7
    %v3563 = vsub.s32 0, %v3562
    %v3564 = vrot.slane %v3559, %v3563
    %v3566 = vadd.f32 %v3556, %v3564
    %v3567 = vadd.f32 %v3557, %v3564
    %v3568 = vadd.f32 %v3566, %v2315
    %v3569 = vadd.f32 %v3567, %v2316
    %s3570 = scalar_lea.vmem %s14, 1
    %v3571 = vld [vmem:[%s3570] sm:$0x1]
    %s3572 = scalar_lea.vmem %s15, 1
    %v3573 = vld [vmem:[%s3572] sm:$0x1]
    %v3574 = vsel %vm228, %v3568, 0.0
    %3575 = vadd.xlane.f32.xlu0 %v3574
    %v3576 = vpop.xlane.xlu0 %3575
    %v3577 = vsel %vm228, %v3569, 0.0
    %3578 = vadd.xlane.f32.xlu0 %v3577
    %v3579 = vpop.xlane.xlu0 %3578
    %v3580 = vmul.f32 %v3576, %v2029
    %v3581 = vmul.f32 %v3579, %v2029
    %v3582 = vsub.f32 %v3568, %v3580
    %v3583 = vsub.f32 %v3569, %v3581
    %v3584 = vmul.f32 %v3582, %v3582
    %v3585 = vmul.f32 %v3583, %v3583
    %v3586 = vsel %vm228, %v3584, 0.0
    %3587 = vadd.xlane.f32.xlu0 %v3586
    %v3588 = vpop.xlane.xlu0 %3587
    %v3589 = vsel %vm228, %v3585, 0.0
    %3590 = vadd.xlane.f32.xlu0 %v3589
    %v3591 = vpop.xlane.xlu0 %3590
    %v3592 = vmul.f32 %v3588, %v2029
    %v3593 = vmul.f32 %v3591, %v2029
    %v3594 = vadd.f32 %v3592, 1e-05
    %v3595 = vadd.f32 %v3593, 1e-05
    %v3596 = vrsqrt.pop %v3594
    %v3597 = vrsqrt.pop %v3595
    %v3598 = vmul.f32 %v3582, %v3596
    %v3599 = vmul.f32 %v3583, %v3597
    %v3601 = vlaneseq
    %v3602 = vshrl.u32 %v3601, 7
    %v3603 = vsub.s32 0, %v3602
    %v3604 = vrot.slane %v3571, %v3603
    %v3606 = vmul.f32 %v3598, %v3604
    %v3607 = vmul.f32 %v3599, %v3604
    %v3609 = vlaneseq
    %v3610 = vshrl.u32 %v3609, 7
    %v3611 = vsub.s32 0, %v3610
    %v3612 = vrot.slane %v3573, %v3611
    %v3614 = vadd.f32 %v3606, %v3612
    %v3615 = vadd.f32 %v3607, %v3612
    %v3616 = vmul.f32 %v3614, %v2069
    %v3617 = vmul.f32 %v3615, %v2074
    %s3618 = scalar_lea.vmem %s16, 32
    %v3619 = vld [vmem:[%s3618] sm:$0xff]
    %v3620 = vld [vmem:[%s3618 + $0x8] sm:$0xff]
    %v3621 = vld [vmem:[%s3618 + $0x10] sm:$0xff]
    %v3622 = vld [vmem:[%s3618 + $0x18] sm:$0xff]
    %s3623 = scalar_lea.vmem %s17, 1
    %v3624 = vld [vmem:[%s3623] sm:$0x1]
    %v3626 = vlaneseq
    %v3627 = vshrl.u32 %v3626, 7
    %v3628 = vsub.s32 0, %v3627
    %v3629 = vrot.slane %v3624, %v3628
    %v3632 = vsel %vm228, %v3616, 0
    %v3635 = vsel %vm228, %v3617, 0
    %3637 = vmatprep.subr.mxu0 0.0
    %3638 = vmatpush1.msra.mxu0 0.0
    %3639 = vmatprep.subr.mxu0 0.0
    %3640 = vmatpush1.msra.mxu0 0.0
    %3641 = vmatprep.subr.mxu0 0.0
    %3642 = vmatpush1.msra.mxu0 0.0
    %3643 = vmatprep.subr.mxu0 0.0
    %3644 = vmatpush1.msra.mxu0 0.0
    %3645 = vmatprep.subr.mxu0 0.0
    %3646 = vmatpush1.msra.mxu0 0.0
    %3647 = vmatprep.subr.mxu0 0.0
    %3648 = vmatpush1.msra.mxu0 0.0
    %3649 = vmatprep.subr.mxu0 0.0
    %3650 = vmatpush1.msra.mxu0 0.0
    %3651 = vmatprep.subr.mxu0 0.0
    %3652 = vmatpush1.msra.mxu0 0.0
    %3653 = vmatprep.subr.mxu0 0.0
    %3654 = vmatpush1.msra.mxu0 0.0
    %3655 = vmatprep.subr.mxu0 0.0
    %3656 = vmatpush1.msra.mxu0 0.0
    %3657 = vmatprep.subr.mxu0 0.0
    %3658 = vmatpush1.msra.mxu0 0.0
    %3659 = vmatprep.subr.mxu0 0.0
    %3660 = vmatpush1.msra.mxu0 0.0
    %3661 = vmatprep.subr.mxu0 0.0
    %3662 = vmatpush1.msra.mxu0 %v3622
    %3663 = vmatprep.subr.mxu0 0.0
    %3664 = vmatpush1.msra.mxu0 %v3621
    %3665 = vmatprep.subr.mxu0 0.0
    %3666 = vmatpush1.msra.mxu0 %v3620
    %3667 = vmatprep.subr.mxu0 0.0
    %3668 = vmatpush1.msra.mxu0 %v3619
    %3669 = vmatprep.subr.mxu0 0.0
    %3670 = vmatpush2.msra.mxu0 0.0
    %3671 = vmatprep.subr.mxu0 0.0
    %3672 = vmatpush2.msra.mxu0 0.0
    %3673 = vmatprep.subr.mxu0 0.0
    %3674 = vmatpush2.msra.mxu0 0.0
    %3675 = vmatprep.subr.mxu0 0.0
    %3676 = vmatpush2.msra.mxu0 0.0
    %3677 = vmatprep.subr.mxu0 0.0
    %3678 = vmatpush2.msra.mxu0 0.0
    %3679 = vmatprep.subr.mxu0 0.0
    %3680 = vmatpush2.msra.mxu0 0.0
    %3681 = vmatprep.subr.mxu0 0.0
    %3682 = vmatpush2.msra.mxu0 0.0
    %3683 = vmatprep.subr.mxu0 0.0
    %3684 = vmatpush2.msra.mxu0 0.0
    %3685 = vmatprep.subr.mxu0 0.0
    %3686 = vmatpush2.msra.mxu0 0.0
    %3687 = vmatprep.subr.mxu0 0.0
    %3688 = vmatpush2.msra.mxu0 0.0
    %3689 = vmatprep.subr.mxu0 0.0
    %3690 = vmatpush2.msra.mxu0 0.0
    %3691 = vmatprep.subr.mxu0 0.0
    %3692 = vmatpush2.msra.mxu0 0.0
    %3693 = vmatprep.subr.mxu0 0.0
    %3694 = vmatpush2.msra.mxu0 0.0
    %3695 = vmatprep.subr.mxu0 0.0
    %3696 = vmatpush2.msra.mxu0 0.0
    %3697 = vmatprep.subr.mxu0 0.0
    %3698 = vmatpush2.msra.mxu0 0.0
    %3699 = vmatprep.subr.mxu0 0.0
    %3700 = vmatpush2.msra.mxu0 0.0
    %3701 = vmatprep.mubr.f32.mxu0 0.0
    %3702 = vmatmul.mubr.f32.gmra.mxu0 %v3632
    %v3703 = vpop.f32.mrf.mxu0
    %v3704 = vadd.f32 %v3629, %v3703
    %v3705 = vpop.f32.mrf.mxu0
    %3706 = vmatprep.mubr.f32.mxu0 0.0
    %3707 = vmatmul.mubr.f32.gmra.mxu0 %v3635
    %v3708 = vpop.f32.mrf.mxu0
    %v3709 = vadd.f32 %v3629, %v3708
    %v3710 = vpop.f32.mrf.mxu0
    %3711 = vdwg.mxu0
    %v3712 = vmax.f32 %v3704, 0.0
    %v3713 = vmax.f32 %v3709, 0.0
    %s3714 = scalar_lea.vmem %s18, 64
    %v3715 = vld [vmem:[%s3714] sm:$0xff]
    %v3716 = vld [vmem:[%s3714 + $0x8] sm:$0xff]
    %v3717 = vld [vmem:[%s3714 + $0x10] sm:$0xff]
    %v3718 = vld [vmem:[%s3714 + $0x18] sm:$0xff]
    %v3719 = vld [vmem:[%s3714 + $0x20] sm:$0xff]
    %v3720 = vld [vmem:[%s3714 + $0x28] sm:$0xff]
    %v3721 = vld [vmem:[%s3714 + $0x30] sm:$0xff]
    %v3722 = vld [vmem:[%s3714 + $0x38] sm:$0xff]
    %s3723 = scalar_lea.vmem %s19, 1
    %v3724 = vld [vmem:[%s3723] sm:$0x1]
    %v3726 = vlaneseq
    %v3727 = vshrl.u32 %v3726, 7
    %v3728 = vsub.s32 0, %v3727
    %v3729 = vrot.slane %v3724, %v3728
    %v3732 = vsel %vm2187, %v3712, 0
    %v3735 = vsel %vm2187, %v3713, 0
    %3737 = vmatprep.subr.mxu0 0.0
    %3738 = vmatpush1.msra.mxu0 0.0
    %3739 = vmatprep.subr.mxu0 0.0
    %3740 = vmatpush1.msra.mxu0 0.0
    %3741 = vmatprep.subr.mxu0 0.0
    %3742 = vmatpush1.msra.mxu0 0.0
    %3743 = vmatprep.subr.mxu0 0.0
    %3744 = vmatpush1.msra.mxu0 0.0
    %3745 = vmatprep.subr.mxu0 0.0
    %3746 = vmatpush1.msra.mxu0 0.0
    %3747 = vmatprep.subr.mxu0 0.0
    %3748 = vmatpush1.msra.mxu0 0.0
    %3749 = vmatprep.subr.mxu0 0.0
    %3750 = vmatpush1.msra.mxu0 0.0
    %3751 = vmatprep.subr.mxu0 0.0
    %3752 = vmatpush1.msra.mxu0 0.0
    %3753 = vmatprep.subr.mxu0 0.0
    %3754 = vmatpush1.msra.mxu0 %v3722
    %3755 = vmatprep.subr.mxu0 0.0
    %3756 = vmatpush1.msra.mxu0 %v3721
    %3757 = vmatprep.subr.mxu0 0.0
    %3758 = vmatpush1.msra.mxu0 %v3720
    %3759 = vmatprep.subr.mxu0 0.0
    %3760 = vmatpush1.msra.mxu0 %v3719
    %3761 = vmatprep.subr.mxu0 0.0
    %3762 = vmatpush1.msra.mxu0 %v3718
    %3763 = vmatprep.subr.mxu0 0.0
    %3764 = vmatpush1.msra.mxu0 %v3717
    %3765 = vmatprep.subr.mxu0 0.0
    %3766 = vmatpush1.msra.mxu0 %v3716
    %3767 = vmatprep.subr.mxu0 0.0
    %3768 = vmatpush1.msra.mxu0 %v3715
    %3769 = vmatprep.subr.mxu0 0.0
    %3770 = vmatpush2.msra.mxu0 0.0
    %3771 = vmatprep.subr.mxu0 0.0
    %3772 = vmatpush2.msra.mxu0 0.0
    %3773 = vmatprep.subr.mxu0 0.0
    %3774 = vmatpush2.msra.mxu0 0.0
    %3775 = vmatprep.subr.mxu0 0.0
    %3776 = vmatpush2.msra.mxu0 0.0
    %3777 = vmatprep.subr.mxu0 0.0
    %3778 = vmatpush2.msra.mxu0 0.0
    %3779 = vmatprep.subr.mxu0 0.0
    %3780 = vmatpush2.msra.mxu0 0.0
    %3781 = vmatprep.subr.mxu0 0.0
    %3782 = vmatpush2.msra.mxu0 0.0
    %3783 = vmatprep.subr.mxu0 0.0
    %3784 = vmatpush2.msra.mxu0 0.0
    %3785 = vmatprep.subr.mxu0 0.0
    %3786 = vmatpush2.msra.mxu0 0.0
    %3787 = vmatprep.subr.mxu0 0.0
    %3788 = vmatpush2.msra.mxu0 0.0
    %3789 = vmatprep.subr.mxu0 0.0
    %3790 = vmatpush2.msra.mxu0 0.0
    %3791 = vmatprep.subr.mxu0 0.0
    %3792 = vmatpush2.msra.mxu0 0.0
    %3793 = vmatprep.subr.mxu0 0.0
    %3794 = vmatpush2.msra.mxu0 0.0
    %3795 = vmatprep.subr.mxu0 0.0
    %3796 = vmatpush2.msra.mxu0 0.0
    %3797 = vmatprep.subr.mxu0 0.0
    %3798 = vmatpush2.msra.mxu0 0.0
    %3799 = vmatprep.subr.mxu0 0.0
    %3800 = vmatpush2.msra.mxu0 0.0
    %3801 = vmatprep.mubr.f32.mxu0 0.0
    %3802 = vmatmul.mubr.f32.gmra.mxu0 %v3732
    %v3803 = vpop.f32.mrf.mxu0
    %v3804 = vadd.f32 %v3729, %v3803
    %v3805 = vpop.f32.mrf.mxu0
    %3806 = vmatprep.mubr.f32.mxu0 0.0
    %3807 = vmatmul.mubr.f32.gmra.mxu0 %v3735
    %v3808 = vpop.f32.mrf.mxu0
    %v3809 = vadd.f32 %v3729, %v3808
    %v3810 = vpop.f32.mrf.mxu0
    %3811 = vdwg.mxu0
    %v3812 = vadd.f32 %v3804, %v3616
    %v3813 = vadd.f32 %v3809, %v3617
    %s3814 = scalar_lea.vmem %s20, 1
    %v3815 = vld [vmem:[%s3814] sm:$0x1]
    %s3816 = scalar_lea.vmem %s21, 1
    %v3817 = vld [vmem:[%s3816] sm:$0x1]
    %v3818 = vsel %vm228, %v3812, 0.0
    %3819 = vadd.xlane.f32.xlu0 %v3818
    %v3820 = vpop.xlane.xlu0 %3819
    %v3821 = vsel %vm228, %v3813, 0.0
    %3822 = vadd.xlane.f32.xlu0 %v3821
    %v3823 = vpop.xlane.xlu0 %3822
    %v3824 = vmul.f32 %v3820, %v2029
    %v3825 = vmul.f32 %v3823, %v2029
    %v3826 = vsub.f32 %v3812, %v3824
    %v3827 = vsub.f32 %v3813, %v3825
    %v3828 = vmul.f32 %v3826, %v3826
    %v3829 = vmul.f32 %v3827, %v3827
    %v3830 = vsel %vm228, %v3828, 0.0
    %3831 = vadd.xlane.f32.xlu0 %v3830
    %v3832 = vpop.xlane.xlu0 %3831
    %v3833 = vsel %vm228, %v3829, 0.0
    %3834 = vadd.xlane.f32.xlu0 %v3833
    %v3835 = vpop.xlane.xlu0 %3834
    %v3836 = vmul.f32 %v3832, %v2029
    %v3837 = vmul.f32 %v3835, %v2029
    %v3838 = vadd.f32 %v3836, 1e-05
    %v3839 = vadd.f32 %v3837, 1e-05
    %v3840 = vrsqrt.pop %v3838
    %v3841 = vrsqrt.pop %v3839
    %v3842 = vmul.f32 %v3826, %v3840
    %v3843 = vmul.f32 %v3827, %v3841
    %v3845 = vlaneseq
    %v3846 = vshrl.u32 %v3845, 7
    %v3847 = vsub.s32 0, %v3846
    %v3848 = vrot.slane %v3815, %v3847
    %v3850 = vmul.f32 %v3842, %v3848
    %v3851 = vmul.f32 %v3843, %v3848
    %v3853 = vlaneseq
    %v3854 = vshrl.u32 %v3853, 7
    %v3855 = vsub.s32 0, %v3854
    %v3856 = vrot.slane %v3817, %v3855
    %v3858 = vadd.f32 %v3850, %v3856
    %v3859 = vadd.f32 %v3851, %v3856
    %v3860 = vmul.f32 %v3858, %v2069
    %v3861 = vmul.f32 %v3859, %v2074
    %v3862 = vld [vmem:[#allocation3] sm:$0xff]
    %v3863 = vld [vmem:[#allocation3 + $0x8] sm:$0xff]
    %v3864 = vld [vmem:[#allocation3 + $0x10] sm:$0xff]
    %v3865 = vld [vmem:[#allocation3 + $0x18] sm:$0xff]
    %v3866 = vld [vmem:[#allocation3 + $0x20] sm:$0xff]
    %v3867 = vld [vmem:[#allocation3 + $0x28] sm:$0xff]
    %v3868 = vld [vmem:[#allocation3 + $0x30] sm:$0xff]
    %v3869 = vld [vmem:[#allocation3 + $0x38] sm:$0xff]
    %v3870 = vld [vmem:[#allocation3 + $0x40] sm:$0xff]
    %v3871 = vld [vmem:[#allocation3 + $0x48] sm:$0xff]
    %v3872 = vld [vmem:[#allocation3 + $0x50] sm:$0xff]
    %v3873 = vld [vmem:[#allocation3 + $0x58] sm:$0xff]
    %v3874 = vld [vmem:[#allocation3 + $0x60] sm:$0xff]
    %v3875 = vld [vmem:[#allocation3 + $0x68] sm:$0xff]
    %v3876 = vld [vmem:[#allocation3 + $0x70] sm:$0xff]
    %v3877 = vld [vmem:[#allocation3 + $0x78] sm:$0xff]
    %v3878 = vld [vmem:[#allocation3 + $0x80] sm:$0xff]
    %v3879 = vld [vmem:[#allocation3 + $0x88] sm:$0xff]
    %v3880 = vld [vmem:[#allocation3 + $0x90] sm:$0xff]
    %v3881 = vld [vmem:[#allocation3 + $0x98] sm:$0xff]
    %v3882 = vld [vmem:[#allocation3 + $0xa0] sm:$0xff]
    %v3883 = vld [vmem:[#allocation3 + $0xa8] sm:$0xff]
    %v3884 = vld [vmem:[#allocation3 + $0xb0] sm:$0xff]
    %v3885 = vld [vmem:[#allocation3 + $0xb8] sm:$0xff]
    %v3886 = vld [vmem:[#allocation3 + $0xc0] sm:$0xff]
    %v3887 = vld [vmem:[#allocation3 + $0xc8] sm:$0xff]
    %v3888 = vld [vmem:[#allocation3 + $0xd0] sm:$0xff]
    %v3889 = vld [vmem:[#allocation3 + $0xd8] sm:$0xff]
    %v3890 = vld [vmem:[#allocation3 + $0xe0] sm:$0xff]
    %v3891 = vld [vmem:[#allocation3 + $0xe8] sm:$0xff]
    %v3892 = vld [vmem:[#allocation3 + $0xf0] sm:$0xff]
    %v3893 = vld [vmem:[#allocation3 + $0xf8] sm:$0xff]
    %v3896 = vrot.slane %v3860, 1
    %vm3897 = vcmask 1041409
    %v3898 = vsel %vm3897, %v3861, %v3896
    %v3899 = vsel %vm228, %v3898, 0
    %3901 = vmatprep.subr.mxu0 0.0
    %3902 = vmatpush1.msra.mxu0 0.0
    %3903 = vmatprep.subr.mxu0 0.0
    %3904 = vmatpush1.msra.mxu0 0.0
    %3905 = vmatprep.subr.mxu0 0.0
    %3906 = vmatpush1.msra.mxu0 0.0
    %3907 = vmatprep.subr.mxu0 0.0
    %3908 = vmatpush1.msra.mxu0 0.0
    %3909 = vmatprep.subr.mxu0 0.0
    %3910 = vmatpush1.msra.mxu0 0.0
    %3911 = vmatprep.subr.mxu0 0.0
    %3912 = vmatpush1.msra.mxu0 0.0
    %3913 = vmatprep.subr.mxu0 0.0
    %3914 = vmatpush1.msra.mxu0 0.0
    %3915 = vmatprep.subr.mxu0 0.0
    %3916 = vmatpush1.msra.mxu0 0.0
    %3917 = vmatprep.subr.mxu0 0.0
    %3918 = vmatpush1.msra.mxu0 0.0
    %3919 = vmatprep.subr.mxu0 0.0
    %3920 = vmatpush1.msra.mxu0 0.0
    %3921 = vmatprep.subr.mxu0 0.0
    %3922 = vmatpush1.msra.mxu0 0.0
    %3923 = vmatprep.subr.mxu0 0.0
    %3924 = vmatpush1.msra.mxu0 0.0
    %3925 = vmatprep.subr.mxu0 %v3891
    %3926 = vmatpush1.msra.mxu0 %v3890
    %3927 = vmatprep.subr.mxu0 %v3887
    %3928 = vmatpush1.msra.mxu0 %v3886
    %3929 = vmatprep.subr.mxu0 %v3883
    %3930 = vmatpush1.msra.mxu0 %v3882
    %3931 = vmatprep.subr.mxu0 %v3879
    %3932 = vmatpush1.msra.mxu0 %v3878
    %3933 = vmatprep.subr.mxu0 0.0
    %3934 = vmatpush2.msra.mxu0 0.0
    %3935 = vmatprep.subr.mxu0 0.0
    %3936 = vmatpush2.msra.mxu0 0.0
    %3937 = vmatprep.subr.mxu0 0.0
    %3938 = vmatpush2.msra.mxu0 0.0
    %3939 = vmatprep.subr.mxu0 0.0
    %3940 = vmatpush2.msra.mxu0 0.0
    %3941 = vmatprep.subr.mxu0 0.0
    %3942 = vmatpush2.msra.mxu0 0.0
    %3943 = vmatprep.subr.mxu0 0.0
    %3944 = vmatpush2.msra.mxu0 0.0
    %3945 = vmatprep.subr.mxu0 0.0
    %3946 = vmatpush2.msra.mxu0 0.0
    %3947 = vmatprep.subr.mxu0 0.0
    %3948 = vmatpush2.msra.mxu0 0.0
    %3949 = vmatprep.subr.mxu0 0.0
    %3950 = vmatpush2.msra.mxu0 0.0
    %3951 = vmatprep.subr.mxu0 0.0
    %3952 = vmatpush2.msra.mxu0 0.0
    %3953 = vmatprep.subr.mxu0 0.0
    %3954 = vmatpush2.msra.mxu0 0.0
    %3955 = vmatprep.subr.mxu0 0.0
    %3956 = vmatpush2.msra.mxu0 0.0
    %3957 = vmatprep.subr.mxu0 0.0
    %3958 = vmatpush2.msra.mxu0 0.0
    %3959 = vmatprep.subr.mxu0 0.0
    %3960 = vmatpush2.msra.mxu0 0.0
    %3961 = vmatprep.subr.mxu0 0.0
    %3962 = vmatpush2.msra.mxu0 0.0
    %3963 = vmatprep.subr.mxu0 0.0
    %3964 = vmatpush2.msra.mxu0 0.0
    %3965 = vmatprep.mubr.f32.mxu0 0.0
    %3966 = vmatmul.mubr.f32.gmra.mxu0 %v3899
    %v3967 = vpop.f32.mrf.mxu0
    %v3968 = vadd.f32 0.0, %v3967
    %v3969 = vpop.f32.mrf.mxu0
    %v3970 = vadd.f32 0.0, %v3969
    %3971 = vdwg.mxu0
    %3972 = vmatprep.subr.mxu0 0.0
    %3973 = vmatpush1.msra.mxu0 0.0
    %3974 = vmatprep.subr.mxu0 0.0
    %3975 = vmatpush1.msra.mxu0 0.0
    %3976 = vmatprep.subr.mxu0 0.0
    %3977 = vmatpush1.msra.mxu0 0.0
    %3978 = vmatprep.subr.mxu0 0.0
    %3979 = vmatpush1.msra.mxu0 0.0
    %3980 = vmatprep.subr.mxu0 0.0
    %3981 = vmatpush1.msra.mxu0 0.0
    %3982 = vmatprep.subr.mxu0 0.0
    %3983 = vmatpush1.msra.mxu0 0.0
    %3984 = vmatprep.subr.mxu0 0.0
    %3985 = vmatpush1.msra.mxu0 0.0
    %3986 = vmatprep.subr.mxu0 0.0
    %3987 = vmatpush1.msra.mxu0 0.0
    %3988 = vmatprep.subr.mxu0 0.0
    %3989 = vmatpush1.msra.mxu0 0.0
    %3990 = vmatprep.subr.mxu0 0.0
    %3991 = vmatpush1.msra.mxu0 0.0
    %3992 = vmatprep.subr.mxu0 0.0
    %3993 = vmatpush1.msra.mxu0 0.0
    %3994 = vmatprep.subr.mxu0 0.0
    %3995 = vmatpush1.msra.mxu0 0.0
    %3996 = vmatprep.subr.mxu0 %v3893
    %3997 = vmatpush1.msra.mxu0 %v3892
    %3998 = vmatprep.subr.mxu0 %v3889
    %3999 = vmatpush1.msra.mxu0 %v3888
    %4000 = vmatprep.subr.mxu0 %v3885
    %4001 = vmatpush1.msra.mxu0 %v3884
    %4002 = vmatprep.subr.mxu0 %v3881
    %4003 = vmatpush1.msra.mxu0 %v3880
    %4004 = vmatprep.subr.mxu0 0.0
    %4005 = vmatpush2.msra.mxu0 0.0
    %4006 = vmatprep.subr.mxu0 0.0
    %4007 = vmatpush2.msra.mxu0 0.0
    %4008 = vmatprep.subr.mxu0 0.0
    %4009 = vmatpush2.msra.mxu0 0.0
    %4010 = vmatprep.subr.mxu0 0.0
    %4011 = vmatpush2.msra.mxu0 0.0
    %4012 = vmatprep.subr.mxu0 0.0
    %4013 = vmatpush2.msra.mxu0 0.0
    %4014 = vmatprep.subr.mxu0 0.0
    %4015 = vmatpush2.msra.mxu0 0.0
    %4016 = vmatprep.subr.mxu0 0.0
    %4017 = vmatpush2.msra.mxu0 0.0
    %4018 = vmatprep.subr.mxu0 0.0
    %4019 = vmatpush2.msra.mxu0 0.0
    %4020 = vmatprep.subr.mxu0 0.0
    %4021 = vmatpush2.msra.mxu0 0.0
    %4022 = vmatprep.subr.mxu0 0.0
    %4023 = vmatpush2.msra.mxu0 0.0
    %4024 = vmatprep.subr.mxu0 0.0
    %4025 = vmatpush2.msra.mxu0 0.0
    %4026 = vmatprep.subr.mxu0 0.0
    %4027 = vmatpush2.msra.mxu0 0.0
    %4028 = vmatprep.subr.mxu0 0.0
    %4029 = vmatpush2.msra.mxu0 0.0
    %4030 = vmatprep.subr.mxu0 0.0
    %4031 = vmatpush2.msra.mxu0 0.0
    %4032 = vmatprep.subr.mxu0 0.0
    %4033 = vmatpush2.msra.mxu0 0.0
    %4034 = vmatprep.subr.mxu0 0.0
    %4035 = vmatpush2.msra.mxu0 0.0
    %4036 = vmatprep.mubr.f32.mxu0 0.0
    %4037 = vmatmul.mubr.f32.gmra.mxu0 %v3899
    %v4038 = vpop.f32.mrf.mxu0
    %v4039 = vadd.f32 0.0, %v4038
    %v4040 = vpop.f32.mrf.mxu0
    %v4041 = vadd.f32 0.0, %v4040
    %4042 = vdwg.mxu0
    %v4043 = vrot.slane %v3861, 7
    %v4044 = vsel %vm3897, %v4043, %v3860
    %v4045 = vsel %vm228, %v4044, 0
    %4047 = vmatprep.subr.mxu0 0.0
    %4048 = vmatpush1.msra.mxu0 0.0
    %4049 = vmatprep.subr.mxu0 0.0
    %4050 = vmatpush1.msra.mxu0 0.0
    %4051 = vmatprep.subr.mxu0 0.0
    %4052 = vmatpush1.msra.mxu0 0.0
    %4053 = vmatprep.subr.mxu0 0.0
    %4054 = vmatpush1.msra.mxu0 0.0
    %4055 = vmatprep.subr.mxu0 0.0
    %4056 = vmatpush1.msra.mxu0 0.0
    %4057 = vmatprep.subr.mxu0 0.0
    %4058 = vmatpush1.msra.mxu0 0.0
    %4059 = vmatprep.subr.mxu0 0.0
    %4060 = vmatpush1.msra.mxu0 0.0
    %4061 = vmatprep.subr.mxu0 0.0
    %4062 = vmatpush1.msra.mxu0 0.0
    %4063 = vmatprep.subr.mxu0 0.0
    %4064 = vmatpush1.msra.mxu0 0.0
    %4065 = vmatprep.subr.mxu0 0.0
    %4066 = vmatpush1.msra.mxu0 0.0
    %4067 = vmatprep.subr.mxu0 0.0
    %4068 = vmatpush1.msra.mxu0 0.0
    %4069 = vmatprep.subr.mxu0 0.0
    %4070 = vmatpush1.msra.mxu0 0.0
    %4071 = vmatprep.subr.mxu0 %v3875
    %4072 = vmatpush1.msra.mxu0 %v3874
    %4073 = vmatprep.subr.mxu0 %v3871
    %4074 = vmatpush1.msra.mxu0 %v3870
    %4075 = vmatprep.subr.mxu0 %v3867
    %4076 = vmatpush1.msra.mxu0 %v3866
    %4077 = vmatprep.subr.mxu0 %v3863
    %4078 = vmatpush1.msra.mxu0 %v3862
    %4079 = vmatprep.subr.mxu0 0.0
    %4080 = vmatpush2.msra.mxu0 0.0
    %4081 = vmatprep.subr.mxu0 0.0
    %4082 = vmatpush2.msra.mxu0 0.0
    %4083 = vmatprep.subr.mxu0 0.0
    %4084 = vmatpush2.msra.mxu0 0.0
    %4085 = vmatprep.subr.mxu0 0.0
    %4086 = vmatpush2.msra.mxu0 0.0
    %4087 = vmatprep.subr.mxu0 0.0
    %4088 = vmatpush2.msra.mxu0 0.0
    %4089 = vmatprep.subr.mxu0 0.0
    %4090 = vmatpush2.msra.mxu0 0.0
    %4091 = vmatprep.subr.mxu0 0.0
    %4092 = vmatpush2.msra.mxu0 0.0
    %4093 = vmatprep.subr.mxu0 0.0
    %4094 = vmatpush2.msra.mxu0 0.0
    %4095 = vmatprep.subr.mxu0 0.0
    %4096 = vmatpush2.msra.mxu0 0.0
    %4097 = vmatprep.subr.mxu0 0.0
    %4098 = vmatpush2.msra.mxu0 0.0
    %4099 = vmatprep.subr.mxu0 0.0
    %4100 = vmatpush2.msra.mxu0 0.0
    %4101 = vmatprep.subr.mxu0 0.0
    %4102 = vmatpush2.msra.mxu0 0.0
    %4103 = vmatprep.subr.mxu0 0.0
    %4104 = vmatpush2.msra.mxu0 0.0
    %4105 = vmatprep.subr.mxu0 0.0
    %4106 = vmatpush2.msra.mxu0 0.0
    %4107 = vmatprep.subr.mxu0 0.0
    %4108 = vmatpush2.msra.mxu0 0.0
    %4109 = vmatprep.subr.mxu0 0.0
    %4110 = vmatpush2.msra.mxu0 0.0
    %4111 = vmatprep.mubr.f32.mxu0 0.0
    %4112 = vmatmul.mubr.f32.gmra.mxu0 %v4045
    %v4113 = vpop.f32.mrf.mxu0
    %v4114 = vadd.f32 %v3968, %v4113
    %v4115 = vpop.f32.mrf.mxu0
    %v4116 = vadd.f32 %v3970, %v4115
    %4117 = vdwg.mxu0
    %4118 = vmatprep.subr.mxu0 0.0
    %4119 = vmatpush1.msra.mxu0 0.0
    %4120 = vmatprep.subr.mxu0 0.0
    %4121 = vmatpush1.msra.mxu0 0.0
    %4122 = vmatprep.subr.mxu0 0.0
    %4123 = vmatpush1.msra.mxu0 0.0
    %4124 = vmatprep.subr.mxu0 0.0
    %4125 = vmatpush1.msra.mxu0 0.0
    %4126 = vmatprep.subr.mxu0 0.0
    %4127 = vmatpush1.msra.mxu0 0.0
    %4128 = vmatprep.subr.mxu0 0.0
    %4129 = vmatpush1.msra.mxu0 0.0
    %4130 = vmatprep.subr.mxu0 0.0
    %4131 = vmatpush1.msra.mxu0 0.0
    %4132 = vmatprep.subr.mxu0 0.0
    %4133 = vmatpush1.msra.mxu0 0.0
    %4134 = vmatprep.subr.mxu0 0.0
    %4135 = vmatpush1.msra.mxu0 0.0
    %4136 = vmatprep.subr.mxu0 0.0
    %4137 = vmatpush1.msra.mxu0 0.0
    %4138 = vmatprep.subr.mxu0 0.0
    %4139 = vmatpush1.msra.mxu0 0.0
    %4140 = vmatprep.subr.mxu0 0.0
    %4141 = vmatpush1.msra.mxu0 0.0
    %4142 = vmatprep.subr.mxu0 %v3877
    %4143 = vmatpush1.msra.mxu0 %v3876
    %4144 = vmatprep.subr.mxu0 %v3873
    %4145 = vmatpush1.msra.mxu0 %v3872
    %4146 = vmatprep.subr.mxu0 %v3869
    %4147 = vmatpush1.msra.mxu0 %v3868
    %4148 = vmatprep.subr.mxu0 %v3865
    %4149 = vmatpush1.msra.mxu0 %v3864
    %4150 = vmatprep.subr.mxu0 0.0
    %4151 = vmatpush2.msra.mxu0 0.0
    %4152 = vmatprep.subr.mxu0 0.0
    %4153 = vmatpush2.msra.mxu0 0.0
    %4154 = vmatprep.subr.mxu0 0.0
    %4155 = vmatpush2.msra.mxu0 0.0
    %4156 = vmatprep.subr.mxu0 0.0
    %4157 = vmatpush2.msra.mxu0 0.0
    %4158 = vmatprep.subr.mxu0 0.0
    %4159 = vmatpush2.msra.mxu0 0.0
    %4160 = vmatprep.subr.mxu0 0.0
    %4161 = vmatpush2.msra.mxu0 0.0
    %4162 = vmatprep.subr.mxu0 0.0
    %4163 = vmatpush2.msra.mxu0 0.0
    %4164 = vmatprep.subr.mxu0 0.0
    %4165 = vmatpush2.msra.mxu0 0.0
    %4166 = vmatprep.subr.mxu0 0.0
    %4167 = vmatpush2.msra.mxu0 0.0
    %4168 = vmatprep.subr.mxu0 0.0
    %4169 = vmatpush2.msra.mxu0 0.0
    %4170 = vmatprep.subr.mxu0 0.0
    %4171 = vmatpush2.msra.mxu0 0.0
    %4172 = vmatprep.subr.mxu0 0.0
    %4173 = vmatpush2.msra.mxu0 0.0
    %4174 = vmatprep.subr.mxu0 0.0
    %4175 = vmatpush2.msra.mxu0 0.0
    %4176 = vmatprep.subr.mxu0 0.0
    %4177 = vmatpush2.msra.mxu0 0.0
    %4178 = vmatprep.subr.mxu0 0.0
    %4179 = vmatpush2.msra.mxu0 0.0
    %4180 = vmatprep.subr.mxu0 0.0
    %4181 = vmatpush2.msra.mxu0 0.0
    %4182 = vmatprep.mubr.f32.mxu0 0.0
    %4183 = vmatmul.mubr.f32.gmra.mxu0 %v4045
    %v4184 = vpop.f32.mrf.mxu0
    %v4185 = vadd.f32 %v4039, %v4184
    %v4186 = vpop.f32.mrf.mxu0
    %v4187 = vadd.f32 %v4041, %v4186
    %4188 = vdwg.mxu0
    %v4189 = vld [vmem:[#allocation3 + $0x100] sm:$0xff]
    %v4190 = vld [vmem:[#allocation3 + $0x108] sm:$0xff]
    %v4191 = vld [vmem:[#allocation3 + $0x110] sm:$0xff]
    %v4192 = vld [vmem:[#allocation3 + $0x118] sm:$0xff]
    %v4193 = vld [vmem:[#allocation3 + $0x120] sm:$0xff]
    %v4194 = vld [vmem:[#allocation3 + $0x128] sm:$0xff]
    %v4195 = vld [vmem:[#allocation3 + $0x130] sm:$0xff]
    %v4196 = vld [vmem:[#allocation3 + $0x138] sm:$0xff]
    %v4197 = vld [vmem:[#allocation3 + $0x140] sm:$0xff]
    %v4198 = vld [vmem:[#allocation3 + $0x148] sm:$0xff]
    %v4199 = vld [vmem:[#allocation3 + $0x150] sm:$0xff]
    %v4200 = vld [vmem:[#allocation3 + $0x158] sm:$0xff]
    %v4201 = vld [vmem:[#allocation3 + $0x160] sm:$0xff]
    %v4202 = vld [vmem:[#allocation3 + $0x168] sm:$0xff]
    %v4203 = vld [vmem:[#allocation3 + $0x170] sm:$0xff]
    %v4204 = vld [vmem:[#allocation3 + $0x178] sm:$0xff]
    %v4205 = vrot.slane %v3860, 2
    %v4206 = vrot.slane %v3861, 1
    %v4207 = vsel %vm3897, %v4206, %v4205
    %v4208 = vsel %vm228, %v4207, 0
    %4210 = vmatprep.subr.mxu0 0.0
    %4211 = vmatpush1.msra.mxu0 0.0
    %4212 = vmatprep.subr.mxu0 0.0
    %4213 = vmatpush1.msra.mxu0 0.0
    %4214 = vmatprep.subr.mxu0 0.0
    %4215 = vmatpush1.msra.mxu0 0.0
    %4216 = vmatprep.subr.mxu0 0.0
    %4217 = vmatpush1.msra.mxu0 0.0
    %4218 = vmatprep.subr.mxu0 0.0
    %4219 = vmatpush1.msra.mxu0 0.0
    %4220 = vmatprep.subr.mxu0 0.0
    %4221 = vmatpush1.msra.mxu0 0.0
    %4222 = vmatprep.subr.mxu0 0.0
    %4223 = vmatpush1.msra.mxu0 0.0
    %4224 = vmatprep.subr.mxu0 0.0
    %4225 = vmatpush1.msra.mxu0 0.0
    %4226 = vmatprep.subr.mxu0 0.0
    %4227 = vmatpush1.msra.mxu0 0.0
    %4228 = vmatprep.subr.mxu0 0.0
    %4229 = vmatpush1.msra.mxu0 0.0
    %4230 = vmatprep.subr.mxu0 0.0
    %4231 = vmatpush1.msra.mxu0 0.0
    %4232 = vmatprep.subr.mxu0 0.0
    %4233 = vmatpush1.msra.mxu0 0.0
    %4234 = vmatprep.subr.mxu0 %v4202
    %4235 = vmatpush1.msra.mxu0 %v4201
    %4236 = vmatprep.subr.mxu0 %v4198
    %4237 = vmatpush1.msra.mxu0 %v4197
    %4238 = vmatprep.subr.mxu0 %v4194
    %4239 = vmatpush1.msra.mxu0 %v4193
    %4240 = vmatprep.subr.mxu0 %v4190
    %4241 = vmatpush1.msra.mxu0 %v4189
    %4242 = vmatprep.subr.mxu0 0.0
    %4243 = vmatpush2.msra.mxu0 0.0
    %4244 = vmatprep.subr.mxu0 0.0
    %4245 = vmatpush2.msra.mxu0 0.0
    %4246 = vmatprep.subr.mxu0 0.0
    %4247 = vmatpush2.msra.mxu0 0.0
    %4248 = vmatprep.subr.mxu0 0.0
    %4249 = vmatpush2.msra.mxu0 0.0
    %4250 = vmatprep.subr.mxu0 0.0
    %4251 = vmatpush2.msra.mxu0 0.0
    %4252 = vmatprep.subr.mxu0 0.0
    %4253 = vmatpush2.msra.mxu0 0.0
    %4254 = vmatprep.subr.mxu0 0.0
    %4255 = vmatpush2.msra.mxu0 0.0
    %4256 = vmatprep.subr.mxu0 0.0
    %4257 = vmatpush2.msra.mxu0 0.0
    %4258 = vmatprep.subr.mxu0 0.0
    %4259 = vmatpush2.msra.mxu0 0.0
    %4260 = vmatprep.subr.mxu0 0.0
    %4261 = vmatpush2.msra.mxu0 0.0
    %4262 = vmatprep.subr.mxu0 0.0
    %4263 = vmatpush2.msra.mxu0 0.0
    %4264 = vmatprep.subr.mxu0 0.0
    %4265 = vmatpush2.msra.mxu0 0.0
    %4266 = vmatprep.subr.mxu0 0.0
    %4267 = vmatpush2.msra.mxu0 0.0
    %4268 = vmatprep.subr.mxu0 0.0
    %4269 = vmatpush2.msra.mxu0 0.0
    %4270 = vmatprep.subr.mxu0 0.0
    %4271 = vmatpush2.msra.mxu0 0.0
    %4272 = vmatprep.subr.mxu0 0.0
    %4273 = vmatpush2.msra.mxu0 0.0
    %4274 = vmatprep.mubr.f32.mxu0 0.0
    %4275 = vmatmul.mubr.f32.gmra.mxu0 %v4208
    %v4276 = vpop.f32.mrf.mxu0
    %v4277 = vadd.f32 0.0, %v4276
    %v4278 = vpop.f32.mrf.mxu0
    %v4279 = vadd.f32 0.0, %v4278
    %4280 = vdwg.mxu0
    %4281 = vmatprep.subr.mxu0 0.0
    %4282 = vmatpush1.msra.mxu0 0.0
    %4283 = vmatprep.subr.mxu0 0.0
    %4284 = vmatpush1.msra.mxu0 0.0
    %4285 = vmatprep.subr.mxu0 0.0
    %4286 = vmatpush1.msra.mxu0 0.0
    %4287 = vmatprep.subr.mxu0 0.0
    %4288 = vmatpush1.msra.mxu0 0.0
    %4289 = vmatprep.subr.mxu0 0.0
    %4290 = vmatpush1.msra.mxu0 0.0
    %4291 = vmatprep.subr.mxu0 0.0
    %4292 = vmatpush1.msra.mxu0 0.0
    %4293 = vmatprep.subr.mxu0 0.0
    %4294 = vmatpush1.msra.mxu0 0.0
    %4295 = vmatprep.subr.mxu0 0.0
    %4296 = vmatpush1.msra.mxu0 0.0
    %4297 = vmatprep.subr.mxu0 0.0
    %4298 = vmatpush1.msra.mxu0 0.0
    %4299 = vmatprep.subr.mxu0 0.0
    %4300 = vmatpush1.msra.mxu0 0.0
    %4301 = vmatprep.subr.mxu0 0.0
    %4302 = vmatpush1.msra.mxu0 0.0
    %4303 = vmatprep.subr.mxu0 0.0
    %4304 = vmatpush1.msra.mxu0 0.0
    %4305 = vmatprep.subr.mxu0 %v4204
    %4306 = vmatpush1.msra.mxu0 %v4203
    %4307 = vmatprep.subr.mxu0 %v4200
    %4308 = vmatpush1.msra.mxu0 %v4199
    %4309 = vmatprep.subr.mxu0 %v4196
    %4310 = vmatpush1.msra.mxu0 %v4195
    %4311 = vmatprep.subr.mxu0 %v4192
    %4312 = vmatpush1.msra.mxu0 %v4191
    %4313 = vmatprep.subr.mxu0 0.0
    %4314 = vmatpush2.msra.mxu0 0.0
    %4315 = vmatprep.subr.mxu0 0.0
    %4316 = vmatpush2.msra.mxu0 0.0
    %4317 = vmatprep.subr.mxu0 0.0
    %4318 = vmatpush2.msra.mxu0 0.0
    %4319 = vmatprep.subr.mxu0 0.0
    %4320 = vmatpush2.msra.mxu0 0.0
    %4321 = vmatprep.subr.mxu0 0.0
    %4322 = vmatpush2.msra.mxu0 0.0
    %4323 = vmatprep.subr.mxu0 0.0
    %4324 = vmatpush2.msra.mxu0 0.0
    %4325 = vmatprep.subr.mxu0 0.0
    %4326 = vmatpush2.msra.mxu0 0.0
    %4327 = vmatprep.subr.mxu0 0.0
    %4328 = vmatpush2.msra.mxu0 0.0
    %4329 = vmatprep.subr.mxu0 0.0
    %4330 = vmatpush2.msra.mxu0 0.0
    %4331 = vmatprep.subr.mxu0 0.0
    %4332 = vmatpush2.msra.mxu0 0.0
    %4333 = vmatprep.subr.mxu0 0.0
    %4334 = vmatpush2.msra.mxu0 0.0
    %4335 = vmatprep.subr.mxu0 0.0
    %4336 = vmatpush2.msra.mxu0 0.0
    %4337 = vmatprep.subr.mxu0 0.0
    %4338 = vmatpush2.msra.mxu0 0.0
    %4339 = vmatprep.subr.mxu0 0.0
    %4340 = vmatpush2.msra.mxu0 0.0
    %4341 = vmatprep.subr.mxu0 0.0
    %4342 = vmatpush2.msra.mxu0 0.0
    %4343 = vmatprep.subr.mxu0 0.0
    %4344 = vmatpush2.msra.mxu0 0.0
    %4345 = vmatprep.mubr.f32.mxu0 0.0
    %4346 = vmatmul.mubr.f32.gmra.mxu0 %v4208
    %v4347 = vpop.f32.mrf.mxu0
    %v4348 = vadd.f32 0.0, %v4347
    %v4349 = vpop.f32.mrf.mxu0
    %v4350 = vadd.f32 0.0, %v4349
    %4351 = vdwg.mxu0
    %v4352 = vadd.f32 %v4114, %v4277
    %v4353 = vadd.f32 %v4116, %v4279
    %v4354 = vadd.f32 %v4185, %v4348
    %v4355 = vadd.f32 %v4187, %v4350
    %v4356 = vld [vmem:[#allocation3 + $0x180] sm:$0xff]
    %v4357 = vld [vmem:[#allocation3 + $0x188] sm:$0xff]
    %v4358 = vld [vmem:[#allocation3 + $0x190] sm:$0xff]
    %v4359 = vld [vmem:[#allocation3 + $0x198] sm:$0xff]
    %v4360 = vld [vmem:[#allocation3 + $0x1a0] sm:$0xff]
    %v4361 = vld [vmem:[#allocation3 + $0x1a8] sm:$0xff]
    %v4362 = vld [vmem:[#allocation3 + $0x1b0] sm:$0xff]
    %v4363 = vld [vmem:[#allocation3 + $0x1b8] sm:$0xff]
    %v4364 = vld [vmem:[#allocation3 + $0x1c0] sm:$0xff]
    %v4365 = vld [vmem:[#allocation3 + $0x1c8] sm:$0xff]
    %v4366 = vld [vmem:[#allocation3 + $0x1d0] sm:$0xff]
    %v4367 = vld [vmem:[#allocation3 + $0x1d8] sm:$0xff]
    %v4368 = vld [vmem:[#allocation3 + $0x1e0] sm:$0xff]
    %v4369 = vld [vmem:[#allocation3 + $0x1e8] sm:$0xff]
    %v4370 = vld [vmem:[#allocation3 + $0x1f0] sm:$0xff]
    %v4371 = vld [vmem:[#allocation3 + $0x1f8] sm:$0xff]
    %v4372 = vrot.slane %v3860, 3
    %v4373 = vrot.slane %v3861, 2
    %v4374 = vsel %vm3897, %v4373, %v4372
    %v4375 = vsel %vm228, %v4374, 0
    %4377 = vmatprep.subr.mxu0 0.0
    %4378 = vmatpush1.msra.mxu0 0.0
    %4379 = vmatprep.subr.mxu0 0.0
    %4380 = vmatpush1.msra.mxu0 0.0
    %4381 = vmatprep.subr.mxu0 0.0
    %4382 = vmatpush1.msra.mxu0 0.0
    %4383 = vmatprep.subr.mxu0 0.0
    %4384 = vmatpush1.msra.mxu0 0.0
    %4385 = vmatprep.subr.mxu0 0.0
    %4386 = vmatpush1.msra.mxu0 0.0
    %4387 = vmatprep.subr.mxu0 0.0
    %4388 = vmatpush1.msra.mxu0 0.0
    %4389 = vmatprep.subr.mxu0 0.0
    %4390 = vmatpush1.msra.mxu0 0.0
    %4391 = vmatprep.subr.mxu0 0.0
    %4392 = vmatpush1.msra.mxu0 0.0
    %4393 = vmatprep.subr.mxu0 0.0
    %4394 = vmatpush1.msra.mxu0 0.0
    %4395 = vmatprep.subr.mxu0 0.0
    %4396 = vmatpush1.msra.mxu0 0.0
    %4397 = vmatprep.subr.mxu0 0.0
    %4398 = vmatpush1.msra.mxu0 0.0
    %4399 = vmatprep.subr.mxu0 0.0
    %4400 = vmatpush1.msra.mxu0 0.0
    %4401 = vmatprep.subr.mxu0 %v4369
    %4402 = vmatpush1.msra.mxu0 %v4368
    %4403 = vmatprep.subr.mxu0 %v4365
    %4404 = vmatpush1.msra.mxu0 %v4364
    %4405 = vmatprep.subr.mxu0 %v4361
    %4406 = vmatpush1.msra.mxu0 %v4360
    %4407 = vmatprep.subr.mxu0 %v4357
    %4408 = vmatpush1.msra.mxu0 %v4356
    %4409 = vmatprep.subr.mxu0 0.0
    %4410 = vmatpush2.msra.mxu0 0.0
    %4411 = vmatprep.subr.mxu0 0.0
    %4412 = vmatpush2.msra.mxu0 0.0
    %4413 = vmatprep.subr.mxu0 0.0
    %4414 = vmatpush2.msra.mxu0 0.0
    %4415 = vmatprep.subr.mxu0 0.0
    %4416 = vmatpush2.msra.mxu0 0.0
    %4417 = vmatprep.subr.mxu0 0.0
    %4418 = vmatpush2.msra.mxu0 0.0
    %4419 = vmatprep.subr.mxu0 0.0
    %4420 = vmatpush2.msra.mxu0 0.0
    %4421 = vmatprep.subr.mxu0 0.0
    %4422 = vmatpush2.msra.mxu0 0.0
    %4423 = vmatprep.subr.mxu0 0.0
    %4424 = vmatpush2.msra.mxu0 0.0
    %4425 = vmatprep.subr.mxu0 0.0
    %4426 = vmatpush2.msra.mxu0 0.0
    %4427 = vmatprep.subr.mxu0 0.0
    %4428 = vmatpush2.msra.mxu0 0.0
    %4429 = vmatprep.subr.mxu0 0.0
    %4430 = vmatpush2.msra.mxu0 0.0
    %4431 = vmatprep.subr.mxu0 0.0
    %4432 = vmatpush2.msra.mxu0 0.0
    %4433 = vmatprep.subr.mxu0 0.0
    %4434 = vmatpush2.msra.mxu0 0.0
    %4435 = vmatprep.subr.mxu0 0.0
    %4436 = vmatpush2.msra.mxu0 0.0
    %4437 = vmatprep.subr.mxu0 0.0
    %4438 = vmatpush2.msra.mxu0 0.0
    %4439 = vmatprep.subr.mxu0 0.0
    %4440 = vmatpush2.msra.mxu0 0.0
    %4441 = vmatprep.mubr.f32.mxu0 0.0
    %4442 = vmatmul.mubr.f32.gmra.mxu0 %v4375
    %v4443 = vpop.f32.mrf.mxu0
    %v4444 = vadd.f32 0.0, %v4443
    %v4445 = vpop.f32.mrf.mxu0
    %v4446 = vadd.f32 0.0, %v4445
    %4447 = vdwg.mxu0
    %4448 = vmatprep.subr.mxu0 0.0
    %4449 = vmatpush1.msra.mxu0 0.0
    %4450 = vmatprep.subr.mxu0 0.0
    %4451 = vmatpush1.msra.mxu0 0.0
    %4452 = vmatprep.subr.mxu0 0.0
    %4453 = vmatpush1.msra.mxu0 0.0
    %4454 = vmatprep.subr.mxu0 0.0
    %4455 = vmatpush1.msra.mxu0 0.0
    %4456 = vmatprep.subr.mxu0 0.0
    %4457 = vmatpush1.msra.mxu0 0.0
    %4458 = vmatprep.subr.mxu0 0.0
    %4459 = vmatpush1.msra.mxu0 0.0
    %4460 = vmatprep.subr.mxu0 0.0
    %4461 = vmatpush1.msra.mxu0 0.0
    %4462 = vmatprep.subr.mxu0 0.0
    %4463 = vmatpush1.msra.mxu0 0.0
    %4464 = vmatprep.subr.mxu0 0.0
    %4465 = vmatpush1.msra.mxu0 0.0
    %4466 = vmatprep.subr.mxu0 0.0
    %4467 = vmatpush1.msra.mxu0 0.0
    %4468 = vmatprep.subr.mxu0 0.0
    %4469 = vmatpush1.msra.mxu0 0.0
    %4470 = vmatprep.subr.mxu0 0.0
    %4471 = vmatpush1.msra.mxu0 0.0
    %4472 = vmatprep.subr.mxu0 %v4371
    %4473 = vmatpush1.msra.mxu0 %v4370
    %4474 = vmatprep.subr.mxu0 %v4367
    %4475 = vmatpush1.msra.mxu0 %v4366
    %4476 = vmatprep.subr.mxu0 %v4363
    %4477 = vmatpush1.msra.mxu0 %v4362
    %4478 = vmatprep.subr.mxu0 %v4359
    %4479 = vmatpush1.msra.mxu0 %v4358
    %4480 = vmatprep.subr.mxu0 0.0
    %4481 = vmatpush2.msra.mxu0 0.0
    %4482 = vmatprep.subr.mxu0 0.0
    %4483 = vmatpush2.msra.mxu0 0.0
    %4484 = vmatprep.subr.mxu0 0.0
    %4485 = vmatpush2.msra.mxu0 0.0
    %4486 = vmatprep.subr.mxu0 0.0
    %4487 = vmatpush2.msra.mxu0 0.0
    %4488 = vmatprep.subr.mxu0 0.0
    %4489 = vmatpush2.msra.mxu0 0.0
    %4490 = vmatprep.subr.mxu0 0.0
    %4491 = vmatpush2.msra.mxu0 0.0
    %4492 = vmatprep.subr.mxu0 0.0
    %4493 = vmatpush2.msra.mxu0 0.0
    %4494 = vmatprep.subr.mxu0 0.0
    %4495 = vmatpush2.msra.mxu0 0.0
    %4496 = vmatprep.subr.mxu0 0.0
    %4497 = vmatpush2.msra.mxu0 0.0
    %4498 = vmatprep.subr.mxu0 0.0
    %4499 = vmatpush2.msra.mxu0 0.0
    %4500 = vmatprep.subr.mxu0 0.0
    %4501 = vmatpush2.msra.mxu0 0.0
    %4502 = vmatprep.subr.mxu0 0.0
    %4503 = vmatpush2.msra.mxu0 0.0
    %4504 = vmatprep.subr.mxu0 0.0
    %4505 = vmatpush2.msra.mxu0 0.0
    %4506 = vmatprep.subr.mxu0 0.0
    %4507 = vmatpush2.msra.mxu0 0.0
    %4508 = vmatprep.subr.mxu0 0.0
    %4509 = vmatpush2.msra.mxu0 0.0
    %4510 = vmatprep.subr.mxu0 0.0
    %4511 = vmatpush2.msra.mxu0 0.0
    %4512 = vmatprep.mubr.f32.mxu0 0.0
    %4513 = vmatmul.mubr.f32.gmra.mxu0 %v4375
    %v4514 = vpop.f32.mrf.mxu0
    %v4515 = vadd.f32 0.0, %v4514
    %v4516 = vpop.f32.mrf.mxu0
    %v4517 = vadd.f32 0.0, %v4516
    %4518 = vdwg.mxu0
    %v4519 = vadd.f32 %v4352, %v4444
    %v4520 = vadd.f32 %v4353, %v4446
    %v4521 = vadd.f32 %v4354, %v4515
    %v4522 = vadd.f32 %v4355, %v4517
    %v4523 = vld [vmem:[#allocation3 + $0x200] sm:$0xff]
    %v4524 = vld [vmem:[#allocation3 + $0x208] sm:$0xff]
    %v4525 = vld [vmem:[#allocation3 + $0x210] sm:$0xff]
    %v4526 = vld [vmem:[#allocation3 + $0x218] sm:$0xff]
    %v4527 = vld [vmem:[#allocation3 + $0x220] sm:$0xff]
    %v4528 = vld [vmem:[#allocation3 + $0x228] sm:$0xff]
    %v4529 = vld [vmem:[#allocation3 + $0x230] sm:$0xff]
    %v4530 = vld [vmem:[#allocation3 + $0x238] sm:$0xff]
    %v4531 = vld [vmem:[#allocation3 + $0x240] sm:$0xff]
    %v4532 = vld [vmem:[#allocation3 + $0x248] sm:$0xff]
    %v4533 = vld [vmem:[#allocation3 + $0x250] sm:$0xff]
    %v4534 = vld [vmem:[#allocation3 + $0x258] sm:$0xff]
    %v4535 = vld [vmem:[#allocation3 + $0x260] sm:$0xff]
    %v4536 = vld [vmem:[#allocation3 + $0x268] sm:$0xff]
    %v4537 = vld [vmem:[#allocation3 + $0x270] sm:$0xff]
    %v4538 = vld [vmem:[#allocation3 + $0x278] sm:$0xff]
    %v4539 = vrot.slane %v3860, 4
    %v4540 = vrot.slane %v3861, 3
    %v4541 = vsel %vm3897, %v4540, %v4539
    %v4542 = vsel %vm228, %v4541, 0
    %4544 = vmatprep.subr.mxu0 0.0
    %4545 = vmatpush1.msra.mxu0 0.0
    %4546 = vmatprep.subr.mxu0 0.0
    %4547 = vmatpush1.msra.mxu0 0.0
    %4548 = vmatprep.subr.mxu0 0.0
    %4549 = vmatpush1.msra.mxu0 0.0
    %4550 = vmatprep.subr.mxu0 0.0
    %4551 = vmatpush1.msra.mxu0 0.0
    %4552 = vmatprep.subr.mxu0 0.0
    %4553 = vmatpush1.msra.mxu0 0.0
    %4554 = vmatprep.subr.mxu0 0.0
    %4555 = vmatpush1.msra.mxu0 0.0
    %4556 = vmatprep.subr.mxu0 0.0
    %4557 = vmatpush1.msra.mxu0 0.0
    %4558 = vmatprep.subr.mxu0 0.0
    %4559 = vmatpush1.msra.mxu0 0.0
    %4560 = vmatprep.subr.mxu0 0.0
    %4561 = vmatpush1.msra.mxu0 0.0
    %4562 = vmatprep.subr.mxu0 0.0
    %4563 = vmatpush1.msra.mxu0 0.0
    %4564 = vmatprep.subr.mxu0 0.0
    %4565 = vmatpush1.msra.mxu0 0.0
    %4566 = vmatprep.subr.mxu0 0.0
    %4567 = vmatpush1.msra.mxu0 0.0
    %4568 = vmatprep.subr.mxu0 %v4536
    %4569 = vmatpush1.msra.mxu0 %v4535
    %4570 = vmatprep.subr.mxu0 %v4532
    %4571 = vmatpush1.msra.mxu0 %v4531
    %4572 = vmatprep.subr.mxu0 %v4528
    %4573 = vmatpush1.msra.mxu0 %v4527
    %4574 = vmatprep.subr.mxu0 %v4524
    %4575 = vmatpush1.msra.mxu0 %v4523
    %4576 = vmatprep.subr.mxu0 0.0
    %4577 = vmatpush2.msra.mxu0 0.0
    %4578 = vmatprep.subr.mxu0 0.0
    %4579 = vmatpush2.msra.mxu0 0.0
    %4580 = vmatprep.subr.mxu0 0.0
    %4581 = vmatpush2.msra.mxu0 0.0
    %4582 = vmatprep.subr.mxu0 0.0
    %4583 = vmatpush2.msra.mxu0 0.0
    %4584 = vmatprep.subr.mxu0 0.0
    %4585 = vmatpush2.msra.mxu0 0.0
    %4586 = vmatprep.subr.mxu0 0.0
    %4587 = vmatpush2.msra.mxu0 0.0
    %4588 = vmatprep.subr.mxu0 0.0
    %4589 = vmatpush2.msra.mxu0 0.0
    %4590 = vmatprep.subr.mxu0 0.0
    %4591 = vmatpush2.msra.mxu0 0.0
    %4592 = vmatprep.subr.mxu0 0.0
    %4593 = vmatpush2.msra.mxu0 0.0
    %4594 = vmatprep.subr.mxu0 0.0
    %4595 = vmatpush2.msra.mxu0 0.0
    %4596 = vmatprep.subr.mxu0 0.0
    %4597 = vmatpush2.msra.mxu0 0.0
    %4598 = vmatprep.subr.mxu0 0.0
    %4599 = vmatpush2.msra.mxu0 0.0
    %4600 = vmatprep.subr.mxu0 0.0
    %4601 = vmatpush2.msra.mxu0 0.0
    %4602 = vmatprep.subr.mxu0 0.0
    %4603 = vmatpush2.msra.mxu0 0.0
    %4604 = vmatprep.subr.mxu0 0.0
    %4605 = vmatpush2.msra.mxu0 0.0
    %4606 = vmatprep.subr.mxu0 0.0
    %4607 = vmatpush2.msra.mxu0 0.0
    %4608 = vmatprep.mubr.f32.mxu0 0.0
    %4609 = vmatmul.mubr.f32.gmra.mxu0 %v4542
    %v4610 = vpop.f32.mrf.mxu0
    %v4611 = vadd.f32 0.0, %v4610
    %v4612 = vpop.f32.mrf.mxu0
    %v4613 = vadd.f32 0.0, %v4612
    %4614 = vdwg.mxu0
    %4615 = vmatprep.subr.mxu0 0.0
    %4616 = vmatpush1.msra.mxu0 0.0
    %4617 = vmatprep.subr.mxu0 0.0
    %4618 = vmatpush1.msra.mxu0 0.0
    %4619 = vmatprep.subr.mxu0 0.0
    %4620 = vmatpush1.msra.mxu0 0.0
    %4621 = vmatprep.subr.mxu0 0.0
    %4622 = vmatpush1.msra.mxu0 0.0
    %4623 = vmatprep.subr.mxu0 0.0
    %4624 = vmatpush1.msra.mxu0 0.0
    %4625 = vmatprep.subr.mxu0 0.0
    %4626 = vmatpush1.msra.mxu0 0.0
    %4627 = vmatprep.subr.mxu0 0.0
    %4628 = vmatpush1.msra.mxu0 0.0
    %4629 = vmatprep.subr.mxu0 0.0
    %4630 = vmatpush1.msra.mxu0 0.0
    %4631 = vmatprep.subr.mxu0 0.0
    %4632 = vmatpush1.msra.mxu0 0.0
    %4633 = vmatprep.subr.mxu0 0.0
    %4634 = vmatpush1.msra.mxu0 0.0
    %4635 = vmatprep.subr.mxu0 0.0
    %4636 = vmatpush1.msra.mxu0 0.0
    %4637 = vmatprep.subr.mxu0 0.0
    %4638 = vmatpush1.msra.mxu0 0.0
    %4639 = vmatprep.subr.mxu0 %v4538
    %4640 = vmatpush1.msra.mxu0 %v4537
    %4641 = vmatprep.subr.mxu0 %v4534
    %4642 = vmatpush1.msra.mxu0 %v4533
    %4643 = vmatprep.subr.mxu0 %v4530
    %4644 = vmatpush1.msra.mxu0 %v4529
    %4645 = vmatprep.subr.mxu0 %v4526
    %4646 = vmatpush1.msra.mxu0 %v4525
    %4647 = vmatprep.subr.mxu0 0.0
    %4648 = vmatpush2.msra.mxu0 0.0
    %4649 = vmatprep.subr.mxu0 0.0
    %4650 = vmatpush2.msra.mxu0 0.0
    %4651 = vmatprep.subr.mxu0 0.0
    %4652 = vmatpush2.msra.mxu0 0.0
    %4653 = vmatprep.subr.mxu0 0.0
    %4654 = vmatpush2.msra.mxu0 0.0
    %4655 = vmatprep.subr.mxu0 0.0
    %4656 = vmatpush2.msra.mxu0 0.0
    %4657 = vmatprep.subr.mxu0 0.0
    %4658 = vmatpush2.msra.mxu0 0.0
    %4659 = vmatprep.subr.mxu0 0.0
    %4660 = vmatpush2.msra.mxu0 0.0
    %4661 = vmatprep.subr.mxu0 0.0
    %4662 = vmatpush2.msra.mxu0 0.0
    %4663 = vmatprep.subr.mxu0 0.0
    %4664 = vmatpush2.msra.mxu0 0.0
    %4665 = vmatprep.subr.mxu0 0.0
    %4666 = vmatpush2.msra.mxu0 0.0
    %4667 = vmatprep.subr.mxu0 0.0
    %4668 = vmatpush2.msra.mxu0 0.0
    %4669 = vmatprep.subr.mxu0 0.0
    %4670 = vmatpush2.msra.mxu0 0.0
    %4671 = vmatprep.subr.mxu0 0.0
    %4672 = vmatpush2.msra.mxu0 0.0
    %4673 = vmatprep.subr.mxu0 0.0
    %4674 = vmatpush2.msra.mxu0 0.0
    %4675 = vmatprep.subr.mxu0 0.0
    %4676 = vmatpush2.msra.mxu0 0.0
    %4677 = vmatprep.subr.mxu0 0.0
    %4678 = vmatpush2.msra.mxu0 0.0
    %4679 = vmatprep.mubr.f32.mxu0 0.0
    %4680 = vmatmul.mubr.f32.gmra.mxu0 %v4542
    %v4681 = vpop.f32.mrf.mxu0
    %v4682 = vadd.f32 0.0, %v4681
    %v4683 = vpop.f32.mrf.mxu0
    %v4684 = vadd.f32 0.0, %v4683
    %4685 = vdwg.mxu0
    %v4686 = vadd.f32 %v4519, %v4611
    %v4687 = vadd.f32 %v4520, %v4613
    %v4688 = vadd.f32 %v4521, %v4682
    %v4689 = vadd.f32 %v4522, %v4684
    %v4690 = vld [vmem:[#allocation3 + $0x280] sm:$0xff]
    %v4691 = vld [vmem:[#allocation3 + $0x288] sm:$0xff]
    %v4692 = vld [vmem:[#allocation3 + $0x290] sm:$0xff]
    %v4693 = vld [vmem:[#allocation3 + $0x298] sm:$0xff]
    %v4694 = vld [vmem:[#allocation3 + $0x2a0] sm:$0xff]
    %v4695 = vld [vmem:[#allocation3 + $0x2a8] sm:$0xff]
    %v4696 = vld [vmem:[#allocation3 + $0x2b0] sm:$0xff]
    %v4697 = vld [vmem:[#allocation3 + $0x2b8] sm:$0xff]
    %v4698 = vld [vmem:[#allocation3 + $0x2c0] sm:$0xff]
    %v4699 = vld [vmem:[#allocation3 + $0x2c8] sm:$0xff]
    %v4700 = vld [vmem:[#allocation3 + $0x2d0] sm:$0xff]
    %v4701 = vld [vmem:[#allocation3 + $0x2d8] sm:$0xff]
    %v4702 = vld [vmem:[#allocation3 + $0x2e0] sm:$0xff]
    %v4703 = vld [vmem:[#allocation3 + $0x2e8] sm:$0xff]
    %v4704 = vld [vmem:[#allocation3 + $0x2f0] sm:$0xff]
    %v4705 = vld [vmem:[#allocation3 + $0x2f8] sm:$0xff]
    %v4706 = vrot.slane %v3860, 5
    %v4707 = vrot.slane %v3861, 4
    %v4708 = vsel %vm3897, %v4707, %v4706
    %v4709 = vsel %vm228, %v4708, 0
    %4711 = vmatprep.subr.mxu0 0.0
    %4712 = vmatpush1.msra.mxu0 0.0
    %4713 = vmatprep.subr.mxu0 0.0
    %4714 = vmatpush1.msra.mxu0 0.0
    %4715 = vmatprep.subr.mxu0 0.0
    %4716 = vmatpush1.msra.mxu0 0.0
    %4717 = vmatprep.subr.mxu0 0.0
    %4718 = vmatpush1.msra.mxu0 0.0
    %4719 = vmatprep.subr.mxu0 0.0
    %4720 = vmatpush1.msra.mxu0 0.0
    %4721 = vmatprep.subr.mxu0 0.0
    %4722 = vmatpush1.msra.mxu0 0.0
    %4723 = vmatprep.subr.mxu0 0.0
    %4724 = vmatpush1.msra.mxu0 0.0
    %4725 = vmatprep.subr.mxu0 0.0
    %4726 = vmatpush1.msra.mxu0 0.0
    %4727 = vmatprep.subr.mxu0 0.0
    %4728 = vmatpush1.msra.mxu0 0.0
    %4729 = vmatprep.subr.mxu0 0.0
    %4730 = vmatpush1.msra.mxu0 0.0
    %4731 = vmatprep.subr.mxu0 0.0
    %4732 = vmatpush1.msra.mxu0 0.0
    %4733 = vmatprep.subr.mxu0 0.0
    %4734 = vmatpush1.msra.mxu0 0.0
    %4735 = vmatprep.subr.mxu0 %v4703
    %4736 = vmatpush1.msra.mxu0 %v4702
    %4737 = vmatprep.subr.mxu0 %v4699
    %4738 = vmatpush1.msra.mxu0 %v4698
    %4739 = vmatprep.subr.mxu0 %v4695
    %4740 = vmatpush1.msra.mxu0 %v4694
    %4741 = vmatprep.subr.mxu0 %v4691
    %4742 = vmatpush1.msra.mxu0 %v4690
    %4743 = vmatprep.subr.mxu0 0.0
    %4744 = vmatpush2.msra.mxu0 0.0
    %4745 = vmatprep.subr.mxu0 0.0
    %4746 = vmatpush2.msra.mxu0 0.0
    %4747 = vmatprep.subr.mxu0 0.0
    %4748 = vmatpush2.msra.mxu0 0.0
    %4749 = vmatprep.subr.mxu0 0.0
    %4750 = vmatpush2.msra.mxu0 0.0
    %4751 = vmatprep.subr.mxu0 0.0
    %4752 = vmatpush2.msra.mxu0 0.0
    %4753 = vmatprep.subr.mxu0 0.0
    %4754 = vmatpush2.msra.mxu0 0.0
    %4755 = vmatprep.subr.mxu0 0.0
    %4756 = vmatpush2.msra.mxu0 0.0
    %4757 = vmatprep.subr.mxu0 0.0
    %4758 = vmatpush2.msra.mxu0 0.0
    %4759 = vmatprep.subr.mxu0 0.0
    %4760 = vmatpush2.msra.mxu0 0.0
    %4761 = vmatprep.subr.mxu0 0.0
    %4762 = vmatpush2.msra.mxu0 0.0
    %4763 = vmatprep.subr.mxu0 0.0
    %4764 = vmatpush2.msra.mxu0 0.0
    %4765 = vmatprep.subr.mxu0 0.0
    %4766 = vmatpush2.msra.mxu0 0.0
    %4767 = vmatprep.subr.mxu0 0.0
    %4768 = vmatpush2.msra.mxu0 0.0
    %4769 = vmatprep.subr.mxu0 0.0
    %4770 = vmatpush2.msra.mxu0 0.0
    %4771 = vmatprep.subr.mxu0 0.0
    %4772 = vmatpush2.msra.mxu0 0.0
    %4773 = vmatprep.subr.mxu0 0.0
    %4774 = vmatpush2.msra.mxu0 0.0
    %4775 = vmatprep.mubr.f32.mxu0 0.0
    %4776 = vmatmul.mubr.f32.gmra.mxu0 %v4709
    %v4777 = vpop.f32.mrf.mxu0
    %v4778 = vadd.f32 0.0, %v4777
    %v4779 = vpop.f32.mrf.mxu0
    %v4780 = vadd.f32 0.0, %v4779
    %4781 = vdwg.mxu0
    %4782 = vmatprep.subr.mxu0 0.0
    %4783 = vmatpush1.msra.mxu0 0.0
    %4784 = vmatprep.subr.mxu0 0.0
    %4785 = vmatpush1.msra.mxu0 0.0
    %4786 = vmatprep.subr.mxu0 0.0
    %4787 = vmatpush1.msra.mxu0 0.0
    %4788 = vmatprep.subr.mxu0 0.0
    %4789 = vmatpush1.msra.mxu0 0.0
    %4790 = vmatprep.subr.mxu0 0.0
    %4791 = vmatpush1.msra.mxu0 0.0
    %4792 = vmatprep.subr.mxu0 0.0
    %4793 = vmatpush1.msra.mxu0 0.0
    %4794 = vmatprep.subr.mxu0 0.0
    %4795 = vmatpush1.msra.mxu0 0.0
    %4796 = vmatprep.subr.mxu0 0.0
    %4797 = vmatpush1.msra.mxu0 0.0
    %4798 = vmatprep.subr.mxu0 0.0
    %4799 = vmatpush1.msra.mxu0 0.0
    %4800 = vmatprep.subr.mxu0 0.0
    %4801 = vmatpush1.msra.mxu0 0.0
    %4802 = vmatprep.subr.mxu0 0.0
    %4803 = vmatpush1.msra.mxu0 0.0
    %4804 = vmatprep.subr.mxu0 0.0
    %4805 = vmatpush1.msra.mxu0 0.0
    %4806 = vmatprep.subr.mxu0 %v4705
    %4807 = vmatpush1.msra.mxu0 %v4704
    %4808 = vmatprep.subr.mxu0 %v4701
    %4809 = vmatpush1.msra.mxu0 %v4700
    %4810 = vmatprep.subr.mxu0 %v4697
    %4811 = vmatpush1.msra.mxu0 %v4696
    %4812 = vmatprep.subr.mxu0 %v4693
    %4813 = vmatpush1.msra.mxu0 %v4692
    %4814 = vmatprep.subr.mxu0 0.0
    %4815 = vmatpush2.msra.mxu0 0.0
    %4816 = vmatprep.subr.mxu0 0.0
    %4817 = vmatpush2.msra.mxu0 0.0
    %4818 = vmatprep.subr.mxu0 0.0
    %4819 = vmatpush2.msra.mxu0 0.0
    %4820 = vmatprep.subr.mxu0 0.0
    %4821 = vmatpush2.msra.mxu0 0.0
    %4822 = vmatprep.subr.mxu0 0.0
    %4823 = vmatpush2.msra.mxu0 0.0
    %4824 = vmatprep.subr.mxu0 0.0
    %4825 = vmatpush2.msra.mxu0 0.0
    %4826 = vmatprep.subr.mxu0 0.0
    %4827 = vmatpush2.msra.mxu0 0.0
    %4828 = vmatprep.subr.mxu0 0.0
    %4829 = vmatpush2.msra.mxu0 0.0
    %4830 = vmatprep.subr.mxu0 0.0
    %4831 = vmatpush2.msra.mxu0 0.0
    %4832 = vmatprep.subr.mxu0 0.0
    %4833 = vmatpush2.msra.mxu0 0.0
    %4834 = vmatprep.subr.mxu0 0.0
    %4835 = vmatpush2.msra.mxu0 0.0
    %4836 = vmatprep.subr.mxu0 0.0
    %4837 = vmatpush2.msra.mxu0 0.0
    %4838 = vmatprep.subr.mxu0 0.0
    %4839 = vmatpush2.msra.mxu0 0.0
    %4840 = vmatprep.subr.mxu0 0.0
    %4841 = vmatpush2.msra.mxu0 0.0
    %4842 = vmatprep.subr.mxu0 0.0
    %4843 = vmatpush2.msra.mxu0 0.0
    %4844 = vmatprep.subr.mxu0 0.0
    %4845 = vmatpush2.msra.mxu0 0.0
    %4846 = vmatprep.mubr.f32.mxu0 0.0
    %4847 = vmatmul.mubr.f32.gmra.mxu0 %v4709
    %v4848 = vpop.f32.mrf.mxu0
    %v4849 = vadd.f32 0.0, %v4848
    %v4850 = vpop.f32.mrf.mxu0
    %v4851 = vadd.f32 0.0, %v4850
    %4852 = vdwg.mxu0
    %v4853 = vadd.f32 %v4686, %v4778
    %v4854 = vadd.f32 %v4687, %v4780
    %v4855 = vadd.f32 %v4688, %v4849
    %v4856 = vadd.f32 %v4689, %v4851
    %v4857 = vld [vmem:[#allocation3 + $0x300] sm:$0xff]
    %v4858 = vld [vmem:[#allocation3 + $0x308] sm:$0xff]
    %v4859 = vld [vmem:[#allocation3 + $0x310] sm:$0xff]
    %v4860 = vld [vmem:[#allocation3 + $0x318] sm:$0xff]
    %v4861 = vld [vmem:[#allocation3 + $0x320] sm:$0xff]
    %v4862 = vld [vmem:[#allocation3 + $0x328] sm:$0xff]
    %v4863 = vld [vmem:[#allocation3 + $0x330] sm:$0xff]
    %v4864 = vld [vmem:[#allocation3 + $0x338] sm:$0xff]
    %v4865 = vld [vmem:[#allocation3 + $0x340] sm:$0xff]
    %v4866 = vld [vmem:[#allocation3 + $0x348] sm:$0xff]
    %v4867 = vld [vmem:[#allocation3 + $0x350] sm:$0xff]
    %v4868 = vld [vmem:[#allocation3 + $0x358] sm:$0xff]
    %v4869 = vld [vmem:[#allocation3 + $0x360] sm:$0xff]
    %v4870 = vld [vmem:[#allocation3 + $0x368] sm:$0xff]
    %v4871 = vld [vmem:[#allocation3 + $0x370] sm:$0xff]
    %v4872 = vld [vmem:[#allocation3 + $0x378] sm:$0xff]
    %v4873 = vrot.slane %v3860, 6
    %v4874 = vrot.slane %v3861, 5
    %v4875 = vsel %vm3897, %v4874, %v4873
    %v4876 = vsel %vm228, %v4875, 0
    %4878 = vmatprep.subr.mxu0 0.0
    %4879 = vmatpush1.msra.mxu0 0.0
    %4880 = vmatprep.subr.mxu0 0.0
    %4881 = vmatpush1.msra.mxu0 0.0
    %4882 = vmatprep.subr.mxu0 0.0
    %4883 = vmatpush1.msra.mxu0 0.0
    %4884 = vmatprep.subr.mxu0 0.0
    %4885 = vmatpush1.msra.mxu0 0.0
    %4886 = vmatprep.subr.mxu0 0.0
    %4887 = vmatpush1.msra.mxu0 0.0
    %4888 = vmatprep.subr.mxu0 0.0
    %4889 = vmatpush1.msra.mxu0 0.0
    %4890 = vmatprep.subr.mxu0 0.0
    %4891 = vmatpush1.msra.mxu0 0.0
    %4892 = vmatprep.subr.mxu0 0.0
    %4893 = vmatpush1.msra.mxu0 0.0
    %4894 = vmatprep.subr.mxu0 0.0
    %4895 = vmatpush1.msra.mxu0 0.0
    %4896 = vmatprep.subr.mxu0 0.0
    %4897 = vmatpush1.msra.mxu0 0.0
    %4898 = vmatprep.subr.mxu0 0.0
    %4899 = vmatpush1.msra.mxu0 0.0
    %4900 = vmatprep.subr.mxu0 0.0
    %4901 = vmatpush1.msra.mxu0 0.0
    %4902 = vmatprep.subr.mxu0 %v4870
    %4903 = vmatpush1.msra.mxu0 %v4869
    %4904 = vmatprep.subr.mxu0 %v4866
    %4905 = vmatpush1.msra.mxu0 %v4865
    %4906 = vmatprep.subr.mxu0 %v4862
    %4907 = vmatpush1.msra.mxu0 %v4861
    %4908 = vmatprep.subr.mxu0 %v4858
    %4909 = vmatpush1.msra.mxu0 %v4857
    %4910 = vmatprep.subr.mxu0 0.0
    %4911 = vmatpush2.msra.mxu0 0.0
    %4912 = vmatprep.subr.mxu0 0.0
    %4913 = vmatpush2.msra.mxu0 0.0
    %4914 = vmatprep.subr.mxu0 0.0
    %4915 = vmatpush2.msra.mxu0 0.0
    %4916 = vmatprep.subr.mxu0 0.0
    %4917 = vmatpush2.msra.mxu0 0.0
    %4918 = vmatprep.subr.mxu0 0.0
    %4919 = vmatpush2.msra.mxu0 0.0
    %4920 = vmatprep.subr.mxu0 0.0
    %4921 = vmatpush2.msra.mxu0 0.0
    %4922 = vmatprep.subr.mxu0 0.0
    %4923 = vmatpush2.msra.mxu0 0.0
    %4924 = vmatprep.subr.mxu0 0.0
    %4925 = vmatpush2.msra.mxu0 0.0
    %4926 = vmatprep.subr.mxu0 0.0
    %4927 = vmatpush2.msra.mxu0 0.0
    %4928 = vmatprep.subr.mxu0 0.0
    %4929 = vmatpush2.msra.mxu0 0.0
    %4930 = vmatprep.subr.mxu0 0.0
    %4931 = vmatpush2.msra.mxu0 0.0
    %4932 = vmatprep.subr.mxu0 0.0
    %4933 = vmatpush2.msra.mxu0 0.0
    %4934 = vmatprep.subr.mxu0 0.0
    %4935 = vmatpush2.msra.mxu0 0.0
    %4936 = vmatprep.subr.mxu0 0.0
    %4937 = vmatpush2.msra.mxu0 0.0
    %4938 = vmatprep.subr.mxu0 0.0
    %4939 = vmatpush2.msra.mxu0 0.0
    %4940 = vmatprep.subr.mxu0 0.0
    %4941 = vmatpush2.msra.mxu0 0.0
    %4942 = vmatprep.mubr.f32.mxu0 0.0
    %4943 = vmatmul.mubr.f32.gmra.mxu0 %v4876
    %v4944 = vpop.f32.mrf.mxu0
    %v4945 = vadd.f32 0.0, %v4944
    %v4946 = vpop.f32.mrf.mxu0
    %v4947 = vadd.f32 0.0, %v4946
    %4948 = vdwg.mxu0
    %4949 = vmatprep.subr.mxu0 0.0
    %4950 = vmatpush1.msra.mxu0 0.0
    %4951 = vmatprep.subr.mxu0 0.0
    %4952 = vmatpush1.msra.mxu0 0.0
    %4953 = vmatprep.subr.mxu0 0.0
    %4954 = vmatpush1.msra.mxu0 0.0
    %4955 = vmatprep.subr.mxu0 0.0
    %4956 = vmatpush1.msra.mxu0 0.0
    %4957 = vmatprep.subr.mxu0 0.0
    %4958 = vmatpush1.msra.mxu0 0.0
    %4959 = vmatprep.subr.mxu0 0.0
    %4960 = vmatpush1.msra.mxu0 0.0
    %4961 = vmatprep.subr.mxu0 0.0
    %4962 = vmatpush1.msra.mxu0 0.0
    %4963 = vmatprep.subr.mxu0 0.0
    %4964 = vmatpush1.msra.mxu0 0.0
    %4965 = vmatprep.subr.mxu0 0.0
    %4966 = vmatpush1.msra.mxu0 0.0
    %4967 = vmatprep.subr.mxu0 0.0
    %4968 = vmatpush1.msra.mxu0 0.0
    %4969 = vmatprep.subr.mxu0 0.0
    %4970 = vmatpush1.msra.mxu0 0.0
    %4971 = vmatprep.subr.mxu0 0.0
    %4972 = vmatpush1.msra.mxu0 0.0
    %4973 = vmatprep.subr.mxu0 %v4872
    %4974 = vmatpush1.msra.mxu0 %v4871
    %4975 = vmatprep.subr.mxu0 %v4868
    %4976 = vmatpush1.msra.mxu0 %v4867
    %4977 = vmatprep.subr.mxu0 %v4864
    %4978 = vmatpush1.msra.mxu0 %v4863
    %4979 = vmatprep.subr.mxu0 %v4860
    %4980 = vmatpush1.msra.mxu0 %v4859
    %4981 = vmatprep.subr.mxu0 0.0
    %4982 = vmatpush2.msra.mxu0 0.0
    %4983 = vmatprep.subr.mxu0 0.0
    %4984 = vmatpush2.msra.mxu0 0.0
    %4985 = vmatprep.subr.mxu0 0.0
    %4986 = vmatpush2.msra.mxu0 0.0
    %4987 = vmatprep.subr.mxu0 0.0
    %4988 = vmatpush2.msra.mxu0 0.0
    %4989 = vmatprep.subr.mxu0 0.0
    %4990 = vmatpush2.msra.mxu0 0.0
    %4991 = vmatprep.subr.mxu0 0.0
    %4992 = vmatpush2.msra.mxu0 0.0
    %4993 = vmatprep.subr.mxu0 0.0
    %4994 = vmatpush2.msra.mxu0 0.0
    %4995 = vmatprep.subr.mxu0 0.0
    %4996 = vmatpush2.msra.mxu0 0.0
    %4997 = vmatprep.subr.mxu0 0.0
    %4998 = vmatpush2.msra.mxu0 0.0
    %4999 = vmatprep.subr.mxu0 0.0
    %5000 = vmatpush2.msra.mxu0 0.0
    %5001 = vmatprep.subr.mxu0 0.0
    %5002 = vmatpush2.msra.mxu0 0.0
    %5003 = vmatprep.subr.mxu0 0.0
    %5004 = vmatpush2.msra.mxu0 0.0
    %5005 = vmatprep.subr.mxu0 0.0
    %5006 = vmatpush2.msra.mxu0 0.0
    %5007 = vmatprep.subr.mxu0 0.0
    %5008 = vmatpush2.msra.mxu0 0.0
    %5009 = vmatprep.subr.mxu0 0.0
    %5010 = vmatpush2.msra.mxu0 0.0
    %5011 = vmatprep.subr.mxu0 0.0
    %5012 = vmatpush2.msra.mxu0 0.0
    %5013 = vmatprep.mubr.f32.mxu0 0.0
    %5014 = vmatmul.mubr.f32.gmra.mxu0 %v4876
    %v5015 = vpop.f32.mrf.mxu0
    %v5016 = vadd.f32 0.0, %v5015
    %v5017 = vpop.f32.mrf.mxu0
    %v5018 = vadd.f32 0.0, %v5017
    %5019 = vdwg.mxu0
    %v5020 = vadd.f32 %v4853, %v4945
    %v5021 = vadd.f32 %v4854, %v4947
    %v5022 = vadd.f32 %v4855, %v5016
    %v5023 = vadd.f32 %v4856, %v5018
    %v5024 = vld [vmem:[#allocation3 + $0x380] sm:$0xff]
    %v5025 = vld [vmem:[#allocation3 + $0x388] sm:$0xff]
    %v5026 = vld [vmem:[#allocation3 + $0x390] sm:$0xff]
    %v5027 = vld [vmem:[#allocation3 + $0x398] sm:$0xff]
    %v5028 = vld [vmem:[#allocation3 + $0x3a0] sm:$0xff]
    %v5029 = vld [vmem:[#allocation3 + $0x3a8] sm:$0xff]
    %v5030 = vld [vmem:[#allocation3 + $0x3b0] sm:$0xff]
    %v5031 = vld [vmem:[#allocation3 + $0x3b8] sm:$0xff]
    %v5032 = vld [vmem:[#allocation3 + $0x3c0] sm:$0xff]
    %v5033 = vld [vmem:[#allocation3 + $0x3c8] sm:$0xff]
    %v5034 = vld [vmem:[#allocation3 + $0x3d0] sm:$0xff]
    %v5035 = vld [vmem:[#allocation3 + $0x3d8] sm:$0xff]
    %v5036 = vld [vmem:[#allocation3 + $0x3e0] sm:$0xff]
    %v5037 = vld [vmem:[#allocation3 + $0x3e8] sm:$0xff]
    %v5038 = vld [vmem:[#allocation3 + $0x3f0] sm:$0xff]
    %v5039 = vld [vmem:[#allocation3 + $0x3f8] sm:$0xff]
    %v5040 = vrot.slane %v3860, 7
    %v5041 = vrot.slane %v3861, 6
    %v5042 = vsel %vm3897, %v5041, %v5040
    %v5043 = vsel %vm228, %v5042, 0
    %5045 = vmatprep.subr.mxu0 0.0
    %5046 = vmatpush1.msra.mxu0 0.0
    %5047 = vmatprep.subr.mxu0 0.0
    %5048 = vmatpush1.msra.mxu0 0.0
    %5049 = vmatprep.subr.mxu0 0.0
    %5050 = vmatpush1.msra.mxu0 0.0
    %5051 = vmatprep.subr.mxu0 0.0
    %5052 = vmatpush1.msra.mxu0 0.0
    %5053 = vmatprep.subr.mxu0 0.0
    %5054 = vmatpush1.msra.mxu0 0.0
    %5055 = vmatprep.subr.mxu0 0.0
    %5056 = vmatpush1.msra.mxu0 0.0
    %5057 = vmatprep.subr.mxu0 0.0
    %5058 = vmatpush1.msra.mxu0 0.0
    %5059 = vmatprep.subr.mxu0 0.0
    %5060 = vmatpush1.msra.mxu0 0.0
    %5061 = vmatprep.subr.mxu0 0.0
    %5062 = vmatpush1.msra.mxu0 0.0
    %5063 = vmatprep.subr.mxu0 0.0
    %5064 = vmatpush1.msra.mxu0 0.0
    %5065 = vmatprep.subr.mxu0 0.0
    %5066 = vmatpush1.msra.mxu0 0.0
    %5067 = vmatprep.subr.mxu0 0.0
    %5068 = vmatpush1.msra.mxu0 0.0
    %5069 = vmatprep.subr.mxu0 %v5037
    %5070 = vmatpush1.msra.mxu0 %v5036
    %5071 = vmatprep.subr.mxu0 %v5033
    %5072 = vmatpush1.msra.mxu0 %v5032
    %5073 = vmatprep.subr.mxu0 %v5029
    %5074 = vmatpush1.msra.mxu0 %v5028
    %5075 = vmatprep.subr.mxu0 %v5025
    %5076 = vmatpush1.msra.mxu0 %v5024
    %5077 = vmatprep.subr.mxu0 0.0
    %5078 = vmatpush2.msra.mxu0 0.0
    %5079 = vmatprep.subr.mxu0 0.0
    %5080 = vmatpush2.msra.mxu0 0.0
    %5081 = vmatprep.subr.mxu0 0.0
    %5082 = vmatpush2.msra.mxu0 0.0
    %5083 = vmatprep.subr.mxu0 0.0
    %5084 = vmatpush2.msra.mxu0 0.0
    %5085 = vmatprep.subr.mxu0 0.0
    %5086 = vmatpush2.msra.mxu0 0.0
    %5087 = vmatprep.subr.mxu0 0.0
    %5088 = vmatpush2.msra.mxu0 0.0
    %5089 = vmatprep.subr.mxu0 0.0
    %5090 = vmatpush2.msra.mxu0 0.0
    %5091 = vmatprep.subr.mxu0 0.0
    %5092 = vmatpush2.msra.mxu0 0.0
    %5093 = vmatprep.subr.mxu0 0.0
    %5094 = vmatpush2.msra.mxu0 0.0
    %5095 = vmatprep.subr.mxu0 0.0
    %5096 = vmatpush2.msra.mxu0 0.0
    %5097 = vmatprep.subr.mxu0 0.0
    %5098 = vmatpush2.msra.mxu0 0.0
    %5099 = vmatprep.subr.mxu0 0.0
    %5100 = vmatpush2.msra.mxu0 0.0
    %5101 = vmatprep.subr.mxu0 0.0
    %5102 = vmatpush2.msra.mxu0 0.0
    %5103 = vmatprep.subr.mxu0 0.0
    %5104 = vmatpush2.msra.mxu0 0.0
    %5105 = vmatprep.subr.mxu0 0.0
    %5106 = vmatpush2.msra.mxu0 0.0
    %5107 = vmatprep.subr.mxu0 0.0
    %5108 = vmatpush2.msra.mxu0 0.0
    %5109 = vmatprep.mubr.f32.mxu0 0.0
    %5110 = vmatmul.mubr.f32.gmra.mxu0 %v5043
    %v5111 = vpop.f32.mrf.mxu0
    %v5112 = vadd.f32 0.0, %v5111
    %v5113 = vpop.f32.mrf.mxu0
    %v5114 = vadd.f32 0.0, %v5113
    %5115 = vdwg.mxu0
    %5116 = vmatprep.subr.mxu0 0.0
    %5117 = vmatpush1.msra.mxu0 0.0
    %5118 = vmatprep.subr.mxu0 0.0
    %5119 = vmatpush1.msra.mxu0 0.0
    %5120 = vmatprep.subr.mxu0 0.0
    %5121 = vmatpush1.msra.mxu0 0.0
    %5122 = vmatprep.subr.mxu0 0.0
    %5123 = vmatpush1.msra.mxu0 0.0
    %5124 = vmatprep.subr.mxu0 0.0
    %5125 = vmatpush1.msra.mxu0 0.0
    %5126 = vmatprep.subr.mxu0 0.0
    %5127 = vmatpush1.msra.mxu0 0.0
    %5128 = vmatprep.subr.mxu0 0.0
    %5129 = vmatpush1.msra.mxu0 0.0
    %5130 = vmatprep.subr.mxu0 0.0
    %5131 = vmatpush1.msra.mxu0 0.0
    %5132 = vmatprep.subr.mxu0 0.0
    %5133 = vmatpush1.msra.mxu0 0.0
    %5134 = vmatprep.subr.mxu0 0.0
    %5135 = vmatpush1.msra.mxu0 0.0
    %5136 = vmatprep.subr.mxu0 0.0
    %5137 = vmatpush1.msra.mxu0 0.0
    %5138 = vmatprep.subr.mxu0 0.0
    %5139 = vmatpush1.msra.mxu0 0.0
    %5140 = vmatprep.subr.mxu0 %v5039
    %5141 = vmatpush1.msra.mxu0 %v5038
    %5142 = vmatprep.subr.mxu0 %v5035
    %5143 = vmatpush1.msra.mxu0 %v5034
    %5144 = vmatprep.subr.mxu0 %v5031
    %5145 = vmatpush1.msra.mxu0 %v5030
    %5146 = vmatprep.subr.mxu0 %v5027
    %5147 = vmatpush1.msra.mxu0 %v5026
    %5148 = vmatprep.subr.mxu0 0.0
    %5149 = vmatpush2.msra.mxu0 0.0
    %5150 = vmatprep.subr.mxu0 0.0
    %5151 = vmatpush2.msra.mxu0 0.0
    %5152 = vmatprep.subr.mxu0 0.0
    %5153 = vmatpush2.msra.mxu0 0.0
    %5154 = vmatprep.subr.mxu0 0.0
    %5155 = vmatpush2.msra.mxu0 0.0
    %5156 = vmatprep.subr.mxu0 0.0
    %5157 = vmatpush2.msra.mxu0 0.0
    %5158 = vmatprep.subr.mxu0 0.0
    %5159 = vmatpush2.msra.mxu0 0.0
    %5160 = vmatprep.subr.mxu0 0.0
    %5161 = vmatpush2.msra.mxu0 0.0
    %5162 = vmatprep.subr.mxu0 0.0
    %5163 = vmatpush2.msra.mxu0 0.0
    %5164 = vmatprep.subr.mxu0 0.0
    %5165 = vmatpush2.msra.mxu0 0.0
    %5166 = vmatprep.subr.mxu0 0.0
    %5167 = vmatpush2.msra.mxu0 0.0
    %5168 = vmatprep.subr.mxu0 0.0
    %5169 = vmatpush2.msra.mxu0 0.0
    %5170 = vmatprep.subr.mxu0 0.0
    %5171 = vmatpush2.msra.mxu0 0.0
    %5172 = vmatprep.subr.mxu0 0.0
    %5173 = vmatpush2.msra.mxu0 0.0
    %5174 = vmatprep.subr.mxu0 0.0
    %5175 = vmatpush2.msra.mxu0 0.0
    %5176 = vmatprep.subr.mxu0 0.0
    %5177 = vmatpush2.msra.mxu0 0.0
    %5178 = vmatprep.subr.mxu0 0.0
    %5179 = vmatpush2.msra.mxu0 0.0
    %5180 = vmatprep.mubr.f32.mxu0 0.0
    %5181 = vmatmul.mubr.f32.gmra.mxu0 %v5043
    %v5182 = vpop.f32.mrf.mxu0
    %v5183 = vadd.f32 0.0, %v5182
    %v5184 = vpop.f32.mrf.mxu0
    %v5185 = vadd.f32 0.0, %v5184
    %5186 = vdwg.mxu0
    %v5187 = vadd.f32 %v5020, %v5112
    %v5188 = vadd.f32 %v5021, %v5114
    %v5189 = vadd.f32 %v5022, %v5183
    %v5190 = vadd.f32 %v5023, %v5185
    %v5191 = vld [vmem:[%s23] sm:$0xf]
    %v5193 = vlaneseq
    %v5194 = vshrl.u32 %v5193, 7
    %v5195 = vsub.s32 0, %v5194
    %v5196 = vrot.slane %v5191, %v5195
    %v5197 = vlaneseq
    %v5198 = vshrl.u32 %v5197, 7
    %v5199 = vsub.s32 1, %v5198
    %v5200 = vrot.slane %v5191, %v5199
    %v5201 = vlaneseq
    %v5202 = vshrl.u32 %v5201, 7
    %v5203 = vsub.s32 2, %v5202
    %v5204 = vrot.slane %v5191, %v5203
    %v5205 = vlaneseq
    %v5206 = vshrl.u32 %v5205, 7
    %v5207 = vsub.s32 3, %v5206
    %v5208 = vrot.slane %v5191, %v5207
    %v5213 = vadd.f32 %v5187, %v5196
    %v5214 = vadd.f32 %v5188, %v5200
    %v5215 = vadd.f32 %v5189, %v5204
    %v5216 = vadd.f32 %v5190, %v5208
    %v5217 = vld [vmem:[#allocation6] sm:$0xff]
    %v5218 = vld [vmem:[#allocation6 + $0x8] sm:$0xff]
    %v5219 = vld [vmem:[#allocation6 + $0x10] sm:$0xff]
    %v5220 = vld [vmem:[#allocation6 + $0x18] sm:$0xff]
    %v5221 = vld [vmem:[#allocation6 + $0x20] sm:$0xff]
    %v5222 = vld [vmem:[#allocation6 + $0x28] sm:$0xff]
    %v5223 = vld [vmem:[#allocation6 + $0x30] sm:$0xff]
    %v5224 = vld [vmem:[#allocation6 + $0x38] sm:$0xff]
    %v5225 = vld [vmem:[#allocation6 + $0x40] sm:$0xff]
    %v5226 = vld [vmem:[#allocation6 + $0x48] sm:$0xff]
    %v5227 = vld [vmem:[#allocation6 + $0x50] sm:$0xff]
    %v5228 = vld [vmem:[#allocation6 + $0x58] sm:$0xff]
    %v5229 = vld [vmem:[#allocation6 + $0x60] sm:$0xff]
    %v5230 = vld [vmem:[#allocation6 + $0x68] sm:$0xff]
    %v5231 = vld [vmem:[#allocation6 + $0x70] sm:$0xff]
    %v5232 = vld [vmem:[#allocation6 + $0x78] sm:$0xff]
    %v5233 = vld [vmem:[#allocation6 + $0x80] sm:$0xff]
    %v5234 = vld [vmem:[#allocation6 + $0x88] sm:$0xff]
    %v5235 = vld [vmem:[#allocation6 + $0x90] sm:$0xff]
    %v5236 = vld [vmem:[#allocation6 + $0x98] sm:$0xff]
    %v5237 = vld [vmem:[#allocation6 + $0xa0] sm:$0xff]
    %v5238 = vld [vmem:[#allocation6 + $0xa8] sm:$0xff]
    %v5239 = vld [vmem:[#allocation6 + $0xb0] sm:$0xff]
    %v5240 = vld [vmem:[#allocation6 + $0xb8] sm:$0xff]
    %v5241 = vld [vmem:[#allocation6 + $0xc0] sm:$0xff]
    %v5242 = vld [vmem:[#allocation6 + $0xc8] sm:$0xff]
    %v5243 = vld [vmem:[#allocation6 + $0xd0] sm:$0xff]
    %v5244 = vld [vmem:[#allocation6 + $0xd8] sm:$0xff]
    %v5245 = vld [vmem:[#allocation6 + $0xe0] sm:$0xff]
    %v5246 = vld [vmem:[#allocation6 + $0xe8] sm:$0xff]
    %v5247 = vld [vmem:[#allocation6 + $0xf0] sm:$0xff]
    %v5248 = vld [vmem:[#allocation6 + $0xf8] sm:$0xff]
    %v5249 = vld [vmem:[#allocation6 + $0x100] sm:$0xff]
    %v5250 = vld [vmem:[#allocation6 + $0x108] sm:$0xff]
    %v5251 = vld [vmem:[#allocation6 + $0x110] sm:$0xff]
    %v5252 = vld [vmem:[#allocation6 + $0x118] sm:$0xff]
    %v5253 = vld [vmem:[#allocation6 + $0x120] sm:$0xff]
    %v5254 = vld [vmem:[#allocation6 + $0x128] sm:$0xff]
    %v5255 = vld [vmem:[#allocation6 + $0x130] sm:$0xff]
    %v5256 = vld [vmem:[#allocation6 + $0x138] sm:$0xff]
    %v5257 = vld [vmem:[#allocation6 + $0x140] sm:$0xff]
    %v5258 = vld [vmem:[#allocation6 + $0x148] sm:$0xff]
    %v5259 = vld [vmem:[#allocation6 + $0x150] sm:$0xff]
    %v5260 = vld [vmem:[#allocation6 + $0x158] sm:$0xff]
    %v5261 = vld [vmem:[#allocation6 + $0x160] sm:$0xff]
    %v5262 = vld [vmem:[#allocation6 + $0x168] sm:$0xff]
    %v5263 = vld [vmem:[#allocation6 + $0x170] sm:$0xff]
    %v5264 = vld [vmem:[#allocation6 + $0x178] sm:$0xff]
    %v5265 = vld [vmem:[#allocation6 + $0x180] sm:$0xff]
    %v5266 = vld [vmem:[#allocation6 + $0x188] sm:$0xff]
    %v5267 = vld [vmem:[#allocation6 + $0x190] sm:$0xff]
    %v5268 = vld [vmem:[#allocation6 + $0x198] sm:$0xff]
    %v5269 = vld [vmem:[#allocation6 + $0x1a0] sm:$0xff]
    %v5270 = vld [vmem:[#allocation6 + $0x1a8] sm:$0xff]
    %v5271 = vld [vmem:[#allocation6 + $0x1b0] sm:$0xff]
    %v5272 = vld [vmem:[#allocation6 + $0x1b8] sm:$0xff]
    %v5273 = vld [vmem:[#allocation6 + $0x1c0] sm:$0xff]
    %v5274 = vld [vmem:[#allocation6 + $0x1c8] sm:$0xff]
    %v5275 = vld [vmem:[#allocation6 + $0x1d0] sm:$0xff]
    %v5276 = vld [vmem:[#allocation6 + $0x1d8] sm:$0xff]
    %v5277 = vld [vmem:[#allocation6 + $0x1e0] sm:$0xff]
    %v5278 = vld [vmem:[#allocation6 + $0x1e8] sm:$0xff]
    %v5279 = vld [vmem:[#allocation6 + $0x1f0] sm:$0xff]
    %v5280 = vld [vmem:[#allocation6 + $0x1f8] sm:$0xff]
    %v5281 = vld [vmem:[%s25] sm:$0x1]
    %v5283 = vlaneseq
    %v5284 = vshrl.u32 %v5283, 7
    %v5285 = vsub.s32 0, %v5284
    %v5286 = vrot.slane %v5281, %v5285
    %5288 = vmatprep.subr.mxu0 0.0
    %5289 = vmatpush1.msra.mxu0 %v5232
    %5290 = vmatprep.subr.mxu0 0.0
    %5291 = vmatpush1.msra.mxu0 %v5231
    %5292 = vmatprep.subr.mxu0 0.0
    %5293 = vmatpush1.msra.mxu0 %v5230
    %5294 = vmatprep.subr.mxu0 0.0
    %5295 = vmatpush1.msra.mxu0 %v5229
    %5296 = vmatprep.subr.mxu0 0.0
    %5297 = vmatpush1.msra.mxu0 %v5228
    %5298 = vmatprep.subr.mxu0 0.0
    %5299 = vmatpush1.msra.mxu0 %v5227
    %5300 = vmatprep.subr.mxu0 0.0
    %5301 = vmatpush1.msra.mxu0 %v5226
    %5302 = vmatprep.subr.mxu0 0.0
    %5303 = vmatpush1.msra.mxu0 %v5225
    %5304 = vmatprep.subr.mxu0 0.0
    %5305 = vmatpush1.msra.mxu0 %v5224
    %5306 = vmatprep.subr.mxu0 0.0
    %5307 = vmatpush1.msra.mxu0 %v5223
    %5308 = vmatprep.subr.mxu0 0.0
    %5309 = vmatpush1.msra.mxu0 %v5222
    %5310 = vmatprep.subr.mxu0 0.0
    %5311 = vmatpush1.msra.mxu0 %v5221
    %5312 = vmatprep.subr.mxu0 0.0
    %5313 = vmatpush1.msra.mxu0 %v5220
    %5314 = vmatprep.subr.mxu0 0.0
    %5315 = vmatpush1.msra.mxu0 %v5219
    %5316 = vmatprep.subr.mxu0 0.0
    %5317 = vmatpush1.msra.mxu0 %v5218
    %5318 = vmatprep.subr.mxu0 0.0
    %5319 = vmatpush1.msra.mxu0 %v5217
    %5320 = vmatprep.subr.mxu0 0.0
    %5321 = vmatpush2.msra.mxu0 %v5248
    %5322 = vmatprep.subr.mxu0 0.0
    %5323 = vmatpush2.msra.mxu0 %v5247
    %5324 = vmatprep.subr.mxu0 0.0
    %5325 = vmatpush2.msra.mxu0 %v5246
    %5326 = vmatprep.subr.mxu0 0.0
    %5327 = vmatpush2.msra.mxu0 %v5245
    %5328 = vmatprep.subr.mxu0 0.0
    %5329 = vmatpush2.msra.mxu0 %v5244
    %5330 = vmatprep.subr.mxu0 0.0
    %5331 = vmatpush2.msra.mxu0 %v5243
    %5332 = vmatprep.subr.mxu0 0.0
    %5333 = vmatpush2.msra.mxu0 %v5242
    %5334 = vmatprep.subr.mxu0 0.0
    %5335 = vmatpush2.msra.mxu0 %v5241
    %5336 = vmatprep.subr.mxu0 0.0
    %5337 = vmatpush2.msra.mxu0 %v5240
    %5338 = vmatprep.subr.mxu0 0.0
    %5339 = vmatpush2.msra.mxu0 %v5239
    %5340 = vmatprep.subr.mxu0 0.0
    %5341 = vmatpush2.msra.mxu0 %v5238
    %5342 = vmatprep.subr.mxu0 0.0
    %5343 = vmatpush2.msra.mxu0 %v5237
    %5344 = vmatprep.subr.mxu0 0.0
    %5345 = vmatpush2.msra.mxu0 %v5236
    %5346 = vmatprep.subr.mxu0 0.0
    %5347 = vmatpush2.msra.mxu0 %v5235
    %5348 = vmatprep.subr.mxu0 0.0
    %5349 = vmatpush2.msra.mxu0 %v5234
    %5350 = vmatprep.subr.mxu0 0.0
    %5351 = vmatpush2.msra.mxu0 %v5233
    %5352 = vmatprep.mubr.f32.mxu0 %v5214
    %5353 = vmatmul.mubr.f32.gmra.mxu0 %v5213
    %v5354 = vpop.f32.mrf.mxu0
    %v5355 = vadd.f32 %v5286, %v5354
    %v5356 = vpop.f32.mrf.mxu0
    %5357 = vdwg.mxu0
    %5358 = vmatprep.subr.mxu0 0.0
    %5359 = vmatpush1.msra.mxu0 %v5264
    %5360 = vmatprep.subr.mxu0 0.0
    %5361 = vmatpush1.msra.mxu0 %v5263
    %5362 = vmatprep.subr.mxu0 0.0
    %5363 = vmatpush1.msra.mxu0 %v5262
    %5364 = vmatprep.subr.mxu0 0.0
    %5365 = vmatpush1.msra.mxu0 %v5261
    %5366 = vmatprep.subr.mxu0 0.0
    %5367 = vmatpush1.msra.mxu0 %v5260
    %5368 = vmatprep.subr.mxu0 0.0
    %5369 = vmatpush1.msra.mxu0 %v5259
    %5370 = vmatprep.subr.mxu0 0.0
    %5371 = vmatpush1.msra.mxu0 %v5258
    %5372 = vmatprep.subr.mxu0 0.0
    %5373 = vmatpush1.msra.mxu0 %v5257
    %5374 = vmatprep.subr.mxu0 0.0
    %5375 = vmatpush1.msra.mxu0 %v5256
    %5376 = vmatprep.subr.mxu0 0.0
    %5377 = vmatpush1.msra.mxu0 %v5255
    %5378 = vmatprep.subr.mxu0 0.0
    %5379 = vmatpush1.msra.mxu0 %v5254
    %5380 = vmatprep.subr.mxu0 0.0
    %5381 = vmatpush1.msra.mxu0 %v5253
    %5382 = vmatprep.subr.mxu0 0.0
    %5383 = vmatpush1.msra.mxu0 %v5252
    %5384 = vmatprep.subr.mxu0 0.0
    %5385 = vmatpush1.msra.mxu0 %v5251
    %5386 = vmatprep.subr.mxu0 0.0
    %5387 = vmatpush1.msra.mxu0 %v5250
    %5388 = vmatprep.subr.mxu0 0.0
    %5389 = vmatpush1.msra.mxu0 %v5249
    %5390 = vmatprep.subr.mxu0 0.0
    %5391 = vmatpush2.msra.mxu0 %v5280
    %5392 = vmatprep.subr.mxu0 0.0
    %5393 = vmatpush2.msra.mxu0 %v5279
    %5394 = vmatprep.subr.mxu0 0.0
    %5395 = vmatpush2.msra.mxu0 %v5278
    %5396 = vmatprep.subr.mxu0 0.0
    %5397 = vmatpush2.msra.mxu0 %v5277
    %5398 = vmatprep.subr.mxu0 0.0
    %5399 = vmatpush2.msra.mxu0 %v5276
    %5400 = vmatprep.subr.mxu0 0.0
    %5401 = vmatpush2.msra.mxu0 %v5275
    %5402 = vmatprep.subr.mxu0 0.0
    %5403 = vmatpush2.msra.mxu0 %v5274
    %5404 = vmatprep.subr.mxu0 0.0
    %5405 = vmatpush2.msra.mxu0 %v5273
    %5406 = vmatprep.subr.mxu0 0.0
    %5407 = vmatpush2.msra.mxu0 %v5272
    %5408 = vmatprep.subr.mxu0 0.0
    %5409 = vmatpush2.msra.mxu0 %v5271
    %5410 = vmatprep.subr.mxu0 0.0
    %5411 = vmatpush2.msra.mxu0 %v5270
    %5412 = vmatprep.subr.mxu0 0.0
    %5413 = vmatpush2.msra.mxu0 %v5269
    %5414 = vmatprep.subr.mxu0 0.0
    %5415 = vmatpush2.msra.mxu0 %v5268
    %5416 = vmatprep.subr.mxu0 0.0
    %5417 = vmatpush2.msra.mxu0 %v5267
    %5418 = vmatprep.subr.mxu0 0.0
    %5419 = vmatpush2.msra.mxu0 %v5266
    %5420 = vmatprep.subr.mxu0 0.0
    %5421 = vmatpush2.msra.mxu0 %v5265
    %5422 = vmatprep.mubr.f32.mxu0 %v5216
    %5423 = vmatmul.mubr.f32.gmra.mxu0 %v5215
    %v5424 = vpop.f32.mrf.mxu0
    %v5425 = vadd.f32 %v5355, %v5424
    %v5426 = vpop.f32.mrf.mxu0
    %5427 = vdwg.mxu0
    %vm5428 = vcmask 33792
    %5429 = vst.msk [vmem:[#allocation8] sm:$0x3] %vm5428, %v5425
    // Predicated region
    $region114: #{_lambda_.1} parent=1 // pred_check
      _
    $region115: #{_lambda_.1} parent=1 // pred_check_branch
      %5431 = sbr.rel (0) target = $region117
    $region116: #{_lambda_.1} parent=1 // pred_region
      %s5433 = ssub.s32 32, 32
      %5434 = vsyncadd [#allocation5], %s5433
      %s5436 = sshll.u32 [#allocation8], 4
      %s5437 = int_to_ptr.vmem [resolvable:$true] %s5436
      %5439 = dma.vmem_to_hbm [thread:$0]  %s5437, 32, %s26, [#allocation5]
    $region117: #{_lambda_.1} parent=1 // pred_fallthru
      _
    // Predicated region
    $region118: #{_lambda_.1} parent=1 // pred_check
      _
    $region119: #{_lambda_.1} parent=1 // pred_check_branch
      %5441 = sbr.rel (0) target = $region121
    $region120: #{_lambda_.1} parent=1 // pred_region
      %5442 = dma.done [#allocation5], 32
    $region121: #{_lambda_.1} parent=1 // pred_fallthru
      _
    %5443 = vsyncpa [#allocation4], 1
    %5444 = vsyncpa [#allocation7], 1
    %5445 = vsyncpa [#allocation5], 1

</llo_original>
